<compile_context>
chip_gen: v6e
topology: v6e:2x2x1
jax: 0.10.0
libtpu: 0.0.40
codegen_flags: <defaults>
</compile_context>

<pallas_src>
import functools
import math

import jax
import jax.numpy as jnp
from jax.experimental import pallas as pl
from jax.experimental.pallas import tpu as pltpu


_MXU_DTYPE = jnp.bfloat16            # MXU input dtype; accumulation stays f32
_VMEM_LIMIT = 32 * 1024 * 1024       # explicit scoped-VMEM budget (v7x-safe)
_NEG_INF = -1e9


# ----------------------------- in-kernel helpers -----------------------------

def _mxu(a, b):
    """MXU matmul: bf16 inputs, f32 accumulation."""
    return jnp.dot(a.astype(_MXU_DTYPE), b.astype(_MXU_DTYPE),
                   preferred_element_type=jnp.float32)


def _mxu_nt(a, b):
    """a @ b.T without an explicit transpose (contract last dims of both)."""
    return jax.lax.dot_general(
        a.astype(_MXU_DTYPE), b.astype(_MXU_DTYPE),
        dimension_numbers=(((1,), (1,)), ((), ())),
        preferred_element_type=jnp.float32)


def _layernorm(x, g, b, eps=1e-5):
    mu = jnp.mean(x, axis=-1, keepdims=True)
    var = jnp.mean(jnp.square(x - mu), axis=-1, keepdims=True)
    return (x - mu) * jax.lax.rsqrt(var + eps) * g + b


def _conv1d(x, w, b, k, relu):
    """'same' Conv1d over time, channels-last, entirely in VMEM.

    x: (T, Cin); w: (k*Cin, Cout) with w[i*Cin + c, o] == torch_w[o, c, i].
    The im2col is realized as k shifted in-register views of x, one MXU dot
    each (no HBM-materialized (T, k*Cin) tensor).
    """
    T, Cin = x.shape
    pad = (k - 1) // 2
    acc = None
    for i in range(k):
        off = i - pad
        if off < 0:
            xs = jnp.concatenate(
                [jnp.zeros((-off, Cin), x.dtype), x[:T + off, :]], axis=0)
        elif off > 0:
            xs = jnp.concatenate(
                [x[off:, :], jnp.zeros((off, Cin), x.dtype)], axis=0)
        else:
            xs = x
        part = _mxu(xs, w[i * Cin:(i + 1) * Cin, :])
        acc = part if acc is None else acc + part
    acc = acc + b
    return jnp.maximum(acc, 0.0) if relu else acc


# ----------------------------- fused FFT block -----------------------------

def _fft_block_kernel(x_ref, bias_ref, npm_ref,
                      wqkv_ref, bqkv_ref, wo_ref, bo_ref,
                      ln1g_ref, ln1b_ref,
                      c1w_ref, c1b_ref, c2w_ref, c2b_ref,
                      ln2g_ref, ln2b_ref,
                      o_ref, *, n_head, k1, k2):
    x = x_ref[0]                          # (T, D) f32
    key_bias = bias_ref[0]                # (1, T): 0 at valid keys, -1e9 at PAD
    npm = npm_ref[0]                      # (T, 1): 1.0 at valid positions

    D = x.shape[-1]
    dk = D // n_head
    scale = 1.0 / math.sqrt(dk)

    # ---- multi-head self-attention (fused QKV matmul, heads kept in-kernel) --
    qkv = _mxu(x, wqkv_ref[...]) + bqkv_ref[...]          # (T, 3D)
    heads = []
    for h in range(n_head):
        q = qkv[:, h * dk:(h + 1) * dk]
        k = qkv[:, D + h * dk:D + (h + 1) * dk]
        v = qkv[:, 2 * D + h * dk:2 * D + (h + 1) * dk]
        s = _mxu_nt(q, k) * scale + key_bias               # (T, T)
        s = s - jnp.max(s, axis=-1, keepdims=True)
        p = jnp.exp(s)
        p = p * pl.reciprocal(jnp.sum(p, axis=-1, keepdims=True), approx=True)
        heads.append(_mxu(p, v))                           # (T, dk)
    attn = jnp.concatenate(heads, axis=-1)                 # (T, D)
    out = _mxu(attn, wo_ref[...]) + bo_ref[...]
    x1 = _layernorm(out + x, ln1g_ref[...], ln1b_ref[...]) * npm

    # ---- position-wise conv feed-forward (residual + LN + mask fused) ----
    h1 = _conv1d(x1, c1w_ref[...], c1b_ref[...], k1, relu=True)
    h2 = _conv1d(h1, c2w_ref[...], c2b_ref[...], k2, relu=False)
    x2 = _layernorm(h2 + x1, ln2g_ref[...], ln2b_ref[...]) * npm

    o_ref[0] = x2


def fft_block(x, attn_bias, npmask, p, cfg):
    B, T, D = x.shape
    F = p["c1_b"].shape[-1]
    H = cfg["encoder_head"]
    k1, k2 = cfg["fft_conv1d_kernels"]
    dk = D // H

    flops = B * (2 * T * D * 3 * D            # fused QKV
                 + 4 * H * T * T * dk         # scores + attn @ V
                 + 2 * T * D * D              # output projection
                 + 2 * T * (k1 * D * F + k2 * F * D))
    bytes_accessed = 4 * (2 * B * T * D + 2 * B * T
                          + 3 * D * D + D * D + k1 * D * F + k2 * F * D
                          + 7 * D + 2 * F)
    cost = pl.CostEstimate(flops=flops,
                           transcendentals=B * (H * T * T + 2 * T),
                           bytes_accessed=bytes_accessed)

    kernel = functools.partial(_fft_block_kernel, n_head=H, k1=k1, k2=k2)
    row = pl.BlockSpec((1, T, D), lambda b: (b, 0, 0))

    def full2d(shape):
        return pl.BlockSpec(shape, lambda b: (0, 0))

    return pl.pallas_call(
        kernel,
        grid=(B,),
        in_specs=[
            row,
            pl.BlockSpec((1, 1, T), lambda b: (b, 0, 0)),
            pl.BlockSpec((1, T, 1), lambda b: (b, 0, 0)),
            full2d((D, 3 * D)), full2d((1, 3 * D)),
            full2d((D, D)), full2d((1, D)),
            full2d((1, D)), full2d((1, D)),
            full2d((k1 * D, F)), full2d((1, F)),
            full2d((k2 * F, D)), full2d((1, D)),
            full2d((1, D)), full2d((1, D)),
        ],
        out_specs=row,
        out_shape=jax.ShapeDtypeStruct((B, T, D), jnp.float32),
        compiler_params=pltpu.CompilerParams(
            dimension_semantics=("parallel",),
            vmem_limit_bytes=_VMEM_LIMIT),
        cost_estimate=cost,
    )(x, attn_bias, npmask,
      p["wqkv"], p["bqkv"].reshape(1, -1),
      p["wo"], p["bo"].reshape(1, -1),
      p["ln1_g"].reshape(1, -1), p["ln1_b"].reshape(1, -1),
      p["c1_w"], p["c1_b"].reshape(1, -1),
      p["c2_w"], p["c2_b"].reshape(1, -1),
      p["ln2_g"].reshape(1, -1), p["ln2_b"].reshape(1, -1))


# ----------------------------- fused variance predictor --------------------

def _var_pred_kernel(x_ref, npm_ref,
                     c1w_ref, c1b_ref, ln1g_ref, ln1b_ref,
                     c2w_ref, c2b_ref, ln2g_ref, ln2b_ref,
                     linw_ref, linb_ref, o_ref):
    x = x_ref[0]                          # (T, D)
    npm = npm_ref[0]                      # (T, 1)
    h = _conv1d(x, c1w_ref[...], c1b_ref[...], 3, relu=True)
    h = _layernorm(h, ln1g_ref[...], ln1b_ref[...])
    h = _conv1d(h, c2w_ref[...], c2b_ref[...], 3, relu=True)
    h = _layernorm(h, ln2g_ref[...], ln2b_ref[...])
    # Final N=1 projection as a VPU row-reduction (avoids a 1-lane MXU matmul
    # and a masked width-1 store).
    out = jnp.sum(h * linw_ref[...], axis=-1, keepdims=True) + linb_ref[...]
    o_ref[0] = out * npm                  # mask predictions at PAD positions


def variance_predictor(x, npmask, p):
    B, T, D = x.shape
    F = p["c1_b"].shape[-1]

    def full2d(shape):
        return pl.BlockSpec(shape, lambda b: (0, 0))

    out = pl.pallas_call(
        _var_pred_kernel,
        grid=(B,),
        in_specs=[
            pl.BlockSpec((1, T, D), lambda b: (b, 0, 0)),
            pl.BlockSpec((1, T, 1), lambda b: (b, 0, 0)),
            full2d((3 * D, F)), full2d((1, F)),
            full2d((1, F)), full2d((1, F)),
            full2d((3 * F, F)), full2d((1, F)),
            full2d((1, F)), full2d((1, F)),
            full2d((1, F)), full2d((1, 1)),
        ],
        out_specs=pl.BlockSpec((1, T, 1), lambda b: (b, 0, 0)),
        out_shape=jax.ShapeDtypeStruct((B, T, 1), jnp.float32),
        compiler_params=pltpu.CompilerParams(
            dimension_semantics=("parallel",),
            vmem_limit_bytes=_VMEM_LIMIT),
    )(x, npmask,
      p["c1_w"], p["c1_b"].reshape(1, -1),
      p["ln1_g"].reshape(1, -1), p["ln1_b"].reshape(1, -1),
      p["c2_w"], p["c2_b"].reshape(1, -1),
      p["ln2_g"].reshape(1, -1), p["ln2_b"].reshape(1, -1),
      p["lin_w"].reshape(1, -1), p["lin_b"].reshape(1, 1))
    return out[..., 0]                   # (B, T)


# ----------------------------- fused mask + mel_linear ----------------------

def _mel_kernel(y_ref, valid_ref, w_ref, b_ref, o_ref):
    y = y_ref[0] * valid_ref[0]           # mask_tensor BEFORE mel_linear
    o_ref[0] = _mxu(y, w_ref[...]) + b_ref[...]


def mel_linear(y, valid, w, b):
    B, M, D = y.shape
    N = w.shape[-1]
    return pl.pallas_call(
        _mel_kernel,
        grid=(B,),
        in_specs=[
            pl.BlockSpec((1, M, D), lambda b_: (b_, 0, 0)),
            pl.BlockSpec((1, M, 1), lambda b_: (b_, 0, 0)),
            pl.BlockSpec((D, N), lambda b_: (0, 0)),
            pl.BlockSpec((1, N), lambda b_: (0, 0)),
        ],
        out_specs=pl.BlockSpec((1, M, N), lambda b_: (b_, 0, 0)),
        out_shape=jax.ShapeDtypeStruct((B, M, N), jnp.float32),
        compiler_params=pltpu.CompilerParams(
            dimension_semantics=("parallel",),
            vmem_limit_bytes=_VMEM_LIMIT),
    )(y, valid, w, b.reshape(1, -1))


# ----------------------------- JAX glue (masks / gathers) -------------------

def get_non_pad_mask_3d(seq, pad_token):
    return (seq != pad_token).astype(jnp.float32)[:, :, None]       # (B,T,1)


def get_attn_key_pad_bias(seq_k, pad_token):
    # Additive bias version of get_attn_key_pad_mask (0 valid, -1e9 at PAD keys).
    return jnp.where(seq_k == pad_token, _NEG_INF, 0.0).astype(
        jnp.float32)[:, None, :]                                    # (B,1,T)


def get_mask_from_lengths(lengths, max_len):
    ids = jnp.arange(max_len)
    return ids[None, :] < lengths[:, None]


def length_regulator(x, durations, mel_max_length):
    # Training-time LR: expand phoneme i by durations[b, i], pad to mel_max_length.
    B, T, D = x.shape
    cum = jnp.cumsum(durations, axis=1)                              # (B, T)
    t = jnp.arange(mel_max_length)                                   # (M,)
    idx = jnp.sum(t[None, :, None] >= cum[:, None, :], axis=-1)      # (B, M)
    valid = t[None, :] < cum[:, -1:]
    idx = jnp.clip(idx, 0, T - 1)
    out = jnp.take_along_axis(x, idx[..., None], axis=1)
    return jnp.where(valid[..., None], out, 0.0)


# ----------------------------- full forward -----------------------------

def fastspeech2_forward(params, cfg, mel_cfg, src_seq, src_pos, mel_pos,
                        mel_max_length, length_target, pitch_target,
                        energy_target):
    PAD = cfg["PAD"]

    # ---------------- Encoder ----------------
    enc_npm = get_non_pad_mask_3d(src_seq, PAD)              # (B, T, 1)
    enc_attn_bias = get_attn_key_pad_bias(src_seq, PAD)      # (B, 1, T)
    x = (jnp.take(params["enc"]["word_emb"], src_seq, axis=0)
         + jnp.take(params["enc"]["pos_emb"], src_pos, axis=0))
    for lp in params["enc"]["layers"]:
        x = fft_block(x, enc_attn_bias, enc_npm, lp, cfg)

    # ------------- Variance adaptor (training path) -------------
    # TODO(synk): the reference VariancePredictor source is not in the spec;
    # standard FastSpeech2 ordering + pad-masked predictions are used here.
    va = params["va"]
    log_duration_pred = variance_predictor(x, enc_npm, va["duration"])
    x = length_regulator(x, length_target, mel_max_length)

    mel_npm = get_non_pad_mask_3d(mel_pos, PAD)              # (B, M, 1)
    mel_attn_bias = get_attn_key_pad_bias(mel_pos, PAD)      # (B, 1, M)

    pitch_pred = variance_predictor(x, mel_npm, va["pitch"])
    pitch_idx = jnp.searchsorted(va["pitch_bins"], pitch_target)
    x = x + jnp.take(va["pitch_emb"], pitch_idx, axis=0)
    energy_pred = variance_predictor(x, mel_npm, va["energy"])
    energy_idx = jnp.searchsorted(va["energy_bins"], energy_target)
    x = x + jnp.take(va["energy_emb"], energy_idx, axis=0)

    # ---------------- Decoder ----------------
    y = x + jnp.take(params["dec"]["pos_emb"], mel_pos, axis=0)
    for lp in params["dec"]["layers"]:
        y = fft_block(y, mel_attn_bias, mel_npm, lp, cfg)

    # ------------ mask_tensor + mel_linear (fused kernel) ------------
    lengths = jnp.max(mel_pos, axis=-1)
    valid = get_mask_from_lengths(lengths, mel_max_length)
    valid = valid.astype(jnp.float32)[:, :, None]            # (B, M, 1)
    mel = mel_linear(y, valid, params["mel_w"], params["mel_b"])
    return mel, log_duration_pred, pitch_pred, energy_pred


# ----------------------------- parameter init -----------------------------

def _dense(key, shape, scale=0.02):
    return jax.random.normal(key, shape, jnp.float32) * scale


def _embedding(key, n, d, pad0=True):
    t = jax.random.normal(key, (n, d), jnp.float32) * 0.02
    if pad0:
        t = t.at[0].set(0.0)
    return t


def init_fft_params(key, D, F, kernels):
    ks = jax.random.split(key, 4)
    k1, k2 = kernels
    return dict(
        wqkv=_dense(ks[0], (D, 3 * D)), bqkv=jnp.zeros((3 * D,), jnp.float32),
        wo=_dense(ks[1], (D, D)), bo=jnp.zeros((D,), jnp.float32),
        ln1_g=jnp.ones((D,), jnp.float32), ln1_b=jnp.zeros((D,), jnp.float32),
        c1_w=_dense(ks[2], (k1 * D, F)), c1_b=jnp.zeros((F,), jnp.float32),
        c2_w=_dense(ks[3], (k2 * F, D)), c2_b=jnp.zeros((D,), jnp.float32),
        ln2_g=jnp.ones((D,), jnp.float32), ln2_b=jnp.zeros((D,), jnp.float32),
    )


def init_vp_params(key, D, F):
    ks = jax.random.split(key, 3)
    return dict(
        c1_w=_dense(ks[0], (3 * D, F)), c1_b=jnp.zeros((F,), jnp.float32),
        ln1_g=jnp.ones((F,), jnp.float32), ln1_b=jnp.zeros((F,), jnp.float32),
        c2_w=_dense(ks[1], (3 * F, F)), c2_b=jnp.zeros((F,), jnp.float32),
        ln2_g=jnp.ones((F,), jnp.float32), ln2_b=jnp.zeros((F,), jnp.float32),
        lin_w=_dense(ks[2], (F, 1)), lin_b=jnp.zeros((1,), jnp.float32),
    )


def init_params(key, cfg, mel_cfg):
    D = cfg["encoder_dim"]
    F = cfg["encoder_conv1d_filter_size"]
    VF = cfg["variance_filter"]
    n_pos = cfg["max_seq_len"] + 1
    n_bins = cfg["n_bins"]
    ks = jax.random.split(key, 16)

    enc = dict(
        word_emb=_embedding(ks[0], cfg["vocab_size"], D),
        pos_emb=_embedding(ks[1], n_pos, D),
        layers=[init_fft_params(k, D, F, cfg["fft_conv1d_kernels"])
                for k in jax.random.split(ks[2], cfg["encoder_n_layer"])],
    )
    dec = dict(
        pos_emb=_embedding(ks[3], n_pos, D),
        layers=[init_fft_params(k, D, F, cfg["fft_conv1d_kernels"])
                for k in jax.random.split(ks[4], cfg["decoder_n_layer"])],
    )
    va = dict(
        duration=init_vp_params(ks[5], D, VF),
        pitch=init_vp_params(ks[6], D, VF),
        energy=init_vp_params(ks[7], D, VF),
        pitch_bins=jnp.linspace(0.0, 1.0, n_bins - 1),
        energy_bins=jnp.linspace(0.0, 1.0, n_bins - 1),
        pitch_emb=_embedding(ks[8], n_bins, D, pad0=False),
        energy_emb=_embedding(ks[9], n_bins, D, pad0=False),
    )
    return dict(
        enc=enc, dec=dec, va=va,
        mel_w=_dense(ks[10], (cfg["decoder_dim"], mel_cfg["num_mels"])),
        mel_b=jnp.zeros((mel_cfg["num_mels"],), jnp.float32),
    )


# ----------------------------- main -----------------------------

if __name__ == "__main__":
    cfg = dict(
        PAD=0, vocab_size=32, max_seq_len=32,
        encoder_dim=32, decoder_dim=32,
        encoder_n_layer=2, decoder_n_layer=2,
        encoder_head=2, encoder_conv1d_filter_size=64,
        fft_conv1d_kernels=(3, 1), dropout=0.1,
        variance_filter=32, n_bins=16,
    )
    mel_cfg = dict(num_mels=16)

    key = jax.random.PRNGKey(0)
    kp, k1, k2, k3 = jax.random.split(key, 4)
    params = init_params(kp, cfg, mel_cfg)

    B, T_src, mel_max_length = 2, 16, 32
    src_lens = jnp.array([16, 12], dtype=jnp.int32)
    ids = jnp.arange(T_src, dtype=jnp.int32)
    src_seq = jax.random.randint(k1, (B, T_src), 1, cfg["vocab_size"],
                                 dtype=jnp.int32)
    valid = ids[None, :] < src_lens[:, None]
    src_seq = jnp.where(valid, src_seq, 0)
    src_pos = jnp.where(valid, ids[None, :] + 1, 0).astype(jnp.int32)
    length_target = jnp.where(valid, 2, 0).astype(jnp.int32)  # durations sum 32/24
    mel_lens = jnp.sum(length_target, axis=1)
    mids = jnp.arange(mel_max_length, dtype=jnp.int32)
    mel_pos = jnp.where(mids[None, :] < mel_lens[:, None],
                        mids[None, :] + 1, 0).astype(jnp.int32)
    pitch_target = jax.random.uniform(k2, (B, mel_max_length), jnp.float32)
    energy_target = jax.random.uniform(k3, (B, mel_max_length), jnp.float32)

    fwd = jax.jit(
        lambda p, a, b_, c, d, e, f: fastspeech2_forward(
            p, cfg, mel_cfg, a, b_, c, mel_max_length, d, e, f))

    mel, dur_pred, pitch_pred, energy_pred = fwd(
        params, src_seq, src_pos, mel_pos,
        length_target, pitch_target, energy_target)

    jax.block_until_ready((mel, dur_pred, pitch_pred, energy_pred))
    assert mel.shape == (B, mel_max_length, mel_cfg["num_mels"])
    assert dur_pred.shape == (B, T_src)
    assert pitch_pred.shape == (B, mel_max_length)
    assert energy_pred.shape == (B, mel_max_length)
    assert bool(jnp.all(jnp.isfinite(mel)))
    print("KERNEL_OK")
</pallas_src>

<mosaic_0001>
module attributes {stable_mosaic.version = 11 : i64} {
  func.func @_fft_block_kernel(%arg0: i32, %arg1: memref<1x16x32xf32, #tpu.memory_space<vmem>>, %arg2: memref<1x1x16xf32, #tpu.memory_space<vmem>>, %arg3: memref<1x16x1xf32, #tpu.memory_space<vmem>>, %arg4: memref<32x96xf32, #tpu.memory_space<vmem>>, %arg5: memref<1x96xf32, #tpu.memory_space<vmem>>, %arg6: memref<32x32xf32, #tpu.memory_space<vmem>>, %arg7: memref<1x32xf32, #tpu.memory_space<vmem>>, %arg8: memref<1x32xf32, #tpu.memory_space<vmem>>, %arg9: memref<1x32xf32, #tpu.memory_space<vmem>>, %arg10: memref<96x64xf32, #tpu.memory_space<vmem>>, %arg11: memref<1x64xf32, #tpu.memory_space<vmem>>, %arg12: memref<64x32xf32, #tpu.memory_space<vmem>>, %arg13: memref<1x32xf32, #tpu.memory_space<vmem>>, %arg14: memref<1x32xf32, #tpu.memory_space<vmem>>, %arg15: memref<1x32xf32, #tpu.memory_space<vmem>>, %arg16: memref<1x16x32xf32, #tpu.memory_space<vmem>>) attributes {dimension_semantics = [#tpu.dimension_semantics<parallel>], iteration_bounds = array<i64: 2>, scalar_prefetch = 0 : i64, scratch_operands = 0 : i64, tpu.core_type = #tpu.core_type<tc>, window_params = [{transform_indices = @transform_0, window_bounds = array<i64: 1, 16, 32>}, {transform_indices = @transform_1, window_bounds = array<i64: 1, 1, 16>}, {transform_indices = @transform_2, window_bounds = array<i64: 1, 16, 1>}, {pipeline_mode = #tpu.pipeline_mode<synchronous>, transform_indices = @transform_3, window_bounds = array<i64: 32, 96>}, {pipeline_mode = #tpu.pipeline_mode<synchronous>, transform_indices = @transform_4, window_bounds = array<i64: 1, 96>}, {pipeline_mode = #tpu.pipeline_mode<synchronous>, transform_indices = @transform_5, window_bounds = array<i64: 32, 32>}, {pipeline_mode = #tpu.pipeline_mode<synchronous>, transform_indices = @transform_6, window_bounds = array<i64: 1, 32>}, {pipeline_mode = #tpu.pipeline_mode<synchronous>, transform_indices = @transform_7, window_bounds = array<i64: 1, 32>}, {pipeline_mode = #tpu.pipeline_mode<synchronous>, transform_indices = @transform_8, window_bounds = array<i64: 1, 32>}, {pipeline_mode = #tpu.pipeline_mode<synchronous>, transform_indices = @transform_9, window_bounds = array<i64: 96, 64>}, {pipeline_mode = #tpu.pipeline_mode<synchronous>, transform_indices = @transform_10, window_bounds = array<i64: 1, 64>}, {pipeline_mode = #tpu.pipeline_mode<synchronous>, transform_indices = @transform_11, window_bounds = array<i64: 64, 32>}, {pipeline_mode = #tpu.pipeline_mode<synchronous>, transform_indices = @transform_12, window_bounds = array<i64: 1, 32>}, {pipeline_mode = #tpu.pipeline_mode<synchronous>, transform_indices = @transform_13, window_bounds = array<i64: 1, 32>}, {pipeline_mode = #tpu.pipeline_mode<synchronous>, transform_indices = @transform_14, window_bounds = array<i64: 1, 32>}, {transform_indices = @transform_15, window_bounds = array<i64: 1, 16, 32>}]} {
    %c0 = arith.constant 0 : index
    %c0_0 = arith.constant 0 : index
    %c0_1 = arith.constant 0 : index
    %0 = vector.load %arg1[%c0, %c0_0, %c0_1] : memref<1x16x32xf32, #tpu.memory_space<vmem>>, vector<1x16x32xf32>
    %1 = vector.shape_cast %0 : vector<1x16x32xf32> to vector<16x32xf32>
    %c0_2 = arith.constant 0 : index
    %c0_3 = arith.constant 0 : index
    %c0_4 = arith.constant 0 : index
    %2 = vector.load %arg2[%c0_2, %c0_3, %c0_4] : memref<1x1x16xf32, #tpu.memory_space<vmem>>, vector<1x1x16xf32>
    %3 = vector.shape_cast %2 : vector<1x1x16xf32> to vector<1x16xf32>
    %c0_5 = arith.constant 0 : index
    %c0_6 = arith.constant 0 : index
    %c0_7 = arith.constant 0 : index
    %4 = vector.load %arg3[%c0_5, %c0_6, %c0_7] : memref<1x16x1xf32, #tpu.memory_space<vmem>>, vector<1x16x1xf32>
    %5 = vector.shape_cast %4 : vector<1x16x1xf32> to vector<16x1xf32>
    %c0_8 = arith.constant 0 : index
    %c0_9 = arith.constant 0 : index
    %6 = vector.load %arg4[%c0_8, %c0_9] : memref<32x96xf32, #tpu.memory_space<vmem>>, vector<32x96xf32>
    %7 = arith.truncf %1 : vector<16x32xf32> to vector<16x32xbf16>
    %8 = arith.truncf %6 : vector<32x96xf32> to vector<32x96xbf16>
    %cst = arith.constant dense<0.000000e+00> : vector<16x96xf32>
    %9 = tpu.matmul %7, %8, %cst {dimension_numbers = #tpu.dot_dimension_numbers<[1], [0], [0], [1], [0, 0, 1, 1], [], []>} : vector<16x32xbf16>, vector<32x96xbf16>, vector<16x96xf32> -> vector<16x96xf32>
    %c0_10 = arith.constant 0 : index
    %c0_11 = arith.constant 0 : index
    %10 = vector.load %arg5[%c0_10, %c0_11] : memref<1x96xf32, #tpu.memory_space<vmem>>, vector<1x96xf32>
    %11 = vector.broadcast %10 : vector<1x96xf32> to vector<16x96xf32>
    %12 = arith.addf %9, %11 : vector<16x96xf32>
    %13 = vector.extract_strided_slice %12 {offsets = [0, 0], sizes = [16, 16], strides = [1, 1]} : vector<16x96xf32> to vector<16x16xf32>
    %14 = vector.extract_strided_slice %12 {offsets = [0, 32], sizes = [16, 16], strides = [1, 1]} : vector<16x96xf32> to vector<16x16xf32>
    %15 = vector.extract_strided_slice %12 {offsets = [0, 64], sizes = [16, 16], strides = [1, 1]} : vector<16x96xf32> to vector<16x16xf32>
    %16 = arith.truncf %13 : vector<16x16xf32> to vector<16x16xbf16>
    %17 = arith.truncf %14 : vector<16x16xf32> to vector<16x16xbf16>
    %cst_12 = arith.constant dense<0.000000e+00> : vector<16x16xf32>
    %18 = tpu.matmul %16, %17, %cst_12 {dimension_numbers = #tpu.dot_dimension_numbers<[1], [1], [0], [0], [0, 0, 1, 0], [], []>} : vector<16x16xbf16>, vector<16x16xbf16>, vector<16x16xf32> -> vector<16x16xf32>
    %cst_13 = arith.constant 2.500000e-01 : f32
    %19 = vector.broadcast %cst_13 : f32 to vector<16x16xf32>
    %20 = arith.mulf %18, %19 : vector<16x16xf32>
    %21 = vector.broadcast %3 : vector<1x16xf32> to vector<16x16xf32>
    %22 = arith.addf %20, %21 : vector<16x16xf32>
    %cst_14 = arith.constant dense<0xFF800000> : vector<16xf32>
    %23 = vector.multi_reduction <maximumf>, %22, %cst_14 [1] : vector<16x16xf32> to vector<16xf32>
    %24 = vector.shape_cast %23 : vector<16xf32> to vector<16x1xf32>
    %25 = vector.broadcast %24 : vector<16x1xf32> to vector<16x16xf32>
    %26 = arith.subf %22, %25 : vector<16x16xf32>
    %27 = math.exp %26 : vector<16x16xf32>
    %cst_15 = arith.constant dense<0.000000e+00> : vector<16xf32>
    %28 = vector.multi_reduction <add>, %27, %cst_15 [1] : vector<16x16xf32> to vector<16xf32>
    %29 = vector.shape_cast %28 : vector<16xf32> to vector<16x1xf32>
    %30 = tpu.reciprocal %29 {approx = true} : vector<16x1xf32> -> vector<16x1xf32>
    %31 = vector.broadcast %30 : vector<16x1xf32> to vector<16x16xf32>
    %32 = arith.mulf %27, %31 : vector<16x16xf32>
    %33 = arith.truncf %32 : vector<16x16xf32> to vector<16x16xbf16>
    %34 = arith.truncf %15 : vector<16x16xf32> to vector<16x16xbf16>
    %cst_16 = arith.constant dense<0.000000e+00> : vector<16x16xf32>
    %35 = tpu.matmul %33, %34, %cst_16 {dimension_numbers = #tpu.dot_dimension_numbers<[1], [0], [0], [1], [0, 0, 1, 1], [], []>} : vector<16x16xbf16>, vector<16x16xbf16>, vector<16x16xf32> -> vector<16x16xf32>
    %36 = vector.extract_strided_slice %12 {offsets = [0, 16], sizes = [16, 16], strides = [1, 1]} : vector<16x96xf32> to vector<16x16xf32>
    %37 = vector.extract_strided_slice %12 {offsets = [0, 48], sizes = [16, 16], strides = [1, 1]} : vector<16x96xf32> to vector<16x16xf32>
    %38 = vector.extract_strided_slice %12 {offsets = [0, 80], sizes = [16, 16], strides = [1, 1]} : vector<16x96xf32> to vector<16x16xf32>
    %39 = arith.truncf %36 : vector<16x16xf32> to vector<16x16xbf16>
    %40 = arith.truncf %37 : vector<16x16xf32> to vector<16x16xbf16>
    %cst_17 = arith.constant dense<0.000000e+00> : vector<16x16xf32>
    %41 = tpu.matmul %39, %40, %cst_17 {dimension_numbers = #tpu.dot_dimension_numbers<[1], [1], [0], [0], [0, 0, 1, 0], [], []>} : vector<16x16xbf16>, vector<16x16xbf16>, vector<16x16xf32> -> vector<16x16xf32>
    %cst_18 = arith.constant 2.500000e-01 : f32
    %42 = vector.broadcast %cst_18 : f32 to vector<16x16xf32>
    %43 = arith.mulf %41, %42 : vector<16x16xf32>
    %44 = vector.broadcast %3 : vector<1x16xf32> to vector<16x16xf32>
    %45 = arith.addf %43, %44 : vector<16x16xf32>
    %cst_19 = arith.constant dense<0xFF800000> : vector<16xf32>
    %46 = vector.multi_reduction <maximumf>, %45, %cst_19 [1] : vector<16x16xf32> to vector<16xf32>
    %47 = vector.shape_cast %46 : vector<16xf32> to vector<16x1xf32>
    %48 = vector.broadcast %47 : vector<16x1xf32> to vector<16x16xf32>
    %49 = arith.subf %45, %48 : vector<16x16xf32>
    %50 = math.exp %49 : vector<16x16xf32>
    %cst_20 = arith.constant dense<0.000000e+00> : vector<16xf32>
    %51 = vector.multi_reduction <add>, %50, %cst_20 [1] : vector<16x16xf32> to vector<16xf32>
    %52 = vector.shape_cast %51 : vector<16xf32> to vector<16x1xf32>
    %53 = tpu.reciprocal %52 {approx = true} : vector<16x1xf32> -> vector<16x1xf32>
    %54 = vector.broadcast %53 : vector<16x1xf32> to vector<16x16xf32>
    %55 = arith.mulf %50, %54 : vector<16x16xf32>
    %56 = arith.truncf %55 : vector<16x16xf32> to vector<16x16xbf16>
    %57 = arith.truncf %38 : vector<16x16xf32> to vector<16x16xbf16>
    %cst_21 = arith.constant dense<0.000000e+00> : vector<16x16xf32>
    %58 = tpu.matmul %56, %57, %cst_21 {dimension_numbers = #tpu.dot_dimension_numbers<[1], [0], [0], [1], [0, 0, 1, 1], [], []>} : vector<16x16xbf16>, vector<16x16xbf16>, vector<16x16xf32> -> vector<16x16xf32>
    %59 = tpu.concatenate %35, %58 in 1 : vector<16x16xf32>, vector<16x16xf32> -> vector<16x32xf32>
    %c0_22 = arith.constant 0 : index
    %c0_23 = arith.constant 0 : index
    %60 = vector.load %arg6[%c0_22, %c0_23] : memref<32x32xf32, #tpu.memory_space<vmem>>, vector<32x32xf32>
    %61 = arith.truncf %59 : vector<16x32xf32> to vector<16x32xbf16>
    %62 = arith.truncf %60 : vector<32x32xf32> to vector<32x32xbf16>
    %cst_24 = arith.constant dense<0.000000e+00> : vector<16x32xf32>
    %63 = tpu.matmul %61, %62, %cst_24 {dimension_numbers = #tpu.dot_dimension_numbers<[1], [0], [0], [1], [0, 0, 1, 1], [], []>} : vector<16x32xbf16>, vector<32x32xbf16>, vector<16x32xf32> -> vector<16x32xf32>
    %c0_25 = arith.constant 0 : index
    %c0_26 = arith.constant 0 : index
    %64 = vector.load %arg7[%c0_25, %c0_26] : memref<1x32xf32, #tpu.memory_space<vmem>>, vector<1x32xf32>
    %65 = vector.broadcast %64 : vector<1x32xf32> to vector<16x32xf32>
    %66 = arith.addf %63, %65 : vector<16x32xf32>
    %67 = arith.addf %66, %1 : vector<16x32xf32>
    %c0_27 = arith.constant 0 : index
    %c0_28 = arith.constant 0 : index
    %68 = vector.load %arg8[%c0_27, %c0_28] : memref<1x32xf32, #tpu.memory_space<vmem>>, vector<1x32xf32>
    %c0_29 = arith.constant 0 : index
    %c0_30 = arith.constant 0 : index
    %69 = vector.load %arg9[%c0_29, %c0_30] : memref<1x32xf32, #tpu.memory_space<vmem>>, vector<1x32xf32>
    %cst_31 = arith.constant dense<0.000000e+00> : vector<16xf32>
    %70 = vector.multi_reduction <add>, %67, %cst_31 [1] : vector<16x32xf32> to vector<16xf32>
    %71 = vector.shape_cast %70 : vector<16xf32> to vector<16x1xf32>
    %cst_32 = arith.constant 3.200000e+01 : f32
    %72 = vector.broadcast %cst_32 : f32 to vector<16x1xf32>
    %73 = arith.divf %71, %72 : vector<16x1xf32>
    %74 = vector.broadcast %73 : vector<16x1xf32> to vector<16x32xf32>
    %75 = arith.subf %67, %74 : vector<16x32xf32>
    %76 = arith.mulf %75, %75 : vector<16x32xf32>
    %cst_33 = arith.constant dense<0.000000e+00> : vector<16xf32>
    %77 = vector.multi_reduction <add>, %76, %cst_33 [1] : vector<16x32xf32> to vector<16xf32>
    %78 = vector.shape_cast %77 : vector<16xf32> to vector<16x1xf32>
    %cst_34 = arith.constant 3.200000e+01 : f32
    %79 = vector.broadcast %cst_34 : f32 to vector<16x1xf32>
    %80 = arith.divf %78, %79 : vector<16x1xf32>
    %81 = vector.broadcast %73 : vector<16x1xf32> to vector<16x32xf32>
    %82 = arith.subf %67, %81 : vector<16x32xf32>
    %cst_35 = arith.constant 9.99999974E-6 : f32
    %83 = vector.broadcast %cst_35 : f32 to vector<16x1xf32>
    %84 = arith.addf %80, %83 : vector<16x1xf32>
    %85 = math.rsqrt %84 : vector<16x1xf32>
    %86 = vector.broadcast %85 : vector<16x1xf32> to vector<16x32xf32>
    %87 = arith.mulf %82, %86 : vector<16x32xf32>
    %88 = vector.broadcast %68 : vector<1x32xf32> to vector<16x32xf32>
    %89 = arith.mulf %87, %88 : vector<16x32xf32>
    %90 = vector.broadcast %69 : vector<1x32xf32> to vector<16x32xf32>
    %91 = arith.addf %89, %90 : vector<16x32xf32>
    %92 = vector.broadcast %5 : vector<16x1xf32> to vector<16x32xf32>
    %93 = arith.mulf %91, %92 : vector<16x32xf32>
    %c0_36 = arith.constant 0 : index
    %c0_37 = arith.constant 0 : index
    %94 = vector.load %arg10[%c0_36, %c0_37] : memref<96x64xf32, #tpu.memory_space<vmem>>, vector<96x64xf32>
    %c0_38 = arith.constant 0 : index
    %c0_39 = arith.constant 0 : index
    %95 = vector.load %arg11[%c0_38, %c0_39] : memref<1x64xf32, #tpu.memory_space<vmem>>, vector<1x64xf32>
    %cst_40 = arith.constant 0.000000e+00 : f32
    %96 = vector.broadcast %cst_40 : f32 to vector<1x32xf32>
    %97 = vector.extract_strided_slice %93 {offsets = [0, 0], sizes = [15, 32], strides = [1, 1]} : vector<16x32xf32> to vector<15x32xf32>
    %98 = tpu.concatenate %96, %97 in 0 : vector<1x32xf32>, vector<15x32xf32> -> vector<16x32xf32>
    %99 = vector.extract_strided_slice %94 {offsets = [0, 0], sizes = [32, 64], strides = [1, 1]} : vector<96x64xf32> to vector<32x64xf32>
    %100 = arith.truncf %98 : vector<16x32xf32> to vector<16x32xbf16>
    %101 = arith.truncf %99 : vector<32x64xf32> to vector<32x64xbf16>
    %cst_41 = arith.constant dense<0.000000e+00> : vector<16x64xf32>
    %102 = tpu.matmul %100, %101, %cst_41 {dimension_numbers = #tpu.dot_dimension_numbers<[1], [0], [0], [1], [0, 0, 1, 1], [], []>} : vector<16x32xbf16>, vector<32x64xbf16>, vector<16x64xf32> -> vector<16x64xf32>
    %103 = vector.extract_strided_slice %94 {offsets = [32, 0], sizes = [32, 64], strides = [1, 1]} : vector<96x64xf32> to vector<32x64xf32>
    %104 = arith.truncf %93 : vector<16x32xf32> to vector<16x32xbf16>
    %105 = arith.truncf %103 : vector<32x64xf32> to vector<32x64xbf16>
    %cst_42 = arith.constant dense<0.000000e+00> : vector<16x64xf32>
    %106 = tpu.matmul %104, %105, %cst_42 {dimension_numbers = #tpu.dot_dimension_numbers<[1], [0], [0], [1], [0, 0, 1, 1], [], []>} : vector<16x32xbf16>, vector<32x64xbf16>, vector<16x64xf32> -> vector<16x64xf32>
    %107 = arith.addf %102, %106 : vector<16x64xf32>
    %108 = vector.extract_strided_slice %93 {offsets = [1, 0], sizes = [15, 32], strides = [1, 1]} : vector<16x32xf32> to vector<15x32xf32>
    %cst_43 = arith.constant 0.000000e+00 : f32
    %109 = vector.broadcast %cst_43 : f32 to vector<1x32xf32>
    %110 = tpu.concatenate %108, %109 in 0 : vector<15x32xf32>, vector<1x32xf32> -> vector<16x32xf32>
    %111 = vector.extract_strided_slice %94 {offsets = [64, 0], sizes = [32, 64], strides = [1, 1]} : vector<96x64xf32> to vector<32x64xf32>
    %112 = arith.truncf %110 : vector<16x32xf32> to vector<16x32xbf16>
    %113 = arith.truncf %111 : vector<32x64xf32> to vector<32x64xbf16>
    %cst_44 = arith.constant dense<0.000000e+00> : vector<16x64xf32>
    %114 = tpu.matmul %112, %113, %cst_44 {dimension_numbers = #tpu.dot_dimension_numbers<[1], [0], [0], [1], [0, 0, 1, 1], [], []>} : vector<16x32xbf16>, vector<32x64xbf16>, vector<16x64xf32> -> vector<16x64xf32>
    %115 = arith.addf %107, %114 : vector<16x64xf32>
    %116 = vector.broadcast %95 : vector<1x64xf32> to vector<16x64xf32>
    %117 = arith.addf %115, %116 : vector<16x64xf32>
    %cst_45 = arith.constant 0.000000e+00 : f32
    %118 = vector.broadcast %cst_45 : f32 to vector<16x64xf32>
    %119 = arith.maximumf %117, %118 : vector<16x64xf32>
    %c0_46 = arith.constant 0 : index
    %c0_47 = arith.constant 0 : index
    %120 = vector.load %arg12[%c0_46, %c0_47] : memref<64x32xf32, #tpu.memory_space<vmem>>, vector<64x32xf32>
    %c0_48 = arith.constant 0 : index
    %c0_49 = arith.constant 0 : index
    %121 = vector.load %arg13[%c0_48, %c0_49] : memref<1x32xf32, #tpu.memory_space<vmem>>, vector<1x32xf32>
    %122 = arith.truncf %119 : vector<16x64xf32> to vector<16x64xbf16>
    %123 = arith.truncf %120 : vector<64x32xf32> to vector<64x32xbf16>
    %cst_50 = arith.constant dense<0.000000e+00> : vector<16x32xf32>
    %124 = tpu.matmul %122, %123, %cst_50 {dimension_numbers = #tpu.dot_dimension_numbers<[1], [0], [0], [1], [0, 0, 1, 1], [], []>} : vector<16x64xbf16>, vector<64x32xbf16>, vector<16x32xf32> -> vector<16x32xf32>
    %125 = vector.broadcast %121 : vector<1x32xf32> to vector<16x32xf32>
    %126 = arith.addf %124, %125 : vector<16x32xf32>
    %127 = arith.addf %126, %93 : vector<16x32xf32>
    %c0_51 = arith.constant 0 : index
    %c0_52 = arith.constant 0 : index
    %128 = vector.load %arg14[%c0_51, %c0_52] : memref<1x32xf32, #tpu.memory_space<vmem>>, vector<1x32xf32>
    %c0_53 = arith.constant 0 : index
    %c0_54 = arith.constant 0 : index
    %129 = vector.load %arg15[%c0_53, %c0_54] : memref<1x32xf32, #tpu.memory_space<vmem>>, vector<1x32xf32>
    %cst_55 = arith.constant dense<0.000000e+00> : vector<16xf32>
    %130 = vector.multi_reduction <add>, %127, %cst_55 [1] : vector<16x32xf32> to vector<16xf32>
    %131 = vector.shape_cast %130 : vector<16xf32> to vector<16x1xf32>
    %cst_56 = arith.constant 3.200000e+01 : f32
    %132 = vector.broadcast %cst_56 : f32 to vector<16x1xf32>
    %133 = arith.divf %131, %132 : vector<16x1xf32>
    %134 = vector.broadcast %133 : vector<16x1xf32> to vector<16x32xf32>
    %135 = arith.subf %127, %134 : vector<16x32xf32>
    %136 = arith.mulf %135, %135 : vector<16x32xf32>
    %cst_57 = arith.constant dense<0.000000e+00> : vector<16xf32>
    %137 = vector.multi_reduction <add>, %136, %cst_57 [1] : vector<16x32xf32> to vector<16xf32>
    %138 = vector.shape_cast %137 : vector<16xf32> to vector<16x1xf32>
    %cst_58 = arith.constant 3.200000e+01 : f32
    %139 = vector.broadcast %cst_58 : f32 to vector<16x1xf32>
    %140 = arith.divf %138, %139 : vector<16x1xf32>
    %141 = vector.broadcast %133 : vector<16x1xf32> to vector<16x32xf32>
    %142 = arith.subf %127, %141 : vector<16x32xf32>
    %cst_59 = arith.constant 9.99999974E-6 : f32
    %143 = vector.broadcast %cst_59 : f32 to vector<16x1xf32>
    %144 = arith.addf %140, %143 : vector<16x1xf32>
    %145 = math.rsqrt %144 : vector<16x1xf32>
    %146 = vector.broadcast %145 : vector<16x1xf32> to vector<16x32xf32>
    %147 = arith.mulf %142, %146 : vector<16x32xf32>
    %148 = vector.broadcast %128 : vector<1x32xf32> to vector<16x32xf32>
    %149 = arith.mulf %147, %148 : vector<16x32xf32>
    %150 = vector.broadcast %129 : vector<1x32xf32> to vector<16x32xf32>
    %151 = arith.addf %149, %150 : vector<16x32xf32>
    %152 = vector.broadcast %5 : vector<16x1xf32> to vector<16x32xf32>
    %153 = arith.mulf %151, %152 : vector<16x32xf32>
    %c0_60 = arith.constant 0 : index
    %c0_61 = arith.constant 0 : index
    %c0_62 = arith.constant 0 : index
    %154 = vector.load %arg16[%c0_60, %c0_61, %c0_62] : memref<1x16x32xf32, #tpu.memory_space<vmem>>, vector<1x16x32xf32>
    %155 = vector.shape_cast %154 : vector<1x16x32xf32> to vector<16x32xf32>
    %156 = vector.shape_cast %153 : vector<16x32xf32> to vector<1x16x32xf32>
    tpu.vector_store %arg16[%c0_60, %c0_61, %c0_62], %156 {strides = array<i32>} : memref<1x16x32xf32, #tpu.memory_space<vmem>>, vector<1x16x32xf32>,
    return
  }
  func.func @transform_0(%arg0: i32) -> (i32, i32, i32) {
    %c0_i32 = arith.constant 0 : i32
    %c0_i32_0 = arith.constant 0 : i32
    %c0_i32_1 = arith.constant 0 : i32
    return %arg0, %c0_i32, %c0_i32_0 : i32, i32, i32
  }
  func.func @transform_1(%arg0: i32) -> (i32, i32, i32) {
    %c0_i32 = arith.constant 0 : i32
    %c0_i32_0 = arith.constant 0 : i32
    %c0_i32_1 = arith.constant 0 : i32
    return %arg0, %c0_i32, %c0_i32_0 : i32, i32, i32
  }
  func.func @transform_2(%arg0: i32) -> (i32, i32, i32) {
    %c0_i32 = arith.constant 0 : i32
    %c0_i32_0 = arith.constant 0 : i32
    %c0_i32_1 = arith.constant 0 : i32
    return %arg0, %c0_i32, %c0_i32_0 : i32, i32, i32
  }
  func.func @transform_3(%arg0: i32) -> (i32, i32) {
    %c0_i32 = arith.constant 0 : i32
    %c0_i32_0 = arith.constant 0 : i32
    %c0_i32_1 = arith.constant 0 : i32
    return %c0_i32, %c0_i32_0 : i32, i32
  }
  func.func @transform_4(%arg0: i32) -> (i32, i32) {
    %c0_i32 = arith.constant 0 : i32
    %c0_i32_0 = arith.constant 0 : i32
    %c0_i32_1 = arith.constant 0 : i32
    return %c0_i32, %c0_i32_0 : i32, i32
  }
  func.func @transform_5(%arg0: i32) -> (i32, i32) {
    %c0_i32 = arith.constant 0 : i32
    %c0_i32_0 = arith.constant 0 : i32
    %c0_i32_1 = arith.constant 0 : i32
    return %c0_i32, %c0_i32_0 : i32, i32
  }
  func.func @transform_6(%arg0: i32) -> (i32, i32) {
    %c0_i32 = arith.constant 0 : i32
    %c0_i32_0 = arith.constant 0 : i32
    %c0_i32_1 = arith.constant 0 : i32
    return %c0_i32, %c0_i32_0 : i32, i32
  }
  func.func @transform_7(%arg0: i32) -> (i32, i32) {
    %c0_i32 = arith.constant 0 : i32
    %c0_i32_0 = arith.constant 0 : i32
    %c0_i32_1 = arith.constant 0 : i32
    return %c0_i32, %c0_i32_0 : i32, i32
  }
  func.func @transform_8(%arg0: i32) -> (i32, i32) {
    %c0_i32 = arith.constant 0 : i32
    %c0_i32_0 = arith.constant 0 : i32
    %c0_i32_1 = arith.constant 0 : i32
    return %c0_i32, %c0_i32_0 : i32, i32
  }
  func.func @transform_9(%arg0: i32) -> (i32, i32) {
    %c0_i32 = arith.constant 0 : i32
    %c0_i32_0 = arith.constant 0 : i32
    %c0_i32_1 = arith.constant 0 : i32
    return %c0_i32, %c0_i32_0 : i32, i32
  }
  func.func @transform_10(%arg0: i32) -> (i32, i32) {
    %c0_i32 = arith.constant 0 : i32
    %c0_i32_0 = arith.constant 0 : i32
    %c0_i32_1 = arith.constant 0 : i32
    return %c0_i32, %c0_i32_0 : i32, i32
  }
  func.func @transform_11(%arg0: i32) -> (i32, i32) {
    %c0_i32 = arith.constant 0 : i32
    %c0_i32_0 = arith.constant 0 : i32
    %c0_i32_1 = arith.constant 0 : i32
    return %c0_i32, %c0_i32_0 : i32, i32
  }
  func.func @transform_12(%arg0: i32) -> (i32, i32) {
    %c0_i32 = arith.constant 0 : i32
    %c0_i32_0 = arith.constant 0 : i32
    %c0_i32_1 = arith.constant 0 : i32
    return %c0_i32, %c0_i32_0 : i32, i32
  }
  func.func @transform_13(%arg0: i32) -> (i32, i32) {
    %c0_i32 = arith.constant 0 : i32
    %c0_i32_0 = arith.constant 0 : i32
    %c0_i32_1 = arith.constant 0 : i32
    return %c0_i32, %c0_i32_0 : i32, i32
  }
  func.func @transform_14(%arg0: i32) -> (i32, i32) {
    %c0_i32 = arith.constant 0 : i32
    %c0_i32_0 = arith.constant 0 : i32
    %c0_i32_1 = arith.constant 0 : i32
    return %c0_i32, %c0_i32_0 : i32, i32
  }
  func.func @transform_15(%arg0: i32) -> (i32, i32, i32) {
    %c0_i32 = arith.constant 0 : i32
    %c0_i32_0 = arith.constant 0 : i32
    %c0_i32_1 = arith.constant 0 : i32
    return %arg0, %c0_i32, %c0_i32_0 : i32, i32, i32
  }
}

module attributes {stable_mosaic.version = 11 : i64} {
  func.func @_fft_block_kernel(%arg0: i32, %arg1: memref<1x32x32xf32, #tpu.memory_space<vmem>>, %arg2: memref<1x1x32xf32, #tpu.memory_space<vmem>>, %arg3: memref<1x32x1xf32, #tpu.memory_space<vmem>>, %arg4: memref<32x96xf32, #tpu.memory_space<vmem>>, %arg5: memref<1x96xf32, #tpu.memory_space<vmem>>, %arg6: memref<32x32xf32, #tpu.memory_space<vmem>>, %arg7: memref<1x32xf32, #tpu.memory_space<vmem>>, %arg8: memref<1x32xf32, #tpu.memory_space<vmem>>, %arg9: memref<1x32xf32, #tpu.memory_space<vmem>>, %arg10: memref<96x64xf32, #tpu.memory_space<vmem>>, %arg11: memref<1x64xf32, #tpu.memory_space<vmem>>, %arg12: memref<64x32xf32, #tpu.memory_space<vmem>>, %arg13: memref<1x32xf32, #tpu.memory_space<vmem>>, %arg14: memref<1x32xf32, #tpu.memory_space<vmem>>, %arg15: memref<1x32xf32, #tpu.memory_space<vmem>>, %arg16: memref<1x32x32xf32, #tpu.memory_space<vmem>>) attributes {dimension_semantics = [#tpu.dimension_semantics<parallel>], iteration_bounds = array<i64: 2>, scalar_prefetch = 0 : i64, scratch_operands = 0 : i64, tpu.core_type = #tpu.core_type<tc>, window_params = [{transform_indices = @transform_0, window_bounds = array<i64: 1, 32, 32>}, {transform_indices = @transform_1, window_bounds = array<i64: 1, 1, 32>}, {transform_indices = @transform_2, window_bounds = array<i64: 1, 32, 1>}, {pipeline_mode = #tpu.pipeline_mode<synchronous>, transform_indices = @transform_3, window_bounds = array<i64: 32, 96>}, {pipeline_mode = #tpu.pipeline_mode<synchronous>, transform_indices = @transform_4, window_bounds = array<i64: 1, 96>}, {pipeline_mode = #tpu.pipeline_mode<synchronous>, transform_indices = @transform_5, window_bounds = array<i64: 32, 32>}, {pipeline_mode = #tpu.pipeline_mode<synchronous>, transform_indices = @transform_6, window_bounds = array<i64: 1, 32>}, {pipeline_mode = #tpu.pipeline_mode<synchronous>, transform_indices = @transform_7, window_bounds = array<i64: 1, 32>}, {pipeline_mode = #tpu.pipeline_mode<synchronous>, transform_indices = @transform_8, window_bounds = array<i64: 1, 32>}, {pipeline_mode = #tpu.pipeline_mode<synchronous>, transform_indices = @transform_9, window_bounds = array<i64: 96, 64>}, {pipeline_mode = #tpu.pipeline_mode<synchronous>, transform_indices = @transform_10, window_bounds = array<i64: 1, 64>}, {pipeline_mode = #tpu.pipeline_mode<synchronous>, transform_indices = @transform_11, window_bounds = array<i64: 64, 32>}, {pipeline_mode = #tpu.pipeline_mode<synchronous>, transform_indices = @transform_12, window_bounds = array<i64: 1, 32>}, {pipeline_mode = #tpu.pipeline_mode<synchronous>, transform_indices = @transform_13, window_bounds = array<i64: 1, 32>}, {pipeline_mode = #tpu.pipeline_mode<synchronous>, transform_indices = @transform_14, window_bounds = array<i64: 1, 32>}, {transform_indices = @transform_15, window_bounds = array<i64: 1, 32, 32>}]} {
    %c0 = arith.constant 0 : index
    %c0_0 = arith.constant 0 : index
    %c0_1 = arith.constant 0 : index
    %0 = vector.load %arg1[%c0, %c0_0, %c0_1] : memref<1x32x32xf32, #tpu.memory_space<vmem>>, vector<1x32x32xf32>
    %1 = vector.shape_cast %0 : vector<1x32x32xf32> to vector<32x32xf32>
    %c0_2 = arith.constant 0 : index
    %c0_3 = arith.constant 0 : index
    %c0_4 = arith.constant 0 : index
    %2 = vector.load %arg2[%c0_2, %c0_3, %c0_4] : memref<1x1x32xf32, #tpu.memory_space<vmem>>, vector<1x1x32xf32>
    %3 = vector.shape_cast %2 : vector<1x1x32xf32> to vector<1x32xf32>
    %c0_5 = arith.constant 0 : index
    %c0_6 = arith.constant 0 : index
    %c0_7 = arith.constant 0 : index
    %4 = vector.load %arg3[%c0_5, %c0_6, %c0_7] : memref<1x32x1xf32, #tpu.memory_space<vmem>>, vector<1x32x1xf32>
    %5 = vector.shape_cast %4 : vector<1x32x1xf32> to vector<32x1xf32>
    %c0_8 = arith.constant 0 : index
    %c0_9 = arith.constant 0 : index
    %6 = vector.load %arg4[%c0_8, %c0_9] : memref<32x96xf32, #tpu.memory_space<vmem>>, vector<32x96xf32>
    %7 = arith.truncf %1 : vector<32x32xf32> to vector<32x32xbf16>
    %8 = arith.truncf %6 : vector<32x96xf32> to vector<32x96xbf16>
    %cst = arith.constant dense<0.000000e+00> : vector<32x96xf32>
    %9 = tpu.matmul %7, %8, %cst {dimension_numbers = #tpu.dot_dimension_numbers<[1], [0], [0], [1], [0, 0, 1, 1], [], []>} : vector<32x32xbf16>, vector<32x96xbf16>, vector<32x96xf32> -> vector<32x96xf32>
    %c0_10 = arith.constant 0 : index
    %c0_11 = arith.constant 0 : index
    %10 = vector.load %arg5[%c0_10, %c0_11] : memref<1x96xf32, #tpu.memory_space<vmem>>, vector<1x96xf32>
    %11 = vector.broadcast %10 : vector<1x96xf32> to vector<32x96xf32>
    %12 = arith.addf %9, %11 : vector<32x96xf32>
    %13 = vector.extract_strided_slice %12 {offsets = [0, 0], sizes = [32, 16], strides = [1, 1]} : vector<32x96xf32> to vector<32x16xf32>
    %14 = vector.extract_strided_slice %12 {offsets = [0, 32], sizes = [32, 16], strides = [1, 1]} : vector<32x96xf32> to vector<32x16xf32>
    %15 = vector.extract_strided_slice %12 {offsets = [0, 64], sizes = [32, 16], strides = [1, 1]} : vector<32x96xf32> to vector<32x16xf32>
    %16 = arith.truncf %13 : vector<32x16xf32> to vector<32x16xbf16>
    %17 = arith.truncf %14 : vector<32x16xf32> to vector<32x16xbf16>
    %cst_12 = arith.constant dense<0.000000e+00> : vector<32x32xf32>
    %18 = tpu.matmul %16, %17, %cst_12 {dimension_numbers = #tpu.dot_dimension_numbers<[1], [1], [0], [0], [0, 0, 1, 0], [], []>} : vector<32x16xbf16>, vector<32x16xbf16>, vector<32x32xf32> -> vector<32x32xf32>
    %cst_13 = arith.constant 2.500000e-01 : f32
    %19 = vector.broadcast %cst_13 : f32 to vector<32x32xf32>
    %20 = arith.mulf %18, %19 : vector<32x32xf32>
    %21 = vector.broadcast %3 : vector<1x32xf32> to vector<32x32xf32>
    %22 = arith.addf %20, %21 : vector<32x32xf32>
    %cst_14 = arith.constant dense<0xFF800000> : vector<32xf32>
    %23 = vector.multi_reduction <maximumf>, %22, %cst_14 [1] : vector<32x32xf32> to vector<32xf32>
    %24 = vector.shape_cast %23 : vector<32xf32> to vector<32x1xf32>
    %25 = vector.broadcast %24 : vector<32x1xf32> to vector<32x32xf32>
    %26 = arith.subf %22, %25 : vector<32x32xf32>
    %27 = math.exp %26 : vector<32x32xf32>
    %cst_15 = arith.constant dense<0.000000e+00> : vector<32xf32>
    %28 = vector.multi_reduction <add>, %27, %cst_15 [1] : vector<32x32xf32> to vector<32xf32>
    %29 = vector.shape_cast %28 : vector<32xf32> to vector<32x1xf32>
    %30 = tpu.reciprocal %29 {approx = true} : vector<32x1xf32> -> vector<32x1xf32>
    %31 = vector.broadcast %30 : vector<32x1xf32> to vector<32x32xf32>
    %32 = arith.mulf %27, %31 : vector<32x32xf32>
    %33 = arith.truncf %32 : vector<32x32xf32> to vector<32x32xbf16>
    %34 = arith.truncf %15 : vector<32x16xf32> to vector<32x16xbf16>
    %cst_16 = arith.constant dense<0.000000e+00> : vector<32x16xf32>
    %35 = tpu.matmul %33, %34, %cst_16 {dimension_numbers = #tpu.dot_dimension_numbers<[1], [0], [0], [1], [0, 0, 1, 1], [], []>} : vector<32x32xbf16>, vector<32x16xbf16>, vector<32x16xf32> -> vector<32x16xf32>
    %36 = vector.extract_strided_slice %12 {offsets = [0, 16], sizes = [32, 16], strides = [1, 1]} : vector<32x96xf32> to vector<32x16xf32>
    %37 = vector.extract_strided_slice %12 {offsets = [0, 48], sizes = [32, 16], strides = [1, 1]} : vector<32x96xf32> to vector<32x16xf32>
    %38 = vector.extract_strided_slice %12 {offsets = [0, 80], sizes = [32, 16], strides = [1, 1]} : vector<32x96xf32> to vector<32x16xf32>
    %39 = arith.truncf %36 : vector<32x16xf32> to vector<32x16xbf16>
    %40 = arith.truncf %37 : vector<32x16xf32> to vector<32x16xbf16>
    %cst_17 = arith.constant dense<0.000000e+00> : vector<32x32xf32>
    %41 = tpu.matmul %39, %40, %cst_17 {dimension_numbers = #tpu.dot_dimension_numbers<[1], [1], [0], [0], [0, 0, 1, 0], [], []>} : vector<32x16xbf16>, vector<32x16xbf16>, vector<32x32xf32> -> vector<32x32xf32>
    %cst_18 = arith.constant 2.500000e-01 : f32
    %42 = vector.broadcast %cst_18 : f32 to vector<32x32xf32>
    %43 = arith.mulf %41, %42 : vector<32x32xf32>
    %44 = vector.broadcast %3 : vector<1x32xf32> to vector<32x32xf32>
    %45 = arith.addf %43, %44 : vector<32x32xf32>
    %cst_19 = arith.constant dense<0xFF800000> : vector<32xf32>
    %46 = vector.multi_reduction <maximumf>, %45, %cst_19 [1] : vector<32x32xf32> to vector<32xf32>
    %47 = vector.shape_cast %46 : vector<32xf32> to vector<32x1xf32>
    %48 = vector.broadcast %47 : vector<32x1xf32> to vector<32x32xf32>
    %49 = arith.subf %45, %48 : vector<32x32xf32>
    %50 = math.exp %49 : vector<32x32xf32>
    %cst_20 = arith.constant dense<0.000000e+00> : vector<32xf32>
    %51 = vector.multi_reduction <add>, %50, %cst_20 [1] : vector<32x32xf32> to vector<32xf32>
    %52 = vector.shape_cast %51 : vector<32xf32> to vector<32x1xf32>
    %53 = tpu.reciprocal %52 {approx = true} : vector<32x1xf32> -> vector<32x1xf32>
    %54 = vector.broadcast %53 : vector<32x1xf32> to vector<32x32xf32>
    %55 = arith.mulf %50, %54 : vector<32x32xf32>
    %56 = arith.truncf %55 : vector<32x32xf32> to vector<32x32xbf16>
    %57 = arith.truncf %38 : vector<32x16xf32> to vector<32x16xbf16>
    %cst_21 = arith.constant dense<0.000000e+00> : vector<32x16xf32>
    %58 = tpu.matmul %56, %57, %cst_21 {dimension_numbers = #tpu.dot_dimension_numbers<[1], [0], [0], [1], [0, 0, 1, 1], [], []>} : vector<32x32xbf16>, vector<32x16xbf16>, vector<32x16xf32> -> vector<32x16xf32>
    %59 = tpu.concatenate %35, %58 in 1 : vector<32x16xf32>, vector<32x16xf32> -> vector<32x32xf32>
    %c0_22 = arith.constant 0 : index
    %c0_23 = arith.constant 0 : index
    %60 = vector.load %arg6[%c0_22, %c0_23] : memref<32x32xf32, #tpu.memory_space<vmem>>, vector<32x32xf32>
    %61 = arith.truncf %59 : vector<32x32xf32> to vector<32x32xbf16>
    %62 = arith.truncf %60 : vector<32x32xf32> to vector<32x32xbf16>
    %cst_24 = arith.constant dense<0.000000e+00> : vector<32x32xf32>
    %63 = tpu.matmul %61, %62, %cst_24 {dimension_numbers = #tpu.dot_dimension_numbers<[1], [0], [0], [1], [0, 0, 1, 1], [], []>} : vector<32x32xbf16>, vector<32x32xbf16>, vector<32x32xf32> -> vector<32x32xf32>
    %c0_25 = arith.constant 0 : index
    %c0_26 = arith.constant 0 : index
    %64 = vector.load %arg7[%c0_25, %c0_26] : memref<1x32xf32, #tpu.memory_space<vmem>>, vector<1x32xf32>
    %65 = vector.broadcast %64 : vector<1x32xf32> to vector<32x32xf32>
    %66 = arith.addf %63, %65 : vector<32x32xf32>
    %67 = arith.addf %66, %1 : vector<32x32xf32>
    %c0_27 = arith.constant 0 : index
    %c0_28 = arith.constant 0 : index
    %68 = vector.load %arg8[%c0_27, %c0_28] : memref<1x32xf32, #tpu.memory_space<vmem>>, vector<1x32xf32>
    %c0_29 = arith.constant 0 : index
    %c0_30 = arith.constant 0 : index
    %69 = vector.load %arg9[%c0_29, %c0_30] : memref<1x32xf32, #tpu.memory_space<vmem>>, vector<1x32xf32>
    %cst_31 = arith.constant dense<0.000000e+00> : vector<32xf32>
    %70 = vector.multi_reduction <add>, %67, %cst_31 [1] : vector<32x32xf32> to vector<32xf32>
    %71 = vector.shape_cast %70 : vector<32xf32> to vector<32x1xf32>
    %cst_32 = arith.constant 3.200000e+01 : f32
    %72 = vector.broadcast %cst_32 : f32 to vector<32x1xf32>
    %73 = arith.divf %71, %72 : vector<32x1xf32>
    %74 = vector.broadcast %73 : vector<32x1xf32> to vector<32x32xf32>
    %75 = arith.subf %67, %74 : vector<32x32xf32>
    %76 = arith.mulf %75, %75 : vector<32x32xf32>
    %cst_33 = arith.constant dense<0.000000e+00> : vector<32xf32>
    %77 = vector.multi_reduction <add>, %76, %cst_33 [1] : vector<32x32xf32> to vector<32xf32>
    %78 = vector.shape_cast %77 : vector<32xf32> to vector<32x1xf32>
    %cst_34 = arith.constant 3.200000e+01 : f32
    %79 = vector.broadcast %cst_34 : f32 to vector<32x1xf32>
    %80 = arith.divf %78, %79 : vector<32x1xf32>
    %81 = vector.broadcast %73 : vector<32x1xf32> to vector<32x32xf32>
    %82 = arith.subf %67, %81 : vector<32x32xf32>
    %cst_35 = arith.constant 9.99999974E-6 : f32
    %83 = vector.broadcast %cst_35 : f32 to vector<32x1xf32>
    %84 = arith.addf %80, %83 : vector<32x1xf32>
    %85 = math.rsqrt %84 : vector<32x1xf32>
    %86 = vector.broadcast %85 : vector<32x1xf32> to vector<32x32xf32>
    %87 = arith.mulf %82, %86 : vector<32x32xf32>
    %88 = vector.broadcast %68 : vector<1x32xf32> to vector<32x32xf32>
    %89 = arith.mulf %87, %88 : vector<32x32xf32>
    %90 = vector.broadcast %69 : vector<1x32xf32> to vector<32x32xf32>
    %91 = arith.addf %89, %90 : vector<32x32xf32>
    %92 = vector.broadcast %5 : vector<32x1xf32> to vector<32x32xf32>
    %93 = arith.mulf %91, %92 : vector<32x32xf32>
    %c0_36 = arith.constant 0 : index
    %c0_37 = arith.constant 0 : index
    %94 = vector.load %arg10[%c0_36, %c0_37] : memref<96x64xf32, #tpu.memory_space<vmem>>, vector<96x64xf32>
    %c0_38 = arith.constant 0 : index
    %c0_39 = arith.constant 0 : index
    %95 = vector.load %arg11[%c0_38, %c0_39] : memref<1x64xf32, #tpu.memory_space<vmem>>, vector<1x64xf32>
    %cst_40 = arith.constant 0.000000e+00 : f32
    %96 = vector.broadcast %cst_40 : f32 to vector<1x32xf32>
    %97 = vector.extract_strided_slice %93 {offsets = [0, 0], sizes = [31, 32], strides = [1, 1]} : vector<32x32xf32> to vector<31x32xf32>
    %98 = tpu.concatenate %96, %97 in 0 : vector<1x32xf32>, vector<31x32xf32> -> vector<32x32xf32>
    %99 = vector.extract_strided_slice %94 {offsets = [0, 0], sizes = [32, 64], strides = [1, 1]} : vector<96x64xf32> to vector<32x64xf32>
    %100 = arith.truncf %98 : vector<32x32xf32> to vector<32x32xbf16>
    %101 = arith.truncf %99 : vector<32x64xf32> to vector<32x64xbf16>
    %cst_41 = arith.constant dense<0.000000e+00> : vector<32x64xf32>
    %102 = tpu.matmul %100, %101, %cst_41 {dimension_numbers = #tpu.dot_dimension_numbers<[1], [0], [0], [1], [0, 0, 1, 1], [], []>} : vector<32x32xbf16>, vector<32x64xbf16>, vector<32x64xf32> -> vector<32x64xf32>
    %103 = vector.extract_strided_slice %94 {offsets = [32, 0], sizes = [32, 64], strides = [1, 1]} : vector<96x64xf32> to vector<32x64xf32>
    %104 = arith.truncf %93 : vector<32x32xf32> to vector<32x32xbf16>
    %105 = arith.truncf %103 : vector<32x64xf32> to vector<32x64xbf16>
    %cst_42 = arith.constant dense<0.000000e+00> : vector<32x64xf32>
    %106 = tpu.matmul %104, %105, %cst_42 {dimension_numbers = #tpu.dot_dimension_numbers<[1], [0], [0], [1], [0, 0, 1, 1], [], []>} : vector<32x32xbf16>, vector<32x64xbf16>, vector<32x64xf32> -> vector<32x64xf32>
    %107 = arith.addf %102, %106 : vector<32x64xf32>
    %108 = vector.extract_strided_slice %93 {offsets = [1, 0], sizes = [31, 32], strides = [1, 1]} : vector<32x32xf32> to vector<31x32xf32>
    %cst_43 = arith.constant 0.000000e+00 : f32
    %109 = vector.broadcast %cst_43 : f32 to vector<1x32xf32>
    %110 = tpu.concatenate %108, %109 in 0 : vector<31x32xf32>, vector<1x32xf32> -> vector<32x32xf32>
    %111 = vector.extract_strided_slice %94 {offsets = [64, 0], sizes = [32, 64], strides = [1, 1]} : vector<96x64xf32> to vector<32x64xf32>
    %112 = arith.truncf %110 : vector<32x32xf32> to vector<32x32xbf16>
    %113 = arith.truncf %111 : vector<32x64xf32> to vector<32x64xbf16>
    %cst_44 = arith.constant dense<0.000000e+00> : vector<32x64xf32>
    %114 = tpu.matmul %112, %113, %cst_44 {dimension_numbers = #tpu.dot_dimension_numbers<[1], [0], [0], [1], [0, 0, 1, 1], [], []>} : vector<32x32xbf16>, vector<32x64xbf16>, vector<32x64xf32> -> vector<32x64xf32>
    %115 = arith.addf %107, %114 : vector<32x64xf32>
    %116 = vector.broadcast %95 : vector<1x64xf32> to vector<32x64xf32>
    %117 = arith.addf %115, %116 : vector<32x64xf32>
    %cst_45 = arith.constant 0.000000e+00 : f32
    %118 = vector.broadcast %cst_45 : f32 to vector<32x64xf32>
    %119 = arith.maximumf %117, %118 : vector<32x64xf32>
    %c0_46 = arith.constant 0 : index
    %c0_47 = arith.constant 0 : index
    %120 = vector.load %arg12[%c0_46, %c0_47] : memref<64x32xf32, #tpu.memory_space<vmem>>, vector<64x32xf32>
    %c0_48 = arith.constant 0 : index
    %c0_49 = arith.constant 0 : index
    %121 = vector.load %arg13[%c0_48, %c0_49] : memref<1x32xf32, #tpu.memory_space<vmem>>, vector<1x32xf32>
    %122 = arith.truncf %119 : vector<32x64xf32> to vector<32x64xbf16>
    %123 = arith.truncf %120 : vector<64x32xf32> to vector<64x32xbf16>
    %cst_50 = arith.constant dense<0.000000e+00> : vector<32x32xf32>
    %124 = tpu.matmul %122, %123, %cst_50 {dimension_numbers = #tpu.dot_dimension_numbers<[1], [0], [0], [1], [0, 0, 1, 1], [], []>} : vector<32x64xbf16>, vector<64x32xbf16>, vector<32x32xf32> -> vector<32x32xf32>
    %125 = vector.broadcast %121 : vector<1x32xf32> to vector<32x32xf32>
    %126 = arith.addf %124, %125 : vector<32x32xf32>
    %127 = arith.addf %126, %93 : vector<32x32xf32>
    %c0_51 = arith.constant 0 : index
    %c0_52 = arith.constant 0 : index
    %128 = vector.load %arg14[%c0_51, %c0_52] : memref<1x32xf32, #tpu.memory_space<vmem>>, vector<1x32xf32>
    %c0_53 = arith.constant 0 : index
    %c0_54 = arith.constant 0 : index
    %129 = vector.load %arg15[%c0_53, %c0_54] : memref<1x32xf32, #tpu.memory_space<vmem>>, vector<1x32xf32>
    %cst_55 = arith.constant dense<0.000000e+00> : vector<32xf32>
    %130 = vector.multi_reduction <add>, %127, %cst_55 [1] : vector<32x32xf32> to vector<32xf32>
    %131 = vector.shape_cast %130 : vector<32xf32> to vector<32x1xf32>
    %cst_56 = arith.constant 3.200000e+01 : f32
    %132 = vector.broadcast %cst_56 : f32 to vector<32x1xf32>
    %133 = arith.divf %131, %132 : vector<32x1xf32>
    %134 = vector.broadcast %133 : vector<32x1xf32> to vector<32x32xf32>
    %135 = arith.subf %127, %134 : vector<32x32xf32>
    %136 = arith.mulf %135, %135 : vector<32x32xf32>
    %cst_57 = arith.constant dense<0.000000e+00> : vector<32xf32>
    %137 = vector.multi_reduction <add>, %136, %cst_57 [1] : vector<32x32xf32> to vector<32xf32>
    %138 = vector.shape_cast %137 : vector<32xf32> to vector<32x1xf32>
    %cst_58 = arith.constant 3.200000e+01 : f32
    %139 = vector.broadcast %cst_58 : f32 to vector<32x1xf32>
    %140 = arith.divf %138, %139 : vector<32x1xf32>
    %141 = vector.broadcast %133 : vector<32x1xf32> to vector<32x32xf32>
    %142 = arith.subf %127, %141 : vector<32x32xf32>
    %cst_59 = arith.constant 9.99999974E-6 : f32
    %143 = vector.broadcast %cst_59 : f32 to vector<32x1xf32>
    %144 = arith.addf %140, %143 : vector<32x1xf32>
    %145 = math.rsqrt %144 : vector<32x1xf32>
    %146 = vector.broadcast %145 : vector<32x1xf32> to vector<32x32xf32>
    %147 = arith.mulf %142, %146 : vector<32x32xf32>
    %148 = vector.broadcast %128 : vector<1x32xf32> to vector<32x32xf32>
    %149 = arith.mulf %147, %148 : vector<32x32xf32>
    %150 = vector.broadcast %129 : vector<1x32xf32> to vector<32x32xf32>
    %151 = arith.addf %149, %150 : vector<32x32xf32>
    %152 = vector.broadcast %5 : vector<32x1xf32> to vector<32x32xf32>
    %153 = arith.mulf %151, %152 : vector<32x32xf32>
    %c0_60 = arith.constant 0 : index
    %c0_61 = arith.constant 0 : index
    %c0_62 = arith.constant 0 : index
    %154 = vector.load %arg16[%c0_60, %c0_61, %c0_62] : memref<1x32x32xf32, #tpu.memory_space<vmem>>, vector<1x32x32xf32>
    %155 = vector.shape_cast %154 : vector<1x32x32xf32> to vector<32x32xf32>
    %156 = vector.shape_cast %153 : vector<32x32xf32> to vector<1x32x32xf32>
    tpu.vector_store %arg16[%c0_60, %c0_61, %c0_62], %156 {strides = array<i32>} : memref<1x32x32xf32, #tpu.memory_space<vmem>>, vector<1x32x32xf32>,
    return
  }
  func.func @transform_0(%arg0: i32) -> (i32, i32, i32) {
    %c0_i32 = arith.constant 0 : i32
    %c0_i32_0 = arith.constant 0 : i32
    %c0_i32_1 = arith.constant 0 : i32
    return %arg0, %c0_i32, %c0_i32_0 : i32, i32, i32
  }
  func.func @transform_1(%arg0: i32) -> (i32, i32, i32) {
    %c0_i32 = arith.constant 0 : i32
    %c0_i32_0 = arith.constant 0 : i32
    %c0_i32_1 = arith.constant 0 : i32
    return %arg0, %c0_i32, %c0_i32_0 : i32, i32, i32
  }
  func.func @transform_2(%arg0: i32) -> (i32, i32, i32) {
    %c0_i32 = arith.constant 0 : i32
    %c0_i32_0 = arith.constant 0 : i32
    %c0_i32_1 = arith.constant 0 : i32
    return %arg0, %c0_i32, %c0_i32_0 : i32, i32, i32
  }
  func.func @transform_3(%arg0: i32) -> (i32, i32) {
    %c0_i32 = arith.constant 0 : i32
    %c0_i32_0 = arith.constant 0 : i32
    %c0_i32_1 = arith.constant 0 : i32
    return %c0_i32, %c0_i32_0 : i32, i32
  }
  func.func @transform_4(%arg0: i32) -> (i32, i32) {
    %c0_i32 = arith.constant 0 : i32
    %c0_i32_0 = arith.constant 0 : i32
    %c0_i32_1 = arith.constant 0 : i32
    return %c0_i32, %c0_i32_0 : i32, i32
  }
  func.func @transform_5(%arg0: i32) -> (i32, i32) {
    %c0_i32 = arith.constant 0 : i32
    %c0_i32_0 = arith.constant 0 : i32
    %c0_i32_1 = arith.constant 0 : i32
    return %c0_i32, %c0_i32_0 : i32, i32
  }
  func.func @transform_6(%arg0: i32) -> (i32, i32) {
    %c0_i32 = arith.constant 0 : i32
    %c0_i32_0 = arith.constant 0 : i32
    %c0_i32_1 = arith.constant 0 : i32
    return %c0_i32, %c0_i32_0 : i32, i32
  }
  func.func @transform_7(%arg0: i32) -> (i32, i32) {
    %c0_i32 = arith.constant 0 : i32
    %c0_i32_0 = arith.constant 0 : i32
    %c0_i32_1 = arith.constant 0 : i32
    return %c0_i32, %c0_i32_0 : i32, i32
  }
  func.func @transform_8(%arg0: i32) -> (i32, i32) {
    %c0_i32 = arith.constant 0 : i32
    %c0_i32_0 = arith.constant 0 : i32
    %c0_i32_1 = arith.constant 0 : i32
    return %c0_i32, %c0_i32_0 : i32, i32
  }
  func.func @transform_9(%arg0: i32) -> (i32, i32) {
    %c0_i32 = arith.constant 0 : i32
    %c0_i32_0 = arith.constant 0 : i32
    %c0_i32_1 = arith.constant 0 : i32
    return %c0_i32, %c0_i32_0 : i32, i32
  }
  func.func @transform_10(%arg0: i32) -> (i32, i32) {
    %c0_i32 = arith.constant 0 : i32
    %c0_i32_0 = arith.constant 0 : i32
    %c0_i32_1 = arith.constant 0 : i32
    return %c0_i32, %c0_i32_0 : i32, i32
  }
  func.func @transform_11(%arg0: i32) -> (i32, i32) {
    %c0_i32 = arith.constant 0 : i32
    %c0_i32_0 = arith.constant 0 : i32
    %c0_i32_1 = arith.constant 0 : i32
    return %c0_i32, %c0_i32_0 : i32, i32
  }
  func.func @transform_12(%arg0: i32) -> (i32, i32) {
    %c0_i32 = arith.constant 0 : i32
    %c0_i32_0 = arith.constant 0 : i32
    %c0_i32_1 = arith.constant 0 : i32
    return %c0_i32, %c0_i32_0 : i32, i32
  }
  func.func @transform_13(%arg0: i32) -> (i32, i32) {
    %c0_i32 = arith.constant 0 : i32
    %c0_i32_0 = arith.constant 0 : i32
    %c0_i32_1 = arith.constant 0 : i32
    return %c0_i32, %c0_i32_0 : i32, i32
  }
  func.func @transform_14(%arg0: i32) -> (i32, i32) {
    %c0_i32 = arith.constant 0 : i32
    %c0_i32_0 = arith.constant 0 : i32
    %c0_i32_1 = arith.constant 0 : i32
    return %c0_i32, %c0_i32_0 : i32, i32
  }
  func.func @transform_15(%arg0: i32) -> (i32, i32, i32) {
    %c0_i32 = arith.constant 0 : i32
    %c0_i32_0 = arith.constant 0 : i32
    %c0_i32_1 = arith.constant 0 : i32
    return %arg0, %c0_i32, %c0_i32_0 : i32, i32, i32
  }
}

module attributes {stable_mosaic.version = 11 : i64} {
  func.func @_mel_kernel(%arg0: i32, %arg1: memref<1x32x32xf32, #tpu.memory_space<vmem>>, %arg2: memref<1x32x1xf32, #tpu.memory_space<vmem>>, %arg3: memref<32x16xf32, #tpu.memory_space<vmem>>, %arg4: memref<1x16xf32, #tpu.memory_space<vmem>>, %arg5: memref<1x32x16xf32, #tpu.memory_space<vmem>>) attributes {dimension_semantics = [#tpu.dimension_semantics<parallel>], iteration_bounds = array<i64: 2>, scalar_prefetch = 0 : i64, scratch_operands = 0 : i64, tpu.core_type = #tpu.core_type<tc>, window_params = [{transform_indices = @transform_0, window_bounds = array<i64: 1, 32, 32>}, {transform_indices = @transform_1, window_bounds = array<i64: 1, 32, 1>}, {pipeline_mode = #tpu.pipeline_mode<synchronous>, transform_indices = @transform_2, window_bounds = array<i64: 32, 16>}, {pipeline_mode = #tpu.pipeline_mode<synchronous>, transform_indices = @transform_3, window_bounds = array<i64: 1, 16>}, {transform_indices = @transform_4, window_bounds = array<i64: 1, 32, 16>}]} {
    %c0 = arith.constant 0 : index
    %c0_0 = arith.constant 0 : index
    %c0_1 = arith.constant 0 : index
    %0 = vector.load %arg1[%c0, %c0_0, %c0_1] : memref<1x32x32xf32, #tpu.memory_space<vmem>>, vector<1x32x32xf32>
    %1 = vector.shape_cast %0 : vector<1x32x32xf32> to vector<32x32xf32>
    %c0_2 = arith.constant 0 : index
    %c0_3 = arith.constant 0 : index
    %c0_4 = arith.constant 0 : index
    %2 = vector.load %arg2[%c0_2, %c0_3, %c0_4] : memref<1x32x1xf32, #tpu.memory_space<vmem>>, vector<1x32x1xf32>
    %3 = vector.shape_cast %2 : vector<1x32x1xf32> to vector<32x1xf32>
    %4 = vector.broadcast %3 : vector<32x1xf32> to vector<32x32xf32>
    %5 = arith.mulf %1, %4 : vector<32x32xf32>
    %c0_5 = arith.constant 0 : index
    %c0_6 = arith.constant 0 : index
    %6 = vector.load %arg3[%c0_5, %c0_6] : memref<32x16xf32, #tpu.memory_space<vmem>>, vector<32x16xf32>
    %7 = arith.truncf %5 : vector<32x32xf32> to vector<32x32xbf16>
    %8 = arith.truncf %6 : vector<32x16xf32> to vector<32x16xbf16>
    %cst = arith.constant dense<0.000000e+00> : vector<32x16xf32>
    %9 = tpu.matmul %7, %8, %cst {dimension_numbers = #tpu.dot_dimension_numbers<[1], [0], [0], [1], [0, 0, 1, 1], [], []>} : vector<32x32xbf16>, vector<32x16xbf16>, vector<32x16xf32> -> vector<32x16xf32>
    %c0_7 = arith.constant 0 : index
    %c0_8 = arith.constant 0 : index
    %10 = vector.load %arg4[%c0_7, %c0_8] : memref<1x16xf32, #tpu.memory_space<vmem>>, vector<1x16xf32>
    %11 = vector.broadcast %10 : vector<1x16xf32> to vector<32x16xf32>
    %12 = arith.addf %9, %11 : vector<32x16xf32>
    %c0_9 = arith.constant 0 : index
    %c0_10 = arith.constant 0 : index
    %c0_11 = arith.constant 0 : index
    %13 = vector.load %arg5[%c0_9, %c0_10, %c0_11] : memref<1x32x16xf32, #tpu.memory_space<vmem>>, vector<1x32x16xf32>
    %14 = vector.shape_cast %13 : vector<1x32x16xf32> to vector<32x16xf32>
    %15 = vector.shape_cast %12 : vector<32x16xf32> to vector<1x32x16xf32>
    tpu.vector_store %arg5[%c0_9, %c0_10, %c0_11], %15 {strides = array<i32>} : memref<1x32x16xf32, #tpu.memory_space<vmem>>, vector<1x32x16xf32>,
    return
  }
  func.func @transform_0(%arg0: i32) -> (i32, i32, i32) {
    %c0_i32 = arith.constant 0 : i32
    %c0_i32_0 = arith.constant 0 : i32
    %c0_i32_1 = arith.constant 0 : i32
    return %arg0, %c0_i32, %c0_i32_0 : i32, i32, i32
  }
  func.func @transform_1(%arg0: i32) -> (i32, i32, i32) {
    %c0_i32 = arith.constant 0 : i32
    %c0_i32_0 = arith.constant 0 : i32
    %c0_i32_1 = arith.constant 0 : i32
    return %arg0, %c0_i32, %c0_i32_0 : i32, i32, i32
  }
  func.func @transform_2(%arg0: i32) -> (i32, i32) {
    %c0_i32 = arith.constant 0 : i32
    %c0_i32_0 = arith.constant 0 : i32
    %c0_i32_1 = arith.constant 0 : i32
    return %c0_i32, %c0_i32_0 : i32, i32
  }
  func.func @transform_3(%arg0: i32) -> (i32, i32) {
    %c0_i32 = arith.constant 0 : i32
    %c0_i32_0 = arith.constant 0 : i32
    %c0_i32_1 = arith.constant 0 : i32
    return %c0_i32, %c0_i32_0 : i32, i32
  }
  func.func @transform_4(%arg0: i32) -> (i32, i32, i32) {
    %c0_i32 = arith.constant 0 : i32
    %c0_i32_0 = arith.constant 0 : i32
    %c0_i32_1 = arith.constant 0 : i32
    return %arg0, %c0_i32, %c0_i32_0 : i32, i32, i32
  }
}

module attributes {stable_mosaic.version = 11 : i64} {
  func.func @_var_pred_kernel(%arg0: i32, %arg1: memref<1x32x32xf32, #tpu.memory_space<vmem>>, %arg2: memref<1x32x1xf32, #tpu.memory_space<vmem>>, %arg3: memref<96x32xf32, #tpu.memory_space<vmem>>, %arg4: memref<1x32xf32, #tpu.memory_space<vmem>>, %arg5: memref<1x32xf32, #tpu.memory_space<vmem>>, %arg6: memref<1x32xf32, #tpu.memory_space<vmem>>, %arg7: memref<96x32xf32, #tpu.memory_space<vmem>>, %arg8: memref<1x32xf32, #tpu.memory_space<vmem>>, %arg9: memref<1x32xf32, #tpu.memory_space<vmem>>, %arg10: memref<1x32xf32, #tpu.memory_space<vmem>>, %arg11: memref<1x32xf32, #tpu.memory_space<vmem>>, %arg12: memref<1x1xf32, #tpu.memory_space<vmem>>, %arg13: memref<1x32x1xf32, #tpu.memory_space<vmem>>) attributes {dimension_semantics = [#tpu.dimension_semantics<parallel>], iteration_bounds = array<i64: 2>, scalar_prefetch = 0 : i64, scratch_operands = 0 : i64, tpu.core_type = #tpu.core_type<tc>, window_params = [{transform_indices = @transform_0, window_bounds = array<i64: 1, 32, 32>}, {transform_indices = @transform_1, window_bounds = array<i64: 1, 32, 1>}, {pipeline_mode = #tpu.pipeline_mode<synchronous>, transform_indices = @transform_2, window_bounds = array<i64: 96, 32>}, {pipeline_mode = #tpu.pipeline_mode<synchronous>, transform_indices = @transform_3, window_bounds = array<i64: 1, 32>}, {pipeline_mode = #tpu.pipeline_mode<synchronous>, transform_indices = @transform_4, window_bounds = array<i64: 1, 32>}, {pipeline_mode = #tpu.pipeline_mode<synchronous>, transform_indices = @transform_5, window_bounds = array<i64: 1, 32>}, {pipeline_mode = #tpu.pipeline_mode<synchronous>, transform_indices = @transform_6, window_bounds = array<i64: 96, 32>}, {pipeline_mode = #tpu.pipeline_mode<synchronous>, transform_indices = @transform_7, window_bounds = array<i64: 1, 32>}, {pipeline_mode = #tpu.pipeline_mode<synchronous>, transform_indices = @transform_8, window_bounds = array<i64: 1, 32>}, {pipeline_mode = #tpu.pipeline_mode<synchronous>, transform_indices = @transform_9, window_bounds = array<i64: 1, 32>}, {pipeline_mode = #tpu.pipeline_mode<synchronous>, transform_indices = @transform_10, window_bounds = array<i64: 1, 32>}, {pipeline_mode = #tpu.pipeline_mode<synchronous>, transform_indices = @transform_11, window_bounds = array<i64: 1, 1>}, {transform_indices = @transform_12, window_bounds = array<i64: 1, 32, 1>}]} {
    %c0 = arith.constant 0 : index
    %c0_0 = arith.constant 0 : index
    %c0_1 = arith.constant 0 : index
    %0 = vector.load %arg1[%c0, %c0_0, %c0_1] : memref<1x32x32xf32, #tpu.memory_space<vmem>>, vector<1x32x32xf32>
    %1 = vector.shape_cast %0 : vector<1x32x32xf32> to vector<32x32xf32>
    %c0_2 = arith.constant 0 : index
    %c0_3 = arith.constant 0 : index
    %c0_4 = arith.constant 0 : index
    %2 = vector.load %arg2[%c0_2, %c0_3, %c0_4] : memref<1x32x1xf32, #tpu.memory_space<vmem>>, vector<1x32x1xf32>
    %3 = vector.shape_cast %2 : vector<1x32x1xf32> to vector<32x1xf32>
    %c0_5 = arith.constant 0 : index
    %c0_6 = arith.constant 0 : index
    %4 = vector.load %arg3[%c0_5, %c0_6] : memref<96x32xf32, #tpu.memory_space<vmem>>, vector<96x32xf32>
    %c0_7 = arith.constant 0 : index
    %c0_8 = arith.constant 0 : index
    %5 = vector.load %arg4[%c0_7, %c0_8] : memref<1x32xf32, #tpu.memory_space<vmem>>, vector<1x32xf32>
    %cst = arith.constant 0.000000e+00 : f32
    %6 = vector.broadcast %cst : f32 to vector<1x32xf32>
    %7 = vector.extract_strided_slice %1 {offsets = [0, 0], sizes = [31, 32], strides = [1, 1]} : vector<32x32xf32> to vector<31x32xf32>
    %8 = tpu.concatenate %6, %7 in 0 : vector<1x32xf32>, vector<31x32xf32> -> vector<32x32xf32>
    %9 = vector.extract_strided_slice %4 {offsets = [0, 0], sizes = [32, 32], strides = [1, 1]} : vector<96x32xf32> to vector<32x32xf32>
    %10 = arith.truncf %8 : vector<32x32xf32> to vector<32x32xbf16>
    %11 = arith.truncf %9 : vector<32x32xf32> to vector<32x32xbf16>
    %cst_9 = arith.constant dense<0.000000e+00> : vector<32x32xf32>
    %12 = tpu.matmul %10, %11, %cst_9 {dimension_numbers = #tpu.dot_dimension_numbers<[1], [0], [0], [1], [0, 0, 1, 1], [], []>} : vector<32x32xbf16>, vector<32x32xbf16>, vector<32x32xf32> -> vector<32x32xf32>
    %13 = vector.extract_strided_slice %4 {offsets = [32, 0], sizes = [32, 32], strides = [1, 1]} : vector<96x32xf32> to vector<32x32xf32>
    %14 = arith.truncf %1 : vector<32x32xf32> to vector<32x32xbf16>
    %15 = arith.truncf %13 : vector<32x32xf32> to vector<32x32xbf16>
    %cst_10 = arith.constant dense<0.000000e+00> : vector<32x32xf32>
    %16 = tpu.matmul %14, %15, %cst_10 {dimension_numbers = #tpu.dot_dimension_numbers<[1], [0], [0], [1], [0, 0, 1, 1], [], []>} : vector<32x32xbf16>, vector<32x32xbf16>, vector<32x32xf32> -> vector<32x32xf32>
    %17 = arith.addf %12, %16 : vector<32x32xf32>
    %18 = vector.extract_strided_slice %1 {offsets = [1, 0], sizes = [31, 32], strides = [1, 1]} : vector<32x32xf32> to vector<31x32xf32>
    %cst_11 = arith.constant 0.000000e+00 : f32
    %19 = vector.broadcast %cst_11 : f32 to vector<1x32xf32>
    %20 = tpu.concatenate %18, %19 in 0 : vector<31x32xf32>, vector<1x32xf32> -> vector<32x32xf32>
    %21 = vector.extract_strided_slice %4 {offsets = [64, 0], sizes = [32, 32], strides = [1, 1]} : vector<96x32xf32> to vector<32x32xf32>
    %22 = arith.truncf %20 : vector<32x32xf32> to vector<32x32xbf16>
    %23 = arith.truncf %21 : vector<32x32xf32> to vector<32x32xbf16>
    %cst_12 = arith.constant dense<0.000000e+00> : vector<32x32xf32>
    %24 = tpu.matmul %22, %23, %cst_12 {dimension_numbers = #tpu.dot_dimension_numbers<[1], [0], [0], [1], [0, 0, 1, 1], [], []>} : vector<32x32xbf16>, vector<32x32xbf16>, vector<32x32xf32> -> vector<32x32xf32>
    %25 = arith.addf %17, %24 : vector<32x32xf32>
    %26 = vector.broadcast %5 : vector<1x32xf32> to vector<32x32xf32>
    %27 = arith.addf %25, %26 : vector<32x32xf32>
    %cst_13 = arith.constant 0.000000e+00 : f32
    %28 = vector.broadcast %cst_13 : f32 to vector<32x32xf32>
    %29 = arith.maximumf %27, %28 : vector<32x32xf32>
    %c0_14 = arith.constant 0 : index
    %c0_15 = arith.constant 0 : index
    %30 = vector.load %arg5[%c0_14, %c0_15] : memref<1x32xf32, #tpu.memory_space<vmem>>, vector<1x32xf32>
    %c0_16 = arith.constant 0 : index
    %c0_17 = arith.constant 0 : index
    %31 = vector.load %arg6[%c0_16, %c0_17] : memref<1x32xf32, #tpu.memory_space<vmem>>, vector<1x32xf32>
    %cst_18 = arith.constant dense<0.000000e+00> : vector<32xf32>
    %32 = vector.multi_reduction <add>, %29, %cst_18 [1] : vector<32x32xf32> to vector<32xf32>
    %33 = vector.shape_cast %32 : vector<32xf32> to vector<32x1xf32>
    %cst_19 = arith.constant 3.200000e+01 : f32
    %34 = vector.broadcast %cst_19 : f32 to vector<32x1xf32>
    %35 = arith.divf %33, %34 : vector<32x1xf32>
    %36 = vector.broadcast %35 : vector<32x1xf32> to vector<32x32xf32>
    %37 = arith.subf %29, %36 : vector<32x32xf32>
    %38 = arith.mulf %37, %37 : vector<32x32xf32>
    %cst_20 = arith.constant dense<0.000000e+00> : vector<32xf32>
    %39 = vector.multi_reduction <add>, %38, %cst_20 [1] : vector<32x32xf32> to vector<32xf32>
    %40 = vector.shape_cast %39 : vector<32xf32> to vector<32x1xf32>
    %cst_21 = arith.constant 3.200000e+01 : f32
    %41 = vector.broadcast %cst_21 : f32 to vector<32x1xf32>
    %42 = arith.divf %40, %41 : vector<32x1xf32>
    %43 = vector.broadcast %35 : vector<32x1xf32> to vector<32x32xf32>
    %44 = arith.subf %29, %43 : vector<32x32xf32>
    %cst_22 = arith.constant 9.99999974E-6 : f32
    %45 = vector.broadcast %cst_22 : f32 to vector<32x1xf32>
    %46 = arith.addf %42, %45 : vector<32x1xf32>
    %47 = math.rsqrt %46 : vector<32x1xf32>
    %48 = vector.broadcast %47 : vector<32x1xf32> to vector<32x32xf32>
    %49 = arith.mulf %44, %48 : vector<32x32xf32>
    %50 = vector.broadcast %30 : vector<1x32xf32> to vector<32x32xf32>
    %51 = arith.mulf %49, %50 : vector<32x32xf32>
    %52 = vector.broadcast %31 : vector<1x32xf32> to vector<32x32xf32>
    %53 = arith.addf %51, %52 : vector<32x32xf32>
    %c0_23 = arith.constant 0 : index
    %c0_24 = arith.constant 0 : index
    %54 = vector.load %arg7[%c0_23, %c0_24] : memref<96x32xf32, #tpu.memory_space<vmem>>, vector<96x32xf32>
    %c0_25 = arith.constant 0 : index
    %c0_26 = arith.constant 0 : index
    %55 = vector.load %arg8[%c0_25, %c0_26] : memref<1x32xf32, #tpu.memory_space<vmem>>, vector<1x32xf32>
    %cst_27 = arith.constant 0.000000e+00 : f32
    %56 = vector.broadcast %cst_27 : f32 to vector<1x32xf32>
    %57 = vector.extract_strided_slice %53 {offsets = [0, 0], sizes = [31, 32], strides = [1, 1]} : vector<32x32xf32> to vector<31x32xf32>
    %58 = tpu.concatenate %56, %57 in 0 : vector<1x32xf32>, vector<31x32xf32> -> vector<32x32xf32>
    %59 = vector.extract_strided_slice %54 {offsets = [0, 0], sizes = [32, 32], strides = [1, 1]} : vector<96x32xf32> to vector<32x32xf32>
    %60 = arith.truncf %58 : vector<32x32xf32> to vector<32x32xbf16>
    %61 = arith.truncf %59 : vector<32x32xf32> to vector<32x32xbf16>
    %cst_28 = arith.constant dense<0.000000e+00> : vector<32x32xf32>
    %62 = tpu.matmul %60, %61, %cst_28 {dimension_numbers = #tpu.dot_dimension_numbers<[1], [0], [0], [1], [0, 0, 1, 1], [], []>} : vector<32x32xbf16>, vector<32x32xbf16>, vector<32x32xf32> -> vector<32x32xf32>
    %63 = vector.extract_strided_slice %54 {offsets = [32, 0], sizes = [32, 32], strides = [1, 1]} : vector<96x32xf32> to vector<32x32xf32>
    %64 = arith.truncf %53 : vector<32x32xf32> to vector<32x32xbf16>
    %65 = arith.truncf %63 : vector<32x32xf32> to vector<32x32xbf16>
    %cst_29 = arith.constant dense<0.000000e+00> : vector<32x32xf32>
    %66 = tpu.matmul %64, %65, %cst_29 {dimension_numbers = #tpu.dot_dimension_numbers<[1], [0], [0], [1], [0, 0, 1, 1], [], []>} : vector<32x32xbf16>, vector<32x32xbf16>, vector<32x32xf32> -> vector<32x32xf32>
    %67 = arith.addf %62, %66 : vector<32x32xf32>
    %68 = vector.extract_strided_slice %53 {offsets = [1, 0], sizes = [31, 32], strides = [1, 1]} : vector<32x32xf32> to vector<31x32xf32>
    %cst_30 = arith.constant 0.000000e+00 : f32
    %69 = vector.broadcast %cst_30 : f32 to vector<1x32xf32>
    %70 = tpu.concatenate %68, %69 in 0 : vector<31x32xf32>, vector<1x32xf32> -> vector<32x32xf32>
    %71 = vector.extract_strided_slice %54 {offsets = [64, 0], sizes = [32, 32], strides = [1, 1]} : vector<96x32xf32> to vector<32x32xf32>
    %72 = arith.truncf %70 : vector<32x32xf32> to vector<32x32xbf16>
    %73 = arith.truncf %71 : vector<32x32xf32> to vector<32x32xbf16>
    %cst_31 = arith.constant dense<0.000000e+00> : vector<32x32xf32>
    %74 = tpu.matmul %72, %73, %cst_31 {dimension_numbers = #tpu.dot_dimension_numbers<[1], [0], [0], [1], [0, 0, 1, 1], [], []>} : vector<32x32xbf16>, vector<32x32xbf16>, vector<32x32xf32> -> vector<32x32xf32>
    %75 = arith.addf %67, %74 : vector<32x32xf32>
    %76 = vector.broadcast %55 : vector<1x32xf32> to vector<32x32xf32>
    %77 = arith.addf %75, %76 : vector<32x32xf32>
    %cst_32 = arith.constant 0.000000e+00 : f32
    %78 = vector.broadcast %cst_32 : f32 to vector<32x32xf32>
    %79 = arith.maximumf %77, %78 : vector<32x32xf32>
    %c0_33 = arith.constant 0 : index
    %c0_34 = arith.constant 0 : index
    %80 = vector.load %arg9[%c0_33, %c0_34] : memref<1x32xf32, #tpu.memory_space<vmem>>, vector<1x32xf32>
    %c0_35 = arith.constant 0 : index
    %c0_36 = arith.constant 0 : index
    %81 = vector.load %arg10[%c0_35, %c0_36] : memref<1x32xf32, #tpu.memory_space<vmem>>, vector<1x32xf32>
    %cst_37 = arith.constant dense<0.000000e+00> : vector<32xf32>
    %82 = vector.multi_reduction <add>, %79, %cst_37 [1] : vector<32x32xf32> to vector<32xf32>
    %83 = vector.shape_cast %82 : vector<32xf32> to vector<32x1xf32>
    %cst_38 = arith.constant 3.200000e+01 : f32
    %84 = vector.broadcast %cst_38 : f32 to vector<32x1xf32>
    %85 = arith.divf %83, %84 : vector<32x1xf32>
    %86 = vector.broadcast %85 : vector<32x1xf32> to vector<32x32xf32>
    %87 = arith.subf %79, %86 : vector<32x32xf32>
    %88 = arith.mulf %87, %87 : vector<32x32xf32>
    %cst_39 = arith.constant dense<0.000000e+00> : vector<32xf32>
    %89 = vector.multi_reduction <add>, %88, %cst_39 [1] : vector<32x32xf32> to vector<32xf32>
    %90 = vector.shape_cast %89 : vector<32xf32> to vector<32x1xf32>
    %cst_40 = arith.constant 3.200000e+01 : f32
    %91 = vector.broadcast %cst_40 : f32 to vector<32x1xf32>
    %92 = arith.divf %90, %91 : vector<32x1xf32>
    %93 = vector.broadcast %85 : vector<32x1xf32> to vector<32x32xf32>
    %94 = arith.subf %79, %93 : vector<32x32xf32>
    %cst_41 = arith.constant 9.99999974E-6 : f32
    %95 = vector.broadcast %cst_41 : f32 to vector<32x1xf32>
    %96 = arith.addf %92, %95 : vector<32x1xf32>
    %97 = math.rsqrt %96 : vector<32x1xf32>
    %98 = vector.broadcast %97 : vector<32x1xf32> to vector<32x32xf32>
    %99 = arith.mulf %94, %98 : vector<32x32xf32>
    %100 = vector.broadcast %80 : vector<1x32xf32> to vector<32x32xf32>
    %101 = arith.mulf %99, %100 : vector<32x32xf32>
    %102 = vector.broadcast %81 : vector<1x32xf32> to vector<32x32xf32>
    %103 = arith.addf %101, %102 : vector<32x32xf32>
    %c0_42 = arith.constant 0 : index
    %c0_43 = arith.constant 0 : index
    %104 = vector.load %arg11[%c0_42, %c0_43] : memref<1x32xf32, #tpu.memory_space<vmem>>, vector<1x32xf32>
    %105 = vector.broadcast %104 : vector<1x32xf32> to vector<32x32xf32>
    %106 = arith.mulf %103, %105 : vector<32x32xf32>
    %cst_44 = arith.constant dense<0.000000e+00> : vector<32xf32>
    %107 = vector.multi_reduction <add>, %106, %cst_44 [1] : vector<32x32xf32> to vector<32xf32>
    %108 = vector.shape_cast %107 : vector<32xf32> to vector<32x1xf32>
    %c0_45 = arith.constant 0 : index
    %c0_46 = arith.constant 0 : index
    %109 = vector.load %arg12[%c0_45, %c0_46] : memref<1x1xf32, #tpu.memory_space<vmem>>, vector<1x1xf32>
    %110 = vector.broadcast %109 : vector<1x1xf32> to vector<32x1xf32>
    %111 = arith.addf %108, %110 : vector<32x1xf32>
    %112 = arith.mulf %111, %3 : vector<32x1xf32>
    %c0_47 = arith.constant 0 : index
    %c0_48 = arith.constant 0 : index
    %c0_49 = arith.constant 0 : index
    %113 = vector.load %arg13[%c0_47, %c0_48, %c0_49] : memref<1x32x1xf32, #tpu.memory_space<vmem>>, vector<1x32x1xf32>
    %114 = vector.shape_cast %113 : vector<1x32x1xf32> to vector<32x1xf32>
    %115 = vector.shape_cast %112 : vector<32x1xf32> to vector<1x32x1xf32>
    tpu.vector_store %arg13[%c0_47, %c0_48, %c0_49], %115 {strides = array<i32>} : memref<1x32x1xf32, #tpu.memory_space<vmem>>, vector<1x32x1xf32>,
    return
  }
  func.func @transform_0(%arg0: i32) -> (i32, i32, i32) {
    %c0_i32 = arith.constant 0 : i32
    %c0_i32_0 = arith.constant 0 : i32
    %c0_i32_1 = arith.constant 0 : i32
    return %arg0, %c0_i32, %c0_i32_0 : i32, i32, i32
  }
  func.func @transform_1(%arg0: i32) -> (i32, i32, i32) {
    %c0_i32 = arith.constant 0 : i32
    %c0_i32_0 = arith.constant 0 : i32
    %c0_i32_1 = arith.constant 0 : i32
    return %arg0, %c0_i32, %c0_i32_0 : i32, i32, i32
  }
  func.func @transform_2(%arg0: i32) -> (i32, i32) {
    %c0_i32 = arith.constant 0 : i32
    %c0_i32_0 = arith.constant 0 : i32
    %c0_i32_1 = arith.constant 0 : i32
    return %c0_i32, %c0_i32_0 : i32, i32
  }
  func.func @transform_3(%arg0: i32) -> (i32, i32) {
    %c0_i32 = arith.constant 0 : i32
    %c0_i32_0 = arith.constant 0 : i32
    %c0_i32_1 = arith.constant 0 : i32
    return %c0_i32, %c0_i32_0 : i32, i32
  }
  func.func @transform_4(%arg0: i32) -> (i32, i32) {
    %c0_i32 = arith.constant 0 : i32
    %c0_i32_0 = arith.constant 0 : i32
    %c0_i32_1 = arith.constant 0 : i32
    return %c0_i32, %c0_i32_0 : i32, i32
  }
  func.func @transform_5(%arg0: i32) -> (i32, i32) {
    %c0_i32 = arith.constant 0 : i32
    %c0_i32_0 = arith.constant 0 : i32
    %c0_i32_1 = arith.constant 0 : i32
    return %c0_i32, %c0_i32_0 : i32, i32
  }
  func.func @transform_6(%arg0: i32) -> (i32, i32) {
    %c0_i32 = arith.constant 0 : i32
    %c0_i32_0 = arith.constant 0 : i32
    %c0_i32_1 = arith.constant 0 : i32
    return %c0_i32, %c0_i32_0 : i32, i32
  }
  func.func @transform_7(%arg0: i32) -> (i32, i32) {
    %c0_i32 = arith.constant 0 : i32
    %c0_i32_0 = arith.constant 0 : i32
    %c0_i32_1 = arith.constant 0 : i32
    return %c0_i32, %c0_i32_0 : i32, i32
  }
  func.func @transform_8(%arg0: i32) -> (i32, i32) {
    %c0_i32 = arith.constant 0 : i32
    %c0_i32_0 = arith.constant 0 : i32
    %c0_i32_1 = arith.constant 0 : i32
    return %c0_i32, %c0_i32_0 : i32, i32
  }
  func.func @transform_9(%arg0: i32) -> (i32, i32) {
    %c0_i32 = arith.constant 0 : i32
    %c0_i32_0 = arith.constant 0 : i32
    %c0_i32_1 = arith.constant 0 : i32
    return %c0_i32, %c0_i32_0 : i32, i32
  }
  func.func @transform_10(%arg0: i32) -> (i32, i32) {
    %c0_i32 = arith.constant 0 : i32
    %c0_i32_0 = arith.constant 0 : i32
    %c0_i32_1 = arith.constant 0 : i32
    return %c0_i32, %c0_i32_0 : i32, i32
  }
  func.func @transform_11(%arg0: i32) -> (i32, i32) {
    %c0_i32 = arith.constant 0 : i32
    %c0_i32_0 = arith.constant 0 : i32
    %c0_i32_1 = arith.constant 0 : i32
    return %c0_i32, %c0_i32_0 : i32, i32
  }
  func.func @transform_12(%arg0: i32) -> (i32, i32, i32) {
    %c0_i32 = arith.constant 0 : i32
    %c0_i32_0 = arith.constant 0 : i32
    %c0_i32_1 = arith.constant 0 : i32
    return %arg0, %c0_i32, %c0_i32_0 : i32, i32, i32
  }
}

module attributes {stable_mosaic.version = 11 : i64} {
  func.func @_var_pred_kernel(%arg0: i32, %arg1: memref<1x16x32xf32, #tpu.memory_space<vmem>>, %arg2: memref<1x16x1xf32, #tpu.memory_space<vmem>>, %arg3: memref<96x32xf32, #tpu.memory_space<vmem>>, %arg4: memref<1x32xf32, #tpu.memory_space<vmem>>, %arg5: memref<1x32xf32, #tpu.memory_space<vmem>>, %arg6: memref<1x32xf32, #tpu.memory_space<vmem>>, %arg7: memref<96x32xf32, #tpu.memory_space<vmem>>, %arg8: memref<1x32xf32, #tpu.memory_space<vmem>>, %arg9: memref<1x32xf32, #tpu.memory_space<vmem>>, %arg10: memref<1x32xf32, #tpu.memory_space<vmem>>, %arg11: memref<1x32xf32, #tpu.memory_space<vmem>>, %arg12: memref<1x1xf32, #tpu.memory_space<vmem>>, %arg13: memref<1x16x1xf32, #tpu.memory_space<vmem>>) attributes {dimension_semantics = [#tpu.dimension_semantics<parallel>], iteration_bounds = array<i64: 2>, scalar_prefetch = 0 : i64, scratch_operands = 0 : i64, tpu.core_type = #tpu.core_type<tc>, window_params = [{transform_indices = @transform_0, window_bounds = array<i64: 1, 16, 32>}, {transform_indices = @transform_1, window_bounds = array<i64: 1, 16, 1>}, {pipeline_mode = #tpu.pipeline_mode<synchronous>, transform_indices = @transform_2, window_bounds = array<i64: 96, 32>}, {pipeline_mode = #tpu.pipeline_mode<synchronous>, transform_indices = @transform_3, window_bounds = array<i64: 1, 32>}, {pipeline_mode = #tpu.pipeline_mode<synchronous>, transform_indices = @transform_4, window_bounds = array<i64: 1, 32>}, {pipeline_mode = #tpu.pipeline_mode<synchronous>, transform_indices = @transform_5, window_bounds = array<i64: 1, 32>}, {pipeline_mode = #tpu.pipeline_mode<synchronous>, transform_indices = @transform_6, window_bounds = array<i64: 96, 32>}, {pipeline_mode = #tpu.pipeline_mode<synchronous>, transform_indices = @transform_7, window_bounds = array<i64: 1, 32>}, {pipeline_mode = #tpu.pipeline_mode<synchronous>, transform_indices = @transform_8, window_bounds = array<i64: 1, 32>}, {pipeline_mode = #tpu.pipeline_mode<synchronous>, transform_indices = @transform_9, window_bounds = array<i64: 1, 32>}, {pipeline_mode = #tpu.pipeline_mode<synchronous>, transform_indices = @transform_10, window_bounds = array<i64: 1, 32>}, {pipeline_mode = #tpu.pipeline_mode<synchronous>, transform_indices = @transform_11, window_bounds = array<i64: 1, 1>}, {transform_indices = @transform_12, window_bounds = array<i64: 1, 16, 1>}]} {
    %c0 = arith.constant 0 : index
    %c0_0 = arith.constant 0 : index
    %c0_1 = arith.constant 0 : index
    %0 = vector.load %arg1[%c0, %c0_0, %c0_1] : memref<1x16x32xf32, #tpu.memory_space<vmem>>, vector<1x16x32xf32>
    %1 = vector.shape_cast %0 : vector<1x16x32xf32> to vector<16x32xf32>
    %c0_2 = arith.constant 0 : index
    %c0_3 = arith.constant 0 : index
    %c0_4 = arith.constant 0 : index
    %2 = vector.load %arg2[%c0_2, %c0_3, %c0_4] : memref<1x16x1xf32, #tpu.memory_space<vmem>>, vector<1x16x1xf32>
    %3 = vector.shape_cast %2 : vector<1x16x1xf32> to vector<16x1xf32>
    %c0_5 = arith.constant 0 : index
    %c0_6 = arith.constant 0 : index
    %4 = vector.load %arg3[%c0_5, %c0_6] : memref<96x32xf32, #tpu.memory_space<vmem>>, vector<96x32xf32>
    %c0_7 = arith.constant 0 : index
    %c0_8 = arith.constant 0 : index
    %5 = vector.load %arg4[%c0_7, %c0_8] : memref<1x32xf32, #tpu.memory_space<vmem>>, vector<1x32xf32>
    %cst = arith.constant 0.000000e+00 : f32
    %6 = vector.broadcast %cst : f32 to vector<1x32xf32>
    %7 = vector.extract_strided_slice %1 {offsets = [0, 0], sizes = [15, 32], strides = [1, 1]} : vector<16x32xf32> to vector<15x32xf32>
    %8 = tpu.concatenate %6, %7 in 0 : vector<1x32xf32>, vector<15x32xf32> -> vector<16x32xf32>
    %9 = vector.extract_strided_slice %4 {offsets = [0, 0], sizes = [32, 32], strides = [1, 1]} : vector<96x32xf32> to vector<32x32xf32>
    %10 = arith.truncf %8 : vector<16x32xf32> to vector<16x32xbf16>
    %11 = arith.truncf %9 : vector<32x32xf32> to vector<32x32xbf16>
    %cst_9 = arith.constant dense<0.000000e+00> : vector<16x32xf32>
    %12 = tpu.matmul %10, %11, %cst_9 {dimension_numbers = #tpu.dot_dimension_numbers<[1], [0], [0], [1], [0, 0, 1, 1], [], []>} : vector<16x32xbf16>, vector<32x32xbf16>, vector<16x32xf32> -> vector<16x32xf32>
    %13 = vector.extract_strided_slice %4 {offsets = [32, 0], sizes = [32, 32], strides = [1, 1]} : vector<96x32xf32> to vector<32x32xf32>
    %14 = arith.truncf %1 : vector<16x32xf32> to vector<16x32xbf16>
    %15 = arith.truncf %13 : vector<32x32xf32> to vector<32x32xbf16>
    %cst_10 = arith.constant dense<0.000000e+00> : vector<16x32xf32>
    %16 = tpu.matmul %14, %15, %cst_10 {dimension_numbers = #tpu.dot_dimension_numbers<[1], [0], [0], [1], [0, 0, 1, 1], [], []>} : vector<16x32xbf16>, vector<32x32xbf16>, vector<16x32xf32> -> vector<16x32xf32>
    %17 = arith.addf %12, %16 : vector<16x32xf32>
    %18 = vector.extract_strided_slice %1 {offsets = [1, 0], sizes = [15, 32], strides = [1, 1]} : vector<16x32xf32> to vector<15x32xf32>
    %cst_11 = arith.constant 0.000000e+00 : f32
    %19 = vector.broadcast %cst_11 : f32 to vector<1x32xf32>
    %20 = tpu.concatenate %18, %19 in 0 : vector<15x32xf32>, vector<1x32xf32> -> vector<16x32xf32>
    %21 = vector.extract_strided_slice %4 {offsets = [64, 0], sizes = [32, 32], strides = [1, 1]} : vector<96x32xf32> to vector<32x32xf32>
    %22 = arith.truncf %20 : vector<16x32xf32> to vector<16x32xbf16>
    %23 = arith.truncf %21 : vector<32x32xf32> to vector<32x32xbf16>
    %cst_12 = arith.constant dense<0.000000e+00> : vector<16x32xf32>
    %24 = tpu.matmul %22, %23, %cst_12 {dimension_numbers = #tpu.dot_dimension_numbers<[1], [0], [0], [1], [0, 0, 1, 1], [], []>} : vector<16x32xbf16>, vector<32x32xbf16>, vector<16x32xf32> -> vector<16x32xf32>
    %25 = arith.addf %17, %24 : vector<16x32xf32>
    %26 = vector.broadcast %5 : vector<1x32xf32> to vector<16x32xf32>
    %27 = arith.addf %25, %26 : vector<16x32xf32>
    %cst_13 = arith.constant 0.000000e+00 : f32
    %28 = vector.broadcast %cst_13 : f32 to vector<16x32xf32>
    %29 = arith.maximumf %27, %28 : vector<16x32xf32>
    %c0_14 = arith.constant 0 : index
    %c0_15 = arith.constant 0 : index
    %30 = vector.load %arg5[%c0_14, %c0_15] : memref<1x32xf32, #tpu.memory_space<vmem>>, vector<1x32xf32>
    %c0_16 = arith.constant 0 : index
    %c0_17 = arith.constant 0 : index
    %31 = vector.load %arg6[%c0_16, %c0_17] : memref<1x32xf32, #tpu.memory_space<vmem>>, vector<1x32xf32>
    %cst_18 = arith.constant dense<0.000000e+00> : vector<16xf32>
    %32 = vector.multi_reduction <add>, %29, %cst_18 [1] : vector<16x32xf32> to vector<16xf32>
    %33 = vector.shape_cast %32 : vector<16xf32> to vector<16x1xf32>
    %cst_19 = arith.constant 3.200000e+01 : f32
    %34 = vector.broadcast %cst_19 : f32 to vector<16x1xf32>
    %35 = arith.divf %33, %34 : vector<16x1xf32>
    %36 = vector.broadcast %35 : vector<16x1xf32> to vector<16x32xf32>
    %37 = arith.subf %29, %36 : vector<16x32xf32>
    %38 = arith.mulf %37, %37 : vector<16x32xf32>
    %cst_20 = arith.constant dense<0.000000e+00> : vector<16xf32>
    %39 = vector.multi_reduction <add>, %38, %cst_20 [1] : vector<16x32xf32> to vector<16xf32>
    %40 = vector.shape_cast %39 : vector<16xf32> to vector<16x1xf32>
    %cst_21 = arith.constant 3.200000e+01 : f32
    %41 = vector.broadcast %cst_21 : f32 to vector<16x1xf32>
    %42 = arith.divf %40, %41 : vector<16x1xf32>
    %43 = vector.broadcast %35 : vector<16x1xf32> to vector<16x32xf32>
    %44 = arith.subf %29, %43 : vector<16x32xf32>
    %cst_22 = arith.constant 9.99999974E-6 : f32
    %45 = vector.broadcast %cst_22 : f32 to vector<16x1xf32>
    %46 = arith.addf %42, %45 : vector<16x1xf32>
    %47 = math.rsqrt %46 : vector<16x1xf32>
    %48 = vector.broadcast %47 : vector<16x1xf32> to vector<16x32xf32>
    %49 = arith.mulf %44, %48 : vector<16x32xf32>
    %50 = vector.broadcast %30 : vector<1x32xf32> to vector<16x32xf32>
    %51 = arith.mulf %49, %50 : vector<16x32xf32>
    %52 = vector.broadcast %31 : vector<1x32xf32> to vector<16x32xf32>
    %53 = arith.addf %51, %52 : vector<16x32xf32>
    %c0_23 = arith.constant 0 : index
    %c0_24 = arith.constant 0 : index
    %54 = vector.load %arg7[%c0_23, %c0_24] : memref<96x32xf32, #tpu.memory_space<vmem>>, vector<96x32xf32>
    %c0_25 = arith.constant 0 : index
    %c0_26 = arith.constant 0 : index
    %55 = vector.load %arg8[%c0_25, %c0_26] : memref<1x32xf32, #tpu.memory_space<vmem>>, vector<1x32xf32>
    %cst_27 = arith.constant 0.000000e+00 : f32
    %56 = vector.broadcast %cst_27 : f32 to vector<1x32xf32>
    %57 = vector.extract_strided_slice %53 {offsets = [0, 0], sizes = [15, 32], strides = [1, 1]} : vector<16x32xf32> to vector<15x32xf32>
    %58 = tpu.concatenate %56, %57 in 0 : vector<1x32xf32>, vector<15x32xf32> -> vector<16x32xf32>
    %59 = vector.extract_strided_slice %54 {offsets = [0, 0], sizes = [32, 32], strides = [1, 1]} : vector<96x32xf32> to vector<32x32xf32>
    %60 = arith.truncf %58 : vector<16x32xf32> to vector<16x32xbf16>
    %61 = arith.truncf %59 : vector<32x32xf32> to vector<32x32xbf16>
    %cst_28 = arith.constant dense<0.000000e+00> : vector<16x32xf32>
    %62 = tpu.matmul %60, %61, %cst_28 {dimension_numbers = #tpu.dot_dimension_numbers<[1], [0], [0], [1], [0, 0, 1, 1], [], []>} : vector<16x32xbf16>, vector<32x32xbf16>, vector<16x32xf32> -> vector<16x32xf32>
    %63 = vector.extract_strided_slice %54 {offsets = [32, 0], sizes = [32, 32], strides = [1, 1]} : vector<96x32xf32> to vector<32x32xf32>
    %64 = arith.truncf %53 : vector<16x32xf32> to vector<16x32xbf16>
    %65 = arith.truncf %63 : vector<32x32xf32> to vector<32x32xbf16>
    %cst_29 = arith.constant dense<0.000000e+00> : vector<16x32xf32>
    %66 = tpu.matmul %64, %65, %cst_29 {dimension_numbers = #tpu.dot_dimension_numbers<[1], [0], [0], [1], [0, 0, 1, 1], [], []>} : vector<16x32xbf16>, vector<32x32xbf16>, vector<16x32xf32> -> vector<16x32xf32>
    %67 = arith.addf %62, %66 : vector<16x32xf32>
    %68 = vector.extract_strided_slice %53 {offsets = [1, 0], sizes = [15, 32], strides = [1, 1]} : vector<16x32xf32> to vector<15x32xf32>
    %cst_30 = arith.constant 0.000000e+00 : f32
    %69 = vector.broadcast %cst_30 : f32 to vector<1x32xf32>
    %70 = tpu.concatenate %68, %69 in 0 : vector<15x32xf32>, vector<1x32xf32> -> vector<16x32xf32>
    %71 = vector.extract_strided_slice %54 {offsets = [64, 0], sizes = [32, 32], strides = [1, 1]} : vector<96x32xf32> to vector<32x32xf32>
    %72 = arith.truncf %70 : vector<16x32xf32> to vector<16x32xbf16>
    %73 = arith.truncf %71 : vector<32x32xf32> to vector<32x32xbf16>
    %cst_31 = arith.constant dense<0.000000e+00> : vector<16x32xf32>
    %74 = tpu.matmul %72, %73, %cst_31 {dimension_numbers = #tpu.dot_dimension_numbers<[1], [0], [0], [1], [0, 0, 1, 1], [], []>} : vector<16x32xbf16>, vector<32x32xbf16>, vector<16x32xf32> -> vector<16x32xf32>
    %75 = arith.addf %67, %74 : vector<16x32xf32>
    %76 = vector.broadcast %55 : vector<1x32xf32> to vector<16x32xf32>
    %77 = arith.addf %75, %76 : vector<16x32xf32>
    %cst_32 = arith.constant 0.000000e+00 : f32
    %78 = vector.broadcast %cst_32 : f32 to vector<16x32xf32>
    %79 = arith.maximumf %77, %78 : vector<16x32xf32>
    %c0_33 = arith.constant 0 : index
    %c0_34 = arith.constant 0 : index
    %80 = vector.load %arg9[%c0_33, %c0_34] : memref<1x32xf32, #tpu.memory_space<vmem>>, vector<1x32xf32>
    %c0_35 = arith.constant 0 : index
    %c0_36 = arith.constant 0 : index
    %81 = vector.load %arg10[%c0_35, %c0_36] : memref<1x32xf32, #tpu.memory_space<vmem>>, vector<1x32xf32>
    %cst_37 = arith.constant dense<0.000000e+00> : vector<16xf32>
    %82 = vector.multi_reduction <add>, %79, %cst_37 [1] : vector<16x32xf32> to vector<16xf32>
    %83 = vector.shape_cast %82 : vector<16xf32> to vector<16x1xf32>
    %cst_38 = arith.constant 3.200000e+01 : f32
    %84 = vector.broadcast %cst_38 : f32 to vector<16x1xf32>
    %85 = arith.divf %83, %84 : vector<16x1xf32>
    %86 = vector.broadcast %85 : vector<16x1xf32> to vector<16x32xf32>
    %87 = arith.subf %79, %86 : vector<16x32xf32>
    %88 = arith.mulf %87, %87 : vector<16x32xf32>
    %cst_39 = arith.constant dense<0.000000e+00> : vector<16xf32>
    %89 = vector.multi_reduction <add>, %88, %cst_39 [1] : vector<16x32xf32> to vector<16xf32>
    %90 = vector.shape_cast %89 : vector<16xf32> to vector<16x1xf32>
    %cst_40 = arith.constant 3.200000e+01 : f32
    %91 = vector.broadcast %cst_40 : f32 to vector<16x1xf32>
    %92 = arith.divf %90, %91 : vector<16x1xf32>
    %93 = vector.broadcast %85 : vector<16x1xf32> to vector<16x32xf32>
    %94 = arith.subf %79, %93 : vector<16x32xf32>
    %cst_41 = arith.constant 9.99999974E-6 : f32
    %95 = vector.broadcast %cst_41 : f32 to vector<16x1xf32>
    %96 = arith.addf %92, %95 : vector<16x1xf32>
    %97 = math.rsqrt %96 : vector<16x1xf32>
    %98 = vector.broadcast %97 : vector<16x1xf32> to vector<16x32xf32>
    %99 = arith.mulf %94, %98 : vector<16x32xf32>
    %100 = vector.broadcast %80 : vector<1x32xf32> to vector<16x32xf32>
    %101 = arith.mulf %99, %100 : vector<16x32xf32>
    %102 = vector.broadcast %81 : vector<1x32xf32> to vector<16x32xf32>
    %103 = arith.addf %101, %102 : vector<16x32xf32>
    %c0_42 = arith.constant 0 : index
    %c0_43 = arith.constant 0 : index
    %104 = vector.load %arg11[%c0_42, %c0_43] : memref<1x32xf32, #tpu.memory_space<vmem>>, vector<1x32xf32>
    %105 = vector.broadcast %104 : vector<1x32xf32> to vector<16x32xf32>
    %106 = arith.mulf %103, %105 : vector<16x32xf32>
    %cst_44 = arith.constant dense<0.000000e+00> : vector<16xf32>
    %107 = vector.multi_reduction <add>, %106, %cst_44 [1] : vector<16x32xf32> to vector<16xf32>
    %108 = vector.shape_cast %107 : vector<16xf32> to vector<16x1xf32>
    %c0_45 = arith.constant 0 : index
    %c0_46 = arith.constant 0 : index
    %109 = vector.load %arg12[%c0_45, %c0_46] : memref<1x1xf32, #tpu.memory_space<vmem>>, vector<1x1xf32>
    %110 = vector.broadcast %109 : vector<1x1xf32> to vector<16x1xf32>
    %111 = arith.addf %108, %110 : vector<16x1xf32>
    %112 = arith.mulf %111, %3 : vector<16x1xf32>
    %c0_47 = arith.constant 0 : index
    %c0_48 = arith.constant 0 : index
    %c0_49 = arith.constant 0 : index
    %113 = vector.load %arg13[%c0_47, %c0_48, %c0_49] : memref<1x16x1xf32, #tpu.memory_space<vmem>>, vector<1x16x1xf32>
    %114 = vector.shape_cast %113 : vector<1x16x1xf32> to vector<16x1xf32>
    %115 = vector.shape_cast %112 : vector<16x1xf32> to vector<1x16x1xf32>
    tpu.vector_store %arg13[%c0_47, %c0_48, %c0_49], %115 {strides = array<i32>} : memref<1x16x1xf32, #tpu.memory_space<vmem>>, vector<1x16x1xf32>,
    return
  }
  func.func @transform_0(%arg0: i32) -> (i32, i32, i32) {
    %c0_i32 = arith.constant 0 : i32
    %c0_i32_0 = arith.constant 0 : i32
    %c0_i32_1 = arith.constant 0 : i32
    return %arg0, %c0_i32, %c0_i32_0 : i32, i32, i32
  }
  func.func @transform_1(%arg0: i32) -> (i32, i32, i32) {
    %c0_i32 = arith.constant 0 : i32
    %c0_i32_0 = arith.constant 0 : i32
    %c0_i32_1 = arith.constant 0 : i32
    return %arg0, %c0_i32, %c0_i32_0 : i32, i32, i32
  }
  func.func @transform_2(%arg0: i32) -> (i32, i32) {
    %c0_i32 = arith.constant 0 : i32
    %c0_i32_0 = arith.constant 0 : i32
    %c0_i32_1 = arith.constant 0 : i32
    return %c0_i32, %c0_i32_0 : i32, i32
  }
  func.func @transform_3(%arg0: i32) -> (i32, i32) {
    %c0_i32 = arith.constant 0 : i32
    %c0_i32_0 = arith.constant 0 : i32
    %c0_i32_1 = arith.constant 0 : i32
    return %c0_i32, %c0_i32_0 : i32, i32
  }
  func.func @transform_4(%arg0: i32) -> (i32, i32) {
    %c0_i32 = arith.constant 0 : i32
    %c0_i32_0 = arith.constant 0 : i32
    %c0_i32_1 = arith.constant 0 : i32
    return %c0_i32, %c0_i32_0 : i32, i32
  }
  func.func @transform_5(%arg0: i32) -> (i32, i32) {
    %c0_i32 = arith.constant 0 : i32
    %c0_i32_0 = arith.constant 0 : i32
    %c0_i32_1 = arith.constant 0 : i32
    return %c0_i32, %c0_i32_0 : i32, i32
  }
  func.func @transform_6(%arg0: i32) -> (i32, i32) {
    %c0_i32 = arith.constant 0 : i32
    %c0_i32_0 = arith.constant 0 : i32
    %c0_i32_1 = arith.constant 0 : i32
    return %c0_i32, %c0_i32_0 : i32, i32
  }
  func.func @transform_7(%arg0: i32) -> (i32, i32) {
    %c0_i32 = arith.constant 0 : i32
    %c0_i32_0 = arith.constant 0 : i32
    %c0_i32_1 = arith.constant 0 : i32
    return %c0_i32, %c0_i32_0 : i32, i32
  }
  func.func @transform_8(%arg0: i32) -> (i32, i32) {
    %c0_i32 = arith.constant 0 : i32
    %c0_i32_0 = arith.constant 0 : i32
    %c0_i32_1 = arith.constant 0 : i32
    return %c0_i32, %c0_i32_0 : i32, i32
  }
  func.func @transform_9(%arg0: i32) -> (i32, i32) {
    %c0_i32 = arith.constant 0 : i32
    %c0_i32_0 = arith.constant 0 : i32
    %c0_i32_1 = arith.constant 0 : i32
    return %c0_i32, %c0_i32_0 : i32, i32
  }
  func.func @transform_10(%arg0: i32) -> (i32, i32) {
    %c0_i32 = arith.constant 0 : i32
    %c0_i32_0 = arith.constant 0 : i32
    %c0_i32_1 = arith.constant 0 : i32
    return %c0_i32, %c0_i32_0 : i32, i32
  }
  func.func @transform_11(%arg0: i32) -> (i32, i32) {
    %c0_i32 = arith.constant 0 : i32
    %c0_i32_0 = arith.constant 0 : i32
    %c0_i32_1 = arith.constant 0 : i32
    return %c0_i32, %c0_i32_0 : i32, i32
  }
  func.func @transform_12(%arg0: i32) -> (i32, i32, i32) {
    %c0_i32 = arith.constant 0 : i32
    %c0_i32_0 = arith.constant 0 : i32
    %c0_i32_1 = arith.constant 0 : i32
    return %arg0, %c0_i32, %c0_i32_0 : i32, i32, i32
  }
}

</mosaic_0001>

<llo_original>
// kernel: custom-call.2
$region0: #{custom-call.2}
  %s0 = inlined_call_operand.vmem [shape: u32[2,32], index: 0, kind: output, shape index: {}]

// kernel: ne.2
$region0: #{ne.2}
  #allocation0 [shape = 's32[1]{0}', space=sflag, size = 0x4, scoped, tag = 'scoped memory for ne.2']
  %s0 = inlined_call_operand.vmem [shape: f32[2,32], index: 0, kind: input, shape index: {}, may-alias: {0,1}]
  %s1 = inlined_call_operand.vmem [shape: f32[2,32], index: 1, kind: input, shape index: {}, may-alias: {0,1}]
  %s2 = inlined_call_operand.vmem [shape: pred[2,32], index: 2, kind: output, shape index: {}]
  %v3 = vld [vmem:[%s0] sm:$0x3]
  %v4 = vld [vmem:[%s1] sm:$0x3]
  %5 = xla_tuple %v3, %v4
  %6 = xla_tuple %5
  %vm7 = vcmp.ne.f32.partialorder %v3, %v4
  %v8 = vsel %vm7, 1, 0
  %9 = xla_tuple %v8
  %v10 = vpack.c.b16 0, %v8
  %v11 = vpack.c.b8 0, %v10
  %s13 = ssub.s32 2, 1
  %14 = vst [vmem:[%s2] sm:%s13] %v11

// kernel: squeeze.15
$region0: #{squeeze.15}
  %s0 = inlined_call_operand.vmem [shape: f32[64], index: 0, kind: input, shape index: {}]
  %s1 = inlined_call_operand.vmem [shape: f32[2,32], index: 1, kind: output, shape index: {}]
  $region1: #{squeeze.15} parent=0
    #allocation0 [shape = 'u8[4096]{0}', space=vmem, size = 0x1000, scoped, tag = 'scoped mem for output reshape']
    #allocation1 [shape = 'u8[4096]{0}', space=vmem, size = 0x1000, scoped, tag = 'scoped mem for input reshape']
    %s3 = sshll.u32 1, 1
    %s4 = ssub.s32 %s3, 1
    %v5 = vld [vmem:[%s0] sm:%s4]
    %6 = vst [vmem:[#allocation1] sm:%s4] %v5
    %v7 = vld [vmem:[#allocation1] sm:$0x1]
    %vm8 = vcmask 261120
    %9 = vst.msk [vmem:[#allocation0] sm:$0x1] %vm8, %v7
    %v10 = vld [vmem:[#allocation1] sm:$0x1]
    %11 = vrot.lane.b32.xlu0 %v10, 96
    %v12 = vpop.permute.xlu0 %11
    %vm13 = vcmask 261120
    %s14 = scalar_lea.vmem [#allocation0], 1
    %15 = vst.msk [vmem:[%s14] sm:$0x1] %vm13, %v12
    %s17 = sshll.u32 1, 2
    %s18 = ssub.s32 %s17, 1
    %v20 = vld [vmem:[#allocation0] sm:%s18]
    %s21 = sshll.u32 1, 2
    %s22 = ssub.s32 %s21, 1
    %23 = vst [vmem:[%s1] sm:%s22] %v20

// kernel: _lambda_.8
$region0: #{_lambda_.8}
  #allocation0 [shape = 'u32[]', space=smem, size = 0x4, offset = 0x4, fixed_abs, tag = 'smem constant byte address 0x4 - core index']
  #allocation1 [shape = 'u32[144,128]{1,0:T(1,128)}', space=vmem, size = 0x12000, scoped, tag = 'internal scratch']
  %s0 = inlined_call_operand.vmem [shape: f32[2,16,32], index: 0, kind: input, shape index: {}]
  %s1 = inlined_call_operand.vmem [shape: f32[2,1,16], index: 1, kind: input, shape index: {}]
  %s2 = inlined_call_operand.vmem [shape: f32[2,16,1], index: 2, kind: input, shape index: {}]
  %s3 = inlined_call_operand.vmem [shape: f32[32,96], index: 3, kind: input, shape index: {}]
  %s4 = inlined_call_operand.vmem [shape: f32[1,96], index: 4, kind: input, shape index: {}]
  %s5 = inlined_call_operand.vmem [shape: f32[32,32], index: 5, kind: input, shape index: {}]
  %s6 = inlined_call_operand.vmem [shape: f32[1,32], index: 6, kind: input, shape index: {}]
  %s7 = inlined_call_operand.vmem [shape: f32[1,32], index: 7, kind: input, shape index: {}]
  %s8 = inlined_call_operand.vmem [shape: f32[1,32], index: 8, kind: input, shape index: {}]
  %s9 = inlined_call_operand.vmem [shape: f32[96,64], index: 9, kind: input, shape index: {}]
  %s10 = inlined_call_operand.vmem [shape: f32[1,64], index: 10, kind: input, shape index: {}]
  %s11 = inlined_call_operand.vmem [shape: f32[64,32], index: 11, kind: input, shape index: {}]
  %s12 = inlined_call_operand.vmem [shape: f32[1,32], index: 12, kind: input, shape index: {}]
  %s13 = inlined_call_operand.vmem [shape: f32[1,32], index: 13, kind: input, shape index: {}]
  %s14 = inlined_call_operand.vmem [shape: f32[1,32], index: 14, kind: input, shape index: {}]
  %s15 = inlined_call_operand.vmem [shape: f32[2,16,32], index: 15, kind: output, shape index: {}]
  %s16 = sld [smem:[#allocation0]]
  $region93: #{_lambda_.8} parent=0
    _
  %s18 = ssub.s32 1, %s16
  %s19 = scalar_select 0, %s18, %s16
  loop: start=0, step=1, limit=4
  $region2: #{_lambda_.8} parent=0 // loop_pre_header
    _
  $region3: #{_lambda_.8} parent=0 // loop_header
    %s21 = sphi 0, %s25
    %p22 = scmp.ge.s32.totalorder %s21, 4
    %s31 = sphi 0, %s33
    %s34 = sphi 0, %s31
    %s35 = sphi 0, %s34
    %s51 = sphi 0, %s35
    %s57 = sphi 0, %s59
    %s60 = sphi 0, %s57
    %s61 = sphi 0, %s60
    %s77 = sphi 0, %s61
    %s83 = sphi 0, %s85
    %s86 = sphi 0, %s83
    %s87 = sphi 0, %s86
    %s103 = sphi 0, %s87
    %s107 = sphi 0, %s107
    %s109 = sphi 0, %s107
    %s110 = sphi 0, %s109
    %s124 = sphi 0, %s110
    %s128 = sphi 0, %s128
    %s130 = sphi 0, %s128
    %s131 = sphi 0, %s130
    %s145 = sphi 0, %s131
    %s149 = sphi 0, %s149
    %s151 = sphi 0, %s149
    %s152 = sphi 0, %s151
    %s166 = sphi 0, %s152
    %s170 = sphi 0, %s170
    %s172 = sphi 0, %s170
    %s173 = sphi 0, %s172
    %s187 = sphi 0, %s173
    %s191 = sphi 0, %s191
    %s193 = sphi 0, %s191
    %s194 = sphi 0, %s193
    %s208 = sphi 0, %s194
    %s212 = sphi 0, %s212
    %s214 = sphi 0, %s212
    %s215 = sphi 0, %s214
    %s229 = sphi 0, %s215
    %s233 = sphi 0, %s233
    %s235 = sphi 0, %s233
    %s236 = sphi 0, %s235
    %s250 = sphi 0, %s236
    %s254 = sphi 0, %s254
    %s256 = sphi 0, %s254
    %s257 = sphi 0, %s256
    %s271 = sphi 0, %s257
    %s275 = sphi 0, %s275
    %s277 = sphi 0, %s275
    %s278 = sphi 0, %s277
    %s292 = sphi 0, %s278
    %s296 = sphi 0, %s296
    %s298 = sphi 0, %s296
    %s299 = sphi 0, %s298
    %s313 = sphi 0, %s299
    %s317 = sphi 0, %s317
    %s319 = sphi 0, %s317
    %s320 = sphi 0, %s319
    %s334 = sphi 0, %s320
    %s338 = sphi 0, %s338
    %s340 = sphi 0, %s338
    %s341 = sphi 0, %s340
    %s355 = sphi 0, %s341
    %s361 = sphi 0, %s363
    %s364 = sphi 0, %s361
    %s365 = sphi 0, %s364
    %s381 = sphi 0, %s365
  $region4: #{_lambda_.8} parent=0 // loop_header_branch
    %24 = sbr.rel (%p22) target = $region8
  $region5: #{_lambda_.8} parent=0 // loop_body
    %s26 = ssub.s32 %s21, 1
    %s27 = ssub.s32 %s21, 2
    %s28 = sadd.s32 %s21, 1
    %s29 = ssub.s32 %s21, %s28
    %p30 = scmp.eq.s32.totalorder %s29, 0
    %s32 = sadd.s32 %s31, 1
    %s33 = scalar_select %p30, %s31, %s32
    %p36 = pneg %p30
    %p37 = scmp.eq.s32.totalorder %s21, 1
    %p38 = por %p36, %p37
    %p39 = scmp.ne.s32.totalorder %s31, %s34
    %p40 = scmp.eq.s32.totalorder %s21, 0
    %p41 = por %p39, %p40
    %p42 = scmp.ne.s32.totalorder %s31, %s34
    %p43 = scmp.eq.s32.totalorder %s26, 1
    %p44 = por %p42, %p43
    %p45 = scmp.ne.s32.totalorder %s34, %s35
    %p46 = scmp.eq.s32.totalorder %s26, 0
    %p47 = por %p45, %p46
    %p48 = scmp.ne.s32.totalorder %s34, %s35
    %p49 = scmp.eq.s32.totalorder %s27, 1
    %p50 = por %p48, %p49
    %p52 = scmp.ne.s32.totalorder %s35, %s51
    %p53 = scmp.eq.s32.totalorder %s27, 0
    %p54 = por %p52, %p53
    %s55 = ssub.s32 %s21, %s28
    %p56 = scmp.eq.s32.totalorder %s55, 0
    %s58 = sadd.s32 %s57, 1
    %s59 = scalar_select %p56, %s57, %s58
    %p62 = pneg %p56
    %p63 = scmp.eq.s32.totalorder %s21, 1
    %p64 = por %p62, %p63
    %p65 = scmp.ne.s32.totalorder %s57, %s60
    %p66 = scmp.eq.s32.totalorder %s21, 0
    %p67 = por %p65, %p66
    %p68 = scmp.ne.s32.totalorder %s57, %s60
    %p69 = scmp.eq.s32.totalorder %s26, 1
    %p70 = por %p68, %p69
    %p71 = scmp.ne.s32.totalorder %s60, %s61
    %p72 = scmp.eq.s32.totalorder %s26, 0
    %p73 = por %p71, %p72
    %p74 = scmp.ne.s32.totalorder %s60, %s61
    %p75 = scmp.eq.s32.totalorder %s27, 1
    %p76 = por %p74, %p75
    %p78 = scmp.ne.s32.totalorder %s61, %s77
    %p79 = scmp.eq.s32.totalorder %s27, 0
    %p80 = por %p78, %p79
    %s81 = ssub.s32 %s21, %s28
    %p82 = scmp.eq.s32.totalorder %s81, 0
    %s84 = sadd.s32 %s83, 1
    %s85 = scalar_select %p82, %s83, %s84
    %p88 = pneg %p82
    %p89 = scmp.eq.s32.totalorder %s21, 1
    %p90 = por %p88, %p89
    %p91 = scmp.ne.s32.totalorder %s83, %s86
    %p92 = scmp.eq.s32.totalorder %s21, 0
    %p93 = por %p91, %p92
    %p94 = scmp.ne.s32.totalorder %s83, %s86
    %p95 = scmp.eq.s32.totalorder %s26, 1
    %p96 = por %p94, %p95
    %p97 = scmp.ne.s32.totalorder %s86, %s87
    %p98 = scmp.eq.s32.totalorder %s26, 0
    %p99 = por %p97, %p98
    %p100 = scmp.ne.s32.totalorder %s86, %s87
    %p101 = scmp.eq.s32.totalorder %s27, 1
    %p102 = por %p100, %p101
    %p104 = scmp.ne.s32.totalorder %s87, %s103
    %p105 = scmp.eq.s32.totalorder %s27, 0
    %p106 = por %p104, %p105
    %s108 = sadd.s32 %s107, 1
    %p111 = scmp.eq.s32.totalorder %s21, 1
    %p112 = scmp.ne.s32.totalorder %s107, %s109
    %p113 = scmp.eq.s32.totalorder %s21, 0
    %p114 = por %p112, %p113
    %p115 = scmp.ne.s32.totalorder %s107, %s109
    %p116 = scmp.eq.s32.totalorder %s26, 1
    %p117 = por %p115, %p116
    %p118 = scmp.ne.s32.totalorder %s109, %s110
    %p119 = scmp.eq.s32.totalorder %s26, 0
    %p120 = por %p118, %p119
    %p121 = scmp.ne.s32.totalorder %s109, %s110
    %p122 = scmp.eq.s32.totalorder %s27, 1
    %p123 = por %p121, %p122
    %p125 = scmp.ne.s32.totalorder %s110, %s124
    %p126 = scmp.eq.s32.totalorder %s27, 0
    %p127 = por %p125, %p126
    %s129 = sadd.s32 %s128, 1
    %p132 = scmp.eq.s32.totalorder %s21, 1
    %p133 = scmp.ne.s32.totalorder %s128, %s130
    %p134 = scmp.eq.s32.totalorder %s21, 0
    %p135 = por %p133, %p134
    %p136 = scmp.ne.s32.totalorder %s128, %s130
    %p137 = scmp.eq.s32.totalorder %s26, 1
    %p138 = por %p136, %p137
    %p139 = scmp.ne.s32.totalorder %s130, %s131
    %p140 = scmp.eq.s32.totalorder %s26, 0
    %p141 = por %p139, %p140
    %p142 = scmp.ne.s32.totalorder %s130, %s131
    %p143 = scmp.eq.s32.totalorder %s27, 1
    %p144 = por %p142, %p143
    %p146 = scmp.ne.s32.totalorder %s131, %s145
    %p147 = scmp.eq.s32.totalorder %s27, 0
    %p148 = por %p146, %p147
    %s150 = sadd.s32 %s149, 1
    %p153 = scmp.eq.s32.totalorder %s21, 1
    %p154 = scmp.ne.s32.totalorder %s149, %s151
    %p155 = scmp.eq.s32.totalorder %s21, 0
    %p156 = por %p154, %p155
    %p157 = scmp.ne.s32.totalorder %s149, %s151
    %p158 = scmp.eq.s32.totalorder %s26, 1
    %p159 = por %p157, %p158
    %p160 = scmp.ne.s32.totalorder %s151, %s152
    %p161 = scmp.eq.s32.totalorder %s26, 0
    %p162 = por %p160, %p161
    %p163 = scmp.ne.s32.totalorder %s151, %s152
    %p164 = scmp.eq.s32.totalorder %s27, 1
    %p165 = por %p163, %p164
    %p167 = scmp.ne.s32.totalorder %s152, %s166
    %p168 = scmp.eq.s32.totalorder %s27, 0
    %p169 = por %p167, %p168
    %s171 = sadd.s32 %s170, 1
    %p174 = scmp.eq.s32.totalorder %s21, 1
    %p175 = scmp.ne.s32.totalorder %s170, %s172
    %p176 = scmp.eq.s32.totalorder %s21, 0
    %p177 = por %p175, %p176
    %p178 = scmp.ne.s32.totalorder %s170, %s172
    %p179 = scmp.eq.s32.totalorder %s26, 1
    %p180 = por %p178, %p179
    %p181 = scmp.ne.s32.totalorder %s172, %s173
    %p182 = scmp.eq.s32.totalorder %s26, 0
    %p183 = por %p181, %p182
    %p184 = scmp.ne.s32.totalorder %s172, %s173
    %p185 = scmp.eq.s32.totalorder %s27, 1
    %p186 = por %p184, %p185
    %p188 = scmp.ne.s32.totalorder %s173, %s187
    %p189 = scmp.eq.s32.totalorder %s27, 0
    %p190 = por %p188, %p189
    %s192 = sadd.s32 %s191, 1
    %p195 = scmp.eq.s32.totalorder %s21, 1
    %p196 = scmp.ne.s32.totalorder %s191, %s193
    %p197 = scmp.eq.s32.totalorder %s21, 0
    %p198 = por %p196, %p197
    %p199 = scmp.ne.s32.totalorder %s191, %s193
    %p200 = scmp.eq.s32.totalorder %s26, 1
    %p201 = por %p199, %p200
    %p202 = scmp.ne.s32.totalorder %s193, %s194
    %p203 = scmp.eq.s32.totalorder %s26, 0
    %p204 = por %p202, %p203
    %p205 = scmp.ne.s32.totalorder %s193, %s194
    %p206 = scmp.eq.s32.totalorder %s27, 1
    %p207 = por %p205, %p206
    %p209 = scmp.ne.s32.totalorder %s194, %s208
    %p210 = scmp.eq.s32.totalorder %s27, 0
    %p211 = por %p209, %p210
    %s213 = sadd.s32 %s212, 1
    %p216 = scmp.eq.s32.totalorder %s21, 1
    %p217 = scmp.ne.s32.totalorder %s212, %s214
    %p218 = scmp.eq.s32.totalorder %s21, 0
    %p219 = por %p217, %p218
    %p220 = scmp.ne.s32.totalorder %s212, %s214
    %p221 = scmp.eq.s32.totalorder %s26, 1
    %p222 = por %p220, %p221
    %p223 = scmp.ne.s32.totalorder %s214, %s215
    %p224 = scmp.eq.s32.totalorder %s26, 0
    %p225 = por %p223, %p224
    %p226 = scmp.ne.s32.totalorder %s214, %s215
    %p227 = scmp.eq.s32.totalorder %s27, 1
    %p228 = por %p226, %p227
    %p230 = scmp.ne.s32.totalorder %s215, %s229
    %p231 = scmp.eq.s32.totalorder %s27, 0
    %p232 = por %p230, %p231
    %s234 = sadd.s32 %s233, 1
    %p237 = scmp.eq.s32.totalorder %s21, 1
    %p238 = scmp.ne.s32.totalorder %s233, %s235
    %p239 = scmp.eq.s32.totalorder %s21, 0
    %p240 = por %p238, %p239
    %p241 = scmp.ne.s32.totalorder %s233, %s235
    %p242 = scmp.eq.s32.totalorder %s26, 1
    %p243 = por %p241, %p242
    %p244 = scmp.ne.s32.totalorder %s235, %s236
    %p245 = scmp.eq.s32.totalorder %s26, 0
    %p246 = por %p244, %p245
    %p247 = scmp.ne.s32.totalorder %s235, %s236
    %p248 = scmp.eq.s32.totalorder %s27, 1
    %p249 = por %p247, %p248
    %p251 = scmp.ne.s32.totalorder %s236, %s250
    %p252 = scmp.eq.s32.totalorder %s27, 0
    %p253 = por %p251, %p252
    %s255 = sadd.s32 %s254, 1
    %p258 = scmp.eq.s32.totalorder %s21, 1
    %p259 = scmp.ne.s32.totalorder %s254, %s256
    %p260 = scmp.eq.s32.totalorder %s21, 0
    %p261 = por %p259, %p260
    %p262 = scmp.ne.s32.totalorder %s254, %s256
    %p263 = scmp.eq.s32.totalorder %s26, 1
    %p264 = por %p262, %p263
    %p265 = scmp.ne.s32.totalorder %s256, %s257
    %p266 = scmp.eq.s32.totalorder %s26, 0
    %p267 = por %p265, %p266
    %p268 = scmp.ne.s32.totalorder %s256, %s257
    %p269 = scmp.eq.s32.totalorder %s27, 1
    %p270 = por %p268, %p269
    %p272 = scmp.ne.s32.totalorder %s257, %s271
    %p273 = scmp.eq.s32.totalorder %s27, 0
    %p274 = por %p272, %p273
    %s276 = sadd.s32 %s275, 1
    %p279 = scmp.eq.s32.totalorder %s21, 1
    %p280 = scmp.ne.s32.totalorder %s275, %s277
    %p281 = scmp.eq.s32.totalorder %s21, 0
    %p282 = por %p280, %p281
    %p283 = scmp.ne.s32.totalorder %s275, %s277
    %p284 = scmp.eq.s32.totalorder %s26, 1
    %p285 = por %p283, %p284
    %p286 = scmp.ne.s32.totalorder %s277, %s278
    %p287 = scmp.eq.s32.totalorder %s26, 0
    %p288 = por %p286, %p287
    %p289 = scmp.ne.s32.totalorder %s277, %s278
    %p290 = scmp.eq.s32.totalorder %s27, 1
    %p291 = por %p289, %p290
    %p293 = scmp.ne.s32.totalorder %s278, %s292
    %p294 = scmp.eq.s32.totalorder %s27, 0
    %p295 = por %p293, %p294
    %s297 = sadd.s32 %s296, 1
    %p300 = scmp.eq.s32.totalorder %s21, 1
    %p301 = scmp.ne.s32.totalorder %s296, %s298
    %p302 = scmp.eq.s32.totalorder %s21, 0
    %p303 = por %p301, %p302
    %p304 = scmp.ne.s32.totalorder %s296, %s298
    %p305 = scmp.eq.s32.totalorder %s26, 1
    %p306 = por %p304, %p305
    %p307 = scmp.ne.s32.totalorder %s298, %s299
    %p308 = scmp.eq.s32.totalorder %s26, 0
    %p309 = por %p307, %p308
    %p310 = scmp.ne.s32.totalorder %s298, %s299
    %p311 = scmp.eq.s32.totalorder %s27, 1
    %p312 = por %p310, %p311
    %p314 = scmp.ne.s32.totalorder %s299, %s313
    %p315 = scmp.eq.s32.totalorder %s27, 0
    %p316 = por %p314, %p315
    %s318 = sadd.s32 %s317, 1
    %p321 = scmp.eq.s32.totalorder %s21, 1
    %p322 = scmp.ne.s32.totalorder %s317, %s319
    %p323 = scmp.eq.s32.totalorder %s21, 0
    %p324 = por %p322, %p323
    %p325 = scmp.ne.s32.totalorder %s317, %s319
    %p326 = scmp.eq.s32.totalorder %s26, 1
    %p327 = por %p325, %p326
    %p328 = scmp.ne.s32.totalorder %s319, %s320
    %p329 = scmp.eq.s32.totalorder %s26, 0
    %p330 = por %p328, %p329
    %p331 = scmp.ne.s32.totalorder %s319, %s320
    %p332 = scmp.eq.s32.totalorder %s27, 1
    %p333 = por %p331, %p332
    %p335 = scmp.ne.s32.totalorder %s320, %s334
    %p336 = scmp.eq.s32.totalorder %s27, 0
    %p337 = por %p335, %p336
    %s339 = sadd.s32 %s338, 1
    %p342 = scmp.eq.s32.totalorder %s21, 1
    %p343 = scmp.ne.s32.totalorder %s338, %s340
    %p344 = scmp.eq.s32.totalorder %s21, 0
    %p345 = por %p343, %p344
    %p346 = scmp.ne.s32.totalorder %s338, %s340
    %p347 = scmp.eq.s32.totalorder %s26, 1
    %p348 = por %p346, %p347
    %p349 = scmp.ne.s32.totalorder %s340, %s341
    %p350 = scmp.eq.s32.totalorder %s26, 0
    %p351 = por %p349, %p350
    %p352 = scmp.ne.s32.totalorder %s340, %s341
    %p353 = scmp.eq.s32.totalorder %s27, 1
    %p354 = por %p352, %p353
    %p356 = scmp.ne.s32.totalorder %s341, %s355
    %p357 = scmp.eq.s32.totalorder %s27, 0
    %p358 = por %p356, %p357
    %s359 = ssub.s32 %s21, %s28
    %p360 = scmp.eq.s32.totalorder %s359, 0
    %s362 = sadd.s32 %s361, 1
    %s363 = scalar_select %p360, %s361, %s362
    %p366 = pneg %p360
    %p367 = scmp.eq.s32.totalorder %s21, 1
    %p368 = por %p366, %p367
    %p369 = scmp.ne.s32.totalorder %s361, %s364
    %p370 = scmp.eq.s32.totalorder %s21, 0
    %p371 = por %p369, %p370
    %p372 = scmp.ne.s32.totalorder %s361, %s364
    %p373 = scmp.eq.s32.totalorder %s26, 1
    %p374 = por %p372, %p373
    %p375 = scmp.ne.s32.totalorder %s364, %s365
    %p376 = scmp.eq.s32.totalorder %s26, 0
    %p377 = por %p375, %p376
    %p378 = scmp.ne.s32.totalorder %s364, %s365
    %p379 = scmp.eq.s32.totalorder %s27, 1
    %p380 = por %p378, %p379
    %p382 = scmp.ne.s32.totalorder %s365, %s381
    %p383 = scmp.eq.s32.totalorder %s27, 0
    %p384 = por %p382, %p383
    %p385 = scmp.le.s32.totalorder 1, %s21
    %p386 = scmp.lt.s32.totalorder %s21, 3
    %p387 = pnand %p385, %p386
    %p388 = pneg %p387
    // Predicated region
    $region9: #{_lambda_.8} parent=5 // pred_check
      _
    $region10: #{_lambda_.8} parent=5 // pred_check_branch
      %390 = sbr.rel (%p387) target = $region12
    $region11: #{_lambda_.8} parent=5 // pred_region
      %s391 = ssub.s32 %s21, 1
      // Predicated region
      $region13: #{_lambda_.8} parent=11 // pred_check
        %p392 = pneg %p120
      $region14: #{_lambda_.8} parent=11 // pred_check_branch
        %394 = sbr.rel (%p392) target = $region16
      $region15: #{_lambda_.8} parent=11 // pred_region
        _
      $region16: #{_lambda_.8} parent=11 // pred_fallthru
        _
      // Predicated region
      $region17: #{_lambda_.8} parent=11 // pred_check
        %p395 = pneg %p141
      $region18: #{_lambda_.8} parent=11 // pred_check_branch
        %397 = sbr.rel (%p395) target = $region20
      $region19: #{_lambda_.8} parent=11 // pred_region
        _
      $region20: #{_lambda_.8} parent=11 // pred_fallthru
        _
      // Predicated region
      $region21: #{_lambda_.8} parent=11 // pred_check
        %p398 = pneg %p162
      $region22: #{_lambda_.8} parent=11 // pred_check_branch
        %400 = sbr.rel (%p398) target = $region24
      $region23: #{_lambda_.8} parent=11 // pred_region
        _
      $region24: #{_lambda_.8} parent=11 // pred_fallthru
        _
      // Predicated region
      $region25: #{_lambda_.8} parent=11 // pred_check
        %p401 = pneg %p183
      $region26: #{_lambda_.8} parent=11 // pred_check_branch
        %403 = sbr.rel (%p401) target = $region28
      $region27: #{_lambda_.8} parent=11 // pred_region
        _
      $region28: #{_lambda_.8} parent=11 // pred_fallthru
        _
      // Predicated region
      $region29: #{_lambda_.8} parent=11 // pred_check
        %p404 = pneg %p204
      $region30: #{_lambda_.8} parent=11 // pred_check_branch
        %406 = sbr.rel (%p404) target = $region32
      $region31: #{_lambda_.8} parent=11 // pred_region
        _
      $region32: #{_lambda_.8} parent=11 // pred_fallthru
        _
      // Predicated region
      $region33: #{_lambda_.8} parent=11 // pred_check
        %p407 = pneg %p225
      $region34: #{_lambda_.8} parent=11 // pred_check_branch
        %409 = sbr.rel (%p407) target = $region36
      $region35: #{_lambda_.8} parent=11 // pred_region
        _
      $region36: #{_lambda_.8} parent=11 // pred_fallthru
        _
      // Predicated region
      $region37: #{_lambda_.8} parent=11 // pred_check
        %p410 = pneg %p246
      $region38: #{_lambda_.8} parent=11 // pred_check_branch
        %412 = sbr.rel (%p410) target = $region40
      $region39: #{_lambda_.8} parent=11 // pred_region
        _
      $region40: #{_lambda_.8} parent=11 // pred_fallthru
        _
      // Predicated region
      $region41: #{_lambda_.8} parent=11 // pred_check
        %p413 = pneg %p267
      $region42: #{_lambda_.8} parent=11 // pred_check_branch
        %415 = sbr.rel (%p413) target = $region44
      $region43: #{_lambda_.8} parent=11 // pred_region
        _
      $region44: #{_lambda_.8} parent=11 // pred_fallthru
        _
      // Predicated region
      $region45: #{_lambda_.8} parent=11 // pred_check
        %p416 = pneg %p288
      $region46: #{_lambda_.8} parent=11 // pred_check_branch
        %418 = sbr.rel (%p416) target = $region48
      $region47: #{_lambda_.8} parent=11 // pred_region
        _
      $region48: #{_lambda_.8} parent=11 // pred_fallthru
        _
      // Predicated region
      $region49: #{_lambda_.8} parent=11 // pred_check
        %p419 = pneg %p309
      $region50: #{_lambda_.8} parent=11 // pred_check_branch
        %421 = sbr.rel (%p419) target = $region52
      $region51: #{_lambda_.8} parent=11 // pred_region
        _
      $region52: #{_lambda_.8} parent=11 // pred_fallthru
        _
      // Predicated region
      $region53: #{_lambda_.8} parent=11 // pred_check
        %p422 = pneg %p330
      $region54: #{_lambda_.8} parent=11 // pred_check_branch
        %424 = sbr.rel (%p422) target = $region56
      $region55: #{_lambda_.8} parent=11 // pred_region
        _
      $region56: #{_lambda_.8} parent=11 // pred_fallthru
        _
      // Predicated region
      $region57: #{_lambda_.8} parent=11 // pred_check
        %p425 = pneg %p351
      $region58: #{_lambda_.8} parent=11 // pred_check_branch
        %427 = sbr.rel (%p425) target = $region60
      $region59: #{_lambda_.8} parent=11 // pred_region
        _
      $region60: #{_lambda_.8} parent=11 // pred_fallthru
        _
    $region12: #{_lambda_.8} parent=5 // pred_fallthru
      _
    %p428 = scmp.lt.s32.totalorder %s21, 2
    // Predicated region
    $region61: #{_lambda_.8} parent=5 // pred_check
      %p429 = pneg %p428
    $region62: #{_lambda_.8} parent=5 // pred_check_branch
      %431 = sbr.rel (%p429) target = $region64
    $region63: #{_lambda_.8} parent=5 // pred_region
      // Predicated region
      $region65: #{_lambda_.8} parent=63 // pred_check
        %p432 = pneg %p41
      $region66: #{_lambda_.8} parent=63 // pred_check_branch
        %434 = sbr.rel (%p432) target = $region68
      $region67: #{_lambda_.8} parent=63 // pred_region
        %p435 = scmp.lt.s32.totalorder %s21, 1
        %s436 = scalar_select %p435, %s21, 1
        %s437 = smul.addr %s436, 2
        %s438 = smul.addr %s437, 8
        %s439 = scalar_lea.vmem %s0, %s438
      $region68: #{_lambda_.8} parent=63 // pred_fallthru
        _
      // Predicated region
      $region69: #{_lambda_.8} parent=63 // pred_check
        %p440 = pneg %p67
      $region70: #{_lambda_.8} parent=63 // pred_check_branch
        %442 = sbr.rel (%p440) target = $region72
      $region71: #{_lambda_.8} parent=63 // pred_region
        %p443 = scmp.lt.s32.totalorder %s21, 1
        %s444 = scalar_select %p443, %s21, 1
        %s445 = scalar_lea.vmem %s1, %s444
      $region72: #{_lambda_.8} parent=63 // pred_fallthru
        _
      // Predicated region
      $region73: #{_lambda_.8} parent=63 // pred_check
        %p446 = pneg %p93
      $region74: #{_lambda_.8} parent=63 // pred_check_branch
        %448 = sbr.rel (%p446) target = $region76
      $region75: #{_lambda_.8} parent=63 // pred_region
        %p449 = scmp.lt.s32.totalorder %s21, 1
        %s450 = scalar_select %p449, %s21, 1
        %s451 = smul.addr %s450, 2
        %s452 = smul.addr %s451, 8
        %s453 = scalar_lea.vmem %s2, %s452
      $region76: #{_lambda_.8} parent=63 // pred_fallthru
        _
    $region64: #{_lambda_.8} parent=5 // pred_fallthru
      _
    %p454 = scmp.le.s32.totalorder 1, %s21
    %p455 = scmp.lt.s32.totalorder %s21, 3
    %p456 = pnand %p454, %p455
    %p457 = pneg %p456
    // Predicated region
    $region77: #{_lambda_.8} parent=5 // pred_check
      _
    $region78: #{_lambda_.8} parent=5 // pred_check_branch
      %459 = sbr.rel (%p456) target = $region80
    $region79: #{_lambda_.8} parent=5 // pred_region
      %s460 = ssub.s32 %s21, 1
      %p461 = scmp.lt.s32.totalorder %s26, 1
      %s462 = scalar_select %p461, %s26, 1
      %s463 = smul.addr %s462, 2
      %s464 = smul.addr %s463, 8
      %s465 = scalar_lea.vmem %s0, %s464
      %p466 = pneg %p47
      %p467 = pneg %p44
      %p468 = scmp.lt.s32.totalorder %s26, 1
      %s469 = scalar_select %p468, %s26, 1
      %s470 = scalar_lea.vmem %s1, %s469
      %p471 = pneg %p73
      %p472 = pneg %p70
      %p473 = scmp.lt.s32.totalorder %s26, 1
      %s474 = scalar_select %p473, %s26, 1
      %s475 = smul.addr %s474, 2
      %s476 = smul.addr %s475, 8
      %s477 = scalar_lea.vmem %s2, %s476
      %p478 = pneg %p99
      %p479 = pneg %p96
      %p480 = pneg %p120
      %p481 = pneg %p117
      %p482 = pneg %p141
      %p483 = pneg %p138
      %p484 = pneg %p162
      %p485 = pneg %p159
      %p486 = pneg %p183
      %p487 = pneg %p180
      %p488 = pneg %p204
      %p489 = pneg %p201
      %p490 = pneg %p225
      %p491 = pneg %p222
      %p492 = pneg %p246
      %p493 = pneg %p243
      %p494 = pneg %p267
      %p495 = pneg %p264
      %p496 = pneg %p288
      %p497 = pneg %p285
      %p498 = pneg %p309
      %p499 = pneg %p306
      %p500 = pneg %p330
      %p501 = pneg %p327
      %p502 = pneg %p351
      %p503 = pneg %p348
      %p504 = pneg %p377
      %p505 = pneg %p374
      %p506 = scmp.lt.s32.totalorder %s26, 1
      %s507 = scalar_select %p506, %s26, 1
      %s508 = smul.addr %s507, 2
      %s509 = smul.addr %s508, 8
      %s510 = scalar_lea.vmem %s15, %s509
      %p511 = scmp.lt.s32.totalorder %s26, 1
      %s512 = scalar_select %p511, %s26, 1
      %s513 = smul.addr %s512, 2
      %s514 = smul.addr %s513, 8
      %s515 = scalar_lea.vmem %s0, %s514
      %p516 = scmp.lt.s32.totalorder %s26, 1
      %s517 = scalar_select %p516, %s26, 1
      %s518 = scalar_lea.vmem %s1, %s517
      %p519 = scmp.lt.s32.totalorder %s26, 1
      %s520 = scalar_select %p519, %s26, 1
      %s521 = smul.addr %s520, 2
      %s522 = smul.addr %s521, 8
      %s523 = scalar_lea.vmem %s2, %s522
      %p524 = scmp.lt.s32.totalorder %s26, 1
      %s525 = scalar_select %p524, %s26, 1
      %s526 = smul.addr %s525, 2
      %s527 = smul.addr %s526, 8
      %s528 = scalar_lea.vmem %s15, %s527
      %v530 = vld [vmem:[%s515] sm:$0xff]
      %v531 = vld [vmem:[%s515 + $0x8] sm:$0xff]
      %v532 = vld [vmem:[%s518] sm:$0x1]
      %v533 = vld [vmem:[%s523] sm:$0xff]
      %v534 = vld [vmem:[%s523 + $0x8] sm:$0xff]
      %v535 = vld [vmem:[%s3] sm:$0xff]
      %v536 = vld [vmem:[%s3 + $0x8] sm:$0xff]
      %v537 = vld [vmem:[%s3 + $0x10] sm:$0xff]
      %v538 = vld [vmem:[%s3 + $0x18] sm:$0xff]
      %v539 = vpack.c.bf16 %v531, %v530
      %v540 = vpack.c.bf16 %v536, %v535
      %v541 = vpack.c.bf16 %v538, %v537
      %v542 = vld [vmem:[%s4] sm:$0x1]
      %v544 = vlaneseq
      %v545 = vshrl.u32 %v544, 7
      %v546 = vsub.s32 0, %v545
      %v547 = vrot.slane %v542, %v546
      %vm549 = vcmask 261120
      %v551 = vsel %vm549, %v539, 0
      %553 = vmatprep.subr.bf16.mxu0 0
      %554 = vmatpush1.bf16.msra.mxu0 0
      %555 = vmatprep.subr.bf16.mxu0 0
      %556 = vmatpush1.bf16.msra.mxu0 0
      %557 = vmatprep.subr.bf16.mxu0 0
      %558 = vmatpush1.bf16.msra.mxu0 0
      %559 = vmatprep.subr.bf16.mxu0 0
      %560 = vmatpush1.bf16.msra.mxu0 0
      %561 = vmatprep.subr.bf16.mxu0 0
      %562 = vmatpush1.bf16.msra.mxu0 0
      %563 = vmatprep.subr.bf16.mxu0 0
      %564 = vmatpush1.bf16.msra.mxu0 0
      %565 = vmatprep.subr.bf16.mxu0 0
      %566 = vmatpush1.bf16.msra.mxu0 %v541
      %567 = vmatprep.subr.bf16.mxu0 0
      %568 = vmatpush1.bf16.msra.mxu0 %v540
      %569 = vmatprep.subr.bf16.mxu0 0
      %570 = vmatpush2.bf16.msra.mxu0 0
      %571 = vmatprep.subr.bf16.mxu0 0
      %572 = vmatpush2.bf16.msra.mxu0 0
      %573 = vmatprep.subr.bf16.mxu0 0
      %574 = vmatpush2.bf16.msra.mxu0 0
      %575 = vmatprep.subr.bf16.mxu0 0
      %576 = vmatpush2.bf16.msra.mxu0 0
      %577 = vmatprep.subr.bf16.mxu0 0
      %578 = vmatpush2.bf16.msra.mxu0 0
      %579 = vmatprep.subr.bf16.mxu0 0
      %580 = vmatpush2.bf16.msra.mxu0 0
      %581 = vmatprep.subr.bf16.mxu0 0
      %582 = vmatpush2.bf16.msra.mxu0 0
      %583 = vmatprep.subr.bf16.mxu0 0
      %584 = vmatpush2.bf16.msra.mxu0 0
      %585 = vmatprep.mubr.bf16.mxu0 0
      %586 = vmatmul.mubr.bf16.gmra.mxu0 %v551
      %v587 = vpop.f32.mrf.mxu0
      %v588 = vadd.f32 %v547, %v587
      %v589 = vpop.f32.mrf.mxu0
      %v590 = vpop.f32.mrf.mxu0
      %v591 = vadd.f32 %v547, %v590
      %v592 = vpop.f32.mrf.mxu0
      %593 = vdwg.mxu0
      %v594 = vpack.c.bf16 %v591, %v588
      %596 = vrot.lane.b32.xlu0 %v594, 96
      %v597 = vpop.permute.xlu0 %596
      %vm598 = vcmask 130048
      %v600 = vsel %vm598, %v594, 0
      %v603 = vsel %vm598, %v597, 0
      %605 = vmatprep.subr.bf16.mxu0 0
      %606 = vmatpush1.bf16.xpose.msra.mxu0 0
      %607 = vmatprep.subr.bf16.mxu0 0
      %608 = vmatpush1.bf16.xpose.msra.mxu0 0
      %609 = vmatprep.subr.bf16.mxu0 0
      %610 = vmatpush1.bf16.xpose.msra.mxu0 0
      %611 = vmatprep.subr.bf16.mxu0 0
      %612 = vmatpush1.bf16.xpose.msra.mxu0 0
      %613 = vmatprep.subr.bf16.mxu0 0
      %614 = vmatpush1.bf16.xpose.msra.mxu0 0
      %615 = vmatprep.subr.bf16.mxu0 0
      %616 = vmatpush1.bf16.xpose.msra.mxu0 0
      %617 = vmatprep.subr.bf16.mxu0 0
      %618 = vmatpush1.bf16.xpose.msra.mxu0 0
      %619 = vmatprep.subr.bf16.mxu0 0
      %620 = vmatpush1.bf16.xpose.msra.mxu0 %v603
      %621 = vmatprep.subr.bf16.mxu0 0
      %622 = vmatpush2.bf16.xpose.msra.mxu0 0
      %623 = vmatprep.subr.bf16.mxu0 0
      %624 = vmatpush2.bf16.xpose.msra.mxu0 0
      %625 = vmatprep.subr.bf16.mxu0 0
      %626 = vmatpush2.bf16.xpose.msra.mxu0 0
      %627 = vmatprep.subr.bf16.mxu0 0
      %628 = vmatpush2.bf16.xpose.msra.mxu0 0
      %629 = vmatprep.subr.bf16.mxu0 0
      %630 = vmatpush2.bf16.xpose.msra.mxu0 0
      %631 = vmatprep.subr.bf16.mxu0 0
      %632 = vmatpush2.bf16.xpose.msra.mxu0 0
      %633 = vmatprep.subr.bf16.mxu0 0
      %634 = vmatpush2.bf16.xpose.msra.mxu0 0
      %635 = vmatprep.subr.bf16.mxu0 0
      %636 = vmatpush2.bf16.xpose.msra.mxu0 0
      %637 = vmatprep.mubr.bf16.mxu0 0
      %638 = vmatmul.mubr.bf16.gmra.mxu0 %v600
      %v639 = vpop.f32.mrf.mxu0
      %v640 = vadd.f32 0.0, %v639
      %v641 = vpop.f32.mrf.mxu0
      %v642 = vpop.f32.mrf.mxu0
      %v643 = vadd.f32 0.0, %v642
      %v644 = vpop.f32.mrf.mxu0
      %645 = vdwg.mxu0
      %v646 = vmul.f32 %v640, 0.25
      %v647 = vmul.f32 %v643, 0.25
      %v649 = vlaneseq
      %v650 = vshrl.u32 %v649, 7
      %v651 = vsub.s32 0, %v650
      %v652 = vrot.slane %v532, %v651
      %v654 = vadd.f32 %v646, %v652
      %v655 = vadd.f32 %v647, %v652
      %v656 = vsel %vm598, %v654, -inf
      %657 = vmax.xlane.f32.xlu0 %v656
      %v658 = vpop.xlane.xlu0 %657
      %v659 = vsel %vm598, %v655, -inf
      %660 = vmax.xlane.f32.xlu0 %v659
      %v661 = vpop.xlane.xlu0 %660
      %v662 = vsub.f32 %v654, %v658
      %v663 = vsub.f32 %v655, %v661
      %v664 = vmul.f32 %v662, 1.442695
      %v665 = vpow.pop %v664
      %v666 = vmul.f32 %v663, 1.442695
      %v667 = vpow.pop %v666
      %v668 = vsel %vm598, %v665, 0.0
      %669 = vadd.xlane.f32.xlu0 %v668
      %v670 = vpop.xlane.xlu0 %669
      %v671 = vsel %vm598, %v667, 0.0
      %672 = vadd.xlane.f32.xlu0 %v671
      %v673 = vpop.xlane.xlu0 %672
      %v674 = vrcp.pop %v670
      %v675 = vrcp.pop %v673
      %v676 = vmul.f32 %v665, %v674
      %v677 = vmul.f32 %v667, %v675
      %v678 = vpack.c.bf16 %v677, %v676
      %679 = vrot.lane.b32.xlu0 %v594, 64
      %v680 = vpop.permute.xlu0 %679
      %v683 = vsel %vm598, %v678, 0
      %685 = vmatprep.subr.bf16.mxu0 0
      %686 = vmatpush1.bf16.msra.mxu0 0
      %687 = vmatprep.subr.bf16.mxu0 0
      %688 = vmatpush1.bf16.msra.mxu0 0
      %689 = vmatprep.subr.bf16.mxu0 0
      %690 = vmatpush1.bf16.msra.mxu0 0
      %691 = vmatprep.subr.bf16.mxu0 0
      %692 = vmatpush1.bf16.msra.mxu0 0
      %693 = vmatprep.subr.bf16.mxu0 0
      %694 = vmatpush1.bf16.msra.mxu0 0
      %695 = vmatprep.subr.bf16.mxu0 0
      %696 = vmatpush1.bf16.msra.mxu0 0
      %697 = vmatprep.subr.bf16.mxu0 0
      %698 = vmatpush1.bf16.msra.mxu0 0
      %699 = vmatprep.subr.bf16.mxu0 0
      %700 = vmatpush1.bf16.msra.mxu0 %v680
      %701 = vmatprep.subr.bf16.mxu0 0
      %702 = vmatpush2.bf16.msra.mxu0 0
      %703 = vmatprep.subr.bf16.mxu0 0
      %704 = vmatpush2.bf16.msra.mxu0 0
      %705 = vmatprep.subr.bf16.mxu0 0
      %706 = vmatpush2.bf16.msra.mxu0 0
      %707 = vmatprep.subr.bf16.mxu0 0
      %708 = vmatpush2.bf16.msra.mxu0 0
      %709 = vmatprep.subr.bf16.mxu0 0
      %710 = vmatpush2.bf16.msra.mxu0 0
      %711 = vmatprep.subr.bf16.mxu0 0
      %712 = vmatpush2.bf16.msra.mxu0 0
      %713 = vmatprep.subr.bf16.mxu0 0
      %714 = vmatpush2.bf16.msra.mxu0 0
      %715 = vmatprep.subr.bf16.mxu0 0
      %716 = vmatpush2.bf16.msra.mxu0 0
      %717 = vmatprep.mubr.bf16.mxu0 0
      %718 = vmatmul.mubr.bf16.gmra.mxu0 %v683
      %v719 = vpop.f32.mrf.mxu0
      %v720 = vadd.f32 0.0, %v719
      %v721 = vpop.f32.mrf.mxu0
      %v722 = vpop.f32.mrf.mxu0
      %v723 = vadd.f32 0.0, %v722
      %v724 = vpop.f32.mrf.mxu0
      %725 = vdwg.mxu0
      %726 = vrot.lane.b32.xlu0 %v594, 112
      %v727 = vpop.permute.xlu0 %726
      %728 = vrot.lane.b32.xlu0 %v594, 80
      %v729 = vpop.permute.xlu0 %728
      %v731 = vsel %vm598, %v727, 0
      %v734 = vsel %vm598, %v729, 0
      %736 = vmatprep.subr.bf16.mxu0 0
      %737 = vmatpush1.bf16.xpose.msra.mxu0 0
      %738 = vmatprep.subr.bf16.mxu0 0
      %739 = vmatpush1.bf16.xpose.msra.mxu0 0
      %740 = vmatprep.subr.bf16.mxu0 0
      %741 = vmatpush1.bf16.xpose.msra.mxu0 0
      %742 = vmatprep.subr.bf16.mxu0 0
      %743 = vmatpush1.bf16.xpose.msra.mxu0 0
      %744 = vmatprep.subr.bf16.mxu0 0
      %745 = vmatpush1.bf16.xpose.msra.mxu0 0
      %746 = vmatprep.subr.bf16.mxu0 0
      %747 = vmatpush1.bf16.xpose.msra.mxu0 0
      %748 = vmatprep.subr.bf16.mxu0 0
      %749 = vmatpush1.bf16.xpose.msra.mxu0 0
      %750 = vmatprep.subr.bf16.mxu0 0
      %751 = vmatpush1.bf16.xpose.msra.mxu0 %v734
      %752 = vmatprep.subr.bf16.mxu0 0
      %753 = vmatpush2.bf16.xpose.msra.mxu0 0
      %754 = vmatprep.subr.bf16.mxu0 0
      %755 = vmatpush2.bf16.xpose.msra.mxu0 0
      %756 = vmatprep.subr.bf16.mxu0 0
      %757 = vmatpush2.bf16.xpose.msra.mxu0 0
      %758 = vmatprep.subr.bf16.mxu0 0
      %759 = vmatpush2.bf16.xpose.msra.mxu0 0
      %760 = vmatprep.subr.bf16.mxu0 0
      %761 = vmatpush2.bf16.xpose.msra.mxu0 0
      %762 = vmatprep.subr.bf16.mxu0 0
      %763 = vmatpush2.bf16.xpose.msra.mxu0 0
      %764 = vmatprep.subr.bf16.mxu0 0
      %765 = vmatpush2.bf16.xpose.msra.mxu0 0
      %766 = vmatprep.subr.bf16.mxu0 0
      %767 = vmatpush2.bf16.xpose.msra.mxu0 0
      %768 = vmatprep.mubr.bf16.mxu0 0
      %769 = vmatmul.mubr.bf16.gmra.mxu0 %v731
      %v770 = vpop.f32.mrf.mxu0
      %v771 = vadd.f32 0.0, %v770
      %v772 = vpop.f32.mrf.mxu0
      %v773 = vpop.f32.mrf.mxu0
      %v774 = vadd.f32 0.0, %v773
      %v775 = vpop.f32.mrf.mxu0
      %776 = vdwg.mxu0
      %v777 = vmul.f32 %v771, 0.25
      %v778 = vmul.f32 %v774, 0.25
      %v779 = vadd.f32 %v777, %v652
      %v780 = vadd.f32 %v778, %v652
      %v781 = vsel %vm598, %v779, -inf
      %782 = vmax.xlane.f32.xlu0 %v781
      %v783 = vpop.xlane.xlu0 %782
      %v784 = vsel %vm598, %v780, -inf
      %785 = vmax.xlane.f32.xlu0 %v784
      %v786 = vpop.xlane.xlu0 %785
      %v787 = vsub.f32 %v779, %v783
      %v788 = vsub.f32 %v780, %v786
      %v789 = vmul.f32 %v787, 1.442695
      %v790 = vpow.pop %v789
      %v791 = vmul.f32 %v788, 1.442695
      %v792 = vpow.pop %v791
      %v793 = vsel %vm598, %v790, 0.0
      %794 = vadd.xlane.f32.xlu0 %v793
      %v795 = vpop.xlane.xlu0 %794
      %v796 = vsel %vm598, %v792, 0.0
      %797 = vadd.xlane.f32.xlu0 %v796
      %v798 = vpop.xlane.xlu0 %797
      %v799 = vrcp.pop %v795
      %v800 = vrcp.pop %v798
      %v801 = vmul.f32 %v790, %v799
      %v802 = vmul.f32 %v792, %v800
      %v803 = vpack.c.bf16 %v802, %v801
      %804 = vrot.lane.b32.xlu0 %v594, 48
      %v805 = vpop.permute.xlu0 %804
      %v808 = vsel %vm598, %v803, 0
      %810 = vmatprep.subr.bf16.mxu0 0
      %811 = vmatpush1.bf16.msra.mxu0 0
      %812 = vmatprep.subr.bf16.mxu0 0
      %813 = vmatpush1.bf16.msra.mxu0 0
      %814 = vmatprep.subr.bf16.mxu0 0
      %815 = vmatpush1.bf16.msra.mxu0 0
      %816 = vmatprep.subr.bf16.mxu0 0
      %817 = vmatpush1.bf16.msra.mxu0 0
      %818 = vmatprep.subr.bf16.mxu0 0
      %819 = vmatpush1.bf16.msra.mxu0 0
      %820 = vmatprep.subr.bf16.mxu0 0
      %821 = vmatpush1.bf16.msra.mxu0 0
      %822 = vmatprep.subr.bf16.mxu0 0
      %823 = vmatpush1.bf16.msra.mxu0 0
      %824 = vmatprep.subr.bf16.mxu0 0
      %825 = vmatpush1.bf16.msra.mxu0 %v805
      %826 = vmatprep.subr.bf16.mxu0 0
      %827 = vmatpush2.bf16.msra.mxu0 0
      %828 = vmatprep.subr.bf16.mxu0 0
      %829 = vmatpush2.bf16.msra.mxu0 0
      %830 = vmatprep.subr.bf16.mxu0 0
      %831 = vmatpush2.bf16.msra.mxu0 0
      %832 = vmatprep.subr.bf16.mxu0 0
      %833 = vmatpush2.bf16.msra.mxu0 0
      %834 = vmatprep.subr.bf16.mxu0 0
      %835 = vmatpush2.bf16.msra.mxu0 0
      %836 = vmatprep.subr.bf16.mxu0 0
      %837 = vmatpush2.bf16.msra.mxu0 0
      %838 = vmatprep.subr.bf16.mxu0 0
      %839 = vmatpush2.bf16.msra.mxu0 0
      %840 = vmatprep.subr.bf16.mxu0 0
      %841 = vmatpush2.bf16.msra.mxu0 0
      %842 = vmatprep.mubr.bf16.mxu0 0
      %843 = vmatmul.mubr.bf16.gmra.mxu0 %v808
      %v844 = vpop.f32.mrf.mxu0
      %v845 = vadd.f32 0.0, %v844
      %v846 = vpop.f32.mrf.mxu0
      %v847 = vpop.f32.mrf.mxu0
      %v848 = vadd.f32 0.0, %v847
      %v849 = vpop.f32.mrf.mxu0
      %850 = vdwg.mxu0
      %853 = vrot.lane.b32.xlu0 %v845, 16
      %v854 = vpop.permute.xlu0 %853
      %855 = vrot.lane.b32.xlu0 %v848, 16
      %v856 = vpop.permute.xlu0 %855
      %v859 = vsel %vm598, %v720, %v854
      %v860 = vsel %vm598, %v723, %v856
      %v861 = vld [vmem:[%s5] sm:$0xff]
      %v862 = vld [vmem:[%s5 + $0x8] sm:$0xff]
      %v863 = vld [vmem:[%s5 + $0x10] sm:$0xff]
      %v864 = vld [vmem:[%s5 + $0x18] sm:$0xff]
      %v865 = vpack.c.bf16 %v860, %v859
      %v866 = vpack.c.bf16 %v862, %v861
      %v867 = vpack.c.bf16 %v864, %v863
      %v868 = vld [vmem:[%s6] sm:$0x1]
      %v870 = vlaneseq
      %v871 = vshrl.u32 %v870, 7
      %v872 = vsub.s32 0, %v871
      %v873 = vrot.slane %v868, %v872
      %v876 = vsel %vm549, %v865, 0
      %878 = vmatprep.subr.bf16.mxu0 0
      %879 = vmatpush1.bf16.msra.mxu0 0
      %880 = vmatprep.subr.bf16.mxu0 0
      %881 = vmatpush1.bf16.msra.mxu0 0
      %882 = vmatprep.subr.bf16.mxu0 0
      %883 = vmatpush1.bf16.msra.mxu0 0
      %884 = vmatprep.subr.bf16.mxu0 0
      %885 = vmatpush1.bf16.msra.mxu0 0
      %886 = vmatprep.subr.bf16.mxu0 0
      %887 = vmatpush1.bf16.msra.mxu0 0
      %888 = vmatprep.subr.bf16.mxu0 0
      %889 = vmatpush1.bf16.msra.mxu0 0
      %890 = vmatprep.subr.bf16.mxu0 0
      %891 = vmatpush1.bf16.msra.mxu0 %v867
      %892 = vmatprep.subr.bf16.mxu0 0
      %893 = vmatpush1.bf16.msra.mxu0 %v866
      %894 = vmatprep.subr.bf16.mxu0 0
      %895 = vmatpush2.bf16.msra.mxu0 0
      %896 = vmatprep.subr.bf16.mxu0 0
      %897 = vmatpush2.bf16.msra.mxu0 0
      %898 = vmatprep.subr.bf16.mxu0 0
      %899 = vmatpush2.bf16.msra.mxu0 0
      %900 = vmatprep.subr.bf16.mxu0 0
      %901 = vmatpush2.bf16.msra.mxu0 0
      %902 = vmatprep.subr.bf16.mxu0 0
      %903 = vmatpush2.bf16.msra.mxu0 0
      %904 = vmatprep.subr.bf16.mxu0 0
      %905 = vmatpush2.bf16.msra.mxu0 0
      %906 = vmatprep.subr.bf16.mxu0 0
      %907 = vmatpush2.bf16.msra.mxu0 0
      %908 = vmatprep.subr.bf16.mxu0 0
      %909 = vmatpush2.bf16.msra.mxu0 0
      %910 = vmatprep.mubr.bf16.mxu0 0
      %911 = vmatmul.mubr.bf16.gmra.mxu0 %v876
      %v912 = vpop.f32.mrf.mxu0
      %v913 = vadd.f32 %v873, %v912
      %v914 = vpop.f32.mrf.mxu0
      %v915 = vpop.f32.mrf.mxu0
      %v916 = vadd.f32 %v873, %v915
      %v917 = vpop.f32.mrf.mxu0
      %918 = vdwg.mxu0
      %v919 = vadd.f32 %v913, %v530
      %v920 = vadd.f32 %v916, %v531
      %v921 = vld [vmem:[%s7] sm:$0x1]
      %v922 = vld [vmem:[%s8] sm:$0x1]
      %v923 = vsel %vm549, %v919, 0.0
      %924 = vadd.xlane.f32.xlu0 %v923
      %v925 = vpop.xlane.xlu0 %924
      %v926 = vsel %vm549, %v920, 0.0
      %927 = vadd.xlane.f32.xlu0 %v926
      %v928 = vpop.xlane.xlu0 %927
      %v929 = vrcp.pop 32.0
      %v930 = vmul.f32 %v925, %v929
      %v931 = vmul.f32 %v928, %v929
      %v932 = vsub.f32 %v919, %v930
      %v933 = vsub.f32 %v920, %v931
      %v934 = vmul.f32 %v932, %v932
      %v935 = vmul.f32 %v933, %v933
      %v936 = vsel %vm549, %v934, 0.0
      %937 = vadd.xlane.f32.xlu0 %v936
      %v938 = vpop.xlane.xlu0 %937
      %v939 = vsel %vm549, %v935, 0.0
      %940 = vadd.xlane.f32.xlu0 %v939
      %v941 = vpop.xlane.xlu0 %940
      %v942 = vmul.f32 %v938, %v929
      %v943 = vmul.f32 %v941, %v929
      %v944 = vadd.f32 %v942, 1e-05
      %v945 = vadd.f32 %v943, 1e-05
      %v946 = vrsqrt.pop %v944
      %v947 = vrsqrt.pop %v945
      %v948 = vmul.f32 %v932, %v946
      %v949 = vmul.f32 %v933, %v947
      %v951 = vlaneseq
      %v952 = vshrl.u32 %v951, 7
      %v953 = vsub.s32 0, %v952
      %v954 = vrot.slane %v921, %v953
      %v956 = vmul.f32 %v948, %v954
      %v957 = vmul.f32 %v949, %v954
      %v959 = vlaneseq
      %v960 = vshrl.u32 %v959, 7
      %v961 = vsub.s32 0, %v960
      %v962 = vrot.slane %v922, %v961
      %v964 = vadd.f32 %v956, %v962
      %v965 = vadd.f32 %v957, %v962
      %967 = vset.pattern.permute.xlu0 0
      %968 = vperm.xlu0 %967, %v533
      %v969 = vpop.permute.xlu0 %968
      %972 = vset.pattern.permute.xlu0 0
      %973 = vperm.xlu0 %972, %v534
      %v974 = vpop.permute.xlu0 %973
      %v976 = vmul.f32 %v964, %v969
      %v977 = vmul.f32 %v965, %v974
      %v978 = vld [vmem:[%s9] sm:$0xff]
      %v979 = vld [vmem:[%s9 + $0x8] sm:$0xff]
      %v980 = vld [vmem:[%s9 + $0x10] sm:$0xff]
      %v981 = vld [vmem:[%s9 + $0x18] sm:$0xff]
      %v982 = vld [vmem:[%s9 + $0x20] sm:$0xff]
      %v983 = vld [vmem:[%s9 + $0x28] sm:$0xff]
      %v984 = vld [vmem:[%s9 + $0x30] sm:$0xff]
      %v985 = vld [vmem:[%s9 + $0x38] sm:$0xff]
      %v986 = vld [vmem:[%s9 + $0x40] sm:$0xff]
      %v987 = vld [vmem:[%s9 + $0x48] sm:$0xff]
      %v988 = vld [vmem:[%s9 + $0x50] sm:$0xff]
      %v989 = vld [vmem:[%s9 + $0x58] sm:$0xff]
      %v990 = vld [vmem:[%s10] sm:$0x1]
      %vm993 = vcmask 1040384
      %v994 = vrot.slane %v976, 7
      %v995 = vrot.slane %v977, 7
      %v996 = vsel %vm993, %v994, %v995
      %v999 = vsel %vm993, 0.0, %v994
      %v1000 = vpack.c.bf16 %v996, %v999
      %v1001 = vpack.c.bf16 %v979, %v978
      %v1002 = vpack.c.bf16 %v981, %v980
      %v1003 = vpack.c.bf16 %v977, %v976
      %v1004 = vpack.c.bf16 %v983, %v982
      %v1005 = vpack.c.bf16 %v985, %v984
      %v1007 = vsel %vm549, %v1003, 0
      %1009 = vmatprep.subr.bf16.mxu0 0
      %1010 = vmatpush1.bf16.msra.mxu0 0
      %1011 = vmatprep.subr.bf16.mxu0 0
      %1012 = vmatpush1.bf16.msra.mxu0 0
      %1013 = vmatprep.subr.bf16.mxu0 0
      %1014 = vmatpush1.bf16.msra.mxu0 0
      %1015 = vmatprep.subr.bf16.mxu0 0
      %1016 = vmatpush1.bf16.msra.mxu0 0
      %1017 = vmatprep.subr.bf16.mxu0 0
      %1018 = vmatpush1.bf16.msra.mxu0 0
      %1019 = vmatprep.subr.bf16.mxu0 0
      %1020 = vmatpush1.bf16.msra.mxu0 0
      %1021 = vmatprep.subr.bf16.mxu0 0
      %1022 = vmatpush1.bf16.msra.mxu0 %v1005
      %1023 = vmatprep.subr.bf16.mxu0 0
      %1024 = vmatpush1.bf16.msra.mxu0 %v1004
      %1025 = vmatprep.subr.bf16.mxu0 0
      %1026 = vmatpush2.bf16.msra.mxu0 0
      %1027 = vmatprep.subr.bf16.mxu0 0
      %1028 = vmatpush2.bf16.msra.mxu0 0
      %1029 = vmatprep.subr.bf16.mxu0 0
      %1030 = vmatpush2.bf16.msra.mxu0 0
      %1031 = vmatprep.subr.bf16.mxu0 0
      %1032 = vmatpush2.bf16.msra.mxu0 0
      %1033 = vmatprep.subr.bf16.mxu0 0
      %1034 = vmatpush2.bf16.msra.mxu0 0
      %1035 = vmatprep.subr.bf16.mxu0 0
      %1036 = vmatpush2.bf16.msra.mxu0 0
      %1037 = vmatprep.subr.bf16.mxu0 0
      %1038 = vmatpush2.bf16.msra.mxu0 0
      %1039 = vmatprep.subr.bf16.mxu0 0
      %1040 = vmatpush2.bf16.msra.mxu0 0
      %1041 = vmatprep.mubr.bf16.mxu0 0
      %1042 = vmatmul.mubr.bf16.gmra.mxu0 %v1007
      %v1043 = vpop.f32.mrf.mxu0
      %v1044 = vadd.f32 0.0, %v1043
      %v1045 = vpop.f32.mrf.mxu0
      %v1046 = vpop.f32.mrf.mxu0
      %v1047 = vadd.f32 0.0, %v1046
      %v1048 = vpop.f32.mrf.mxu0
      %1049 = vdwg.mxu0
      %v1051 = vsel %vm549, %v1000, 0
      %1053 = vmatprep.subr.bf16.mxu0 0
      %1054 = vmatpush1.bf16.msra.mxu0 0
      %1055 = vmatprep.subr.bf16.mxu0 0
      %1056 = vmatpush1.bf16.msra.mxu0 0
      %1057 = vmatprep.subr.bf16.mxu0 0
      %1058 = vmatpush1.bf16.msra.mxu0 0
      %1059 = vmatprep.subr.bf16.mxu0 0
      %1060 = vmatpush1.bf16.msra.mxu0 0
      %1061 = vmatprep.subr.bf16.mxu0 0
      %1062 = vmatpush1.bf16.msra.mxu0 0
      %1063 = vmatprep.subr.bf16.mxu0 0
      %1064 = vmatpush1.bf16.msra.mxu0 0
      %1065 = vmatprep.subr.bf16.mxu0 0
      %1066 = vmatpush1.bf16.msra.mxu0 %v1002
      %1067 = vmatprep.subr.bf16.mxu0 0
      %1068 = vmatpush1.bf16.msra.mxu0 %v1001
      %1069 = vmatprep.subr.bf16.mxu0 0
      %1070 = vmatpush2.bf16.msra.mxu0 0
      %1071 = vmatprep.subr.bf16.mxu0 0
      %1072 = vmatpush2.bf16.msra.mxu0 0
      %1073 = vmatprep.subr.bf16.mxu0 0
      %1074 = vmatpush2.bf16.msra.mxu0 0
      %1075 = vmatprep.subr.bf16.mxu0 0
      %1076 = vmatpush2.bf16.msra.mxu0 0
      %1077 = vmatprep.subr.bf16.mxu0 0
      %1078 = vmatpush2.bf16.msra.mxu0 0
      %1079 = vmatprep.subr.bf16.mxu0 0
      %1080 = vmatpush2.bf16.msra.mxu0 0
      %1081 = vmatprep.subr.bf16.mxu0 0
      %1082 = vmatpush2.bf16.msra.mxu0 0
      %1083 = vmatprep.subr.bf16.mxu0 0
      %1084 = vmatpush2.bf16.msra.mxu0 0
      %1085 = vmatprep.mubr.bf16.mxu0 0
      %1086 = vmatmul.mubr.bf16.gmra.mxu0 %v1051
      %v1087 = vpop.f32.mrf.mxu0
      %v1088 = vadd.f32 %v1044, %v1087
      %v1089 = vpop.f32.mrf.mxu0
      %v1090 = vpop.f32.mrf.mxu0
      %v1091 = vadd.f32 %v1047, %v1090
      %v1092 = vpop.f32.mrf.mxu0
      %1093 = vdwg.mxu0
      %vm1094 = vcmask 1046528
      %v1095 = vrot.slane %v976, 1
      %v1096 = vrot.slane %v977, 1
      %v1097 = vsel %vm1094, %v1095, %v1096
      %v1100 = vsel %vm1094, %v1096, 0.0
      %v1101 = vpack.c.bf16 %v1100, %v1097
      %v1102 = vpack.c.bf16 %v987, %v986
      %v1103 = vpack.c.bf16 %v989, %v988
      %v1105 = vsel %vm549, %v1101, 0
      %1107 = vmatprep.subr.bf16.mxu0 0
      %1108 = vmatpush1.bf16.msra.mxu0 0
      %1109 = vmatprep.subr.bf16.mxu0 0
      %1110 = vmatpush1.bf16.msra.mxu0 0
      %1111 = vmatprep.subr.bf16.mxu0 0
      %1112 = vmatpush1.bf16.msra.mxu0 0
      %1113 = vmatprep.subr.bf16.mxu0 0
      %1114 = vmatpush1.bf16.msra.mxu0 0
      %1115 = vmatprep.subr.bf16.mxu0 0
      %1116 = vmatpush1.bf16.msra.mxu0 0
      %1117 = vmatprep.subr.bf16.mxu0 0
      %1118 = vmatpush1.bf16.msra.mxu0 0
      %1119 = vmatprep.subr.bf16.mxu0 0
      %1120 = vmatpush1.bf16.msra.mxu0 %v1103
      %1121 = vmatprep.subr.bf16.mxu0 0
      %1122 = vmatpush1.bf16.msra.mxu0 %v1102
      %1123 = vmatprep.subr.bf16.mxu0 0
      %1124 = vmatpush2.bf16.msra.mxu0 0
      %1125 = vmatprep.subr.bf16.mxu0 0
      %1126 = vmatpush2.bf16.msra.mxu0 0
      %1127 = vmatprep.subr.bf16.mxu0 0
      %1128 = vmatpush2.bf16.msra.mxu0 0
      %1129 = vmatprep.subr.bf16.mxu0 0
      %1130 = vmatpush2.bf16.msra.mxu0 0
      %1131 = vmatprep.subr.bf16.mxu0 0
      %1132 = vmatpush2.bf16.msra.mxu0 0
      %1133 = vmatprep.subr.bf16.mxu0 0
      %1134 = vmatpush2.bf16.msra.mxu0 0
      %1135 = vmatprep.subr.bf16.mxu0 0
      %1136 = vmatpush2.bf16.msra.mxu0 0
      %1137 = vmatprep.subr.bf16.mxu0 0
      %1138 = vmatpush2.bf16.msra.mxu0 0
      %1139 = vmatprep.mubr.bf16.mxu0 0
      %1140 = vmatmul.mubr.bf16.gmra.mxu0 %v1105
      %v1141 = vpop.f32.mrf.mxu0
      %v1142 = vadd.f32 0.0, %v1141
      %v1143 = vpop.f32.mrf.mxu0
      %v1144 = vpop.f32.mrf.mxu0
      %v1145 = vadd.f32 0.0, %v1144
      %v1146 = vpop.f32.mrf.mxu0
      %1147 = vdwg.mxu0
      %v1148 = vadd.f32 %v1088, %v1142
      %v1149 = vadd.f32 %v1091, %v1145
      %v1151 = vlaneseq
      %v1152 = vshrl.u32 %v1151, 7
      %v1153 = vsub.s32 0, %v1152
      %v1154 = vrot.slane %v990, %v1153
      %v1156 = vadd.f32 %v1148, %v1154
      %v1157 = vadd.f32 %v1149, %v1154
      %v1158 = vmax.f32 %v1156, 0.0
      %v1159 = vmax.f32 %v1157, 0.0
      %v1160 = vld [vmem:[%s11] sm:$0xff]
      %v1161 = vld [vmem:[%s11 + $0x8] sm:$0xff]
      %v1162 = vld [vmem:[%s11 + $0x10] sm:$0xff]
      %v1163 = vld [vmem:[%s11 + $0x18] sm:$0xff]
      %v1164 = vld [vmem:[%s11 + $0x20] sm:$0xff]
      %v1165 = vld [vmem:[%s11 + $0x28] sm:$0xff]
      %v1166 = vld [vmem:[%s11 + $0x30] sm:$0xff]
      %v1167 = vld [vmem:[%s11 + $0x38] sm:$0xff]
      %v1168 = vld [vmem:[%s12] sm:$0x1]
      %v1169 = vpack.c.bf16 %v1159, %v1158
      %v1170 = vpack.c.bf16 %v1161, %v1160
      %v1171 = vpack.c.bf16 %v1163, %v1162
      %v1172 = vpack.c.bf16 %v1165, %v1164
      %v1173 = vpack.c.bf16 %v1167, %v1166
      %v1175 = vlaneseq
      %v1176 = vshrl.u32 %v1175, 7
      %v1177 = vsub.s32 0, %v1176
      %v1178 = vrot.slane %v1168, %v1177
      %vm1180 = vcmask 523264
      %v1182 = vsel %vm1180, %v1169, 0
      %1184 = vmatprep.subr.bf16.mxu0 0
      %1185 = vmatpush1.bf16.msra.mxu0 0
      %1186 = vmatprep.subr.bf16.mxu0 0
      %1187 = vmatpush1.bf16.msra.mxu0 0
      %1188 = vmatprep.subr.bf16.mxu0 0
      %1189 = vmatpush1.bf16.msra.mxu0 0
      %1190 = vmatprep.subr.bf16.mxu0 0
      %1191 = vmatpush1.bf16.msra.mxu0 0
      %1192 = vmatprep.subr.bf16.mxu0 0
      %1193 = vmatpush1.bf16.msra.mxu0 %v1173
      %1194 = vmatprep.subr.bf16.mxu0 0
      %1195 = vmatpush1.bf16.msra.mxu0 %v1172
      %1196 = vmatprep.subr.bf16.mxu0 0
      %1197 = vmatpush1.bf16.msra.mxu0 %v1171
      %1198 = vmatprep.subr.bf16.mxu0 0
      %1199 = vmatpush1.bf16.msra.mxu0 %v1170
      %1200 = vmatprep.subr.bf16.mxu0 0
      %1201 = vmatpush2.bf16.msra.mxu0 0
      %1202 = vmatprep.subr.bf16.mxu0 0
      %1203 = vmatpush2.bf16.msra.mxu0 0
      %1204 = vmatprep.subr.bf16.mxu0 0
      %1205 = vmatpush2.bf16.msra.mxu0 0
      %1206 = vmatprep.subr.bf16.mxu0 0
      %1207 = vmatpush2.bf16.msra.mxu0 0
      %1208 = vmatprep.subr.bf16.mxu0 0
      %1209 = vmatpush2.bf16.msra.mxu0 0
      %1210 = vmatprep.subr.bf16.mxu0 0
      %1211 = vmatpush2.bf16.msra.mxu0 0
      %1212 = vmatprep.subr.bf16.mxu0 0
      %1213 = vmatpush2.bf16.msra.mxu0 0
      %1214 = vmatprep.subr.bf16.mxu0 0
      %1215 = vmatpush2.bf16.msra.mxu0 0
      %1216 = vmatprep.mubr.bf16.mxu0 0
      %1217 = vmatmul.mubr.bf16.gmra.mxu0 %v1182
      %v1218 = vpop.f32.mrf.mxu0
      %v1219 = vadd.f32 %v1178, %v1218
      %v1220 = vpop.f32.mrf.mxu0
      %v1221 = vpop.f32.mrf.mxu0
      %v1222 = vadd.f32 %v1178, %v1221
      %v1223 = vpop.f32.mrf.mxu0
      %1224 = vdwg.mxu0
      %v1225 = vadd.f32 %v1219, %v976
      %v1226 = vadd.f32 %v1222, %v977
      %v1227 = vld [vmem:[%s13] sm:$0x1]
      %v1228 = vld [vmem:[%s14] sm:$0x1]
      %v1229 = vsel %vm549, %v1225, 0.0
      %1230 = vadd.xlane.f32.xlu0 %v1229
      %v1231 = vpop.xlane.xlu0 %1230
      %v1232 = vsel %vm549, %v1226, 0.0
      %1233 = vadd.xlane.f32.xlu0 %v1232
      %v1234 = vpop.xlane.xlu0 %1233
      %v1235 = vmul.f32 %v1231, %v929
      %v1236 = vmul.f32 %v1234, %v929
      %v1237 = vsub.f32 %v1225, %v1235
      %v1238 = vsub.f32 %v1226, %v1236
      %v1239 = vmul.f32 %v1237, %v1237
      %v1240 = vmul.f32 %v1238, %v1238
      %v1241 = vsel %vm549, %v1239, 0.0
      %1242 = vadd.xlane.f32.xlu0 %v1241
      %v1243 = vpop.xlane.xlu0 %1242
      %v1244 = vsel %vm549, %v1240, 0.0
      %1245 = vadd.xlane.f32.xlu0 %v1244
      %v1246 = vpop.xlane.xlu0 %1245
      %v1247 = vmul.f32 %v1243, %v929
      %v1248 = vmul.f32 %v1246, %v929
      %v1249 = vadd.f32 %v1247, 1e-05
      %v1250 = vadd.f32 %v1248, 1e-05
      %v1251 = vrsqrt.pop %v1249
      %v1252 = vrsqrt.pop %v1250
      %v1253 = vmul.f32 %v1237, %v1251
      %v1254 = vmul.f32 %v1238, %v1252
      %v1256 = vlaneseq
      %v1257 = vshrl.u32 %v1256, 7
      %v1258 = vsub.s32 0, %v1257
      %v1259 = vrot.slane %v1227, %v1258
      %v1261 = vmul.f32 %v1253, %v1259
      %v1262 = vmul.f32 %v1254, %v1259
      %v1264 = vlaneseq
      %v1265 = vshrl.u32 %v1264, 7
      %v1266 = vsub.s32 0, %v1265
      %v1267 = vrot.slane %v1228, %v1266
      %v1269 = vadd.f32 %v1261, %v1267
      %v1270 = vadd.f32 %v1262, %v1267
      %v1271 = vmul.f32 %v1269, %v969
      %v1272 = vmul.f32 %v1270, %v974
      %1273 = vst.msk [vmem:[%s528] sm:$0xff] %vm549, %v1271
      %1274 = vst.msk [vmem:[%s528 + $0x8] sm:$0xff] %vm549, %v1272
      %p1275 = scmp.lt.s32.totalorder %s26, 1
      %s1276 = scalar_select %p1275, %s26, 1
      %s1277 = smul.addr %s1276, 2
      %s1278 = smul.addr %s1277, 8
      %s1279 = scalar_lea.vmem %s15, %s1278
      // Predicated region
      $region81: #{_lambda_.8} parent=79 // pred_check
        %p1280 = pneg %p374
      $region82: #{_lambda_.8} parent=79 // pred_check_branch
        %1282 = sbr.rel (%p1280) target = $region84
      $region83: #{_lambda_.8} parent=79 // pred_region
        _
      $region84: #{_lambda_.8} parent=79 // pred_fallthru
        _
    $region80: #{_lambda_.8} parent=5 // pred_fallthru
      _
    %p1283 = scmp.le.s32.totalorder 2, %s21
    // Predicated region
    $region85: #{_lambda_.8} parent=5 // pred_check
      %p1284 = pneg %p1283
    $region86: #{_lambda_.8} parent=5 // pred_check_branch
      %1286 = sbr.rel (%p1284) target = $region88
    $region87: #{_lambda_.8} parent=5 // pred_region
      %s1287 = ssub.s32 %s21, 2
      // Predicated region
      $region89: #{_lambda_.8} parent=87 // pred_check
        %p1288 = pneg %p380
      $region90: #{_lambda_.8} parent=87 // pred_check_branch
        %1290 = sbr.rel (%p1288) target = $region92
      $region91: #{_lambda_.8} parent=87 // pred_region
        %p1291 = scmp.lt.s32.totalorder %s27, 1
        %s1292 = scalar_select %p1291, %s27, 1
        %s1293 = smul.addr %s1292, 2
        %s1294 = smul.addr %s1293, 8
        %s1295 = scalar_lea.vmem %s15, %s1294
      $region92: #{_lambda_.8} parent=87 // pred_fallthru
        _
    $region88: #{_lambda_.8} parent=5 // pred_fallthru
      _
  $region6: #{_lambda_.8} parent=0 // loop_footer
    %s25 = sadd.s32 1, %s21
  $region7: #{_lambda_.8} parent=0 // loop_footer_branch
    %20 = sbr.rel target = $region3
  $region8: #{_lambda_.8} parent=0 // loop_exit
    _

// kernel: _lambda_.15
$region0: #{_lambda_.15}
  #allocation0 [shape = 'u32[]', space=smem, size = 0x4, offset = 0x4, fixed_abs, tag = 'smem constant byte address 0x4 - core index']
  #allocation1 [shape = 'u32[144,128]{1,0:T(1,128)}', space=vmem, size = 0x12000, scoped, tag = 'internal scratch']
  %s0 = inlined_call_operand.vmem [shape: f32[2,32,32], index: 0, kind: input, shape index: {}]
  %s1 = inlined_call_operand.vmem [shape: f32[2,32,1], index: 1, kind: input, shape index: {}]
  %s2 = inlined_call_operand.vmem [shape: f32[32,16], index: 2, kind: input, shape index: {}]
  %s3 = inlined_call_operand.vmem [shape: f32[1,16], index: 3, kind: input, shape index: {}]
  %s4 = inlined_call_operand.vmem [shape: f32[2,32,16], index: 4, kind: output, shape index: {}]
  %s5 = sld [smem:[#allocation0]]
  $region49: #{_lambda_.15} parent=0
    _
  %s7 = ssub.s32 1, %s5
  %s8 = scalar_select 0, %s7, %s5
  loop: start=0, step=1, limit=4
  $region2: #{_lambda_.15} parent=0 // loop_pre_header
    _
  $region3: #{_lambda_.15} parent=0 // loop_header
    %s10 = sphi 0, %s14
    %p11 = scmp.ge.s32.totalorder %s10, 4
    %s20 = sphi 0, %s22
    %s23 = sphi 0, %s20
    %s24 = sphi 0, %s23
    %s40 = sphi 0, %s24
    %s46 = sphi 0, %s48
    %s49 = sphi 0, %s46
    %s50 = sphi 0, %s49
    %s66 = sphi 0, %s50
    %s70 = sphi 0, %s70
    %s72 = sphi 0, %s70
    %s73 = sphi 0, %s72
    %s87 = sphi 0, %s73
    %s91 = sphi 0, %s91
    %s93 = sphi 0, %s91
    %s94 = sphi 0, %s93
    %s108 = sphi 0, %s94
    %s114 = sphi 0, %s116
    %s117 = sphi 0, %s114
    %s118 = sphi 0, %s117
    %s134 = sphi 0, %s118
  $region4: #{_lambda_.15} parent=0 // loop_header_branch
    %13 = sbr.rel (%p11) target = $region8
  $region5: #{_lambda_.15} parent=0 // loop_body
    %s15 = ssub.s32 %s10, 1
    %s16 = ssub.s32 %s10, 2
    %s17 = sadd.s32 %s10, 1
    %s18 = ssub.s32 %s10, %s17
    %p19 = scmp.eq.s32.totalorder %s18, 0
    %s21 = sadd.s32 %s20, 1
    %s22 = scalar_select %p19, %s20, %s21
    %p25 = pneg %p19
    %p26 = scmp.eq.s32.totalorder %s10, 1
    %p27 = por %p25, %p26
    %p28 = scmp.ne.s32.totalorder %s20, %s23
    %p29 = scmp.eq.s32.totalorder %s10, 0
    %p30 = por %p28, %p29
    %p31 = scmp.ne.s32.totalorder %s20, %s23
    %p32 = scmp.eq.s32.totalorder %s15, 1
    %p33 = por %p31, %p32
    %p34 = scmp.ne.s32.totalorder %s23, %s24
    %p35 = scmp.eq.s32.totalorder %s15, 0
    %p36 = por %p34, %p35
    %p37 = scmp.ne.s32.totalorder %s23, %s24
    %p38 = scmp.eq.s32.totalorder %s16, 1
    %p39 = por %p37, %p38
    %p41 = scmp.ne.s32.totalorder %s24, %s40
    %p42 = scmp.eq.s32.totalorder %s16, 0
    %p43 = por %p41, %p42
    %s44 = ssub.s32 %s10, %s17
    %p45 = scmp.eq.s32.totalorder %s44, 0
    %s47 = sadd.s32 %s46, 1
    %s48 = scalar_select %p45, %s46, %s47
    %p51 = pneg %p45
    %p52 = scmp.eq.s32.totalorder %s10, 1
    %p53 = por %p51, %p52
    %p54 = scmp.ne.s32.totalorder %s46, %s49
    %p55 = scmp.eq.s32.totalorder %s10, 0
    %p56 = por %p54, %p55
    %p57 = scmp.ne.s32.totalorder %s46, %s49
    %p58 = scmp.eq.s32.totalorder %s15, 1
    %p59 = por %p57, %p58
    %p60 = scmp.ne.s32.totalorder %s49, %s50
    %p61 = scmp.eq.s32.totalorder %s15, 0
    %p62 = por %p60, %p61
    %p63 = scmp.ne.s32.totalorder %s49, %s50
    %p64 = scmp.eq.s32.totalorder %s16, 1
    %p65 = por %p63, %p64
    %p67 = scmp.ne.s32.totalorder %s50, %s66
    %p68 = scmp.eq.s32.totalorder %s16, 0
    %p69 = por %p67, %p68
    %s71 = sadd.s32 %s70, 1
    %p74 = scmp.eq.s32.totalorder %s10, 1
    %p75 = scmp.ne.s32.totalorder %s70, %s72
    %p76 = scmp.eq.s32.totalorder %s10, 0
    %p77 = por %p75, %p76
    %p78 = scmp.ne.s32.totalorder %s70, %s72
    %p79 = scmp.eq.s32.totalorder %s15, 1
    %p80 = por %p78, %p79
    %p81 = scmp.ne.s32.totalorder %s72, %s73
    %p82 = scmp.eq.s32.totalorder %s15, 0
    %p83 = por %p81, %p82
    %p84 = scmp.ne.s32.totalorder %s72, %s73
    %p85 = scmp.eq.s32.totalorder %s16, 1
    %p86 = por %p84, %p85
    %p88 = scmp.ne.s32.totalorder %s73, %s87
    %p89 = scmp.eq.s32.totalorder %s16, 0
    %p90 = por %p88, %p89
    %s92 = sadd.s32 %s91, 1
    %p95 = scmp.eq.s32.totalorder %s10, 1
    %p96 = scmp.ne.s32.totalorder %s91, %s93
    %p97 = scmp.eq.s32.totalorder %s10, 0
    %p98 = por %p96, %p97
    %p99 = scmp.ne.s32.totalorder %s91, %s93
    %p100 = scmp.eq.s32.totalorder %s15, 1
    %p101 = por %p99, %p100
    %p102 = scmp.ne.s32.totalorder %s93, %s94
    %p103 = scmp.eq.s32.totalorder %s15, 0
    %p104 = por %p102, %p103
    %p105 = scmp.ne.s32.totalorder %s93, %s94
    %p106 = scmp.eq.s32.totalorder %s16, 1
    %p107 = por %p105, %p106
    %p109 = scmp.ne.s32.totalorder %s94, %s108
    %p110 = scmp.eq.s32.totalorder %s16, 0
    %p111 = por %p109, %p110
    %s112 = ssub.s32 %s10, %s17
    %p113 = scmp.eq.s32.totalorder %s112, 0
    %s115 = sadd.s32 %s114, 1
    %s116 = scalar_select %p113, %s114, %s115
    %p119 = pneg %p113
    %p120 = scmp.eq.s32.totalorder %s10, 1
    %p121 = por %p119, %p120
    %p122 = scmp.ne.s32.totalorder %s114, %s117
    %p123 = scmp.eq.s32.totalorder %s10, 0
    %p124 = por %p122, %p123
    %p125 = scmp.ne.s32.totalorder %s114, %s117
    %p126 = scmp.eq.s32.totalorder %s15, 1
    %p127 = por %p125, %p126
    %p128 = scmp.ne.s32.totalorder %s117, %s118
    %p129 = scmp.eq.s32.totalorder %s15, 0
    %p130 = por %p128, %p129
    %p131 = scmp.ne.s32.totalorder %s117, %s118
    %p132 = scmp.eq.s32.totalorder %s16, 1
    %p133 = por %p131, %p132
    %p135 = scmp.ne.s32.totalorder %s118, %s134
    %p136 = scmp.eq.s32.totalorder %s16, 0
    %p137 = por %p135, %p136
    %p138 = scmp.le.s32.totalorder 1, %s10
    %p139 = scmp.lt.s32.totalorder %s10, 3
    %p140 = pnand %p138, %p139
    %p141 = pneg %p140
    // Predicated region
    $region9: #{_lambda_.15} parent=5 // pred_check
      _
    $region10: #{_lambda_.15} parent=5 // pred_check_branch
      %143 = sbr.rel (%p140) target = $region12
    $region11: #{_lambda_.15} parent=5 // pred_region
      %s144 = ssub.s32 %s10, 1
      // Predicated region
      $region13: #{_lambda_.15} parent=11 // pred_check
        %p145 = pneg %p83
      $region14: #{_lambda_.15} parent=11 // pred_check_branch
        %147 = sbr.rel (%p145) target = $region16
      $region15: #{_lambda_.15} parent=11 // pred_region
        _
      $region16: #{_lambda_.15} parent=11 // pred_fallthru
        _
      // Predicated region
      $region17: #{_lambda_.15} parent=11 // pred_check
        %p148 = pneg %p104
      $region18: #{_lambda_.15} parent=11 // pred_check_branch
        %150 = sbr.rel (%p148) target = $region20
      $region19: #{_lambda_.15} parent=11 // pred_region
        _
      $region20: #{_lambda_.15} parent=11 // pred_fallthru
        _
    $region12: #{_lambda_.15} parent=5 // pred_fallthru
      _
    %p151 = scmp.lt.s32.totalorder %s10, 2
    // Predicated region
    $region21: #{_lambda_.15} parent=5 // pred_check
      %p152 = pneg %p151
    $region22: #{_lambda_.15} parent=5 // pred_check_branch
      %154 = sbr.rel (%p152) target = $region24
    $region23: #{_lambda_.15} parent=5 // pred_region
      // Predicated region
      $region25: #{_lambda_.15} parent=23 // pred_check
        %p155 = pneg %p30
      $region26: #{_lambda_.15} parent=23 // pred_check_branch
        %157 = sbr.rel (%p155) target = $region28
      $region27: #{_lambda_.15} parent=23 // pred_region
        %p158 = scmp.lt.s32.totalorder %s10, 1
        %s159 = scalar_select %p158, %s10, 1
        %s160 = smul.addr %s159, 4
        %s161 = smul.addr %s160, 8
        %s162 = scalar_lea.vmem %s0, %s161
      $region28: #{_lambda_.15} parent=23 // pred_fallthru
        _
      // Predicated region
      $region29: #{_lambda_.15} parent=23 // pred_check
        %p163 = pneg %p56
      $region30: #{_lambda_.15} parent=23 // pred_check_branch
        %165 = sbr.rel (%p163) target = $region32
      $region31: #{_lambda_.15} parent=23 // pred_region
        %p166 = scmp.lt.s32.totalorder %s10, 1
        %s167 = scalar_select %p166, %s10, 1
        %s168 = smul.addr %s167, 4
        %s169 = smul.addr %s168, 8
        %s170 = scalar_lea.vmem %s1, %s169
      $region32: #{_lambda_.15} parent=23 // pred_fallthru
        _
    $region24: #{_lambda_.15} parent=5 // pred_fallthru
      _
    %p171 = scmp.le.s32.totalorder 1, %s10
    %p172 = scmp.lt.s32.totalorder %s10, 3
    %p173 = pnand %p171, %p172
    %p174 = pneg %p173
    // Predicated region
    $region33: #{_lambda_.15} parent=5 // pred_check
      _
    $region34: #{_lambda_.15} parent=5 // pred_check_branch
      %176 = sbr.rel (%p173) target = $region36
    $region35: #{_lambda_.15} parent=5 // pred_region
      %s177 = ssub.s32 %s10, 1
      %p178 = scmp.lt.s32.totalorder %s15, 1
      %s179 = scalar_select %p178, %s15, 1
      %s180 = smul.addr %s179, 4
      %s181 = smul.addr %s180, 8
      %s182 = scalar_lea.vmem %s0, %s181
      %p183 = pneg %p36
      %p184 = pneg %p33
      %p185 = scmp.lt.s32.totalorder %s15, 1
      %s186 = scalar_select %p185, %s15, 1
      %s187 = smul.addr %s186, 4
      %s188 = smul.addr %s187, 8
      %s189 = scalar_lea.vmem %s1, %s188
      %p190 = pneg %p62
      %p191 = pneg %p59
      %p192 = pneg %p83
      %p193 = pneg %p80
      %p194 = pneg %p104
      %p195 = pneg %p101
      %p196 = pneg %p130
      %p197 = pneg %p127
      %p198 = scmp.lt.s32.totalorder %s15, 1
      %s199 = scalar_select %p198, %s15, 1
      %s200 = smul.addr %s199, 4
      %s201 = smul.addr %s200, 8
      %s202 = scalar_lea.vmem %s4, %s201
      %p203 = scmp.lt.s32.totalorder %s15, 1
      %s204 = scalar_select %p203, %s15, 1
      %s205 = smul.addr %s204, 4
      %s206 = smul.addr %s205, 8
      %s207 = scalar_lea.vmem %s0, %s206
      %p208 = scmp.lt.s32.totalorder %s15, 1
      %s209 = scalar_select %p208, %s15, 1
      %s210 = smul.addr %s209, 4
      %s211 = smul.addr %s210, 8
      %s212 = scalar_lea.vmem %s1, %s211
      %p213 = scmp.lt.s32.totalorder %s15, 1
      %s214 = scalar_select %p213, %s15, 1
      %s215 = smul.addr %s214, 4
      %s216 = smul.addr %s215, 8
      %s217 = scalar_lea.vmem %s4, %s216
      %v219 = vld [vmem:[%s207] sm:$0xff]
      %v220 = vld [vmem:[%s207 + $0x8] sm:$0xff]
      %v221 = vld [vmem:[%s207 + $0x10] sm:$0xff]
      %v222 = vld [vmem:[%s207 + $0x18] sm:$0xff]
      %v223 = vld [vmem:[%s212] sm:$0xff]
      %v224 = vld [vmem:[%s212 + $0x8] sm:$0xff]
      %v225 = vld [vmem:[%s212 + $0x10] sm:$0xff]
      %v226 = vld [vmem:[%s212 + $0x18] sm:$0xff]
      %228 = vset.pattern.permute.xlu0 0
      %229 = vperm.xlu0 %228, %v223
      %v230 = vpop.permute.xlu0 %229
      %233 = vset.pattern.permute.xlu0 0
      %234 = vperm.xlu0 %233, %v224
      %v235 = vpop.permute.xlu0 %234
      %238 = vset.pattern.permute.xlu0 0
      %239 = vperm.xlu0 %238, %v225
      %v240 = vpop.permute.xlu0 %239
      %243 = vset.pattern.permute.xlu0 0
      %244 = vperm.xlu0 %243, %v226
      %v245 = vpop.permute.xlu0 %244
      %v247 = vmul.f32 %v219, %v230
      %v248 = vmul.f32 %v220, %v235
      %v249 = vmul.f32 %v221, %v240
      %v250 = vmul.f32 %v222, %v245
      %v251 = vld [vmem:[%s2] sm:$0xff]
      %v252 = vld [vmem:[%s2 + $0x8] sm:$0xff]
      %v253 = vld [vmem:[%s2 + $0x10] sm:$0xff]
      %v254 = vld [vmem:[%s2 + $0x18] sm:$0xff]
      %v255 = vpack.c.bf16 %v248, %v247
      %v256 = vpack.c.bf16 %v250, %v249
      %v257 = vpack.c.bf16 %v252, %v251
      %v258 = vpack.c.bf16 %v254, %v253
      %v259 = vld [vmem:[%s3] sm:$0x1]
      %v261 = vlaneseq
      %v262 = vshrl.u32 %v261, 7
      %v263 = vsub.s32 0, %v262
      %v264 = vrot.slane %v259, %v263
      %vm266 = vcmask 261120
      %v268 = vsel %vm266, %v255, 0
      %v271 = vsel %vm266, %v256, 0
      %273 = vmatprep.subr.bf16.mxu0 0
      %274 = vmatpush1.bf16.msra.mxu0 0
      %275 = vmatprep.subr.bf16.mxu0 0
      %276 = vmatpush1.bf16.msra.mxu0 0
      %277 = vmatprep.subr.bf16.mxu0 0
      %278 = vmatpush1.bf16.msra.mxu0 0
      %279 = vmatprep.subr.bf16.mxu0 0
      %280 = vmatpush1.bf16.msra.mxu0 0
      %281 = vmatprep.subr.bf16.mxu0 0
      %282 = vmatpush1.bf16.msra.mxu0 0
      %283 = vmatprep.subr.bf16.mxu0 0
      %284 = vmatpush1.bf16.msra.mxu0 0
      %285 = vmatprep.subr.bf16.mxu0 0
      %286 = vmatpush1.bf16.msra.mxu0 %v258
      %287 = vmatprep.subr.bf16.mxu0 0
      %288 = vmatpush1.bf16.msra.mxu0 %v257
      %289 = vmatprep.subr.bf16.mxu0 0
      %290 = vmatpush2.bf16.msra.mxu0 0
      %291 = vmatprep.subr.bf16.mxu0 0
      %292 = vmatpush2.bf16.msra.mxu0 0
      %293 = vmatprep.subr.bf16.mxu0 0
      %294 = vmatpush2.bf16.msra.mxu0 0
      %295 = vmatprep.subr.bf16.mxu0 0
      %296 = vmatpush2.bf16.msra.mxu0 0
      %297 = vmatprep.subr.bf16.mxu0 0
      %298 = vmatpush2.bf16.msra.mxu0 0
      %299 = vmatprep.subr.bf16.mxu0 0
      %300 = vmatpush2.bf16.msra.mxu0 0
      %301 = vmatprep.subr.bf16.mxu0 0
      %302 = vmatpush2.bf16.msra.mxu0 0
      %303 = vmatprep.subr.bf16.mxu0 0
      %304 = vmatpush2.bf16.msra.mxu0 0
      %305 = vmatprep.mubr.bf16.mxu0 0
      %306 = vmatmul.mubr.bf16.gmra.mxu0 %v268
      %v307 = vpop.f32.mrf.mxu0
      %v308 = vadd.f32 %v264, %v307
      %v309 = vpop.f32.mrf.mxu0
      %v310 = vpop.f32.mrf.mxu0
      %v311 = vadd.f32 %v264, %v310
      %v312 = vpop.f32.mrf.mxu0
      %313 = vmatprep.mubr.bf16.mxu0 0
      %314 = vmatmul.mubr.bf16.gmra.mxu0 %v271
      %v315 = vpop.f32.mrf.mxu0
      %v316 = vadd.f32 %v264, %v315
      %v317 = vpop.f32.mrf.mxu0
      %v318 = vpop.f32.mrf.mxu0
      %v319 = vadd.f32 %v264, %v318
      %v320 = vpop.f32.mrf.mxu0
      %321 = vdwg.mxu0
      %vm322 = vcmask 130048
      %323 = vst.msk [vmem:[%s217] sm:$0xff] %vm322, %v308
      %324 = vst.msk [vmem:[%s217 + $0x8] sm:$0xff] %vm322, %v311
      %325 = vst.msk [vmem:[%s217 + $0x10] sm:$0xff] %vm322, %v316
      %326 = vst.msk [vmem:[%s217 + $0x18] sm:$0xff] %vm322, %v319
      %p327 = scmp.lt.s32.totalorder %s15, 1
      %s328 = scalar_select %p327, %s15, 1
      %s329 = smul.addr %s328, 4
      %s330 = smul.addr %s329, 8
      %s331 = scalar_lea.vmem %s4, %s330
      // Predicated region
      $region37: #{_lambda_.15} parent=35 // pred_check
        %p332 = pneg %p127
      $region38: #{_lambda_.15} parent=35 // pred_check_branch
        %334 = sbr.rel (%p332) target = $region40
      $region39: #{_lambda_.15} parent=35 // pred_region
        _
      $region40: #{_lambda_.15} parent=35 // pred_fallthru
        _
    $region36: #{_lambda_.15} parent=5 // pred_fallthru
      _
    %p335 = scmp.le.s32.totalorder 2, %s10
    // Predicated region
    $region41: #{_lambda_.15} parent=5 // pred_check
      %p336 = pneg %p335
    $region42: #{_lambda_.15} parent=5 // pred_check_branch
      %338 = sbr.rel (%p336) target = $region44
    $region43: #{_lambda_.15} parent=5 // pred_region
      %s339 = ssub.s32 %s10, 2
      // Predicated region
      $region45: #{_lambda_.15} parent=43 // pred_check
        %p340 = pneg %p133
      $region46: #{_lambda_.15} parent=43 // pred_check_branch
        %342 = sbr.rel (%p340) target = $region48
      $region47: #{_lambda_.15} parent=43 // pred_region
        %p343 = scmp.lt.s32.totalorder %s16, 1
        %s344 = scalar_select %p343, %s16, 1
        %s345 = smul.addr %s344, 4
        %s346 = smul.addr %s345, 8
        %s347 = scalar_lea.vmem %s4, %s346
      $region48: #{_lambda_.15} parent=43 // pred_fallthru
        _
    $region44: #{_lambda_.15} parent=5 // pred_fallthru
      _
  $region6: #{_lambda_.15} parent=0 // loop_footer
    %s14 = sadd.s32 1, %s10
  $region7: #{_lambda_.15} parent=0 // loop_footer_branch
    %9 = sbr.rel target = $region3
  $region8: #{_lambda_.15} parent=0 // loop_exit
    _

// kernel: _lambda_.13
$region0: #{_lambda_.13}
  #allocation0 [shape = 'u32[]', space=smem, size = 0x4, offset = 0x4, fixed_abs, tag = 'smem constant byte address 0x4 - core index']
  #allocation1 [shape = 'u32[144,128]{1,0:T(1,128)}', space=vmem, size = 0x12000, scoped, tag = 'internal scratch']
  %s0 = inlined_call_operand.vmem [shape: f32[2,32,32], index: 0, kind: input, shape index: {}]
  %s1 = inlined_call_operand.vmem [shape: f32[2,1,32], index: 1, kind: input, shape index: {}]
  %s2 = inlined_call_operand.vmem [shape: f32[2,32,1], index: 2, kind: input, shape index: {}]
  %s3 = inlined_call_operand.vmem [shape: f32[32,96], index: 3, kind: input, shape index: {}]
  %s4 = inlined_call_operand.vmem [shape: f32[1,96], index: 4, kind: input, shape index: {}]
  %s5 = inlined_call_operand.vmem [shape: f32[32,32], index: 5, kind: input, shape index: {}]
  %s6 = inlined_call_operand.vmem [shape: f32[1,32], index: 6, kind: input, shape index: {}]
  %s7 = inlined_call_operand.vmem [shape: f32[1,32], index: 7, kind: input, shape index: {}]
  %s8 = inlined_call_operand.vmem [shape: f32[1,32], index: 8, kind: input, shape index: {}]
  %s9 = inlined_call_operand.vmem [shape: f32[96,64], index: 9, kind: input, shape index: {}]
  %s10 = inlined_call_operand.vmem [shape: f32[1,64], index: 10, kind: input, shape index: {}]
  %s11 = inlined_call_operand.vmem [shape: f32[64,32], index: 11, kind: input, shape index: {}]
  %s12 = inlined_call_operand.vmem [shape: f32[1,32], index: 12, kind: input, shape index: {}]
  %s13 = inlined_call_operand.vmem [shape: f32[1,32], index: 13, kind: input, shape index: {}]
  %s14 = inlined_call_operand.vmem [shape: f32[1,32], index: 14, kind: input, shape index: {}]
  %s15 = inlined_call_operand.vmem [shape: f32[2,32,32], index: 15, kind: output, shape index: {}]
  %s16 = sld [smem:[#allocation0]]
  $region93: #{_lambda_.13} parent=0
    _
  %s18 = ssub.s32 1, %s16
  %s19 = scalar_select 0, %s18, %s16
  loop: start=0, step=1, limit=4
  $region2: #{_lambda_.13} parent=0 // loop_pre_header
    _
  $region3: #{_lambda_.13} parent=0 // loop_header
    %s21 = sphi 0, %s25
    %p22 = scmp.ge.s32.totalorder %s21, 4
    %s31 = sphi 0, %s33
    %s34 = sphi 0, %s31
    %s35 = sphi 0, %s34
    %s51 = sphi 0, %s35
    %s57 = sphi 0, %s59
    %s60 = sphi 0, %s57
    %s61 = sphi 0, %s60
    %s77 = sphi 0, %s61
    %s83 = sphi 0, %s85
    %s86 = sphi 0, %s83
    %s87 = sphi 0, %s86
    %s103 = sphi 0, %s87
    %s107 = sphi 0, %s107
    %s109 = sphi 0, %s107
    %s110 = sphi 0, %s109
    %s124 = sphi 0, %s110
    %s128 = sphi 0, %s128
    %s130 = sphi 0, %s128
    %s131 = sphi 0, %s130
    %s145 = sphi 0, %s131
    %s149 = sphi 0, %s149
    %s151 = sphi 0, %s149
    %s152 = sphi 0, %s151
    %s166 = sphi 0, %s152
    %s170 = sphi 0, %s170
    %s172 = sphi 0, %s170
    %s173 = sphi 0, %s172
    %s187 = sphi 0, %s173
    %s191 = sphi 0, %s191
    %s193 = sphi 0, %s191
    %s194 = sphi 0, %s193
    %s208 = sphi 0, %s194
    %s212 = sphi 0, %s212
    %s214 = sphi 0, %s212
    %s215 = sphi 0, %s214
    %s229 = sphi 0, %s215
    %s233 = sphi 0, %s233
    %s235 = sphi 0, %s233
    %s236 = sphi 0, %s235
    %s250 = sphi 0, %s236
    %s254 = sphi 0, %s254
    %s256 = sphi 0, %s254
    %s257 = sphi 0, %s256
    %s271 = sphi 0, %s257
    %s275 = sphi 0, %s275
    %s277 = sphi 0, %s275
    %s278 = sphi 0, %s277
    %s292 = sphi 0, %s278
    %s296 = sphi 0, %s296
    %s298 = sphi 0, %s296
    %s299 = sphi 0, %s298
    %s313 = sphi 0, %s299
    %s317 = sphi 0, %s317
    %s319 = sphi 0, %s317
    %s320 = sphi 0, %s319
    %s334 = sphi 0, %s320
    %s338 = sphi 0, %s338
    %s340 = sphi 0, %s338
    %s341 = sphi 0, %s340
    %s355 = sphi 0, %s341
    %s361 = sphi 0, %s363
    %s364 = sphi 0, %s361
    %s365 = sphi 0, %s364
    %s381 = sphi 0, %s365
  $region4: #{_lambda_.13} parent=0 // loop_header_branch
    %24 = sbr.rel (%p22) target = $region8
  $region5: #{_lambda_.13} parent=0 // loop_body
    %s26 = ssub.s32 %s21, 1
    %s27 = ssub.s32 %s21, 2
    %s28 = sadd.s32 %s21, 1
    %s29 = ssub.s32 %s21, %s28
    %p30 = scmp.eq.s32.totalorder %s29, 0
    %s32 = sadd.s32 %s31, 1
    %s33 = scalar_select %p30, %s31, %s32
    %p36 = pneg %p30
    %p37 = scmp.eq.s32.totalorder %s21, 1
    %p38 = por %p36, %p37
    %p39 = scmp.ne.s32.totalorder %s31, %s34
    %p40 = scmp.eq.s32.totalorder %s21, 0
    %p41 = por %p39, %p40
    %p42 = scmp.ne.s32.totalorder %s31, %s34
    %p43 = scmp.eq.s32.totalorder %s26, 1
    %p44 = por %p42, %p43
    %p45 = scmp.ne.s32.totalorder %s34, %s35
    %p46 = scmp.eq.s32.totalorder %s26, 0
    %p47 = por %p45, %p46
    %p48 = scmp.ne.s32.totalorder %s34, %s35
    %p49 = scmp.eq.s32.totalorder %s27, 1
    %p50 = por %p48, %p49
    %p52 = scmp.ne.s32.totalorder %s35, %s51
    %p53 = scmp.eq.s32.totalorder %s27, 0
    %p54 = por %p52, %p53
    %s55 = ssub.s32 %s21, %s28
    %p56 = scmp.eq.s32.totalorder %s55, 0
    %s58 = sadd.s32 %s57, 1
    %s59 = scalar_select %p56, %s57, %s58
    %p62 = pneg %p56
    %p63 = scmp.eq.s32.totalorder %s21, 1
    %p64 = por %p62, %p63
    %p65 = scmp.ne.s32.totalorder %s57, %s60
    %p66 = scmp.eq.s32.totalorder %s21, 0
    %p67 = por %p65, %p66
    %p68 = scmp.ne.s32.totalorder %s57, %s60
    %p69 = scmp.eq.s32.totalorder %s26, 1
    %p70 = por %p68, %p69
    %p71 = scmp.ne.s32.totalorder %s60, %s61
    %p72 = scmp.eq.s32.totalorder %s26, 0
    %p73 = por %p71, %p72
    %p74 = scmp.ne.s32.totalorder %s60, %s61
    %p75 = scmp.eq.s32.totalorder %s27, 1
    %p76 = por %p74, %p75
    %p78 = scmp.ne.s32.totalorder %s61, %s77
    %p79 = scmp.eq.s32.totalorder %s27, 0
    %p80 = por %p78, %p79
    %s81 = ssub.s32 %s21, %s28
    %p82 = scmp.eq.s32.totalorder %s81, 0
    %s84 = sadd.s32 %s83, 1
    %s85 = scalar_select %p82, %s83, %s84
    %p88 = pneg %p82
    %p89 = scmp.eq.s32.totalorder %s21, 1
    %p90 = por %p88, %p89
    %p91 = scmp.ne.s32.totalorder %s83, %s86
    %p92 = scmp.eq.s32.totalorder %s21, 0
    %p93 = por %p91, %p92
    %p94 = scmp.ne.s32.totalorder %s83, %s86
    %p95 = scmp.eq.s32.totalorder %s26, 1
    %p96 = por %p94, %p95
    %p97 = scmp.ne.s32.totalorder %s86, %s87
    %p98 = scmp.eq.s32.totalorder %s26, 0
    %p99 = por %p97, %p98
    %p100 = scmp.ne.s32.totalorder %s86, %s87
    %p101 = scmp.eq.s32.totalorder %s27, 1
    %p102 = por %p100, %p101
    %p104 = scmp.ne.s32.totalorder %s87, %s103
    %p105 = scmp.eq.s32.totalorder %s27, 0
    %p106 = por %p104, %p105
    %s108 = sadd.s32 %s107, 1
    %p111 = scmp.eq.s32.totalorder %s21, 1
    %p112 = scmp.ne.s32.totalorder %s107, %s109
    %p113 = scmp.eq.s32.totalorder %s21, 0
    %p114 = por %p112, %p113
    %p115 = scmp.ne.s32.totalorder %s107, %s109
    %p116 = scmp.eq.s32.totalorder %s26, 1
    %p117 = por %p115, %p116
    %p118 = scmp.ne.s32.totalorder %s109, %s110
    %p119 = scmp.eq.s32.totalorder %s26, 0
    %p120 = por %p118, %p119
    %p121 = scmp.ne.s32.totalorder %s109, %s110
    %p122 = scmp.eq.s32.totalorder %s27, 1
    %p123 = por %p121, %p122
    %p125 = scmp.ne.s32.totalorder %s110, %s124
    %p126 = scmp.eq.s32.totalorder %s27, 0
    %p127 = por %p125, %p126
    %s129 = sadd.s32 %s128, 1
    %p132 = scmp.eq.s32.totalorder %s21, 1
    %p133 = scmp.ne.s32.totalorder %s128, %s130
    %p134 = scmp.eq.s32.totalorder %s21, 0
    %p135 = por %p133, %p134
    %p136 = scmp.ne.s32.totalorder %s128, %s130
    %p137 = scmp.eq.s32.totalorder %s26, 1
    %p138 = por %p136, %p137
    %p139 = scmp.ne.s32.totalorder %s130, %s131
    %p140 = scmp.eq.s32.totalorder %s26, 0
    %p141 = por %p139, %p140
    %p142 = scmp.ne.s32.totalorder %s130, %s131
    %p143 = scmp.eq.s32.totalorder %s27, 1
    %p144 = por %p142, %p143
    %p146 = scmp.ne.s32.totalorder %s131, %s145
    %p147 = scmp.eq.s32.totalorder %s27, 0
    %p148 = por %p146, %p147
    %s150 = sadd.s32 %s149, 1
    %p153 = scmp.eq.s32.totalorder %s21, 1
    %p154 = scmp.ne.s32.totalorder %s149, %s151
    %p155 = scmp.eq.s32.totalorder %s21, 0
    %p156 = por %p154, %p155
    %p157 = scmp.ne.s32.totalorder %s149, %s151
    %p158 = scmp.eq.s32.totalorder %s26, 1
    %p159 = por %p157, %p158
    %p160 = scmp.ne.s32.totalorder %s151, %s152
    %p161 = scmp.eq.s32.totalorder %s26, 0
    %p162 = por %p160, %p161
    %p163 = scmp.ne.s32.totalorder %s151, %s152
    %p164 = scmp.eq.s32.totalorder %s27, 1
    %p165 = por %p163, %p164
    %p167 = scmp.ne.s32.totalorder %s152, %s166
    %p168 = scmp.eq.s32.totalorder %s27, 0
    %p169 = por %p167, %p168
    %s171 = sadd.s32 %s170, 1
    %p174 = scmp.eq.s32.totalorder %s21, 1
    %p175 = scmp.ne.s32.totalorder %s170, %s172
    %p176 = scmp.eq.s32.totalorder %s21, 0
    %p177 = por %p175, %p176
    %p178 = scmp.ne.s32.totalorder %s170, %s172
    %p179 = scmp.eq.s32.totalorder %s26, 1
    %p180 = por %p178, %p179
    %p181 = scmp.ne.s32.totalorder %s172, %s173
    %p182 = scmp.eq.s32.totalorder %s26, 0
    %p183 = por %p181, %p182
    %p184 = scmp.ne.s32.totalorder %s172, %s173
    %p185 = scmp.eq.s32.totalorder %s27, 1
    %p186 = por %p184, %p185
    %p188 = scmp.ne.s32.totalorder %s173, %s187
    %p189 = scmp.eq.s32.totalorder %s27, 0
    %p190 = por %p188, %p189
    %s192 = sadd.s32 %s191, 1
    %p195 = scmp.eq.s32.totalorder %s21, 1
    %p196 = scmp.ne.s32.totalorder %s191, %s193
    %p197 = scmp.eq.s32.totalorder %s21, 0
    %p198 = por %p196, %p197
    %p199 = scmp.ne.s32.totalorder %s191, %s193
    %p200 = scmp.eq.s32.totalorder %s26, 1
    %p201 = por %p199, %p200
    %p202 = scmp.ne.s32.totalorder %s193, %s194
    %p203 = scmp.eq.s32.totalorder %s26, 0
    %p204 = por %p202, %p203
    %p205 = scmp.ne.s32.totalorder %s193, %s194
    %p206 = scmp.eq.s32.totalorder %s27, 1
    %p207 = por %p205, %p206
    %p209 = scmp.ne.s32.totalorder %s194, %s208
    %p210 = scmp.eq.s32.totalorder %s27, 0
    %p211 = por %p209, %p210
    %s213 = sadd.s32 %s212, 1
    %p216 = scmp.eq.s32.totalorder %s21, 1
    %p217 = scmp.ne.s32.totalorder %s212, %s214
    %p218 = scmp.eq.s32.totalorder %s21, 0
    %p219 = por %p217, %p218
    %p220 = scmp.ne.s32.totalorder %s212, %s214
    %p221 = scmp.eq.s32.totalorder %s26, 1
    %p222 = por %p220, %p221
    %p223 = scmp.ne.s32.totalorder %s214, %s215
    %p224 = scmp.eq.s32.totalorder %s26, 0
    %p225 = por %p223, %p224
    %p226 = scmp.ne.s32.totalorder %s214, %s215
    %p227 = scmp.eq.s32.totalorder %s27, 1
    %p228 = por %p226, %p227
    %p230 = scmp.ne.s32.totalorder %s215, %s229
    %p231 = scmp.eq.s32.totalorder %s27, 0
    %p232 = por %p230, %p231
    %s234 = sadd.s32 %s233, 1
    %p237 = scmp.eq.s32.totalorder %s21, 1
    %p238 = scmp.ne.s32.totalorder %s233, %s235
    %p239 = scmp.eq.s32.totalorder %s21, 0
    %p240 = por %p238, %p239
    %p241 = scmp.ne.s32.totalorder %s233, %s235
    %p242 = scmp.eq.s32.totalorder %s26, 1
    %p243 = por %p241, %p242
    %p244 = scmp.ne.s32.totalorder %s235, %s236
    %p245 = scmp.eq.s32.totalorder %s26, 0
    %p246 = por %p244, %p245
    %p247 = scmp.ne.s32.totalorder %s235, %s236
    %p248 = scmp.eq.s32.totalorder %s27, 1
    %p249 = por %p247, %p248
    %p251 = scmp.ne.s32.totalorder %s236, %s250
    %p252 = scmp.eq.s32.totalorder %s27, 0
    %p253 = por %p251, %p252
    %s255 = sadd.s32 %s254, 1
    %p258 = scmp.eq.s32.totalorder %s21, 1
    %p259 = scmp.ne.s32.totalorder %s254, %s256
    %p260 = scmp.eq.s32.totalorder %s21, 0
    %p261 = por %p259, %p260
    %p262 = scmp.ne.s32.totalorder %s254, %s256
    %p263 = scmp.eq.s32.totalorder %s26, 1
    %p264 = por %p262, %p263
    %p265 = scmp.ne.s32.totalorder %s256, %s257
    %p266 = scmp.eq.s32.totalorder %s26, 0
    %p267 = por %p265, %p266
    %p268 = scmp.ne.s32.totalorder %s256, %s257
    %p269 = scmp.eq.s32.totalorder %s27, 1
    %p270 = por %p268, %p269
    %p272 = scmp.ne.s32.totalorder %s257, %s271
    %p273 = scmp.eq.s32.totalorder %s27, 0
    %p274 = por %p272, %p273
    %s276 = sadd.s32 %s275, 1
    %p279 = scmp.eq.s32.totalorder %s21, 1
    %p280 = scmp.ne.s32.totalorder %s275, %s277
    %p281 = scmp.eq.s32.totalorder %s21, 0
    %p282 = por %p280, %p281
    %p283 = scmp.ne.s32.totalorder %s275, %s277
    %p284 = scmp.eq.s32.totalorder %s26, 1
    %p285 = por %p283, %p284
    %p286 = scmp.ne.s32.totalorder %s277, %s278
    %p287 = scmp.eq.s32.totalorder %s26, 0
    %p288 = por %p286, %p287
    %p289 = scmp.ne.s32.totalorder %s277, %s278
    %p290 = scmp.eq.s32.totalorder %s27, 1
    %p291 = por %p289, %p290
    %p293 = scmp.ne.s32.totalorder %s278, %s292
    %p294 = scmp.eq.s32.totalorder %s27, 0
    %p295 = por %p293, %p294
    %s297 = sadd.s32 %s296, 1
    %p300 = scmp.eq.s32.totalorder %s21, 1
    %p301 = scmp.ne.s32.totalorder %s296, %s298
    %p302 = scmp.eq.s32.totalorder %s21, 0
    %p303 = por %p301, %p302
    %p304 = scmp.ne.s32.totalorder %s296, %s298
    %p305 = scmp.eq.s32.totalorder %s26, 1
    %p306 = por %p304, %p305
    %p307 = scmp.ne.s32.totalorder %s298, %s299
    %p308 = scmp.eq.s32.totalorder %s26, 0
    %p309 = por %p307, %p308
    %p310 = scmp.ne.s32.totalorder %s298, %s299
    %p311 = scmp.eq.s32.totalorder %s27, 1
    %p312 = por %p310, %p311
    %p314 = scmp.ne.s32.totalorder %s299, %s313
    %p315 = scmp.eq.s32.totalorder %s27, 0
    %p316 = por %p314, %p315
    %s318 = sadd.s32 %s317, 1
    %p321 = scmp.eq.s32.totalorder %s21, 1
    %p322 = scmp.ne.s32.totalorder %s317, %s319
    %p323 = scmp.eq.s32.totalorder %s21, 0
    %p324 = por %p322, %p323
    %p325 = scmp.ne.s32.totalorder %s317, %s319
    %p326 = scmp.eq.s32.totalorder %s26, 1
    %p327 = por %p325, %p326
    %p328 = scmp.ne.s32.totalorder %s319, %s320
    %p329 = scmp.eq.s32.totalorder %s26, 0
    %p330 = por %p328, %p329
    %p331 = scmp.ne.s32.totalorder %s319, %s320
    %p332 = scmp.eq.s32.totalorder %s27, 1
    %p333 = por %p331, %p332
    %p335 = scmp.ne.s32.totalorder %s320, %s334
    %p336 = scmp.eq.s32.totalorder %s27, 0
    %p337 = por %p335, %p336
    %s339 = sadd.s32 %s338, 1
    %p342 = scmp.eq.s32.totalorder %s21, 1
    %p343 = scmp.ne.s32.totalorder %s338, %s340
    %p344 = scmp.eq.s32.totalorder %s21, 0
    %p345 = por %p343, %p344
    %p346 = scmp.ne.s32.totalorder %s338, %s340
    %p347 = scmp.eq.s32.totalorder %s26, 1
    %p348 = por %p346, %p347
    %p349 = scmp.ne.s32.totalorder %s340, %s341
    %p350 = scmp.eq.s32.totalorder %s26, 0
    %p351 = por %p349, %p350
    %p352 = scmp.ne.s32.totalorder %s340, %s341
    %p353 = scmp.eq.s32.totalorder %s27, 1
    %p354 = por %p352, %p353
    %p356 = scmp.ne.s32.totalorder %s341, %s355
    %p357 = scmp.eq.s32.totalorder %s27, 0
    %p358 = por %p356, %p357
    %s359 = ssub.s32 %s21, %s28
    %p360 = scmp.eq.s32.totalorder %s359, 0
    %s362 = sadd.s32 %s361, 1
    %s363 = scalar_select %p360, %s361, %s362
    %p366 = pneg %p360
    %p367 = scmp.eq.s32.totalorder %s21, 1
    %p368 = por %p366, %p367
    %p369 = scmp.ne.s32.totalorder %s361, %s364
    %p370 = scmp.eq.s32.totalorder %s21, 0
    %p371 = por %p369, %p370
    %p372 = scmp.ne.s32.totalorder %s361, %s364
    %p373 = scmp.eq.s32.totalorder %s26, 1
    %p374 = por %p372, %p373
    %p375 = scmp.ne.s32.totalorder %s364, %s365
    %p376 = scmp.eq.s32.totalorder %s26, 0
    %p377 = por %p375, %p376
    %p378 = scmp.ne.s32.totalorder %s364, %s365
    %p379 = scmp.eq.s32.totalorder %s27, 1
    %p380 = por %p378, %p379
    %p382 = scmp.ne.s32.totalorder %s365, %s381
    %p383 = scmp.eq.s32.totalorder %s27, 0
    %p384 = por %p382, %p383
    %p385 = scmp.le.s32.totalorder 1, %s21
    %p386 = scmp.lt.s32.totalorder %s21, 3
    %p387 = pnand %p385, %p386
    %p388 = pneg %p387
    // Predicated region
    $region9: #{_lambda_.13} parent=5 // pred_check
      _
    $region10: #{_lambda_.13} parent=5 // pred_check_branch
      %390 = sbr.rel (%p387) target = $region12
    $region11: #{_lambda_.13} parent=5 // pred_region
      %s391 = ssub.s32 %s21, 1
      // Predicated region
      $region13: #{_lambda_.13} parent=11 // pred_check
        %p392 = pneg %p120
      $region14: #{_lambda_.13} parent=11 // pred_check_branch
        %394 = sbr.rel (%p392) target = $region16
      $region15: #{_lambda_.13} parent=11 // pred_region
        _
      $region16: #{_lambda_.13} parent=11 // pred_fallthru
        _
      // Predicated region
      $region17: #{_lambda_.13} parent=11 // pred_check
        %p395 = pneg %p141
      $region18: #{_lambda_.13} parent=11 // pred_check_branch
        %397 = sbr.rel (%p395) target = $region20
      $region19: #{_lambda_.13} parent=11 // pred_region
        _
      $region20: #{_lambda_.13} parent=11 // pred_fallthru
        _
      // Predicated region
      $region21: #{_lambda_.13} parent=11 // pred_check
        %p398 = pneg %p162
      $region22: #{_lambda_.13} parent=11 // pred_check_branch
        %400 = sbr.rel (%p398) target = $region24
      $region23: #{_lambda_.13} parent=11 // pred_region
        _
      $region24: #{_lambda_.13} parent=11 // pred_fallthru
        _
      // Predicated region
      $region25: #{_lambda_.13} parent=11 // pred_check
        %p401 = pneg %p183
      $region26: #{_lambda_.13} parent=11 // pred_check_branch
        %403 = sbr.rel (%p401) target = $region28
      $region27: #{_lambda_.13} parent=11 // pred_region
        _
      $region28: #{_lambda_.13} parent=11 // pred_fallthru
        _
      // Predicated region
      $region29: #{_lambda_.13} parent=11 // pred_check
        %p404 = pneg %p204
      $region30: #{_lambda_.13} parent=11 // pred_check_branch
        %406 = sbr.rel (%p404) target = $region32
      $region31: #{_lambda_.13} parent=11 // pred_region
        _
      $region32: #{_lambda_.13} parent=11 // pred_fallthru
        _
      // Predicated region
      $region33: #{_lambda_.13} parent=11 // pred_check
        %p407 = pneg %p225
      $region34: #{_lambda_.13} parent=11 // pred_check_branch
        %409 = sbr.rel (%p407) target = $region36
      $region35: #{_lambda_.13} parent=11 // pred_region
        _
      $region36: #{_lambda_.13} parent=11 // pred_fallthru
        _
      // Predicated region
      $region37: #{_lambda_.13} parent=11 // pred_check
        %p410 = pneg %p246
      $region38: #{_lambda_.13} parent=11 // pred_check_branch
        %412 = sbr.rel (%p410) target = $region40
      $region39: #{_lambda_.13} parent=11 // pred_region
        _
      $region40: #{_lambda_.13} parent=11 // pred_fallthru
        _
      // Predicated region
      $region41: #{_lambda_.13} parent=11 // pred_check
        %p413 = pneg %p267
      $region42: #{_lambda_.13} parent=11 // pred_check_branch
        %415 = sbr.rel (%p413) target = $region44
      $region43: #{_lambda_.13} parent=11 // pred_region
        _
      $region44: #{_lambda_.13} parent=11 // pred_fallthru
        _
      // Predicated region
      $region45: #{_lambda_.13} parent=11 // pred_check
        %p416 = pneg %p288
      $region46: #{_lambda_.13} parent=11 // pred_check_branch
        %418 = sbr.rel (%p416) target = $region48
      $region47: #{_lambda_.13} parent=11 // pred_region
        _
      $region48: #{_lambda_.13} parent=11 // pred_fallthru
        _
      // Predicated region
      $region49: #{_lambda_.13} parent=11 // pred_check
        %p419 = pneg %p309
      $region50: #{_lambda_.13} parent=11 // pred_check_branch
        %421 = sbr.rel (%p419) target = $region52
      $region51: #{_lambda_.13} parent=11 // pred_region
        _
      $region52: #{_lambda_.13} parent=11 // pred_fallthru
        _
      // Predicated region
      $region53: #{_lambda_.13} parent=11 // pred_check
        %p422 = pneg %p330
      $region54: #{_lambda_.13} parent=11 // pred_check_branch
        %424 = sbr.rel (%p422) target = $region56
      $region55: #{_lambda_.13} parent=11 // pred_region
        _
      $region56: #{_lambda_.13} parent=11 // pred_fallthru
        _
      // Predicated region
      $region57: #{_lambda_.13} parent=11 // pred_check
        %p425 = pneg %p351
      $region58: #{_lambda_.13} parent=11 // pred_check_branch
        %427 = sbr.rel (%p425) target = $region60
      $region59: #{_lambda_.13} parent=11 // pred_region
        _
      $region60: #{_lambda_.13} parent=11 // pred_fallthru
        _
    $region12: #{_lambda_.13} parent=5 // pred_fallthru
      _
    %p428 = scmp.lt.s32.totalorder %s21, 2
    // Predicated region
    $region61: #{_lambda_.13} parent=5 // pred_check
      %p429 = pneg %p428
    $region62: #{_lambda_.13} parent=5 // pred_check_branch
      %431 = sbr.rel (%p429) target = $region64
    $region63: #{_lambda_.13} parent=5 // pred_region
      // Predicated region
      $region65: #{_lambda_.13} parent=63 // pred_check
        %p432 = pneg %p41
      $region66: #{_lambda_.13} parent=63 // pred_check_branch
        %434 = sbr.rel (%p432) target = $region68
      $region67: #{_lambda_.13} parent=63 // pred_region
        %p435 = scmp.lt.s32.totalorder %s21, 1
        %s436 = scalar_select %p435, %s21, 1
        %s437 = smul.addr %s436, 4
        %s438 = smul.addr %s437, 8
        %s439 = scalar_lea.vmem %s0, %s438
      $region68: #{_lambda_.13} parent=63 // pred_fallthru
        _
      // Predicated region
      $region69: #{_lambda_.13} parent=63 // pred_check
        %p440 = pneg %p67
      $region70: #{_lambda_.13} parent=63 // pred_check_branch
        %442 = sbr.rel (%p440) target = $region72
      $region71: #{_lambda_.13} parent=63 // pred_region
        %p443 = scmp.lt.s32.totalorder %s21, 1
        %s444 = scalar_select %p443, %s21, 1
        %s445 = scalar_lea.vmem %s1, %s444
      $region72: #{_lambda_.13} parent=63 // pred_fallthru
        _
      // Predicated region
      $region73: #{_lambda_.13} parent=63 // pred_check
        %p446 = pneg %p93
      $region74: #{_lambda_.13} parent=63 // pred_check_branch
        %448 = sbr.rel (%p446) target = $region76
      $region75: #{_lambda_.13} parent=63 // pred_region
        %p449 = scmp.lt.s32.totalorder %s21, 1
        %s450 = scalar_select %p449, %s21, 1
        %s451 = smul.addr %s450, 4
        %s452 = smul.addr %s451, 8
        %s453 = scalar_lea.vmem %s2, %s452
      $region76: #{_lambda_.13} parent=63 // pred_fallthru
        _
    $region64: #{_lambda_.13} parent=5 // pred_fallthru
      _
    %p454 = scmp.le.s32.totalorder 1, %s21
    %p455 = scmp.lt.s32.totalorder %s21, 3
    %p456 = pnand %p454, %p455
    %p457 = pneg %p456
    // Predicated region
    $region77: #{_lambda_.13} parent=5 // pred_check
      _
    $region78: #{_lambda_.13} parent=5 // pred_check_branch
      %459 = sbr.rel (%p456) target = $region80
    $region79: #{_lambda_.13} parent=5 // pred_region
      %s460 = ssub.s32 %s21, 1
      %p461 = scmp.lt.s32.totalorder %s26, 1
      %s462 = scalar_select %p461, %s26, 1
      %s463 = smul.addr %s462, 4
      %s464 = smul.addr %s463, 8
      %s465 = scalar_lea.vmem %s0, %s464
      %p466 = pneg %p47
      %p467 = pneg %p44
      %p468 = scmp.lt.s32.totalorder %s26, 1
      %s469 = scalar_select %p468, %s26, 1
      %s470 = scalar_lea.vmem %s1, %s469
      %p471 = pneg %p73
      %p472 = pneg %p70
      %p473 = scmp.lt.s32.totalorder %s26, 1
      %s474 = scalar_select %p473, %s26, 1
      %s475 = smul.addr %s474, 4
      %s476 = smul.addr %s475, 8
      %s477 = scalar_lea.vmem %s2, %s476
      %p478 = pneg %p99
      %p479 = pneg %p96
      %p480 = pneg %p120
      %p481 = pneg %p117
      %p482 = pneg %p141
      %p483 = pneg %p138
      %p484 = pneg %p162
      %p485 = pneg %p159
      %p486 = pneg %p183
      %p487 = pneg %p180
      %p488 = pneg %p204
      %p489 = pneg %p201
      %p490 = pneg %p225
      %p491 = pneg %p222
      %p492 = pneg %p246
      %p493 = pneg %p243
      %p494 = pneg %p267
      %p495 = pneg %p264
      %p496 = pneg %p288
      %p497 = pneg %p285
      %p498 = pneg %p309
      %p499 = pneg %p306
      %p500 = pneg %p330
      %p501 = pneg %p327
      %p502 = pneg %p351
      %p503 = pneg %p348
      %p504 = pneg %p377
      %p505 = pneg %p374
      %p506 = scmp.lt.s32.totalorder %s26, 1
      %s507 = scalar_select %p506, %s26, 1
      %s508 = smul.addr %s507, 4
      %s509 = smul.addr %s508, 8
      %s510 = scalar_lea.vmem %s15, %s509
      %p511 = scmp.lt.s32.totalorder %s26, 1
      %s512 = scalar_select %p511, %s26, 1
      %s513 = smul.addr %s512, 4
      %s514 = smul.addr %s513, 8
      %s515 = scalar_lea.vmem %s0, %s514
      %p516 = scmp.lt.s32.totalorder %s26, 1
      %s517 = scalar_select %p516, %s26, 1
      %s518 = scalar_lea.vmem %s1, %s517
      %p519 = scmp.lt.s32.totalorder %s26, 1
      %s520 = scalar_select %p519, %s26, 1
      %s521 = smul.addr %s520, 4
      %s522 = smul.addr %s521, 8
      %s523 = scalar_lea.vmem %s2, %s522
      %p524 = scmp.lt.s32.totalorder %s26, 1
      %s525 = scalar_select %p524, %s26, 1
      %s526 = smul.addr %s525, 4
      %s527 = smul.addr %s526, 8
      %s528 = scalar_lea.vmem %s15, %s527
      %v530 = vld [vmem:[%s515] sm:$0xff]
      %v531 = vld [vmem:[%s515 + $0x8] sm:$0xff]
      %v532 = vld [vmem:[%s515 + $0x10] sm:$0xff]
      %v533 = vld [vmem:[%s515 + $0x18] sm:$0xff]
      %v534 = vld [vmem:[%s518] sm:$0x1]
      %v535 = vld [vmem:[%s523] sm:$0xff]
      %v536 = vld [vmem:[%s523 + $0x8] sm:$0xff]
      %v537 = vld [vmem:[%s523 + $0x10] sm:$0xff]
      %v538 = vld [vmem:[%s523 + $0x18] sm:$0xff]
      %v539 = vld [vmem:[%s3] sm:$0xff]
      %v540 = vld [vmem:[%s3 + $0x8] sm:$0xff]
      %v541 = vld [vmem:[%s3 + $0x10] sm:$0xff]
      %v542 = vld [vmem:[%s3 + $0x18] sm:$0xff]
      %v543 = vpack.c.bf16 %v531, %v530
      %v544 = vpack.c.bf16 %v533, %v532
      %v545 = vpack.c.bf16 %v540, %v539
      %v546 = vpack.c.bf16 %v542, %v541
      %v547 = vld [vmem:[%s4] sm:$0x1]
      %v549 = vlaneseq
      %v550 = vshrl.u32 %v549, 7
      %v551 = vsub.s32 0, %v550
      %v552 = vrot.slane %v547, %v551
      %vm554 = vcmask 261120
      %v556 = vsel %vm554, %v543, 0
      %v559 = vsel %vm554, %v544, 0
      %561 = vmatprep.subr.bf16.mxu0 0
      %562 = vmatpush1.bf16.msra.mxu0 0
      %563 = vmatprep.subr.bf16.mxu0 0
      %564 = vmatpush1.bf16.msra.mxu0 0
      %565 = vmatprep.subr.bf16.mxu0 0
      %566 = vmatpush1.bf16.msra.mxu0 0
      %567 = vmatprep.subr.bf16.mxu0 0
      %568 = vmatpush1.bf16.msra.mxu0 0
      %569 = vmatprep.subr.bf16.mxu0 0
      %570 = vmatpush1.bf16.msra.mxu0 0
      %571 = vmatprep.subr.bf16.mxu0 0
      %572 = vmatpush1.bf16.msra.mxu0 0
      %573 = vmatprep.subr.bf16.mxu0 0
      %574 = vmatpush1.bf16.msra.mxu0 %v546
      %575 = vmatprep.subr.bf16.mxu0 0
      %576 = vmatpush1.bf16.msra.mxu0 %v545
      %577 = vmatprep.subr.bf16.mxu0 0
      %578 = vmatpush2.bf16.msra.mxu0 0
      %579 = vmatprep.subr.bf16.mxu0 0
      %580 = vmatpush2.bf16.msra.mxu0 0
      %581 = vmatprep.subr.bf16.mxu0 0
      %582 = vmatpush2.bf16.msra.mxu0 0
      %583 = vmatprep.subr.bf16.mxu0 0
      %584 = vmatpush2.bf16.msra.mxu0 0
      %585 = vmatprep.subr.bf16.mxu0 0
      %586 = vmatpush2.bf16.msra.mxu0 0
      %587 = vmatprep.subr.bf16.mxu0 0
      %588 = vmatpush2.bf16.msra.mxu0 0
      %589 = vmatprep.subr.bf16.mxu0 0
      %590 = vmatpush2.bf16.msra.mxu0 0
      %591 = vmatprep.subr.bf16.mxu0 0
      %592 = vmatpush2.bf16.msra.mxu0 0
      %593 = vmatprep.mubr.bf16.mxu0 0
      %594 = vmatmul.mubr.bf16.gmra.mxu0 %v556
      %v595 = vpop.f32.mrf.mxu0
      %v596 = vadd.f32 %v552, %v595
      %v597 = vpop.f32.mrf.mxu0
      %v598 = vpop.f32.mrf.mxu0
      %v599 = vadd.f32 %v552, %v598
      %v600 = vpop.f32.mrf.mxu0
      %601 = vmatprep.mubr.bf16.mxu0 0
      %602 = vmatmul.mubr.bf16.gmra.mxu0 %v559
      %v603 = vpop.f32.mrf.mxu0
      %v604 = vadd.f32 %v552, %v603
      %v605 = vpop.f32.mrf.mxu0
      %v606 = vpop.f32.mrf.mxu0
      %v607 = vadd.f32 %v552, %v606
      %v608 = vpop.f32.mrf.mxu0
      %609 = vdwg.mxu0
      %v610 = vpack.c.bf16 %v599, %v596
      %v611 = vpack.c.bf16 %v607, %v604
      %614 = vrot.lane.b32.xlu0 %v610, 96
      %v615 = vpop.permute.xlu0 %614
      %616 = vrot.lane.b32.xlu0 %v611, 96
      %v617 = vpop.permute.xlu0 %616
      %vm618 = vcmask 130048
      %v620 = vsel %vm618, %v610, 0
      %v623 = vsel %vm618, %v611, 0
      %v626 = vsel %vm618, %v615, 0
      %v629 = vsel %vm618, %v617, 0
      %631 = vmatprep.subr.bf16.mxu0 0
      %632 = vmatpush1.bf16.xpose.msra.mxu0 0
      %633 = vmatprep.subr.bf16.mxu0 0
      %634 = vmatpush1.bf16.xpose.msra.mxu0 0
      %635 = vmatprep.subr.bf16.mxu0 0
      %636 = vmatpush1.bf16.xpose.msra.mxu0 0
      %637 = vmatprep.subr.bf16.mxu0 0
      %638 = vmatpush1.bf16.xpose.msra.mxu0 0
      %639 = vmatprep.subr.bf16.mxu0 0
      %640 = vmatpush1.bf16.xpose.msra.mxu0 0
      %641 = vmatprep.subr.bf16.mxu0 0
      %642 = vmatpush1.bf16.xpose.msra.mxu0 0
      %643 = vmatprep.subr.bf16.mxu0 0
      %644 = vmatpush1.bf16.xpose.msra.mxu0 %v629
      %645 = vmatprep.subr.bf16.mxu0 0
      %646 = vmatpush1.bf16.xpose.msra.mxu0 %v626
      %647 = vmatprep.subr.bf16.mxu0 0
      %648 = vmatpush2.bf16.xpose.msra.mxu0 0
      %649 = vmatprep.subr.bf16.mxu0 0
      %650 = vmatpush2.bf16.xpose.msra.mxu0 0
      %651 = vmatprep.subr.bf16.mxu0 0
      %652 = vmatpush2.bf16.xpose.msra.mxu0 0
      %653 = vmatprep.subr.bf16.mxu0 0
      %654 = vmatpush2.bf16.xpose.msra.mxu0 0
      %655 = vmatprep.subr.bf16.mxu0 0
      %656 = vmatpush2.bf16.xpose.msra.mxu0 0
      %657 = vmatprep.subr.bf16.mxu0 0
      %658 = vmatpush2.bf16.xpose.msra.mxu0 0
      %659 = vmatprep.subr.bf16.mxu0 0
      %660 = vmatpush2.bf16.xpose.msra.mxu0 0
      %661 = vmatprep.subr.bf16.mxu0 0
      %662 = vmatpush2.bf16.xpose.msra.mxu0 0
      %663 = vmatprep.mubr.bf16.mxu0 0
      %664 = vmatmul.mubr.bf16.gmra.mxu0 %v620
      %v665 = vpop.f32.mrf.mxu0
      %v666 = vadd.f32 0.0, %v665
      %v667 = vpop.f32.mrf.mxu0
      %v668 = vpop.f32.mrf.mxu0
      %v669 = vadd.f32 0.0, %v668
      %v670 = vpop.f32.mrf.mxu0
      %671 = vmatprep.mubr.bf16.mxu0 0
      %672 = vmatmul.mubr.bf16.gmra.mxu0 %v623
      %v673 = vpop.f32.mrf.mxu0
      %v674 = vadd.f32 0.0, %v673
      %v675 = vpop.f32.mrf.mxu0
      %v676 = vpop.f32.mrf.mxu0
      %v677 = vadd.f32 0.0, %v676
      %v678 = vpop.f32.mrf.mxu0
      %679 = vdwg.mxu0
      %v680 = vmul.f32 %v666, 0.25
      %v681 = vmul.f32 %v669, 0.25
      %v682 = vmul.f32 %v674, 0.25
      %v683 = vmul.f32 %v677, 0.25
      %v685 = vlaneseq
      %v686 = vshrl.u32 %v685, 7
      %v687 = vsub.s32 0, %v686
      %v688 = vrot.slane %v534, %v687
      %v690 = vadd.f32 %v680, %v688
      %v691 = vadd.f32 %v681, %v688
      %v692 = vadd.f32 %v682, %v688
      %v693 = vadd.f32 %v683, %v688
      %v694 = vsel %vm554, %v690, -inf
      %695 = vmax.xlane.f32.xlu0 %v694
      %v696 = vpop.xlane.xlu0 %695
      %v697 = vsel %vm554, %v691, -inf
      %698 = vmax.xlane.f32.xlu0 %v697
      %v699 = vpop.xlane.xlu0 %698
      %v700 = vsel %vm554, %v692, -inf
      %701 = vmax.xlane.f32.xlu0 %v700
      %v702 = vpop.xlane.xlu0 %701
      %v703 = vsel %vm554, %v693, -inf
      %704 = vmax.xlane.f32.xlu0 %v703
      %v705 = vpop.xlane.xlu0 %704
      %v706 = vsub.f32 %v690, %v696
      %v707 = vsub.f32 %v691, %v699
      %v708 = vsub.f32 %v692, %v702
      %v709 = vsub.f32 %v693, %v705
      %v710 = vmul.f32 %v706, 1.442695
      %v711 = vpow.pop %v710
      %v712 = vmul.f32 %v707, 1.442695
      %v713 = vpow.pop %v712
      %v714 = vmul.f32 %v708, 1.442695
      %v715 = vpow.pop %v714
      %v716 = vmul.f32 %v709, 1.442695
      %v717 = vpow.pop %v716
      %v718 = vsel %vm554, %v711, 0.0
      %719 = vadd.xlane.f32.xlu0 %v718
      %v720 = vpop.xlane.xlu0 %719
      %v721 = vsel %vm554, %v713, 0.0
      %722 = vadd.xlane.f32.xlu0 %v721
      %v723 = vpop.xlane.xlu0 %722
      %v724 = vsel %vm554, %v715, 0.0
      %725 = vadd.xlane.f32.xlu0 %v724
      %v726 = vpop.xlane.xlu0 %725
      %v727 = vsel %vm554, %v717, 0.0
      %728 = vadd.xlane.f32.xlu0 %v727
      %v729 = vpop.xlane.xlu0 %728
      %v730 = vrcp.pop %v720
      %v731 = vrcp.pop %v723
      %v732 = vrcp.pop %v726
      %v733 = vrcp.pop %v729
      %v734 = vmul.f32 %v711, %v730
      %v735 = vmul.f32 %v713, %v731
      %v736 = vmul.f32 %v715, %v732
      %v737 = vmul.f32 %v717, %v733
      %v738 = vpack.c.bf16 %v735, %v734
      %v739 = vpack.c.bf16 %v737, %v736
      %740 = vrot.lane.b32.xlu0 %v610, 64
      %v741 = vpop.permute.xlu0 %740
      %742 = vrot.lane.b32.xlu0 %v611, 64
      %v743 = vpop.permute.xlu0 %742
      %v747 = vsel %vm554, %v738, 0
      %v750 = vsel %vm554, %v739, 0
      %752 = vmatprep.subr.bf16.mxu0 0
      %753 = vmatpush1.bf16.msra.mxu0 0
      %754 = vmatprep.subr.bf16.mxu0 0
      %755 = vmatpush1.bf16.msra.mxu0 0
      %756 = vmatprep.subr.bf16.mxu0 0
      %757 = vmatpush1.bf16.msra.mxu0 0
      %758 = vmatprep.subr.bf16.mxu0 0
      %759 = vmatpush1.bf16.msra.mxu0 0
      %760 = vmatprep.subr.bf16.mxu0 0
      %761 = vmatpush1.bf16.msra.mxu0 0
      %762 = vmatprep.subr.bf16.mxu0 0
      %763 = vmatpush1.bf16.msra.mxu0 0
      %764 = vmatprep.subr.bf16.mxu0 0
      %765 = vmatpush1.bf16.msra.mxu0 %v743
      %766 = vmatprep.subr.bf16.mxu0 0
      %767 = vmatpush1.bf16.msra.mxu0 %v741
      %768 = vmatprep.subr.bf16.mxu0 0
      %769 = vmatpush2.bf16.msra.mxu0 0
      %770 = vmatprep.subr.bf16.mxu0 0
      %771 = vmatpush2.bf16.msra.mxu0 0
      %772 = vmatprep.subr.bf16.mxu0 0
      %773 = vmatpush2.bf16.msra.mxu0 0
      %774 = vmatprep.subr.bf16.mxu0 0
      %775 = vmatpush2.bf16.msra.mxu0 0
      %776 = vmatprep.subr.bf16.mxu0 0
      %777 = vmatpush2.bf16.msra.mxu0 0
      %778 = vmatprep.subr.bf16.mxu0 0
      %779 = vmatpush2.bf16.msra.mxu0 0
      %780 = vmatprep.subr.bf16.mxu0 0
      %781 = vmatpush2.bf16.msra.mxu0 0
      %782 = vmatprep.subr.bf16.mxu0 0
      %783 = vmatpush2.bf16.msra.mxu0 0
      %784 = vmatprep.mubr.bf16.mxu0 0
      %785 = vmatmul.mubr.bf16.gmra.mxu0 %v747
      %v786 = vpop.f32.mrf.mxu0
      %v787 = vadd.f32 0.0, %v786
      %v788 = vpop.f32.mrf.mxu0
      %v789 = vpop.f32.mrf.mxu0
      %v790 = vadd.f32 0.0, %v789
      %v791 = vpop.f32.mrf.mxu0
      %792 = vmatprep.mubr.bf16.mxu0 0
      %793 = vmatmul.mubr.bf16.gmra.mxu0 %v750
      %v794 = vpop.f32.mrf.mxu0
      %v795 = vadd.f32 0.0, %v794
      %v796 = vpop.f32.mrf.mxu0
      %v797 = vpop.f32.mrf.mxu0
      %v798 = vadd.f32 0.0, %v797
      %v799 = vpop.f32.mrf.mxu0
      %800 = vdwg.mxu0
      %801 = vrot.lane.b32.xlu0 %v610, 112
      %v802 = vpop.permute.xlu0 %801
      %803 = vrot.lane.b32.xlu0 %v611, 112
      %v804 = vpop.permute.xlu0 %803
      %805 = vrot.lane.b32.xlu0 %v610, 80
      %v806 = vpop.permute.xlu0 %805
      %807 = vrot.lane.b32.xlu0 %v611, 80
      %v808 = vpop.permute.xlu0 %807
      %v810 = vsel %vm618, %v802, 0
      %v813 = vsel %vm618, %v804, 0
      %v816 = vsel %vm618, %v806, 0
      %v819 = vsel %vm618, %v808, 0
      %821 = vmatprep.subr.bf16.mxu0 0
      %822 = vmatpush1.bf16.xpose.msra.mxu0 0
      %823 = vmatprep.subr.bf16.mxu0 0
      %824 = vmatpush1.bf16.xpose.msra.mxu0 0
      %825 = vmatprep.subr.bf16.mxu0 0
      %826 = vmatpush1.bf16.xpose.msra.mxu0 0
      %827 = vmatprep.subr.bf16.mxu0 0
      %828 = vmatpush1.bf16.xpose.msra.mxu0 0
      %829 = vmatprep.subr.bf16.mxu0 0
      %830 = vmatpush1.bf16.xpose.msra.mxu0 0
      %831 = vmatprep.subr.bf16.mxu0 0
      %832 = vmatpush1.bf16.xpose.msra.mxu0 0
      %833 = vmatprep.subr.bf16.mxu0 0
      %834 = vmatpush1.bf16.xpose.msra.mxu0 %v819
      %835 = vmatprep.subr.bf16.mxu0 0
      %836 = vmatpush1.bf16.xpose.msra.mxu0 %v816
      %837 = vmatprep.subr.bf16.mxu0 0
      %838 = vmatpush2.bf16.xpose.msra.mxu0 0
      %839 = vmatprep.subr.bf16.mxu0 0
      %840 = vmatpush2.bf16.xpose.msra.mxu0 0
      %841 = vmatprep.subr.bf16.mxu0 0
      %842 = vmatpush2.bf16.xpose.msra.mxu0 0
      %843 = vmatprep.subr.bf16.mxu0 0
      %844 = vmatpush2.bf16.xpose.msra.mxu0 0
      %845 = vmatprep.subr.bf16.mxu0 0
      %846 = vmatpush2.bf16.xpose.msra.mxu0 0
      %847 = vmatprep.subr.bf16.mxu0 0
      %848 = vmatpush2.bf16.xpose.msra.mxu0 0
      %849 = vmatprep.subr.bf16.mxu0 0
      %850 = vmatpush2.bf16.xpose.msra.mxu0 0
      %851 = vmatprep.subr.bf16.mxu0 0
      %852 = vmatpush2.bf16.xpose.msra.mxu0 0
      %853 = vmatprep.mubr.bf16.mxu0 0
      %854 = vmatmul.mubr.bf16.gmra.mxu0 %v810
      %v855 = vpop.f32.mrf.mxu0
      %v856 = vadd.f32 0.0, %v855
      %v857 = vpop.f32.mrf.mxu0
      %v858 = vpop.f32.mrf.mxu0
      %v859 = vadd.f32 0.0, %v858
      %v860 = vpop.f32.mrf.mxu0
      %861 = vmatprep.mubr.bf16.mxu0 0
      %862 = vmatmul.mubr.bf16.gmra.mxu0 %v813
      %v863 = vpop.f32.mrf.mxu0
      %v864 = vadd.f32 0.0, %v863
      %v865 = vpop.f32.mrf.mxu0
      %v866 = vpop.f32.mrf.mxu0
      %v867 = vadd.f32 0.0, %v866
      %v868 = vpop.f32.mrf.mxu0
      %869 = vdwg.mxu0
      %v870 = vmul.f32 %v856, 0.25
      %v871 = vmul.f32 %v859, 0.25
      %v872 = vmul.f32 %v864, 0.25
      %v873 = vmul.f32 %v867, 0.25
      %v874 = vadd.f32 %v870, %v688
      %v875 = vadd.f32 %v871, %v688
      %v876 = vadd.f32 %v872, %v688
      %v877 = vadd.f32 %v873, %v688
      %v878 = vsel %vm554, %v874, -inf
      %879 = vmax.xlane.f32.xlu0 %v878
      %v880 = vpop.xlane.xlu0 %879
      %v881 = vsel %vm554, %v875, -inf
      %882 = vmax.xlane.f32.xlu0 %v881
      %v883 = vpop.xlane.xlu0 %882
      %v884 = vsel %vm554, %v876, -inf
      %885 = vmax.xlane.f32.xlu0 %v884
      %v886 = vpop.xlane.xlu0 %885
      %v887 = vsel %vm554, %v877, -inf
      %888 = vmax.xlane.f32.xlu0 %v887
      %v889 = vpop.xlane.xlu0 %888
      %v890 = vsub.f32 %v874, %v880
      %v891 = vsub.f32 %v875, %v883
      %v892 = vsub.f32 %v876, %v886
      %v893 = vsub.f32 %v877, %v889
      %v894 = vmul.f32 %v890, 1.442695
      %v895 = vpow.pop %v894
      %v896 = vmul.f32 %v891, 1.442695
      %v897 = vpow.pop %v896
      %v898 = vmul.f32 %v892, 1.442695
      %v899 = vpow.pop %v898
      %v900 = vmul.f32 %v893, 1.442695
      %v901 = vpow.pop %v900
      %v902 = vsel %vm554, %v895, 0.0
      %903 = vadd.xlane.f32.xlu0 %v902
      %v904 = vpop.xlane.xlu0 %903
      %v905 = vsel %vm554, %v897, 0.0
      %906 = vadd.xlane.f32.xlu0 %v905
      %v907 = vpop.xlane.xlu0 %906
      %v908 = vsel %vm554, %v899, 0.0
      %909 = vadd.xlane.f32.xlu0 %v908
      %v910 = vpop.xlane.xlu0 %909
      %v911 = vsel %vm554, %v901, 0.0
      %912 = vadd.xlane.f32.xlu0 %v911
      %v913 = vpop.xlane.xlu0 %912
      %v914 = vrcp.pop %v904
      %v915 = vrcp.pop %v907
      %v916 = vrcp.pop %v910
      %v917 = vrcp.pop %v913
      %v918 = vmul.f32 %v895, %v914
      %v919 = vmul.f32 %v897, %v915
      %v920 = vmul.f32 %v899, %v916
      %v921 = vmul.f32 %v901, %v917
      %v922 = vpack.c.bf16 %v919, %v918
      %v923 = vpack.c.bf16 %v921, %v920
      %924 = vrot.lane.b32.xlu0 %v610, 48
      %v925 = vpop.permute.xlu0 %924
      %926 = vrot.lane.b32.xlu0 %v611, 48
      %v927 = vpop.permute.xlu0 %926
      %v931 = vsel %vm554, %v922, 0
      %v934 = vsel %vm554, %v923, 0
      %936 = vmatprep.subr.bf16.mxu0 0
      %937 = vmatpush1.bf16.msra.mxu0 0
      %938 = vmatprep.subr.bf16.mxu0 0
      %939 = vmatpush1.bf16.msra.mxu0 0
      %940 = vmatprep.subr.bf16.mxu0 0
      %941 = vmatpush1.bf16.msra.mxu0 0
      %942 = vmatprep.subr.bf16.mxu0 0
      %943 = vmatpush1.bf16.msra.mxu0 0
      %944 = vmatprep.subr.bf16.mxu0 0
      %945 = vmatpush1.bf16.msra.mxu0 0
      %946 = vmatprep.subr.bf16.mxu0 0
      %947 = vmatpush1.bf16.msra.mxu0 0
      %948 = vmatprep.subr.bf16.mxu0 0
      %949 = vmatpush1.bf16.msra.mxu0 %v927
      %950 = vmatprep.subr.bf16.mxu0 0
      %951 = vmatpush1.bf16.msra.mxu0 %v925
      %952 = vmatprep.subr.bf16.mxu0 0
      %953 = vmatpush2.bf16.msra.mxu0 0
      %954 = vmatprep.subr.bf16.mxu0 0
      %955 = vmatpush2.bf16.msra.mxu0 0
      %956 = vmatprep.subr.bf16.mxu0 0
      %957 = vmatpush2.bf16.msra.mxu0 0
      %958 = vmatprep.subr.bf16.mxu0 0
      %959 = vmatpush2.bf16.msra.mxu0 0
      %960 = vmatprep.subr.bf16.mxu0 0
      %961 = vmatpush2.bf16.msra.mxu0 0
      %962 = vmatprep.subr.bf16.mxu0 0
      %963 = vmatpush2.bf16.msra.mxu0 0
      %964 = vmatprep.subr.bf16.mxu0 0
      %965 = vmatpush2.bf16.msra.mxu0 0
      %966 = vmatprep.subr.bf16.mxu0 0
      %967 = vmatpush2.bf16.msra.mxu0 0
      %968 = vmatprep.mubr.bf16.mxu0 0
      %969 = vmatmul.mubr.bf16.gmra.mxu0 %v931
      %v970 = vpop.f32.mrf.mxu0
      %v971 = vadd.f32 0.0, %v970
      %v972 = vpop.f32.mrf.mxu0
      %v973 = vpop.f32.mrf.mxu0
      %v974 = vadd.f32 0.0, %v973
      %v975 = vpop.f32.mrf.mxu0
      %976 = vmatprep.mubr.bf16.mxu0 0
      %977 = vmatmul.mubr.bf16.gmra.mxu0 %v934
      %v978 = vpop.f32.mrf.mxu0
      %v979 = vadd.f32 0.0, %v978
      %v980 = vpop.f32.mrf.mxu0
      %v981 = vpop.f32.mrf.mxu0
      %v982 = vadd.f32 0.0, %v981
      %v983 = vpop.f32.mrf.mxu0
      %984 = vdwg.mxu0
      %989 = vrot.lane.b32.xlu0 %v971, 16
      %v990 = vpop.permute.xlu0 %989
      %991 = vrot.lane.b32.xlu0 %v974, 16
      %v992 = vpop.permute.xlu0 %991
      %993 = vrot.lane.b32.xlu0 %v979, 16
      %v994 = vpop.permute.xlu0 %993
      %995 = vrot.lane.b32.xlu0 %v982, 16
      %v996 = vpop.permute.xlu0 %995
      %v1001 = vsel %vm618, %v787, %v990
      %v1002 = vsel %vm618, %v790, %v992
      %v1003 = vsel %vm618, %v795, %v994
      %v1004 = vsel %vm618, %v798, %v996
      %v1005 = vld [vmem:[%s5] sm:$0xff]
      %v1006 = vld [vmem:[%s5 + $0x8] sm:$0xff]
      %v1007 = vld [vmem:[%s5 + $0x10] sm:$0xff]
      %v1008 = vld [vmem:[%s5 + $0x18] sm:$0xff]
      %v1009 = vpack.c.bf16 %v1002, %v1001
      %v1010 = vpack.c.bf16 %v1004, %v1003
      %v1011 = vpack.c.bf16 %v1006, %v1005
      %v1012 = vpack.c.bf16 %v1008, %v1007
      %v1013 = vld [vmem:[%s6] sm:$0x1]
      %v1015 = vlaneseq
      %v1016 = vshrl.u32 %v1015, 7
      %v1017 = vsub.s32 0, %v1016
      %v1018 = vrot.slane %v1013, %v1017
      %v1021 = vsel %vm554, %v1009, 0
      %v1024 = vsel %vm554, %v1010, 0
      %1026 = vmatprep.subr.bf16.mxu0 0
      %1027 = vmatpush1.bf16.msra.mxu0 0
      %1028 = vmatprep.subr.bf16.mxu0 0
      %1029 = vmatpush1.bf16.msra.mxu0 0
      %1030 = vmatprep.subr.bf16.mxu0 0
      %1031 = vmatpush1.bf16.msra.mxu0 0
      %1032 = vmatprep.subr.bf16.mxu0 0
      %1033 = vmatpush1.bf16.msra.mxu0 0
      %1034 = vmatprep.subr.bf16.mxu0 0
      %1035 = vmatpush1.bf16.msra.mxu0 0
      %1036 = vmatprep.subr.bf16.mxu0 0
      %1037 = vmatpush1.bf16.msra.mxu0 0
      %1038 = vmatprep.subr.bf16.mxu0 0
      %1039 = vmatpush1.bf16.msra.mxu0 %v1012
      %1040 = vmatprep.subr.bf16.mxu0 0
      %1041 = vmatpush1.bf16.msra.mxu0 %v1011
      %1042 = vmatprep.subr.bf16.mxu0 0
      %1043 = vmatpush2.bf16.msra.mxu0 0
      %1044 = vmatprep.subr.bf16.mxu0 0
      %1045 = vmatpush2.bf16.msra.mxu0 0
      %1046 = vmatprep.subr.bf16.mxu0 0
      %1047 = vmatpush2.bf16.msra.mxu0 0
      %1048 = vmatprep.subr.bf16.mxu0 0
      %1049 = vmatpush2.bf16.msra.mxu0 0
      %1050 = vmatprep.subr.bf16.mxu0 0
      %1051 = vmatpush2.bf16.msra.mxu0 0
      %1052 = vmatprep.subr.bf16.mxu0 0
      %1053 = vmatpush2.bf16.msra.mxu0 0
      %1054 = vmatprep.subr.bf16.mxu0 0
      %1055 = vmatpush2.bf16.msra.mxu0 0
      %1056 = vmatprep.subr.bf16.mxu0 0
      %1057 = vmatpush2.bf16.msra.mxu0 0
      %1058 = vmatprep.mubr.bf16.mxu0 0
      %1059 = vmatmul.mubr.bf16.gmra.mxu0 %v1021
      %v1060 = vpop.f32.mrf.mxu0
      %v1061 = vadd.f32 %v1018, %v1060
      %v1062 = vpop.f32.mrf.mxu0
      %v1063 = vpop.f32.mrf.mxu0
      %v1064 = vadd.f32 %v1018, %v1063
      %v1065 = vpop.f32.mrf.mxu0
      %1066 = vmatprep.mubr.bf16.mxu0 0
      %1067 = vmatmul.mubr.bf16.gmra.mxu0 %v1024
      %v1068 = vpop.f32.mrf.mxu0
      %v1069 = vadd.f32 %v1018, %v1068
      %v1070 = vpop.f32.mrf.mxu0
      %v1071 = vpop.f32.mrf.mxu0
      %v1072 = vadd.f32 %v1018, %v1071
      %v1073 = vpop.f32.mrf.mxu0
      %1074 = vdwg.mxu0
      %v1075 = vadd.f32 %v1061, %v530
      %v1076 = vadd.f32 %v1064, %v531
      %v1077 = vadd.f32 %v1069, %v532
      %v1078 = vadd.f32 %v1072, %v533
      %v1079 = vld [vmem:[%s7] sm:$0x1]
      %v1080 = vld [vmem:[%s8] sm:$0x1]
      %v1081 = vsel %vm554, %v1075, 0.0
      %1082 = vadd.xlane.f32.xlu0 %v1081
      %v1083 = vpop.xlane.xlu0 %1082
      %v1084 = vsel %vm554, %v1076, 0.0
      %1085 = vadd.xlane.f32.xlu0 %v1084
      %v1086 = vpop.xlane.xlu0 %1085
      %v1087 = vsel %vm554, %v1077, 0.0
      %1088 = vadd.xlane.f32.xlu0 %v1087
      %v1089 = vpop.xlane.xlu0 %1088
      %v1090 = vsel %vm554, %v1078, 0.0
      %1091 = vadd.xlane.f32.xlu0 %v1090
      %v1092 = vpop.xlane.xlu0 %1091
      %v1093 = vrcp.pop 32.0
      %v1094 = vmul.f32 %v1083, %v1093
      %v1095 = vmul.f32 %v1086, %v1093
      %v1096 = vmul.f32 %v1089, %v1093
      %v1097 = vmul.f32 %v1092, %v1093
      %v1098 = vsub.f32 %v1075, %v1094
      %v1099 = vsub.f32 %v1076, %v1095
      %v1100 = vsub.f32 %v1077, %v1096
      %v1101 = vsub.f32 %v1078, %v1097
      %v1102 = vmul.f32 %v1098, %v1098
      %v1103 = vmul.f32 %v1099, %v1099
      %v1104 = vmul.f32 %v1100, %v1100
      %v1105 = vmul.f32 %v1101, %v1101
      %v1106 = vsel %vm554, %v1102, 0.0
      %1107 = vadd.xlane.f32.xlu0 %v1106
      %v1108 = vpop.xlane.xlu0 %1107
      %v1109 = vsel %vm554, %v1103, 0.0
      %1110 = vadd.xlane.f32.xlu0 %v1109
      %v1111 = vpop.xlane.xlu0 %1110
      %v1112 = vsel %vm554, %v1104, 0.0
      %1113 = vadd.xlane.f32.xlu0 %v1112
      %v1114 = vpop.xlane.xlu0 %1113
      %v1115 = vsel %vm554, %v1105, 0.0
      %1116 = vadd.xlane.f32.xlu0 %v1115
      %v1117 = vpop.xlane.xlu0 %1116
      %v1118 = vmul.f32 %v1108, %v1093
      %v1119 = vmul.f32 %v1111, %v1093
      %v1120 = vmul.f32 %v1114, %v1093
      %v1121 = vmul.f32 %v1117, %v1093
      %v1122 = vadd.f32 %v1118, 1e-05
      %v1123 = vadd.f32 %v1119, 1e-05
      %v1124 = vadd.f32 %v1120, 1e-05
      %v1125 = vadd.f32 %v1121, 1e-05
      %v1126 = vrsqrt.pop %v1122
      %v1127 = vrsqrt.pop %v1123
      %v1128 = vrsqrt.pop %v1124
      %v1129 = vrsqrt.pop %v1125
      %v1130 = vmul.f32 %v1098, %v1126
      %v1131 = vmul.f32 %v1099, %v1127
      %v1132 = vmul.f32 %v1100, %v1128
      %v1133 = vmul.f32 %v1101, %v1129
      %v1135 = vlaneseq
      %v1136 = vshrl.u32 %v1135, 7
      %v1137 = vsub.s32 0, %v1136
      %v1138 = vrot.slane %v1079, %v1137
      %v1140 = vmul.f32 %v1130, %v1138
      %v1141 = vmul.f32 %v1131, %v1138
      %v1142 = vmul.f32 %v1132, %v1138
      %v1143 = vmul.f32 %v1133, %v1138
      %v1145 = vlaneseq
      %v1146 = vshrl.u32 %v1145, 7
      %v1147 = vsub.s32 0, %v1146
      %v1148 = vrot.slane %v1080, %v1147
      %v1150 = vadd.f32 %v1140, %v1148
      %v1151 = vadd.f32 %v1141, %v1148
      %v1152 = vadd.f32 %v1142, %v1148
      %v1153 = vadd.f32 %v1143, %v1148
      %1155 = vset.pattern.permute.xlu0 0
      %1156 = vperm.xlu0 %1155, %v535
      %v1157 = vpop.permute.xlu0 %1156
      %1160 = vset.pattern.permute.xlu0 0
      %1161 = vperm.xlu0 %1160, %v536
      %v1162 = vpop.permute.xlu0 %1161
      %1165 = vset.pattern.permute.xlu0 0
      %1166 = vperm.xlu0 %1165, %v537
      %v1167 = vpop.permute.xlu0 %1166
      %1170 = vset.pattern.permute.xlu0 0
      %1171 = vperm.xlu0 %1170, %v538
      %v1172 = vpop.permute.xlu0 %1171
      %v1174 = vmul.f32 %v1150, %v1157
      %v1175 = vmul.f32 %v1151, %v1162
      %v1176 = vmul.f32 %v1152, %v1167
      %v1177 = vmul.f32 %v1153, %v1172
      %v1178 = vld [vmem:[%s9] sm:$0xff]
      %v1179 = vld [vmem:[%s9 + $0x8] sm:$0xff]
      %v1180 = vld [vmem:[%s9 + $0x10] sm:$0xff]
      %v1181 = vld [vmem:[%s9 + $0x18] sm:$0xff]
      %v1182 = vld [vmem:[%s9 + $0x20] sm:$0xff]
      %v1183 = vld [vmem:[%s9 + $0x28] sm:$0xff]
      %v1184 = vld [vmem:[%s9 + $0x30] sm:$0xff]
      %v1185 = vld [vmem:[%s9 + $0x38] sm:$0xff]
      %v1186 = vld [vmem:[%s9 + $0x40] sm:$0xff]
      %v1187 = vld [vmem:[%s9 + $0x48] sm:$0xff]
      %v1188 = vld [vmem:[%s9 + $0x50] sm:$0xff]
      %v1189 = vld [vmem:[%s9 + $0x58] sm:$0xff]
      %v1190 = vld [vmem:[%s10] sm:$0x1]
      %vm1195 = vcmask 1040384
      %v1196 = vrot.slane %v1174, 7
      %v1197 = vrot.slane %v1175, 7
      %v1198 = vsel %vm1195, %v1196, %v1197
      %v1199 = vrot.slane %v1176, 7
      %v1200 = vsel %vm1195, %v1197, %v1199
      %v1201 = vrot.slane %v1177, 7
      %v1202 = vsel %vm1195, %v1199, %v1201
      %v1207 = vsel %vm1195, 0.0, %v1196
      %v1208 = vpack.c.bf16 %v1198, %v1207
      %v1209 = vpack.c.bf16 %v1202, %v1200
      %v1210 = vpack.c.bf16 %v1179, %v1178
      %v1211 = vpack.c.bf16 %v1181, %v1180
      %v1212 = vpack.c.bf16 %v1175, %v1174
      %v1213 = vpack.c.bf16 %v1177, %v1176
      %v1214 = vpack.c.bf16 %v1183, %v1182
      %v1215 = vpack.c.bf16 %v1185, %v1184
      %v1217 = vsel %vm554, %v1212, 0
      %v1220 = vsel %vm554, %v1213, 0
      %1222 = vmatprep.subr.bf16.mxu0 0
      %1223 = vmatpush1.bf16.msra.mxu0 0
      %1224 = vmatprep.subr.bf16.mxu0 0
      %1225 = vmatpush1.bf16.msra.mxu0 0
      %1226 = vmatprep.subr.bf16.mxu0 0
      %1227 = vmatpush1.bf16.msra.mxu0 0
      %1228 = vmatprep.subr.bf16.mxu0 0
      %1229 = vmatpush1.bf16.msra.mxu0 0
      %1230 = vmatprep.subr.bf16.mxu0 0
      %1231 = vmatpush1.bf16.msra.mxu0 0
      %1232 = vmatprep.subr.bf16.mxu0 0
      %1233 = vmatpush1.bf16.msra.mxu0 0
      %1234 = vmatprep.subr.bf16.mxu0 0
      %1235 = vmatpush1.bf16.msra.mxu0 %v1215
      %1236 = vmatprep.subr.bf16.mxu0 0
      %1237 = vmatpush1.bf16.msra.mxu0 %v1214
      %1238 = vmatprep.subr.bf16.mxu0 0
      %1239 = vmatpush2.bf16.msra.mxu0 0
      %1240 = vmatprep.subr.bf16.mxu0 0
      %1241 = vmatpush2.bf16.msra.mxu0 0
      %1242 = vmatprep.subr.bf16.mxu0 0
      %1243 = vmatpush2.bf16.msra.mxu0 0
      %1244 = vmatprep.subr.bf16.mxu0 0
      %1245 = vmatpush2.bf16.msra.mxu0 0
      %1246 = vmatprep.subr.bf16.mxu0 0
      %1247 = vmatpush2.bf16.msra.mxu0 0
      %1248 = vmatprep.subr.bf16.mxu0 0
      %1249 = vmatpush2.bf16.msra.mxu0 0
      %1250 = vmatprep.subr.bf16.mxu0 0
      %1251 = vmatpush2.bf16.msra.mxu0 0
      %1252 = vmatprep.subr.bf16.mxu0 0
      %1253 = vmatpush2.bf16.msra.mxu0 0
      %1254 = vmatprep.mubr.bf16.mxu0 0
      %1255 = vmatmul.mubr.bf16.gmra.mxu0 %v1217
      %v1256 = vpop.f32.mrf.mxu0
      %v1257 = vadd.f32 0.0, %v1256
      %v1258 = vpop.f32.mrf.mxu0
      %v1259 = vpop.f32.mrf.mxu0
      %v1260 = vadd.f32 0.0, %v1259
      %v1261 = vpop.f32.mrf.mxu0
      %1262 = vmatprep.mubr.bf16.mxu0 0
      %1263 = vmatmul.mubr.bf16.gmra.mxu0 %v1220
      %v1264 = vpop.f32.mrf.mxu0
      %v1265 = vadd.f32 0.0, %v1264
      %v1266 = vpop.f32.mrf.mxu0
      %v1267 = vpop.f32.mrf.mxu0
      %v1268 = vadd.f32 0.0, %v1267
      %v1269 = vpop.f32.mrf.mxu0
      %1270 = vdwg.mxu0
      %v1272 = vsel %vm554, %v1208, 0
      %v1275 = vsel %vm554, %v1209, 0
      %1277 = vmatprep.subr.bf16.mxu0 0
      %1278 = vmatpush1.bf16.msra.mxu0 0
      %1279 = vmatprep.subr.bf16.mxu0 0
      %1280 = vmatpush1.bf16.msra.mxu0 0
      %1281 = vmatprep.subr.bf16.mxu0 0
      %1282 = vmatpush1.bf16.msra.mxu0 0
      %1283 = vmatprep.subr.bf16.mxu0 0
      %1284 = vmatpush1.bf16.msra.mxu0 0
      %1285 = vmatprep.subr.bf16.mxu0 0
      %1286 = vmatpush1.bf16.msra.mxu0 0
      %1287 = vmatprep.subr.bf16.mxu0 0
      %1288 = vmatpush1.bf16.msra.mxu0 0
      %1289 = vmatprep.subr.bf16.mxu0 0
      %1290 = vmatpush1.bf16.msra.mxu0 %v1211
      %1291 = vmatprep.subr.bf16.mxu0 0
      %1292 = vmatpush1.bf16.msra.mxu0 %v1210
      %1293 = vmatprep.subr.bf16.mxu0 0
      %1294 = vmatpush2.bf16.msra.mxu0 0
      %1295 = vmatprep.subr.bf16.mxu0 0
      %1296 = vmatpush2.bf16.msra.mxu0 0
      %1297 = vmatprep.subr.bf16.mxu0 0
      %1298 = vmatpush2.bf16.msra.mxu0 0
      %1299 = vmatprep.subr.bf16.mxu0 0
      %1300 = vmatpush2.bf16.msra.mxu0 0
      %1301 = vmatprep.subr.bf16.mxu0 0
      %1302 = vmatpush2.bf16.msra.mxu0 0
      %1303 = vmatprep.subr.bf16.mxu0 0
      %1304 = vmatpush2.bf16.msra.mxu0 0
      %1305 = vmatprep.subr.bf16.mxu0 0
      %1306 = vmatpush2.bf16.msra.mxu0 0
      %1307 = vmatprep.subr.bf16.mxu0 0
      %1308 = vmatpush2.bf16.msra.mxu0 0
      %1309 = vmatprep.mubr.bf16.mxu0 0
      %1310 = vmatmul.mubr.bf16.gmra.mxu0 %v1272
      %v1311 = vpop.f32.mrf.mxu0
      %v1312 = vadd.f32 %v1257, %v1311
      %v1313 = vpop.f32.mrf.mxu0
      %v1314 = vpop.f32.mrf.mxu0
      %v1315 = vadd.f32 %v1260, %v1314
      %v1316 = vpop.f32.mrf.mxu0
      %1317 = vmatprep.mubr.bf16.mxu0 0
      %1318 = vmatmul.mubr.bf16.gmra.mxu0 %v1275
      %v1319 = vpop.f32.mrf.mxu0
      %v1320 = vadd.f32 %v1265, %v1319
      %v1321 = vpop.f32.mrf.mxu0
      %v1322 = vpop.f32.mrf.mxu0
      %v1323 = vadd.f32 %v1268, %v1322
      %v1324 = vpop.f32.mrf.mxu0
      %1325 = vdwg.mxu0
      %vm1326 = vcmask 1046528
      %v1327 = vrot.slane %v1174, 1
      %v1328 = vrot.slane %v1175, 1
      %v1329 = vsel %vm1326, %v1327, %v1328
      %v1330 = vrot.slane %v1176, 1
      %v1331 = vsel %vm1326, %v1328, %v1330
      %v1332 = vrot.slane %v1177, 1
      %v1333 = vsel %vm1326, %v1330, %v1332
      %v1338 = vsel %vm1326, %v1332, 0.0
      %v1339 = vpack.c.bf16 %v1331, %v1329
      %v1340 = vpack.c.bf16 %v1338, %v1333
      %v1341 = vpack.c.bf16 %v1187, %v1186
      %v1342 = vpack.c.bf16 %v1189, %v1188
      %v1344 = vsel %vm554, %v1339, 0
      %v1347 = vsel %vm554, %v1340, 0
      %1349 = vmatprep.subr.bf16.mxu0 0
      %1350 = vmatpush1.bf16.msra.mxu0 0
      %1351 = vmatprep.subr.bf16.mxu0 0
      %1352 = vmatpush1.bf16.msra.mxu0 0
      %1353 = vmatprep.subr.bf16.mxu0 0
      %1354 = vmatpush1.bf16.msra.mxu0 0
      %1355 = vmatprep.subr.bf16.mxu0 0
      %1356 = vmatpush1.bf16.msra.mxu0 0
      %1357 = vmatprep.subr.bf16.mxu0 0
      %1358 = vmatpush1.bf16.msra.mxu0 0
      %1359 = vmatprep.subr.bf16.mxu0 0
      %1360 = vmatpush1.bf16.msra.mxu0 0
      %1361 = vmatprep.subr.bf16.mxu0 0
      %1362 = vmatpush1.bf16.msra.mxu0 %v1342
      %1363 = vmatprep.subr.bf16.mxu0 0
      %1364 = vmatpush1.bf16.msra.mxu0 %v1341
      %1365 = vmatprep.subr.bf16.mxu0 0
      %1366 = vmatpush2.bf16.msra.mxu0 0
      %1367 = vmatprep.subr.bf16.mxu0 0
      %1368 = vmatpush2.bf16.msra.mxu0 0
      %1369 = vmatprep.subr.bf16.mxu0 0
      %1370 = vmatpush2.bf16.msra.mxu0 0
      %1371 = vmatprep.subr.bf16.mxu0 0
      %1372 = vmatpush2.bf16.msra.mxu0 0
      %1373 = vmatprep.subr.bf16.mxu0 0
      %1374 = vmatpush2.bf16.msra.mxu0 0
      %1375 = vmatprep.subr.bf16.mxu0 0
      %1376 = vmatpush2.bf16.msra.mxu0 0
      %1377 = vmatprep.subr.bf16.mxu0 0
      %1378 = vmatpush2.bf16.msra.mxu0 0
      %1379 = vmatprep.subr.bf16.mxu0 0
      %1380 = vmatpush2.bf16.msra.mxu0 0
      %1381 = vmatprep.mubr.bf16.mxu0 0
      %1382 = vmatmul.mubr.bf16.gmra.mxu0 %v1344
      %v1383 = vpop.f32.mrf.mxu0
      %v1384 = vadd.f32 0.0, %v1383
      %v1385 = vpop.f32.mrf.mxu0
      %v1386 = vpop.f32.mrf.mxu0
      %v1387 = vadd.f32 0.0, %v1386
      %v1388 = vpop.f32.mrf.mxu0
      %1389 = vmatprep.mubr.bf16.mxu0 0
      %1390 = vmatmul.mubr.bf16.gmra.mxu0 %v1347
      %v1391 = vpop.f32.mrf.mxu0
      %v1392 = vadd.f32 0.0, %v1391
      %v1393 = vpop.f32.mrf.mxu0
      %v1394 = vpop.f32.mrf.mxu0
      %v1395 = vadd.f32 0.0, %v1394
      %v1396 = vpop.f32.mrf.mxu0
      %1397 = vdwg.mxu0
      %v1398 = vadd.f32 %v1312, %v1384
      %v1399 = vadd.f32 %v1315, %v1387
      %v1400 = vadd.f32 %v1320, %v1392
      %v1401 = vadd.f32 %v1323, %v1395
      %v1403 = vlaneseq
      %v1404 = vshrl.u32 %v1403, 7
      %v1405 = vsub.s32 0, %v1404
      %v1406 = vrot.slane %v1190, %v1405
      %v1408 = vadd.f32 %v1398, %v1406
      %v1409 = vadd.f32 %v1399, %v1406
      %v1410 = vadd.f32 %v1400, %v1406
      %v1411 = vadd.f32 %v1401, %v1406
      %v1412 = vmax.f32 %v1408, 0.0
      %v1413 = vmax.f32 %v1409, 0.0
      %v1414 = vmax.f32 %v1410, 0.0
      %v1415 = vmax.f32 %v1411, 0.0
      %v1416 = vld [vmem:[%s11] sm:$0xff]
      %v1417 = vld [vmem:[%s11 + $0x8] sm:$0xff]
      %v1418 = vld [vmem:[%s11 + $0x10] sm:$0xff]
      %v1419 = vld [vmem:[%s11 + $0x18] sm:$0xff]
      %v1420 = vld [vmem:[%s11 + $0x20] sm:$0xff]
      %v1421 = vld [vmem:[%s11 + $0x28] sm:$0xff]
      %v1422 = vld [vmem:[%s11 + $0x30] sm:$0xff]
      %v1423 = vld [vmem:[%s11 + $0x38] sm:$0xff]
      %v1424 = vld [vmem:[%s12] sm:$0x1]
      %v1425 = vpack.c.bf16 %v1413, %v1412
      %v1426 = vpack.c.bf16 %v1415, %v1414
      %v1427 = vpack.c.bf16 %v1417, %v1416
      %v1428 = vpack.c.bf16 %v1419, %v1418
      %v1429 = vpack.c.bf16 %v1421, %v1420
      %v1430 = vpack.c.bf16 %v1423, %v1422
      %v1432 = vlaneseq
      %v1433 = vshrl.u32 %v1432, 7
      %v1434 = vsub.s32 0, %v1433
      %v1435 = vrot.slane %v1424, %v1434
      %vm1437 = vcmask 523264
      %v1439 = vsel %vm1437, %v1425, 0
      %v1442 = vsel %vm1437, %v1426, 0
      %1444 = vmatprep.subr.bf16.mxu0 0
      %1445 = vmatpush1.bf16.msra.mxu0 0
      %1446 = vmatprep.subr.bf16.mxu0 0
      %1447 = vmatpush1.bf16.msra.mxu0 0
      %1448 = vmatprep.subr.bf16.mxu0 0
      %1449 = vmatpush1.bf16.msra.mxu0 0
      %1450 = vmatprep.subr.bf16.mxu0 0
      %1451 = vmatpush1.bf16.msra.mxu0 0
      %1452 = vmatprep.subr.bf16.mxu0 0
      %1453 = vmatpush1.bf16.msra.mxu0 %v1430
      %1454 = vmatprep.subr.bf16.mxu0 0
      %1455 = vmatpush1.bf16.msra.mxu0 %v1429
      %1456 = vmatprep.subr.bf16.mxu0 0
      %1457 = vmatpush1.bf16.msra.mxu0 %v1428
      %1458 = vmatprep.subr.bf16.mxu0 0
      %1459 = vmatpush1.bf16.msra.mxu0 %v1427
      %1460 = vmatprep.subr.bf16.mxu0 0
      %1461 = vmatpush2.bf16.msra.mxu0 0
      %1462 = vmatprep.subr.bf16.mxu0 0
      %1463 = vmatpush2.bf16.msra.mxu0 0
      %1464 = vmatprep.subr.bf16.mxu0 0
      %1465 = vmatpush2.bf16.msra.mxu0 0
      %1466 = vmatprep.subr.bf16.mxu0 0
      %1467 = vmatpush2.bf16.msra.mxu0 0
      %1468 = vmatprep.subr.bf16.mxu0 0
      %1469 = vmatpush2.bf16.msra.mxu0 0
      %1470 = vmatprep.subr.bf16.mxu0 0
      %1471 = vmatpush2.bf16.msra.mxu0 0
      %1472 = vmatprep.subr.bf16.mxu0 0
      %1473 = vmatpush2.bf16.msra.mxu0 0
      %1474 = vmatprep.subr.bf16.mxu0 0
      %1475 = vmatpush2.bf16.msra.mxu0 0
      %1476 = vmatprep.mubr.bf16.mxu0 0
      %1477 = vmatmul.mubr.bf16.gmra.mxu0 %v1439
      %v1478 = vpop.f32.mrf.mxu0
      %v1479 = vadd.f32 %v1435, %v1478
      %v1480 = vpop.f32.mrf.mxu0
      %v1481 = vpop.f32.mrf.mxu0
      %v1482 = vadd.f32 %v1435, %v1481
      %v1483 = vpop.f32.mrf.mxu0
      %1484 = vmatprep.mubr.bf16.mxu0 0
      %1485 = vmatmul.mubr.bf16.gmra.mxu0 %v1442
      %v1486 = vpop.f32.mrf.mxu0
      %v1487 = vadd.f32 %v1435, %v1486
      %v1488 = vpop.f32.mrf.mxu0
      %v1489 = vpop.f32.mrf.mxu0
      %v1490 = vadd.f32 %v1435, %v1489
      %v1491 = vpop.f32.mrf.mxu0
      %1492 = vdwg.mxu0
      %v1493 = vadd.f32 %v1479, %v1174
      %v1494 = vadd.f32 %v1482, %v1175
      %v1495 = vadd.f32 %v1487, %v1176
      %v1496 = vadd.f32 %v1490, %v1177
      %v1497 = vld [vmem:[%s13] sm:$0x1]
      %v1498 = vld [vmem:[%s14] sm:$0x1]
      %v1499 = vsel %vm554, %v1493, 0.0
      %1500 = vadd.xlane.f32.xlu0 %v1499
      %v1501 = vpop.xlane.xlu0 %1500
      %v1502 = vsel %vm554, %v1494, 0.0
      %1503 = vadd.xlane.f32.xlu0 %v1502
      %v1504 = vpop.xlane.xlu0 %1503
      %v1505 = vsel %vm554, %v1495, 0.0
      %1506 = vadd.xlane.f32.xlu0 %v1505
      %v1507 = vpop.xlane.xlu0 %1506
      %v1508 = vsel %vm554, %v1496, 0.0
      %1509 = vadd.xlane.f32.xlu0 %v1508
      %v1510 = vpop.xlane.xlu0 %1509
      %v1511 = vmul.f32 %v1501, %v1093
      %v1512 = vmul.f32 %v1504, %v1093
      %v1513 = vmul.f32 %v1507, %v1093
      %v1514 = vmul.f32 %v1510, %v1093
      %v1515 = vsub.f32 %v1493, %v1511
      %v1516 = vsub.f32 %v1494, %v1512
      %v1517 = vsub.f32 %v1495, %v1513
      %v1518 = vsub.f32 %v1496, %v1514
      %v1519 = vmul.f32 %v1515, %v1515
      %v1520 = vmul.f32 %v1516, %v1516
      %v1521 = vmul.f32 %v1517, %v1517
      %v1522 = vmul.f32 %v1518, %v1518
      %v1523 = vsel %vm554, %v1519, 0.0
      %1524 = vadd.xlane.f32.xlu0 %v1523
      %v1525 = vpop.xlane.xlu0 %1524
      %v1526 = vsel %vm554, %v1520, 0.0
      %1527 = vadd.xlane.f32.xlu0 %v1526
      %v1528 = vpop.xlane.xlu0 %1527
      %v1529 = vsel %vm554, %v1521, 0.0
      %1530 = vadd.xlane.f32.xlu0 %v1529
      %v1531 = vpop.xlane.xlu0 %1530
      %v1532 = vsel %vm554, %v1522, 0.0
      %1533 = vadd.xlane.f32.xlu0 %v1532
      %v1534 = vpop.xlane.xlu0 %1533
      %v1535 = vmul.f32 %v1525, %v1093
      %v1536 = vmul.f32 %v1528, %v1093
      %v1537 = vmul.f32 %v1531, %v1093
      %v1538 = vmul.f32 %v1534, %v1093
      %v1539 = vadd.f32 %v1535, 1e-05
      %v1540 = vadd.f32 %v1536, 1e-05
      %v1541 = vadd.f32 %v1537, 1e-05
      %v1542 = vadd.f32 %v1538, 1e-05
      %v1543 = vrsqrt.pop %v1539
      %v1544 = vrsqrt.pop %v1540
      %v1545 = vrsqrt.pop %v1541
      %v1546 = vrsqrt.pop %v1542
      %v1547 = vmul.f32 %v1515, %v1543
      %v1548 = vmul.f32 %v1516, %v1544
      %v1549 = vmul.f32 %v1517, %v1545
      %v1550 = vmul.f32 %v1518, %v1546
      %v1552 = vlaneseq
      %v1553 = vshrl.u32 %v1552, 7
      %v1554 = vsub.s32 0, %v1553
      %v1555 = vrot.slane %v1497, %v1554
      %v1557 = vmul.f32 %v1547, %v1555
      %v1558 = vmul.f32 %v1548, %v1555
      %v1559 = vmul.f32 %v1549, %v1555
      %v1560 = vmul.f32 %v1550, %v1555
      %v1562 = vlaneseq
      %v1563 = vshrl.u32 %v1562, 7
      %v1564 = vsub.s32 0, %v1563
      %v1565 = vrot.slane %v1498, %v1564
      %v1567 = vadd.f32 %v1557, %v1565
      %v1568 = vadd.f32 %v1558, %v1565
      %v1569 = vadd.f32 %v1559, %v1565
      %v1570 = vadd.f32 %v1560, %v1565
      %v1571 = vmul.f32 %v1567, %v1157
      %v1572 = vmul.f32 %v1568, %v1162
      %v1573 = vmul.f32 %v1569, %v1167
      %v1574 = vmul.f32 %v1570, %v1172
      %1575 = vst.msk [vmem:[%s528] sm:$0xff] %vm554, %v1571
      %1576 = vst.msk [vmem:[%s528 + $0x8] sm:$0xff] %vm554, %v1572
      %1577 = vst.msk [vmem:[%s528 + $0x10] sm:$0xff] %vm554, %v1573
      %1578 = vst.msk [vmem:[%s528 + $0x18] sm:$0xff] %vm554, %v1574
      %p1579 = scmp.lt.s32.totalorder %s26, 1
      %s1580 = scalar_select %p1579, %s26, 1
      %s1581 = smul.addr %s1580, 4
      %s1582 = smul.addr %s1581, 8
      %s1583 = scalar_lea.vmem %s15, %s1582
      // Predicated region
      $region81: #{_lambda_.13} parent=79 // pred_check
        %p1584 = pneg %p374
      $region82: #{_lambda_.13} parent=79 // pred_check_branch
        %1586 = sbr.rel (%p1584) target = $region84
      $region83: #{_lambda_.13} parent=79 // pred_region
        _
      $region84: #{_lambda_.13} parent=79 // pred_fallthru
        _
    $region80: #{_lambda_.13} parent=5 // pred_fallthru
      _
    %p1587 = scmp.le.s32.totalorder 2, %s21
    // Predicated region
    $region85: #{_lambda_.13} parent=5 // pred_check
      %p1588 = pneg %p1587
    $region86: #{_lambda_.13} parent=5 // pred_check_branch
      %1590 = sbr.rel (%p1588) target = $region88
    $region87: #{_lambda_.13} parent=5 // pred_region
      %s1591 = ssub.s32 %s21, 2
      // Predicated region
      $region89: #{_lambda_.13} parent=87 // pred_check
        %p1592 = pneg %p380
      $region90: #{_lambda_.13} parent=87 // pred_check_branch
        %1594 = sbr.rel (%p1592) target = $region92
      $region91: #{_lambda_.13} parent=87 // pred_region
        %p1595 = scmp.lt.s32.totalorder %s27, 1
        %s1596 = scalar_select %p1595, %s27, 1
        %s1597 = smul.addr %s1596, 4
        %s1598 = smul.addr %s1597, 8
        %s1599 = scalar_lea.vmem %s15, %s1598
      $region92: #{_lambda_.13} parent=87 // pred_fallthru
        _
    $region88: #{_lambda_.13} parent=5 // pred_fallthru
      _
  $region6: #{_lambda_.13} parent=0 // loop_footer
    %s25 = sadd.s32 1, %s21
  $region7: #{_lambda_.13} parent=0 // loop_footer_branch
    %20 = sbr.rel target = $region3
  $region8: #{_lambda_.13} parent=0 // loop_exit
    _

// kernel: _lambda_.11
$region0: #{_lambda_.11}
  #allocation0 [shape = 'u32[]', space=smem, size = 0x4, offset = 0x4, fixed_abs, tag = 'smem constant byte address 0x4 - core index']
  #allocation1 [shape = 'u32[144,128]{1,0:T(1,128)}', space=vmem, size = 0x12000, scoped, tag = 'internal scratch']
  #allocation2 [shape = 'f32[1,1]{1,0:T(1,128)S(1)}', space=vmem, size = 0x200, scoped, tag = 'scoped memory for _lambda_.11']
  %s0 = inlined_call_operand.vmem [shape: f32[2,32,32], index: 0, kind: input, shape index: {}]
  %s1 = inlined_call_operand.vmem [shape: f32[2,32,1], index: 1, kind: input, shape index: {}]
  %s2 = inlined_call_operand.vmem [shape: f32[96,32], index: 2, kind: input, shape index: {}]
  %s3 = inlined_call_operand.vmem [shape: f32[1,32], index: 3, kind: input, shape index: {}]
  %s4 = inlined_call_operand.vmem [shape: f32[1,32], index: 4, kind: input, shape index: {}]
  %s5 = inlined_call_operand.vmem [shape: f32[1,32], index: 5, kind: input, shape index: {}]
  %s6 = inlined_call_operand.vmem [shape: f32[96,32], index: 6, kind: input, shape index: {}]
  %s7 = inlined_call_operand.vmem [shape: f32[1,32], index: 7, kind: input, shape index: {}]
  %s8 = inlined_call_operand.vmem [shape: f32[1,32], index: 8, kind: input, shape index: {}]
  %s9 = inlined_call_operand.vmem [shape: f32[1,32], index: 9, kind: input, shape index: {}]
  %s10 = inlined_call_operand.vmem [shape: f32[1,32], index: 10, kind: input, shape index: {}]
  %s11 = inlined_call_operand.<no memory space> [shape: f32[1,1], index: 11, kind: input, shape index: {}]
  %s12 = inlined_call_operand.vmem [shape: f32[2,32,1], index: 12, kind: output, shape index: {}]
  %s13 = sld [smem:[#allocation0]]
  $region81: #{_lambda_.11} parent=0
    _
  %s15 = ssub.s32 1, %s13
  %s16 = scalar_select 0, %s15, %s13
  %v17 = vstv %s11
  %18 = vst [vmem:[#allocation2] sm:$0x1] %v17
  loop: start=0, step=1, limit=4
  $region2: #{_lambda_.11} parent=0 // loop_pre_header
    _
  $region3: #{_lambda_.11} parent=0 // loop_header
    %s20 = sphi 0, %s24
    %p21 = scmp.ge.s32.totalorder %s20, 4
    %s30 = sphi 0, %s32
    %s33 = sphi 0, %s30
    %s34 = sphi 0, %s33
    %s50 = sphi 0, %s34
    %s56 = sphi 0, %s58
    %s59 = sphi 0, %s56
    %s60 = sphi 0, %s59
    %s76 = sphi 0, %s60
    %s80 = sphi 0, %s80
    %s82 = sphi 0, %s80
    %s83 = sphi 0, %s82
    %s97 = sphi 0, %s83
    %s101 = sphi 0, %s101
    %s103 = sphi 0, %s101
    %s104 = sphi 0, %s103
    %s118 = sphi 0, %s104
    %s122 = sphi 0, %s122
    %s124 = sphi 0, %s122
    %s125 = sphi 0, %s124
    %s139 = sphi 0, %s125
    %s143 = sphi 0, %s143
    %s145 = sphi 0, %s143
    %s146 = sphi 0, %s145
    %s160 = sphi 0, %s146
    %s164 = sphi 0, %s164
    %s166 = sphi 0, %s164
    %s167 = sphi 0, %s166
    %s181 = sphi 0, %s167
    %s185 = sphi 0, %s185
    %s187 = sphi 0, %s185
    %s188 = sphi 0, %s187
    %s202 = sphi 0, %s188
    %s206 = sphi 0, %s206
    %s208 = sphi 0, %s206
    %s209 = sphi 0, %s208
    %s223 = sphi 0, %s209
    %s227 = sphi 0, %s227
    %s229 = sphi 0, %s227
    %s230 = sphi 0, %s229
    %s244 = sphi 0, %s230
    %s248 = sphi 0, %s248
    %s250 = sphi 0, %s248
    %s251 = sphi 0, %s250
    %s265 = sphi 0, %s251
    %s269 = sphi 0, %s269
    %s271 = sphi 0, %s269
    %s272 = sphi 0, %s271
    %s286 = sphi 0, %s272
    %s292 = sphi 0, %s294
    %s295 = sphi 0, %s292
    %s296 = sphi 0, %s295
    %s312 = sphi 0, %s296
  $region4: #{_lambda_.11} parent=0 // loop_header_branch
    %23 = sbr.rel (%p21) target = $region8
  $region5: #{_lambda_.11} parent=0 // loop_body
    %s25 = ssub.s32 %s20, 1
    %s26 = ssub.s32 %s20, 2
    %s27 = sadd.s32 %s20, 1
    %s28 = ssub.s32 %s20, %s27
    %p29 = scmp.eq.s32.totalorder %s28, 0
    %s31 = sadd.s32 %s30, 1
    %s32 = scalar_select %p29, %s30, %s31
    %p35 = pneg %p29
    %p36 = scmp.eq.s32.totalorder %s20, 1
    %p37 = por %p35, %p36
    %p38 = scmp.ne.s32.totalorder %s30, %s33
    %p39 = scmp.eq.s32.totalorder %s20, 0
    %p40 = por %p38, %p39
    %p41 = scmp.ne.s32.totalorder %s30, %s33
    %p42 = scmp.eq.s32.totalorder %s25, 1
    %p43 = por %p41, %p42
    %p44 = scmp.ne.s32.totalorder %s33, %s34
    %p45 = scmp.eq.s32.totalorder %s25, 0
    %p46 = por %p44, %p45
    %p47 = scmp.ne.s32.totalorder %s33, %s34
    %p48 = scmp.eq.s32.totalorder %s26, 1
    %p49 = por %p47, %p48
    %p51 = scmp.ne.s32.totalorder %s34, %s50
    %p52 = scmp.eq.s32.totalorder %s26, 0
    %p53 = por %p51, %p52
    %s54 = ssub.s32 %s20, %s27
    %p55 = scmp.eq.s32.totalorder %s54, 0
    %s57 = sadd.s32 %s56, 1
    %s58 = scalar_select %p55, %s56, %s57
    %p61 = pneg %p55
    %p62 = scmp.eq.s32.totalorder %s20, 1
    %p63 = por %p61, %p62
    %p64 = scmp.ne.s32.totalorder %s56, %s59
    %p65 = scmp.eq.s32.totalorder %s20, 0
    %p66 = por %p64, %p65
    %p67 = scmp.ne.s32.totalorder %s56, %s59
    %p68 = scmp.eq.s32.totalorder %s25, 1
    %p69 = por %p67, %p68
    %p70 = scmp.ne.s32.totalorder %s59, %s60
    %p71 = scmp.eq.s32.totalorder %s25, 0
    %p72 = por %p70, %p71
    %p73 = scmp.ne.s32.totalorder %s59, %s60
    %p74 = scmp.eq.s32.totalorder %s26, 1
    %p75 = por %p73, %p74
    %p77 = scmp.ne.s32.totalorder %s60, %s76
    %p78 = scmp.eq.s32.totalorder %s26, 0
    %p79 = por %p77, %p78
    %s81 = sadd.s32 %s80, 1
    %p84 = scmp.eq.s32.totalorder %s20, 1
    %p85 = scmp.ne.s32.totalorder %s80, %s82
    %p86 = scmp.eq.s32.totalorder %s20, 0
    %p87 = por %p85, %p86
    %p88 = scmp.ne.s32.totalorder %s80, %s82
    %p89 = scmp.eq.s32.totalorder %s25, 1
    %p90 = por %p88, %p89
    %p91 = scmp.ne.s32.totalorder %s82, %s83
    %p92 = scmp.eq.s32.totalorder %s25, 0
    %p93 = por %p91, %p92
    %p94 = scmp.ne.s32.totalorder %s82, %s83
    %p95 = scmp.eq.s32.totalorder %s26, 1
    %p96 = por %p94, %p95
    %p98 = scmp.ne.s32.totalorder %s83, %s97
    %p99 = scmp.eq.s32.totalorder %s26, 0
    %p100 = por %p98, %p99
    %s102 = sadd.s32 %s101, 1
    %p105 = scmp.eq.s32.totalorder %s20, 1
    %p106 = scmp.ne.s32.totalorder %s101, %s103
    %p107 = scmp.eq.s32.totalorder %s20, 0
    %p108 = por %p106, %p107
    %p109 = scmp.ne.s32.totalorder %s101, %s103
    %p110 = scmp.eq.s32.totalorder %s25, 1
    %p111 = por %p109, %p110
    %p112 = scmp.ne.s32.totalorder %s103, %s104
    %p113 = scmp.eq.s32.totalorder %s25, 0
    %p114 = por %p112, %p113
    %p115 = scmp.ne.s32.totalorder %s103, %s104
    %p116 = scmp.eq.s32.totalorder %s26, 1
    %p117 = por %p115, %p116
    %p119 = scmp.ne.s32.totalorder %s104, %s118
    %p120 = scmp.eq.s32.totalorder %s26, 0
    %p121 = por %p119, %p120
    %s123 = sadd.s32 %s122, 1
    %p126 = scmp.eq.s32.totalorder %s20, 1
    %p127 = scmp.ne.s32.totalorder %s122, %s124
    %p128 = scmp.eq.s32.totalorder %s20, 0
    %p129 = por %p127, %p128
    %p130 = scmp.ne.s32.totalorder %s122, %s124
    %p131 = scmp.eq.s32.totalorder %s25, 1
    %p132 = por %p130, %p131
    %p133 = scmp.ne.s32.totalorder %s124, %s125
    %p134 = scmp.eq.s32.totalorder %s25, 0
    %p135 = por %p133, %p134
    %p136 = scmp.ne.s32.totalorder %s124, %s125
    %p137 = scmp.eq.s32.totalorder %s26, 1
    %p138 = por %p136, %p137
    %p140 = scmp.ne.s32.totalorder %s125, %s139
    %p141 = scmp.eq.s32.totalorder %s26, 0
    %p142 = por %p140, %p141
    %s144 = sadd.s32 %s143, 1
    %p147 = scmp.eq.s32.totalorder %s20, 1
    %p148 = scmp.ne.s32.totalorder %s143, %s145
    %p149 = scmp.eq.s32.totalorder %s20, 0
    %p150 = por %p148, %p149
    %p151 = scmp.ne.s32.totalorder %s143, %s145
    %p152 = scmp.eq.s32.totalorder %s25, 1
    %p153 = por %p151, %p152
    %p154 = scmp.ne.s32.totalorder %s145, %s146
    %p155 = scmp.eq.s32.totalorder %s25, 0
    %p156 = por %p154, %p155
    %p157 = scmp.ne.s32.totalorder %s145, %s146
    %p158 = scmp.eq.s32.totalorder %s26, 1
    %p159 = por %p157, %p158
    %p161 = scmp.ne.s32.totalorder %s146, %s160
    %p162 = scmp.eq.s32.totalorder %s26, 0
    %p163 = por %p161, %p162
    %s165 = sadd.s32 %s164, 1
    %p168 = scmp.eq.s32.totalorder %s20, 1
    %p169 = scmp.ne.s32.totalorder %s164, %s166
    %p170 = scmp.eq.s32.totalorder %s20, 0
    %p171 = por %p169, %p170
    %p172 = scmp.ne.s32.totalorder %s164, %s166
    %p173 = scmp.eq.s32.totalorder %s25, 1
    %p174 = por %p172, %p173
    %p175 = scmp.ne.s32.totalorder %s166, %s167
    %p176 = scmp.eq.s32.totalorder %s25, 0
    %p177 = por %p175, %p176
    %p178 = scmp.ne.s32.totalorder %s166, %s167
    %p179 = scmp.eq.s32.totalorder %s26, 1
    %p180 = por %p178, %p179
    %p182 = scmp.ne.s32.totalorder %s167, %s181
    %p183 = scmp.eq.s32.totalorder %s26, 0
    %p184 = por %p182, %p183
    %s186 = sadd.s32 %s185, 1
    %p189 = scmp.eq.s32.totalorder %s20, 1
    %p190 = scmp.ne.s32.totalorder %s185, %s187
    %p191 = scmp.eq.s32.totalorder %s20, 0
    %p192 = por %p190, %p191
    %p193 = scmp.ne.s32.totalorder %s185, %s187
    %p194 = scmp.eq.s32.totalorder %s25, 1
    %p195 = por %p193, %p194
    %p196 = scmp.ne.s32.totalorder %s187, %s188
    %p197 = scmp.eq.s32.totalorder %s25, 0
    %p198 = por %p196, %p197
    %p199 = scmp.ne.s32.totalorder %s187, %s188
    %p200 = scmp.eq.s32.totalorder %s26, 1
    %p201 = por %p199, %p200
    %p203 = scmp.ne.s32.totalorder %s188, %s202
    %p204 = scmp.eq.s32.totalorder %s26, 0
    %p205 = por %p203, %p204
    %s207 = sadd.s32 %s206, 1
    %p210 = scmp.eq.s32.totalorder %s20, 1
    %p211 = scmp.ne.s32.totalorder %s206, %s208
    %p212 = scmp.eq.s32.totalorder %s20, 0
    %p213 = por %p211, %p212
    %p214 = scmp.ne.s32.totalorder %s206, %s208
    %p215 = scmp.eq.s32.totalorder %s25, 1
    %p216 = por %p214, %p215
    %p217 = scmp.ne.s32.totalorder %s208, %s209
    %p218 = scmp.eq.s32.totalorder %s25, 0
    %p219 = por %p217, %p218
    %p220 = scmp.ne.s32.totalorder %s208, %s209
    %p221 = scmp.eq.s32.totalorder %s26, 1
    %p222 = por %p220, %p221
    %p224 = scmp.ne.s32.totalorder %s209, %s223
    %p225 = scmp.eq.s32.totalorder %s26, 0
    %p226 = por %p224, %p225
    %s228 = sadd.s32 %s227, 1
    %p231 = scmp.eq.s32.totalorder %s20, 1
    %p232 = scmp.ne.s32.totalorder %s227, %s229
    %p233 = scmp.eq.s32.totalorder %s20, 0
    %p234 = por %p232, %p233
    %p235 = scmp.ne.s32.totalorder %s227, %s229
    %p236 = scmp.eq.s32.totalorder %s25, 1
    %p237 = por %p235, %p236
    %p238 = scmp.ne.s32.totalorder %s229, %s230
    %p239 = scmp.eq.s32.totalorder %s25, 0
    %p240 = por %p238, %p239
    %p241 = scmp.ne.s32.totalorder %s229, %s230
    %p242 = scmp.eq.s32.totalorder %s26, 1
    %p243 = por %p241, %p242
    %p245 = scmp.ne.s32.totalorder %s230, %s244
    %p246 = scmp.eq.s32.totalorder %s26, 0
    %p247 = por %p245, %p246
    %s249 = sadd.s32 %s248, 1
    %p252 = scmp.eq.s32.totalorder %s20, 1
    %p253 = scmp.ne.s32.totalorder %s248, %s250
    %p254 = scmp.eq.s32.totalorder %s20, 0
    %p255 = por %p253, %p254
    %p256 = scmp.ne.s32.totalorder %s248, %s250
    %p257 = scmp.eq.s32.totalorder %s25, 1
    %p258 = por %p256, %p257
    %p259 = scmp.ne.s32.totalorder %s250, %s251
    %p260 = scmp.eq.s32.totalorder %s25, 0
    %p261 = por %p259, %p260
    %p262 = scmp.ne.s32.totalorder %s250, %s251
    %p263 = scmp.eq.s32.totalorder %s26, 1
    %p264 = por %p262, %p263
    %p266 = scmp.ne.s32.totalorder %s251, %s265
    %p267 = scmp.eq.s32.totalorder %s26, 0
    %p268 = por %p266, %p267
    %s270 = sadd.s32 %s269, 1
    %p273 = scmp.eq.s32.totalorder %s20, 1
    %p274 = scmp.ne.s32.totalorder %s269, %s271
    %p275 = scmp.eq.s32.totalorder %s20, 0
    %p276 = por %p274, %p275
    %p277 = scmp.ne.s32.totalorder %s269, %s271
    %p278 = scmp.eq.s32.totalorder %s25, 1
    %p279 = por %p277, %p278
    %p280 = scmp.ne.s32.totalorder %s271, %s272
    %p281 = scmp.eq.s32.totalorder %s25, 0
    %p282 = por %p280, %p281
    %p283 = scmp.ne.s32.totalorder %s271, %s272
    %p284 = scmp.eq.s32.totalorder %s26, 1
    %p285 = por %p283, %p284
    %p287 = scmp.ne.s32.totalorder %s272, %s286
    %p288 = scmp.eq.s32.totalorder %s26, 0
    %p289 = por %p287, %p288
    %s290 = ssub.s32 %s20, %s27
    %p291 = scmp.eq.s32.totalorder %s290, 0
    %s293 = sadd.s32 %s292, 1
    %s294 = scalar_select %p291, %s292, %s293
    %p297 = pneg %p291
    %p298 = scmp.eq.s32.totalorder %s20, 1
    %p299 = por %p297, %p298
    %p300 = scmp.ne.s32.totalorder %s292, %s295
    %p301 = scmp.eq.s32.totalorder %s20, 0
    %p302 = por %p300, %p301
    %p303 = scmp.ne.s32.totalorder %s292, %s295
    %p304 = scmp.eq.s32.totalorder %s25, 1
    %p305 = por %p303, %p304
    %p306 = scmp.ne.s32.totalorder %s295, %s296
    %p307 = scmp.eq.s32.totalorder %s25, 0
    %p308 = por %p306, %p307
    %p309 = scmp.ne.s32.totalorder %s295, %s296
    %p310 = scmp.eq.s32.totalorder %s26, 1
    %p311 = por %p309, %p310
    %p313 = scmp.ne.s32.totalorder %s296, %s312
    %p314 = scmp.eq.s32.totalorder %s26, 0
    %p315 = por %p313, %p314
    %p316 = scmp.le.s32.totalorder 1, %s20
    %p317 = scmp.lt.s32.totalorder %s20, 3
    %p318 = pnand %p316, %p317
    %p319 = pneg %p318
    // Predicated region
    $region9: #{_lambda_.11} parent=5 // pred_check
      _
    $region10: #{_lambda_.11} parent=5 // pred_check_branch
      %321 = sbr.rel (%p318) target = $region12
    $region11: #{_lambda_.11} parent=5 // pred_region
      %s322 = ssub.s32 %s20, 1
      // Predicated region
      $region13: #{_lambda_.11} parent=11 // pred_check
        %p323 = pneg %p93
      $region14: #{_lambda_.11} parent=11 // pred_check_branch
        %325 = sbr.rel (%p323) target = $region16
      $region15: #{_lambda_.11} parent=11 // pred_region
        _
      $region16: #{_lambda_.11} parent=11 // pred_fallthru
        _
      // Predicated region
      $region17: #{_lambda_.11} parent=11 // pred_check
        %p326 = pneg %p114
      $region18: #{_lambda_.11} parent=11 // pred_check_branch
        %328 = sbr.rel (%p326) target = $region20
      $region19: #{_lambda_.11} parent=11 // pred_region
        _
      $region20: #{_lambda_.11} parent=11 // pred_fallthru
        _
      // Predicated region
      $region21: #{_lambda_.11} parent=11 // pred_check
        %p329 = pneg %p135
      $region22: #{_lambda_.11} parent=11 // pred_check_branch
        %331 = sbr.rel (%p329) target = $region24
      $region23: #{_lambda_.11} parent=11 // pred_region
        _
      $region24: #{_lambda_.11} parent=11 // pred_fallthru
        _
      // Predicated region
      $region25: #{_lambda_.11} parent=11 // pred_check
        %p332 = pneg %p156
      $region26: #{_lambda_.11} parent=11 // pred_check_branch
        %334 = sbr.rel (%p332) target = $region28
      $region27: #{_lambda_.11} parent=11 // pred_region
        _
      $region28: #{_lambda_.11} parent=11 // pred_fallthru
        _
      // Predicated region
      $region29: #{_lambda_.11} parent=11 // pred_check
        %p335 = pneg %p177
      $region30: #{_lambda_.11} parent=11 // pred_check_branch
        %337 = sbr.rel (%p335) target = $region32
      $region31: #{_lambda_.11} parent=11 // pred_region
        _
      $region32: #{_lambda_.11} parent=11 // pred_fallthru
        _
      // Predicated region
      $region33: #{_lambda_.11} parent=11 // pred_check
        %p338 = pneg %p198
      $region34: #{_lambda_.11} parent=11 // pred_check_branch
        %340 = sbr.rel (%p338) target = $region36
      $region35: #{_lambda_.11} parent=11 // pred_region
        _
      $region36: #{_lambda_.11} parent=11 // pred_fallthru
        _
      // Predicated region
      $region37: #{_lambda_.11} parent=11 // pred_check
        %p341 = pneg %p219
      $region38: #{_lambda_.11} parent=11 // pred_check_branch
        %343 = sbr.rel (%p341) target = $region40
      $region39: #{_lambda_.11} parent=11 // pred_region
        _
      $region40: #{_lambda_.11} parent=11 // pred_fallthru
        _
      // Predicated region
      $region41: #{_lambda_.11} parent=11 // pred_check
        %p344 = pneg %p240
      $region42: #{_lambda_.11} parent=11 // pred_check_branch
        %346 = sbr.rel (%p344) target = $region44
      $region43: #{_lambda_.11} parent=11 // pred_region
        _
      $region44: #{_lambda_.11} parent=11 // pred_fallthru
        _
      // Predicated region
      $region45: #{_lambda_.11} parent=11 // pred_check
        %p347 = pneg %p261
      $region46: #{_lambda_.11} parent=11 // pred_check_branch
        %349 = sbr.rel (%p347) target = $region48
      $region47: #{_lambda_.11} parent=11 // pred_region
        _
      $region48: #{_lambda_.11} parent=11 // pred_fallthru
        _
      // Predicated region
      $region49: #{_lambda_.11} parent=11 // pred_check
        %p350 = pneg %p282
      $region50: #{_lambda_.11} parent=11 // pred_check_branch
        %352 = sbr.rel (%p350) target = $region52
      $region51: #{_lambda_.11} parent=11 // pred_region
        _
      $region52: #{_lambda_.11} parent=11 // pred_fallthru
        _
    $region12: #{_lambda_.11} parent=5 // pred_fallthru
      _
    %p353 = scmp.lt.s32.totalorder %s20, 2
    // Predicated region
    $region53: #{_lambda_.11} parent=5 // pred_check
      %p354 = pneg %p353
    $region54: #{_lambda_.11} parent=5 // pred_check_branch
      %356 = sbr.rel (%p354) target = $region56
    $region55: #{_lambda_.11} parent=5 // pred_region
      // Predicated region
      $region57: #{_lambda_.11} parent=55 // pred_check
        %p357 = pneg %p40
      $region58: #{_lambda_.11} parent=55 // pred_check_branch
        %359 = sbr.rel (%p357) target = $region60
      $region59: #{_lambda_.11} parent=55 // pred_region
        %p360 = scmp.lt.s32.totalorder %s20, 1
        %s361 = scalar_select %p360, %s20, 1
        %s362 = smul.addr %s361, 4
        %s363 = smul.addr %s362, 8
        %s364 = scalar_lea.vmem %s0, %s363
      $region60: #{_lambda_.11} parent=55 // pred_fallthru
        _
      // Predicated region
      $region61: #{_lambda_.11} parent=55 // pred_check
        %p365 = pneg %p66
      $region62: #{_lambda_.11} parent=55 // pred_check_branch
        %367 = sbr.rel (%p365) target = $region64
      $region63: #{_lambda_.11} parent=55 // pred_region
        %p368 = scmp.lt.s32.totalorder %s20, 1
        %s369 = scalar_select %p368, %s20, 1
        %s370 = smul.addr %s369, 4
        %s371 = smul.addr %s370, 8
        %s372 = scalar_lea.vmem %s1, %s371
      $region64: #{_lambda_.11} parent=55 // pred_fallthru
        _
    $region56: #{_lambda_.11} parent=5 // pred_fallthru
      _
    %p373 = scmp.le.s32.totalorder 1, %s20
    %p374 = scmp.lt.s32.totalorder %s20, 3
    %p375 = pnand %p373, %p374
    %p376 = pneg %p375
    // Predicated region
    $region65: #{_lambda_.11} parent=5 // pred_check
      _
    $region66: #{_lambda_.11} parent=5 // pred_check_branch
      %378 = sbr.rel (%p375) target = $region68
    $region67: #{_lambda_.11} parent=5 // pred_region
      %s379 = ssub.s32 %s20, 1
      %p380 = scmp.lt.s32.totalorder %s25, 1
      %s381 = scalar_select %p380, %s25, 1
      %s382 = smul.addr %s381, 4
      %s383 = smul.addr %s382, 8
      %s384 = scalar_lea.vmem %s0, %s383
      %p385 = pneg %p46
      %p386 = pneg %p43
      %p387 = scmp.lt.s32.totalorder %s25, 1
      %s388 = scalar_select %p387, %s25, 1
      %s389 = smul.addr %s388, 4
      %s390 = smul.addr %s389, 8
      %s391 = scalar_lea.vmem %s1, %s390
      %p392 = pneg %p72
      %p393 = pneg %p69
      %p394 = pneg %p93
      %p395 = pneg %p90
      %p396 = pneg %p114
      %p397 = pneg %p111
      %p398 = pneg %p135
      %p399 = pneg %p132
      %p400 = pneg %p156
      %p401 = pneg %p153
      %p402 = pneg %p177
      %p403 = pneg %p174
      %p404 = pneg %p198
      %p405 = pneg %p195
      %p406 = pneg %p219
      %p407 = pneg %p216
      %p408 = pneg %p240
      %p409 = pneg %p237
      %p410 = pneg %p261
      %p411 = pneg %p258
      %p412 = pneg %p282
      %p413 = pneg %p279
      %p414 = pneg %p308
      %p415 = pneg %p305
      %p416 = scmp.lt.s32.totalorder %s25, 1
      %s417 = scalar_select %p416, %s25, 1
      %s418 = smul.addr %s417, 4
      %s419 = smul.addr %s418, 8
      %s420 = scalar_lea.vmem %s12, %s419
      %p421 = scmp.lt.s32.totalorder %s25, 1
      %s422 = scalar_select %p421, %s25, 1
      %s423 = smul.addr %s422, 4
      %s424 = smul.addr %s423, 8
      %s425 = scalar_lea.vmem %s0, %s424
      %p426 = scmp.lt.s32.totalorder %s25, 1
      %s427 = scalar_select %p426, %s25, 1
      %s428 = smul.addr %s427, 4
      %s429 = smul.addr %s428, 8
      %s430 = scalar_lea.vmem %s1, %s429
      %p431 = scmp.lt.s32.totalorder %s25, 1
      %s432 = scalar_select %p431, %s25, 1
      %s433 = smul.addr %s432, 4
      %s434 = smul.addr %s433, 8
      %s435 = scalar_lea.vmem %s12, %s434
      %v437 = vld [vmem:[%s425] sm:$0xff]
      %v438 = vld [vmem:[%s425 + $0x8] sm:$0xff]
      %v439 = vld [vmem:[%s425 + $0x10] sm:$0xff]
      %v440 = vld [vmem:[%s425 + $0x18] sm:$0xff]
      %v441 = vld [vmem:[%s430] sm:$0xff]
      %v442 = vld [vmem:[%s430 + $0x8] sm:$0xff]
      %v443 = vld [vmem:[%s430 + $0x10] sm:$0xff]
      %v444 = vld [vmem:[%s430 + $0x18] sm:$0xff]
      %v445 = vld [vmem:[%s2] sm:$0xff]
      %v446 = vld [vmem:[%s2 + $0x8] sm:$0xff]
      %v447 = vld [vmem:[%s2 + $0x10] sm:$0xff]
      %v448 = vld [vmem:[%s2 + $0x18] sm:$0xff]
      %v449 = vld [vmem:[%s2 + $0x20] sm:$0xff]
      %v450 = vld [vmem:[%s2 + $0x28] sm:$0xff]
      %v451 = vld [vmem:[%s2 + $0x30] sm:$0xff]
      %v452 = vld [vmem:[%s2 + $0x38] sm:$0xff]
      %v453 = vld [vmem:[%s2 + $0x40] sm:$0xff]
      %v454 = vld [vmem:[%s2 + $0x48] sm:$0xff]
      %v455 = vld [vmem:[%s2 + $0x50] sm:$0xff]
      %v456 = vld [vmem:[%s2 + $0x58] sm:$0xff]
      %v457 = vld [vmem:[%s3] sm:$0x1]
      %vm462 = vcmask 1040384
      %v463 = vrot.slane %v437, 7
      %v464 = vrot.slane %v438, 7
      %v465 = vsel %vm462, %v463, %v464
      %v466 = vrot.slane %v439, 7
      %v467 = vsel %vm462, %v464, %v466
      %v468 = vrot.slane %v440, 7
      %v469 = vsel %vm462, %v466, %v468
      %v474 = vsel %vm462, 0.0, %v463
      %v475 = vpack.c.bf16 %v465, %v474
      %v476 = vpack.c.bf16 %v469, %v467
      %v477 = vpack.c.bf16 %v446, %v445
      %v478 = vpack.c.bf16 %v448, %v447
      %v479 = vpack.c.bf16 %v438, %v437
      %v480 = vpack.c.bf16 %v440, %v439
      %v481 = vpack.c.bf16 %v450, %v449
      %v482 = vpack.c.bf16 %v452, %v451
      %vm483 = vcmask 261120
      %v485 = vsel %vm483, %v479, 0
      %v488 = vsel %vm483, %v480, 0
      %490 = vmatprep.subr.bf16.mxu0 0
      %491 = vmatpush1.bf16.msra.mxu0 0
      %492 = vmatprep.subr.bf16.mxu0 0
      %493 = vmatpush1.bf16.msra.mxu0 0
      %494 = vmatprep.subr.bf16.mxu0 0
      %495 = vmatpush1.bf16.msra.mxu0 0
      %496 = vmatprep.subr.bf16.mxu0 0
      %497 = vmatpush1.bf16.msra.mxu0 0
      %498 = vmatprep.subr.bf16.mxu0 0
      %499 = vmatpush1.bf16.msra.mxu0 0
      %500 = vmatprep.subr.bf16.mxu0 0
      %501 = vmatpush1.bf16.msra.mxu0 0
      %502 = vmatprep.subr.bf16.mxu0 0
      %503 = vmatpush1.bf16.msra.mxu0 %v482
      %504 = vmatprep.subr.bf16.mxu0 0
      %505 = vmatpush1.bf16.msra.mxu0 %v481
      %506 = vmatprep.subr.bf16.mxu0 0
      %507 = vmatpush2.bf16.msra.mxu0 0
      %508 = vmatprep.subr.bf16.mxu0 0
      %509 = vmatpush2.bf16.msra.mxu0 0
      %510 = vmatprep.subr.bf16.mxu0 0
      %511 = vmatpush2.bf16.msra.mxu0 0
      %512 = vmatprep.subr.bf16.mxu0 0
      %513 = vmatpush2.bf16.msra.mxu0 0
      %514 = vmatprep.subr.bf16.mxu0 0
      %515 = vmatpush2.bf16.msra.mxu0 0
      %516 = vmatprep.subr.bf16.mxu0 0
      %517 = vmatpush2.bf16.msra.mxu0 0
      %518 = vmatprep.subr.bf16.mxu0 0
      %519 = vmatpush2.bf16.msra.mxu0 0
      %520 = vmatprep.subr.bf16.mxu0 0
      %521 = vmatpush2.bf16.msra.mxu0 0
      %522 = vmatprep.mubr.bf16.mxu0 0
      %523 = vmatmul.mubr.bf16.gmra.mxu0 %v485
      %v524 = vpop.f32.mrf.mxu0
      %v525 = vadd.f32 0.0, %v524
      %v526 = vpop.f32.mrf.mxu0
      %v527 = vpop.f32.mrf.mxu0
      %v528 = vadd.f32 0.0, %v527
      %v529 = vpop.f32.mrf.mxu0
      %530 = vmatprep.mubr.bf16.mxu0 0
      %531 = vmatmul.mubr.bf16.gmra.mxu0 %v488
      %v532 = vpop.f32.mrf.mxu0
      %v533 = vadd.f32 0.0, %v532
      %v534 = vpop.f32.mrf.mxu0
      %v535 = vpop.f32.mrf.mxu0
      %v536 = vadd.f32 0.0, %v535
      %v537 = vpop.f32.mrf.mxu0
      %538 = vdwg.mxu0
      %v540 = vsel %vm483, %v475, 0
      %v543 = vsel %vm483, %v476, 0
      %545 = vmatprep.subr.bf16.mxu0 0
      %546 = vmatpush1.bf16.msra.mxu0 0
      %547 = vmatprep.subr.bf16.mxu0 0
      %548 = vmatpush1.bf16.msra.mxu0 0
      %549 = vmatprep.subr.bf16.mxu0 0
      %550 = vmatpush1.bf16.msra.mxu0 0
      %551 = vmatprep.subr.bf16.mxu0 0
      %552 = vmatpush1.bf16.msra.mxu0 0
      %553 = vmatprep.subr.bf16.mxu0 0
      %554 = vmatpush1.bf16.msra.mxu0 0
      %555 = vmatprep.subr.bf16.mxu0 0
      %556 = vmatpush1.bf16.msra.mxu0 0
      %557 = vmatprep.subr.bf16.mxu0 0
      %558 = vmatpush1.bf16.msra.mxu0 %v478
      %559 = vmatprep.subr.bf16.mxu0 0
      %560 = vmatpush1.bf16.msra.mxu0 %v477
      %561 = vmatprep.subr.bf16.mxu0 0
      %562 = vmatpush2.bf16.msra.mxu0 0
      %563 = vmatprep.subr.bf16.mxu0 0
      %564 = vmatpush2.bf16.msra.mxu0 0
      %565 = vmatprep.subr.bf16.mxu0 0
      %566 = vmatpush2.bf16.msra.mxu0 0
      %567 = vmatprep.subr.bf16.mxu0 0
      %568 = vmatpush2.bf16.msra.mxu0 0
      %569 = vmatprep.subr.bf16.mxu0 0
      %570 = vmatpush2.bf16.msra.mxu0 0
      %571 = vmatprep.subr.bf16.mxu0 0
      %572 = vmatpush2.bf16.msra.mxu0 0
      %573 = vmatprep.subr.bf16.mxu0 0
      %574 = vmatpush2.bf16.msra.mxu0 0
      %575 = vmatprep.subr.bf16.mxu0 0
      %576 = vmatpush2.bf16.msra.mxu0 0
      %577 = vmatprep.mubr.bf16.mxu0 0
      %578 = vmatmul.mubr.bf16.gmra.mxu0 %v540
      %v579 = vpop.f32.mrf.mxu0
      %v580 = vadd.f32 %v525, %v579
      %v581 = vpop.f32.mrf.mxu0
      %v582 = vpop.f32.mrf.mxu0
      %v583 = vadd.f32 %v528, %v582
      %v584 = vpop.f32.mrf.mxu0
      %585 = vmatprep.mubr.bf16.mxu0 0
      %586 = vmatmul.mubr.bf16.gmra.mxu0 %v543
      %v587 = vpop.f32.mrf.mxu0
      %v588 = vadd.f32 %v533, %v587
      %v589 = vpop.f32.mrf.mxu0
      %v590 = vpop.f32.mrf.mxu0
      %v591 = vadd.f32 %v536, %v590
      %v592 = vpop.f32.mrf.mxu0
      %593 = vdwg.mxu0
      %vm594 = vcmask 1046528
      %v595 = vrot.slane %v437, 1
      %v596 = vrot.slane %v438, 1
      %v597 = vsel %vm594, %v595, %v596
      %v598 = vrot.slane %v439, 1
      %v599 = vsel %vm594, %v596, %v598
      %v600 = vrot.slane %v440, 1
      %v601 = vsel %vm594, %v598, %v600
      %v606 = vsel %vm594, %v600, 0.0
      %v607 = vpack.c.bf16 %v599, %v597
      %v608 = vpack.c.bf16 %v606, %v601
      %v609 = vpack.c.bf16 %v454, %v453
      %v610 = vpack.c.bf16 %v456, %v455
      %v612 = vsel %vm483, %v607, 0
      %v615 = vsel %vm483, %v608, 0
      %617 = vmatprep.subr.bf16.mxu0 0
      %618 = vmatpush1.bf16.msra.mxu0 0
      %619 = vmatprep.subr.bf16.mxu0 0
      %620 = vmatpush1.bf16.msra.mxu0 0
      %621 = vmatprep.subr.bf16.mxu0 0
      %622 = vmatpush1.bf16.msra.mxu0 0
      %623 = vmatprep.subr.bf16.mxu0 0
      %624 = vmatpush1.bf16.msra.mxu0 0
      %625 = vmatprep.subr.bf16.mxu0 0
      %626 = vmatpush1.bf16.msra.mxu0 0
      %627 = vmatprep.subr.bf16.mxu0 0
      %628 = vmatpush1.bf16.msra.mxu0 0
      %629 = vmatprep.subr.bf16.mxu0 0
      %630 = vmatpush1.bf16.msra.mxu0 %v610
      %631 = vmatprep.subr.bf16.mxu0 0
      %632 = vmatpush1.bf16.msra.mxu0 %v609
      %633 = vmatprep.subr.bf16.mxu0 0
      %634 = vmatpush2.bf16.msra.mxu0 0
      %635 = vmatprep.subr.bf16.mxu0 0
      %636 = vmatpush2.bf16.msra.mxu0 0
      %637 = vmatprep.subr.bf16.mxu0 0
      %638 = vmatpush2.bf16.msra.mxu0 0
      %639 = vmatprep.subr.bf16.mxu0 0
      %640 = vmatpush2.bf16.msra.mxu0 0
      %641 = vmatprep.subr.bf16.mxu0 0
      %642 = vmatpush2.bf16.msra.mxu0 0
      %643 = vmatprep.subr.bf16.mxu0 0
      %644 = vmatpush2.bf16.msra.mxu0 0
      %645 = vmatprep.subr.bf16.mxu0 0
      %646 = vmatpush2.bf16.msra.mxu0 0
      %647 = vmatprep.subr.bf16.mxu0 0
      %648 = vmatpush2.bf16.msra.mxu0 0
      %649 = vmatprep.mubr.bf16.mxu0 0
      %650 = vmatmul.mubr.bf16.gmra.mxu0 %v612
      %v651 = vpop.f32.mrf.mxu0
      %v652 = vadd.f32 0.0, %v651
      %v653 = vpop.f32.mrf.mxu0
      %v654 = vpop.f32.mrf.mxu0
      %v655 = vadd.f32 0.0, %v654
      %v656 = vpop.f32.mrf.mxu0
      %657 = vmatprep.mubr.bf16.mxu0 0
      %658 = vmatmul.mubr.bf16.gmra.mxu0 %v615
      %v659 = vpop.f32.mrf.mxu0
      %v660 = vadd.f32 0.0, %v659
      %v661 = vpop.f32.mrf.mxu0
      %v662 = vpop.f32.mrf.mxu0
      %v663 = vadd.f32 0.0, %v662
      %v664 = vpop.f32.mrf.mxu0
      %665 = vdwg.mxu0
      %v666 = vadd.f32 %v580, %v652
      %v667 = vadd.f32 %v583, %v655
      %v668 = vadd.f32 %v588, %v660
      %v669 = vadd.f32 %v591, %v663
      %v671 = vlaneseq
      %v672 = vshrl.u32 %v671, 7
      %v673 = vsub.s32 0, %v672
      %v674 = vrot.slane %v457, %v673
      %v676 = vadd.f32 %v666, %v674
      %v677 = vadd.f32 %v667, %v674
      %v678 = vadd.f32 %v668, %v674
      %v679 = vadd.f32 %v669, %v674
      %v680 = vmax.f32 %v676, 0.0
      %v681 = vmax.f32 %v677, 0.0
      %v682 = vmax.f32 %v678, 0.0
      %v683 = vmax.f32 %v679, 0.0
      %v684 = vld [vmem:[%s4] sm:$0x1]
      %v685 = vld [vmem:[%s5] sm:$0x1]
      %v686 = vsel %vm483, %v680, 0.0
      %687 = vadd.xlane.f32.xlu0 %v686
      %v688 = vpop.xlane.xlu0 %687
      %v689 = vsel %vm483, %v681, 0.0
      %690 = vadd.xlane.f32.xlu0 %v689
      %v691 = vpop.xlane.xlu0 %690
      %v692 = vsel %vm483, %v682, 0.0
      %693 = vadd.xlane.f32.xlu0 %v692
      %v694 = vpop.xlane.xlu0 %693
      %v695 = vsel %vm483, %v683, 0.0
      %696 = vadd.xlane.f32.xlu0 %v695
      %v697 = vpop.xlane.xlu0 %696
      %v698 = vrcp.pop 32.0
      %v699 = vmul.f32 %v688, %v698
      %v700 = vmul.f32 %v691, %v698
      %v701 = vmul.f32 %v694, %v698
      %v702 = vmul.f32 %v697, %v698
      %v703 = vsub.f32 %v680, %v699
      %v704 = vsub.f32 %v681, %v700
      %v705 = vsub.f32 %v682, %v701
      %v706 = vsub.f32 %v683, %v702
      %v707 = vmul.f32 %v703, %v703
      %v708 = vmul.f32 %v704, %v704
      %v709 = vmul.f32 %v705, %v705
      %v710 = vmul.f32 %v706, %v706
      %v711 = vsel %vm483, %v707, 0.0
      %712 = vadd.xlane.f32.xlu0 %v711
      %v713 = vpop.xlane.xlu0 %712
      %v714 = vsel %vm483, %v708, 0.0
      %715 = vadd.xlane.f32.xlu0 %v714
      %v716 = vpop.xlane.xlu0 %715
      %v717 = vsel %vm483, %v709, 0.0
      %718 = vadd.xlane.f32.xlu0 %v717
      %v719 = vpop.xlane.xlu0 %718
      %v720 = vsel %vm483, %v710, 0.0
      %721 = vadd.xlane.f32.xlu0 %v720
      %v722 = vpop.xlane.xlu0 %721
      %v723 = vmul.f32 %v713, %v698
      %v724 = vmul.f32 %v716, %v698
      %v725 = vmul.f32 %v719, %v698
      %v726 = vmul.f32 %v722, %v698
      %v727 = vadd.f32 %v723, 1e-05
      %v728 = vadd.f32 %v724, 1e-05
      %v729 = vadd.f32 %v725, 1e-05
      %v730 = vadd.f32 %v726, 1e-05
      %v731 = vrsqrt.pop %v727
      %v732 = vrsqrt.pop %v728
      %v733 = vrsqrt.pop %v729
      %v734 = vrsqrt.pop %v730
      %v735 = vmul.f32 %v703, %v731
      %v736 = vmul.f32 %v704, %v732
      %v737 = vmul.f32 %v705, %v733
      %v738 = vmul.f32 %v706, %v734
      %v740 = vlaneseq
      %v741 = vshrl.u32 %v740, 7
      %v742 = vsub.s32 0, %v741
      %v743 = vrot.slane %v684, %v742
      %v745 = vmul.f32 %v735, %v743
      %v746 = vmul.f32 %v736, %v743
      %v747 = vmul.f32 %v737, %v743
      %v748 = vmul.f32 %v738, %v743
      %v750 = vlaneseq
      %v751 = vshrl.u32 %v750, 7
      %v752 = vsub.s32 0, %v751
      %v753 = vrot.slane %v685, %v752
      %v755 = vadd.f32 %v745, %v753
      %v756 = vadd.f32 %v746, %v753
      %v757 = vadd.f32 %v747, %v753
      %v758 = vadd.f32 %v748, %v753
      %v759 = vld [vmem:[%s6] sm:$0xff]
      %v760 = vld [vmem:[%s6 + $0x8] sm:$0xff]
      %v761 = vld [vmem:[%s6 + $0x10] sm:$0xff]
      %v762 = vld [vmem:[%s6 + $0x18] sm:$0xff]
      %v763 = vld [vmem:[%s6 + $0x20] sm:$0xff]
      %v764 = vld [vmem:[%s6 + $0x28] sm:$0xff]
      %v765 = vld [vmem:[%s6 + $0x30] sm:$0xff]
      %v766 = vld [vmem:[%s6 + $0x38] sm:$0xff]
      %v767 = vld [vmem:[%s6 + $0x40] sm:$0xff]
      %v768 = vld [vmem:[%s6 + $0x48] sm:$0xff]
      %v769 = vld [vmem:[%s6 + $0x50] sm:$0xff]
      %v770 = vld [vmem:[%s6 + $0x58] sm:$0xff]
      %v771 = vld [vmem:[%s7] sm:$0x1]
      %v776 = vrot.slane %v755, 7
      %v777 = vrot.slane %v756, 7
      %v778 = vsel %vm462, %v776, %v777
      %v779 = vrot.slane %v757, 7
      %v780 = vsel %vm462, %v777, %v779
      %v781 = vrot.slane %v758, 7
      %v782 = vsel %vm462, %v779, %v781
      %v787 = vsel %vm462, 0.0, %v776
      %v788 = vpack.c.bf16 %v778, %v787
      %v789 = vpack.c.bf16 %v782, %v780
      %v790 = vpack.c.bf16 %v760, %v759
      %v791 = vpack.c.bf16 %v762, %v761
      %v792 = vpack.c.bf16 %v756, %v755
      %v793 = vpack.c.bf16 %v758, %v757
      %v794 = vpack.c.bf16 %v764, %v763
      %v795 = vpack.c.bf16 %v766, %v765
      %v797 = vsel %vm483, %v792, 0
      %v800 = vsel %vm483, %v793, 0
      %802 = vmatprep.subr.bf16.mxu0 0
      %803 = vmatpush1.bf16.msra.mxu0 0
      %804 = vmatprep.subr.bf16.mxu0 0
      %805 = vmatpush1.bf16.msra.mxu0 0
      %806 = vmatprep.subr.bf16.mxu0 0
      %807 = vmatpush1.bf16.msra.mxu0 0
      %808 = vmatprep.subr.bf16.mxu0 0
      %809 = vmatpush1.bf16.msra.mxu0 0
      %810 = vmatprep.subr.bf16.mxu0 0
      %811 = vmatpush1.bf16.msra.mxu0 0
      %812 = vmatprep.subr.bf16.mxu0 0
      %813 = vmatpush1.bf16.msra.mxu0 0
      %814 = vmatprep.subr.bf16.mxu0 0
      %815 = vmatpush1.bf16.msra.mxu0 %v795
      %816 = vmatprep.subr.bf16.mxu0 0
      %817 = vmatpush1.bf16.msra.mxu0 %v794
      %818 = vmatprep.subr.bf16.mxu0 0
      %819 = vmatpush2.bf16.msra.mxu0 0
      %820 = vmatprep.subr.bf16.mxu0 0
      %821 = vmatpush2.bf16.msra.mxu0 0
      %822 = vmatprep.subr.bf16.mxu0 0
      %823 = vmatpush2.bf16.msra.mxu0 0
      %824 = vmatprep.subr.bf16.mxu0 0
      %825 = vmatpush2.bf16.msra.mxu0 0
      %826 = vmatprep.subr.bf16.mxu0 0
      %827 = vmatpush2.bf16.msra.mxu0 0
      %828 = vmatprep.subr.bf16.mxu0 0
      %829 = vmatpush2.bf16.msra.mxu0 0
      %830 = vmatprep.subr.bf16.mxu0 0
      %831 = vmatpush2.bf16.msra.mxu0 0
      %832 = vmatprep.subr.bf16.mxu0 0
      %833 = vmatpush2.bf16.msra.mxu0 0
      %834 = vmatprep.mubr.bf16.mxu0 0
      %835 = vmatmul.mubr.bf16.gmra.mxu0 %v797
      %v836 = vpop.f32.mrf.mxu0
      %v837 = vadd.f32 0.0, %v836
      %v838 = vpop.f32.mrf.mxu0
      %v839 = vpop.f32.mrf.mxu0
      %v840 = vadd.f32 0.0, %v839
      %v841 = vpop.f32.mrf.mxu0
      %842 = vmatprep.mubr.bf16.mxu0 0
      %843 = vmatmul.mubr.bf16.gmra.mxu0 %v800
      %v844 = vpop.f32.mrf.mxu0
      %v845 = vadd.f32 0.0, %v844
      %v846 = vpop.f32.mrf.mxu0
      %v847 = vpop.f32.mrf.mxu0
      %v848 = vadd.f32 0.0, %v847
      %v849 = vpop.f32.mrf.mxu0
      %850 = vdwg.mxu0
      %v852 = vsel %vm483, %v788, 0
      %v855 = vsel %vm483, %v789, 0
      %857 = vmatprep.subr.bf16.mxu0 0
      %858 = vmatpush1.bf16.msra.mxu0 0
      %859 = vmatprep.subr.bf16.mxu0 0
      %860 = vmatpush1.bf16.msra.mxu0 0
      %861 = vmatprep.subr.bf16.mxu0 0
      %862 = vmatpush1.bf16.msra.mxu0 0
      %863 = vmatprep.subr.bf16.mxu0 0
      %864 = vmatpush1.bf16.msra.mxu0 0
      %865 = vmatprep.subr.bf16.mxu0 0
      %866 = vmatpush1.bf16.msra.mxu0 0
      %867 = vmatprep.subr.bf16.mxu0 0
      %868 = vmatpush1.bf16.msra.mxu0 0
      %869 = vmatprep.subr.bf16.mxu0 0
      %870 = vmatpush1.bf16.msra.mxu0 %v791
      %871 = vmatprep.subr.bf16.mxu0 0
      %872 = vmatpush1.bf16.msra.mxu0 %v790
      %873 = vmatprep.subr.bf16.mxu0 0
      %874 = vmatpush2.bf16.msra.mxu0 0
      %875 = vmatprep.subr.bf16.mxu0 0
      %876 = vmatpush2.bf16.msra.mxu0 0
      %877 = vmatprep.subr.bf16.mxu0 0
      %878 = vmatpush2.bf16.msra.mxu0 0
      %879 = vmatprep.subr.bf16.mxu0 0
      %880 = vmatpush2.bf16.msra.mxu0 0
      %881 = vmatprep.subr.bf16.mxu0 0
      %882 = vmatpush2.bf16.msra.mxu0 0
      %883 = vmatprep.subr.bf16.mxu0 0
      %884 = vmatpush2.bf16.msra.mxu0 0
      %885 = vmatprep.subr.bf16.mxu0 0
      %886 = vmatpush2.bf16.msra.mxu0 0
      %887 = vmatprep.subr.bf16.mxu0 0
      %888 = vmatpush2.bf16.msra.mxu0 0
      %889 = vmatprep.mubr.bf16.mxu0 0
      %890 = vmatmul.mubr.bf16.gmra.mxu0 %v852
      %v891 = vpop.f32.mrf.mxu0
      %v892 = vadd.f32 %v837, %v891
      %v893 = vpop.f32.mrf.mxu0
      %v894 = vpop.f32.mrf.mxu0
      %v895 = vadd.f32 %v840, %v894
      %v896 = vpop.f32.mrf.mxu0
      %897 = vmatprep.mubr.bf16.mxu0 0
      %898 = vmatmul.mubr.bf16.gmra.mxu0 %v855
      %v899 = vpop.f32.mrf.mxu0
      %v900 = vadd.f32 %v845, %v899
      %v901 = vpop.f32.mrf.mxu0
      %v902 = vpop.f32.mrf.mxu0
      %v903 = vadd.f32 %v848, %v902
      %v904 = vpop.f32.mrf.mxu0
      %905 = vdwg.mxu0
      %v906 = vrot.slane %v755, 1
      %v907 = vrot.slane %v756, 1
      %v908 = vsel %vm594, %v906, %v907
      %v909 = vrot.slane %v757, 1
      %v910 = vsel %vm594, %v907, %v909
      %v911 = vrot.slane %v758, 1
      %v912 = vsel %vm594, %v909, %v911
      %v917 = vsel %vm594, %v911, 0.0
      %v918 = vpack.c.bf16 %v910, %v908
      %v919 = vpack.c.bf16 %v917, %v912
      %v920 = vpack.c.bf16 %v768, %v767
      %v921 = vpack.c.bf16 %v770, %v769
      %v923 = vsel %vm483, %v918, 0
      %v926 = vsel %vm483, %v919, 0
      %928 = vmatprep.subr.bf16.mxu0 0
      %929 = vmatpush1.bf16.msra.mxu0 0
      %930 = vmatprep.subr.bf16.mxu0 0
      %931 = vmatpush1.bf16.msra.mxu0 0
      %932 = vmatprep.subr.bf16.mxu0 0
      %933 = vmatpush1.bf16.msra.mxu0 0
      %934 = vmatprep.subr.bf16.mxu0 0
      %935 = vmatpush1.bf16.msra.mxu0 0
      %936 = vmatprep.subr.bf16.mxu0 0
      %937 = vmatpush1.bf16.msra.mxu0 0
      %938 = vmatprep.subr.bf16.mxu0 0
      %939 = vmatpush1.bf16.msra.mxu0 0
      %940 = vmatprep.subr.bf16.mxu0 0
      %941 = vmatpush1.bf16.msra.mxu0 %v921
      %942 = vmatprep.subr.bf16.mxu0 0
      %943 = vmatpush1.bf16.msra.mxu0 %v920
      %944 = vmatprep.subr.bf16.mxu0 0
      %945 = vmatpush2.bf16.msra.mxu0 0
      %946 = vmatprep.subr.bf16.mxu0 0
      %947 = vmatpush2.bf16.msra.mxu0 0
      %948 = vmatprep.subr.bf16.mxu0 0
      %949 = vmatpush2.bf16.msra.mxu0 0
      %950 = vmatprep.subr.bf16.mxu0 0
      %951 = vmatpush2.bf16.msra.mxu0 0
      %952 = vmatprep.subr.bf16.mxu0 0
      %953 = vmatpush2.bf16.msra.mxu0 0
      %954 = vmatprep.subr.bf16.mxu0 0
      %955 = vmatpush2.bf16.msra.mxu0 0
      %956 = vmatprep.subr.bf16.mxu0 0
      %957 = vmatpush2.bf16.msra.mxu0 0
      %958 = vmatprep.subr.bf16.mxu0 0
      %959 = vmatpush2.bf16.msra.mxu0 0
      %960 = vmatprep.mubr.bf16.mxu0 0
      %961 = vmatmul.mubr.bf16.gmra.mxu0 %v923
      %v962 = vpop.f32.mrf.mxu0
      %v963 = vadd.f32 0.0, %v962
      %v964 = vpop.f32.mrf.mxu0
      %v965 = vpop.f32.mrf.mxu0
      %v966 = vadd.f32 0.0, %v965
      %v967 = vpop.f32.mrf.mxu0
      %968 = vmatprep.mubr.bf16.mxu0 0
      %969 = vmatmul.mubr.bf16.gmra.mxu0 %v926
      %v970 = vpop.f32.mrf.mxu0
      %v971 = vadd.f32 0.0, %v970
      %v972 = vpop.f32.mrf.mxu0
      %v973 = vpop.f32.mrf.mxu0
      %v974 = vadd.f32 0.0, %v973
      %v975 = vpop.f32.mrf.mxu0
      %976 = vdwg.mxu0
      %v977 = vadd.f32 %v892, %v963
      %v978 = vadd.f32 %v895, %v966
      %v979 = vadd.f32 %v900, %v971
      %v980 = vadd.f32 %v903, %v974
      %v982 = vlaneseq
      %v983 = vshrl.u32 %v982, 7
      %v984 = vsub.s32 0, %v983
      %v985 = vrot.slane %v771, %v984
      %v987 = vadd.f32 %v977, %v985
      %v988 = vadd.f32 %v978, %v985
      %v989 = vadd.f32 %v979, %v985
      %v990 = vadd.f32 %v980, %v985
      %v991 = vmax.f32 %v987, 0.0
      %v992 = vmax.f32 %v988, 0.0
      %v993 = vmax.f32 %v989, 0.0
      %v994 = vmax.f32 %v990, 0.0
      %v995 = vld [vmem:[%s8] sm:$0x1]
      %v996 = vld [vmem:[%s9] sm:$0x1]
      %v997 = vsel %vm483, %v991, 0.0
      %998 = vadd.xlane.f32.xlu0 %v997
      %v999 = vpop.xlane.xlu0 %998
      %v1000 = vsel %vm483, %v992, 0.0
      %1001 = vadd.xlane.f32.xlu0 %v1000
      %v1002 = vpop.xlane.xlu0 %1001
      %v1003 = vsel %vm483, %v993, 0.0
      %1004 = vadd.xlane.f32.xlu0 %v1003
      %v1005 = vpop.xlane.xlu0 %1004
      %v1006 = vsel %vm483, %v994, 0.0
      %1007 = vadd.xlane.f32.xlu0 %v1006
      %v1008 = vpop.xlane.xlu0 %1007
      %v1009 = vmul.f32 %v999, %v698
      %v1010 = vmul.f32 %v1002, %v698
      %v1011 = vmul.f32 %v1005, %v698
      %v1012 = vmul.f32 %v1008, %v698
      %v1013 = vsub.f32 %v991, %v1009
      %v1014 = vsub.f32 %v992, %v1010
      %v1015 = vsub.f32 %v993, %v1011
      %v1016 = vsub.f32 %v994, %v1012
      %v1017 = vmul.f32 %v1013, %v1013
      %v1018 = vmul.f32 %v1014, %v1014
      %v1019 = vmul.f32 %v1015, %v1015
      %v1020 = vmul.f32 %v1016, %v1016
      %v1021 = vsel %vm483, %v1017, 0.0
      %1022 = vadd.xlane.f32.xlu0 %v1021
      %v1023 = vpop.xlane.xlu0 %1022
      %v1024 = vsel %vm483, %v1018, 0.0
      %1025 = vadd.xlane.f32.xlu0 %v1024
      %v1026 = vpop.xlane.xlu0 %1025
      %v1027 = vsel %vm483, %v1019, 0.0
      %1028 = vadd.xlane.f32.xlu0 %v1027
      %v1029 = vpop.xlane.xlu0 %1028
      %v1030 = vsel %vm483, %v1020, 0.0
      %1031 = vadd.xlane.f32.xlu0 %v1030
      %v1032 = vpop.xlane.xlu0 %1031
      %v1033 = vmul.f32 %v1023, %v698
      %v1034 = vmul.f32 %v1026, %v698
      %v1035 = vmul.f32 %v1029, %v698
      %v1036 = vmul.f32 %v1032, %v698
      %v1037 = vadd.f32 %v1033, 1e-05
      %v1038 = vadd.f32 %v1034, 1e-05
      %v1039 = vadd.f32 %v1035, 1e-05
      %v1040 = vadd.f32 %v1036, 1e-05
      %v1041 = vrsqrt.pop %v1037
      %v1042 = vrsqrt.pop %v1038
      %v1043 = vrsqrt.pop %v1039
      %v1044 = vrsqrt.pop %v1040
      %v1045 = vmul.f32 %v1013, %v1041
      %v1046 = vmul.f32 %v1014, %v1042
      %v1047 = vmul.f32 %v1015, %v1043
      %v1048 = vmul.f32 %v1016, %v1044
      %v1050 = vlaneseq
      %v1051 = vshrl.u32 %v1050, 7
      %v1052 = vsub.s32 0, %v1051
      %v1053 = vrot.slane %v995, %v1052
      %v1055 = vmul.f32 %v1045, %v1053
      %v1056 = vmul.f32 %v1046, %v1053
      %v1057 = vmul.f32 %v1047, %v1053
      %v1058 = vmul.f32 %v1048, %v1053
      %v1060 = vlaneseq
      %v1061 = vshrl.u32 %v1060, 7
      %v1062 = vsub.s32 0, %v1061
      %v1063 = vrot.slane %v996, %v1062
      %v1065 = vadd.f32 %v1055, %v1063
      %v1066 = vadd.f32 %v1056, %v1063
      %v1067 = vadd.f32 %v1057, %v1063
      %v1068 = vadd.f32 %v1058, %v1063
      %v1069 = vld [vmem:[%s10] sm:$0x1]
      %v1071 = vlaneseq
      %v1072 = vshrl.u32 %v1071, 7
      %v1073 = vsub.s32 0, %v1072
      %v1074 = vrot.slane %v1069, %v1073
      %v1076 = vmul.f32 %v1065, %v1074
      %v1077 = vmul.f32 %v1066, %v1074
      %v1078 = vmul.f32 %v1067, %v1074
      %v1079 = vmul.f32 %v1068, %v1074
      %v1080 = vsel %vm483, %v1076, 0.0
      %1081 = vadd.xlane.f32.xlu0 %v1080
      %v1082 = vpop.xlane.xlu0 %1081
      %v1083 = vsel %vm483, %v1077, 0.0
      %1084 = vadd.xlane.f32.xlu0 %v1083
      %v1085 = vpop.xlane.xlu0 %1084
      %v1086 = vsel %vm483, %v1078, 0.0
      %1087 = vadd.xlane.f32.xlu0 %v1086
      %v1088 = vpop.xlane.xlu0 %1087
      %v1089 = vsel %vm483, %v1079, 0.0
      %1090 = vadd.xlane.f32.xlu0 %v1089
      %v1091 = vpop.xlane.xlu0 %1090
      %v1092 = vld [vmem:[#allocation2] sm:$0x1]
      %v1094 = vlaneseq
      %v1095 = vshrl.u32 %v1094, 7
      %v1096 = vsub.s32 0, %v1095
      %v1097 = vrot.slane %v1092, %v1096
      %v1099 = vadd.f32 %v1082, %v1097
      %v1100 = vadd.f32 %v1085, %v1097
      %v1101 = vadd.f32 %v1088, %v1097
      %v1102 = vadd.f32 %v1091, %v1097
      %v1103 = vmul.f32 %v1099, %v441
      %v1104 = vmul.f32 %v1100, %v442
      %v1105 = vmul.f32 %v1101, %v443
      %v1106 = vmul.f32 %v1102, %v444
      %vm1107 = vcmask 7168
      %1108 = vst.msk [vmem:[%s435] sm:$0xff] %vm1107, %v1103
      %1109 = vst.msk [vmem:[%s435 + $0x8] sm:$0xff] %vm1107, %v1104
      %1110 = vst.msk [vmem:[%s435 + $0x10] sm:$0xff] %vm1107, %v1105
      %1111 = vst.msk [vmem:[%s435 + $0x18] sm:$0xff] %vm1107, %v1106
      %p1112 = scmp.lt.s32.totalorder %s25, 1
      %s1113 = scalar_select %p1112, %s25, 1
      %s1114 = smul.addr %s1113, 4
      %s1115 = smul.addr %s1114, 8
      %s1116 = scalar_lea.vmem %s12, %s1115
      // Predicated region
      $region69: #{_lambda_.11} parent=67 // pred_check
        %p1117 = pneg %p305
      $region70: #{_lambda_.11} parent=67 // pred_check_branch
        %1119 = sbr.rel (%p1117) target = $region72
      $region71: #{_lambda_.11} parent=67 // pred_region
        _
      $region72: #{_lambda_.11} parent=67 // pred_fallthru
        _
    $region68: #{_lambda_.11} parent=5 // pred_fallthru
      _
    %p1120 = scmp.le.s32.totalorder 2, %s20
    // Predicated region
    $region73: #{_lambda_.11} parent=5 // pred_check
      %p1121 = pneg %p1120
    $region74: #{_lambda_.11} parent=5 // pred_check_branch
      %1123 = sbr.rel (%p1121) target = $region76
    $region75: #{_lambda_.11} parent=5 // pred_region
      %s1124 = ssub.s32 %s20, 2
      // Predicated region
      $region77: #{_lambda_.11} parent=75 // pred_check
        %p1125 = pneg %p311
      $region78: #{_lambda_.11} parent=75 // pred_check_branch
        %1127 = sbr.rel (%p1125) target = $region80
      $region79: #{_lambda_.11} parent=75 // pred_region
        %p1128 = scmp.lt.s32.totalorder %s26, 1
        %s1129 = scalar_select %p1128, %s26, 1
        %s1130 = smul.addr %s1129, 4
        %s1131 = smul.addr %s1130, 8
        %s1132 = scalar_lea.vmem %s12, %s1131
      $region80: #{_lambda_.11} parent=75 // pred_fallthru
        _
    $region76: #{_lambda_.11} parent=5 // pred_fallthru
      _
  $region6: #{_lambda_.11} parent=0 // loop_footer
    %s24 = sadd.s32 1, %s20
  $region7: #{_lambda_.11} parent=0 // loop_footer_branch
    %19 = sbr.rel target = $region3
  $region8: #{_lambda_.11} parent=0 // loop_exit
    _

// kernel: _lambda_.10
$region0: #{_lambda_.10}
  #allocation0 [shape = 'u32[]', space=smem, size = 0x4, offset = 0x4, fixed_abs, tag = 'smem constant byte address 0x4 - core index']
  #allocation1 [shape = 'u32[144,128]{1,0:T(1,128)}', space=vmem, size = 0x12000, scoped, tag = 'internal scratch']
  #allocation2 [shape = 'f32[1,1]{1,0:T(1,128)S(1)}', space=vmem, size = 0x200, scoped, tag = 'scoped memory for _lambda_.10']
  %s0 = inlined_call_operand.vmem [shape: f32[2,16,32], index: 0, kind: input, shape index: {}]
  %s1 = inlined_call_operand.vmem [shape: f32[2,16,1], index: 1, kind: input, shape index: {}]
  %s2 = inlined_call_operand.vmem [shape: f32[96,32], index: 2, kind: input, shape index: {}]
  %s3 = inlined_call_operand.vmem [shape: f32[1,32], index: 3, kind: input, shape index: {}]
  %s4 = inlined_call_operand.vmem [shape: f32[1,32], index: 4, kind: input, shape index: {}]
  %s5 = inlined_call_operand.vmem [shape: f32[1,32], index: 5, kind: input, shape index: {}]
  %s6 = inlined_call_operand.vmem [shape: f32[96,32], index: 6, kind: input, shape index: {}]
  %s7 = inlined_call_operand.vmem [shape: f32[1,32], index: 7, kind: input, shape index: {}]
  %s8 = inlined_call_operand.vmem [shape: f32[1,32], index: 8, kind: input, shape index: {}]
  %s9 = inlined_call_operand.vmem [shape: f32[1,32], index: 9, kind: input, shape index: {}]
  %s10 = inlined_call_operand.vmem [shape: f32[1,32], index: 10, kind: input, shape index: {}]
  %s11 = inlined_call_operand.<no memory space> [shape: f32[1,1], index: 11, kind: input, shape index: {}]
  %s12 = inlined_call_operand.vmem [shape: f32[2,16,1], index: 12, kind: output, shape index: {}]
  %s13 = sld [smem:[#allocation0]]
  $region81: #{_lambda_.10} parent=0
    _
  %s15 = ssub.s32 1, %s13
  %s16 = scalar_select 0, %s15, %s13
  %v17 = vstv %s11
  %18 = vst [vmem:[#allocation2] sm:$0x1] %v17
  loop: start=0, step=1, limit=4
  $region2: #{_lambda_.10} parent=0 // loop_pre_header
    _
  $region3: #{_lambda_.10} parent=0 // loop_header
    %s20 = sphi 0, %s24
    %p21 = scmp.ge.s32.totalorder %s20, 4
    %s30 = sphi 0, %s32
    %s33 = sphi 0, %s30
    %s34 = sphi 0, %s33
    %s50 = sphi 0, %s34
    %s56 = sphi 0, %s58
    %s59 = sphi 0, %s56
    %s60 = sphi 0, %s59
    %s76 = sphi 0, %s60
    %s80 = sphi 0, %s80
    %s82 = sphi 0, %s80
    %s83 = sphi 0, %s82
    %s97 = sphi 0, %s83
    %s101 = sphi 0, %s101
    %s103 = sphi 0, %s101
    %s104 = sphi 0, %s103
    %s118 = sphi 0, %s104
    %s122 = sphi 0, %s122
    %s124 = sphi 0, %s122
    %s125 = sphi 0, %s124
    %s139 = sphi 0, %s125
    %s143 = sphi 0, %s143
    %s145 = sphi 0, %s143
    %s146 = sphi 0, %s145
    %s160 = sphi 0, %s146
    %s164 = sphi 0, %s164
    %s166 = sphi 0, %s164
    %s167 = sphi 0, %s166
    %s181 = sphi 0, %s167
    %s185 = sphi 0, %s185
    %s187 = sphi 0, %s185
    %s188 = sphi 0, %s187
    %s202 = sphi 0, %s188
    %s206 = sphi 0, %s206
    %s208 = sphi 0, %s206
    %s209 = sphi 0, %s208
    %s223 = sphi 0, %s209
    %s227 = sphi 0, %s227
    %s229 = sphi 0, %s227
    %s230 = sphi 0, %s229
    %s244 = sphi 0, %s230
    %s248 = sphi 0, %s248
    %s250 = sphi 0, %s248
    %s251 = sphi 0, %s250
    %s265 = sphi 0, %s251
    %s269 = sphi 0, %s269
    %s271 = sphi 0, %s269
    %s272 = sphi 0, %s271
    %s286 = sphi 0, %s272
    %s292 = sphi 0, %s294
    %s295 = sphi 0, %s292
    %s296 = sphi 0, %s295
    %s312 = sphi 0, %s296
  $region4: #{_lambda_.10} parent=0 // loop_header_branch
    %23 = sbr.rel (%p21) target = $region8
  $region5: #{_lambda_.10} parent=0 // loop_body
    %s25 = ssub.s32 %s20, 1
    %s26 = ssub.s32 %s20, 2
    %s27 = sadd.s32 %s20, 1
    %s28 = ssub.s32 %s20, %s27
    %p29 = scmp.eq.s32.totalorder %s28, 0
    %s31 = sadd.s32 %s30, 1
    %s32 = scalar_select %p29, %s30, %s31
    %p35 = pneg %p29
    %p36 = scmp.eq.s32.totalorder %s20, 1
    %p37 = por %p35, %p36
    %p38 = scmp.ne.s32.totalorder %s30, %s33
    %p39 = scmp.eq.s32.totalorder %s20, 0
    %p40 = por %p38, %p39
    %p41 = scmp.ne.s32.totalorder %s30, %s33
    %p42 = scmp.eq.s32.totalorder %s25, 1
    %p43 = por %p41, %p42
    %p44 = scmp.ne.s32.totalorder %s33, %s34
    %p45 = scmp.eq.s32.totalorder %s25, 0
    %p46 = por %p44, %p45
    %p47 = scmp.ne.s32.totalorder %s33, %s34
    %p48 = scmp.eq.s32.totalorder %s26, 1
    %p49 = por %p47, %p48
    %p51 = scmp.ne.s32.totalorder %s34, %s50
    %p52 = scmp.eq.s32.totalorder %s26, 0
    %p53 = por %p51, %p52
    %s54 = ssub.s32 %s20, %s27
    %p55 = scmp.eq.s32.totalorder %s54, 0
    %s57 = sadd.s32 %s56, 1
    %s58 = scalar_select %p55, %s56, %s57
    %p61 = pneg %p55
    %p62 = scmp.eq.s32.totalorder %s20, 1
    %p63 = por %p61, %p62
    %p64 = scmp.ne.s32.totalorder %s56, %s59
    %p65 = scmp.eq.s32.totalorder %s20, 0
    %p66 = por %p64, %p65
    %p67 = scmp.ne.s32.totalorder %s56, %s59
    %p68 = scmp.eq.s32.totalorder %s25, 1
    %p69 = por %p67, %p68
    %p70 = scmp.ne.s32.totalorder %s59, %s60
    %p71 = scmp.eq.s32.totalorder %s25, 0
    %p72 = por %p70, %p71
    %p73 = scmp.ne.s32.totalorder %s59, %s60
    %p74 = scmp.eq.s32.totalorder %s26, 1
    %p75 = por %p73, %p74
    %p77 = scmp.ne.s32.totalorder %s60, %s76
    %p78 = scmp.eq.s32.totalorder %s26, 0
    %p79 = por %p77, %p78
    %s81 = sadd.s32 %s80, 1
    %p84 = scmp.eq.s32.totalorder %s20, 1
    %p85 = scmp.ne.s32.totalorder %s80, %s82
    %p86 = scmp.eq.s32.totalorder %s20, 0
    %p87 = por %p85, %p86
    %p88 = scmp.ne.s32.totalorder %s80, %s82
    %p89 = scmp.eq.s32.totalorder %s25, 1
    %p90 = por %p88, %p89
    %p91 = scmp.ne.s32.totalorder %s82, %s83
    %p92 = scmp.eq.s32.totalorder %s25, 0
    %p93 = por %p91, %p92
    %p94 = scmp.ne.s32.totalorder %s82, %s83
    %p95 = scmp.eq.s32.totalorder %s26, 1
    %p96 = por %p94, %p95
    %p98 = scmp.ne.s32.totalorder %s83, %s97
    %p99 = scmp.eq.s32.totalorder %s26, 0
    %p100 = por %p98, %p99
    %s102 = sadd.s32 %s101, 1
    %p105 = scmp.eq.s32.totalorder %s20, 1
    %p106 = scmp.ne.s32.totalorder %s101, %s103
    %p107 = scmp.eq.s32.totalorder %s20, 0
    %p108 = por %p106, %p107
    %p109 = scmp.ne.s32.totalorder %s101, %s103
    %p110 = scmp.eq.s32.totalorder %s25, 1
    %p111 = por %p109, %p110
    %p112 = scmp.ne.s32.totalorder %s103, %s104
    %p113 = scmp.eq.s32.totalorder %s25, 0
    %p114 = por %p112, %p113
    %p115 = scmp.ne.s32.totalorder %s103, %s104
    %p116 = scmp.eq.s32.totalorder %s26, 1
    %p117 = por %p115, %p116
    %p119 = scmp.ne.s32.totalorder %s104, %s118
    %p120 = scmp.eq.s32.totalorder %s26, 0
    %p121 = por %p119, %p120
    %s123 = sadd.s32 %s122, 1
    %p126 = scmp.eq.s32.totalorder %s20, 1
    %p127 = scmp.ne.s32.totalorder %s122, %s124
    %p128 = scmp.eq.s32.totalorder %s20, 0
    %p129 = por %p127, %p128
    %p130 = scmp.ne.s32.totalorder %s122, %s124
    %p131 = scmp.eq.s32.totalorder %s25, 1
    %p132 = por %p130, %p131
    %p133 = scmp.ne.s32.totalorder %s124, %s125
    %p134 = scmp.eq.s32.totalorder %s25, 0
    %p135 = por %p133, %p134
    %p136 = scmp.ne.s32.totalorder %s124, %s125
    %p137 = scmp.eq.s32.totalorder %s26, 1
    %p138 = por %p136, %p137
    %p140 = scmp.ne.s32.totalorder %s125, %s139
    %p141 = scmp.eq.s32.totalorder %s26, 0
    %p142 = por %p140, %p141
    %s144 = sadd.s32 %s143, 1
    %p147 = scmp.eq.s32.totalorder %s20, 1
    %p148 = scmp.ne.s32.totalorder %s143, %s145
    %p149 = scmp.eq.s32.totalorder %s20, 0
    %p150 = por %p148, %p149
    %p151 = scmp.ne.s32.totalorder %s143, %s145
    %p152 = scmp.eq.s32.totalorder %s25, 1
    %p153 = por %p151, %p152
    %p154 = scmp.ne.s32.totalorder %s145, %s146
    %p155 = scmp.eq.s32.totalorder %s25, 0
    %p156 = por %p154, %p155
    %p157 = scmp.ne.s32.totalorder %s145, %s146
    %p158 = scmp.eq.s32.totalorder %s26, 1
    %p159 = por %p157, %p158
    %p161 = scmp.ne.s32.totalorder %s146, %s160
    %p162 = scmp.eq.s32.totalorder %s26, 0
    %p163 = por %p161, %p162
    %s165 = sadd.s32 %s164, 1
    %p168 = scmp.eq.s32.totalorder %s20, 1
    %p169 = scmp.ne.s32.totalorder %s164, %s166
    %p170 = scmp.eq.s32.totalorder %s20, 0
    %p171 = por %p169, %p170
    %p172 = scmp.ne.s32.totalorder %s164, %s166
    %p173 = scmp.eq.s32.totalorder %s25, 1
    %p174 = por %p172, %p173
    %p175 = scmp.ne.s32.totalorder %s166, %s167
    %p176 = scmp.eq.s32.totalorder %s25, 0
    %p177 = por %p175, %p176
    %p178 = scmp.ne.s32.totalorder %s166, %s167
    %p179 = scmp.eq.s32.totalorder %s26, 1
    %p180 = por %p178, %p179
    %p182 = scmp.ne.s32.totalorder %s167, %s181
    %p183 = scmp.eq.s32.totalorder %s26, 0
    %p184 = por %p182, %p183
    %s186 = sadd.s32 %s185, 1
    %p189 = scmp.eq.s32.totalorder %s20, 1
    %p190 = scmp.ne.s32.totalorder %s185, %s187
    %p191 = scmp.eq.s32.totalorder %s20, 0
    %p192 = por %p190, %p191
    %p193 = scmp.ne.s32.totalorder %s185, %s187
    %p194 = scmp.eq.s32.totalorder %s25, 1
    %p195 = por %p193, %p194
    %p196 = scmp.ne.s32.totalorder %s187, %s188
    %p197 = scmp.eq.s32.totalorder %s25, 0
    %p198 = por %p196, %p197
    %p199 = scmp.ne.s32.totalorder %s187, %s188
    %p200 = scmp.eq.s32.totalorder %s26, 1
    %p201 = por %p199, %p200
    %p203 = scmp.ne.s32.totalorder %s188, %s202
    %p204 = scmp.eq.s32.totalorder %s26, 0
    %p205 = por %p203, %p204
    %s207 = sadd.s32 %s206, 1
    %p210 = scmp.eq.s32.totalorder %s20, 1
    %p211 = scmp.ne.s32.totalorder %s206, %s208
    %p212 = scmp.eq.s32.totalorder %s20, 0
    %p213 = por %p211, %p212
    %p214 = scmp.ne.s32.totalorder %s206, %s208
    %p215 = scmp.eq.s32.totalorder %s25, 1
    %p216 = por %p214, %p215
    %p217 = scmp.ne.s32.totalorder %s208, %s209
    %p218 = scmp.eq.s32.totalorder %s25, 0
    %p219 = por %p217, %p218
    %p220 = scmp.ne.s32.totalorder %s208, %s209
    %p221 = scmp.eq.s32.totalorder %s26, 1
    %p222 = por %p220, %p221
    %p224 = scmp.ne.s32.totalorder %s209, %s223
    %p225 = scmp.eq.s32.totalorder %s26, 0
    %p226 = por %p224, %p225
    %s228 = sadd.s32 %s227, 1
    %p231 = scmp.eq.s32.totalorder %s20, 1
    %p232 = scmp.ne.s32.totalorder %s227, %s229
    %p233 = scmp.eq.s32.totalorder %s20, 0
    %p234 = por %p232, %p233
    %p235 = scmp.ne.s32.totalorder %s227, %s229
    %p236 = scmp.eq.s32.totalorder %s25, 1
    %p237 = por %p235, %p236
    %p238 = scmp.ne.s32.totalorder %s229, %s230
    %p239 = scmp.eq.s32.totalorder %s25, 0
    %p240 = por %p238, %p239
    %p241 = scmp.ne.s32.totalorder %s229, %s230
    %p242 = scmp.eq.s32.totalorder %s26, 1
    %p243 = por %p241, %p242
    %p245 = scmp.ne.s32.totalorder %s230, %s244
    %p246 = scmp.eq.s32.totalorder %s26, 0
    %p247 = por %p245, %p246
    %s249 = sadd.s32 %s248, 1
    %p252 = scmp.eq.s32.totalorder %s20, 1
    %p253 = scmp.ne.s32.totalorder %s248, %s250
    %p254 = scmp.eq.s32.totalorder %s20, 0
    %p255 = por %p253, %p254
    %p256 = scmp.ne.s32.totalorder %s248, %s250
    %p257 = scmp.eq.s32.totalorder %s25, 1
    %p258 = por %p256, %p257
    %p259 = scmp.ne.s32.totalorder %s250, %s251
    %p260 = scmp.eq.s32.totalorder %s25, 0
    %p261 = por %p259, %p260
    %p262 = scmp.ne.s32.totalorder %s250, %s251
    %p263 = scmp.eq.s32.totalorder %s26, 1
    %p264 = por %p262, %p263
    %p266 = scmp.ne.s32.totalorder %s251, %s265
    %p267 = scmp.eq.s32.totalorder %s26, 0
    %p268 = por %p266, %p267
    %s270 = sadd.s32 %s269, 1
    %p273 = scmp.eq.s32.totalorder %s20, 1
    %p274 = scmp.ne.s32.totalorder %s269, %s271
    %p275 = scmp.eq.s32.totalorder %s20, 0
    %p276 = por %p274, %p275
    %p277 = scmp.ne.s32.totalorder %s269, %s271
    %p278 = scmp.eq.s32.totalorder %s25, 1
    %p279 = por %p277, %p278
    %p280 = scmp.ne.s32.totalorder %s271, %s272
    %p281 = scmp.eq.s32.totalorder %s25, 0
    %p282 = por %p280, %p281
    %p283 = scmp.ne.s32.totalorder %s271, %s272
    %p284 = scmp.eq.s32.totalorder %s26, 1
    %p285 = por %p283, %p284
    %p287 = scmp.ne.s32.totalorder %s272, %s286
    %p288 = scmp.eq.s32.totalorder %s26, 0
    %p289 = por %p287, %p288
    %s290 = ssub.s32 %s20, %s27
    %p291 = scmp.eq.s32.totalorder %s290, 0
    %s293 = sadd.s32 %s292, 1
    %s294 = scalar_select %p291, %s292, %s293
    %p297 = pneg %p291
    %p298 = scmp.eq.s32.totalorder %s20, 1
    %p299 = por %p297, %p298
    %p300 = scmp.ne.s32.totalorder %s292, %s295
    %p301 = scmp.eq.s32.totalorder %s20, 0
    %p302 = por %p300, %p301
    %p303 = scmp.ne.s32.totalorder %s292, %s295
    %p304 = scmp.eq.s32.totalorder %s25, 1
    %p305 = por %p303, %p304
    %p306 = scmp.ne.s32.totalorder %s295, %s296
    %p307 = scmp.eq.s32.totalorder %s25, 0
    %p308 = por %p306, %p307
    %p309 = scmp.ne.s32.totalorder %s295, %s296
    %p310 = scmp.eq.s32.totalorder %s26, 1
    %p311 = por %p309, %p310
    %p313 = scmp.ne.s32.totalorder %s296, %s312
    %p314 = scmp.eq.s32.totalorder %s26, 0
    %p315 = por %p313, %p314
    %p316 = scmp.le.s32.totalorder 1, %s20
    %p317 = scmp.lt.s32.totalorder %s20, 3
    %p318 = pnand %p316, %p317
    %p319 = pneg %p318
    // Predicated region
    $region9: #{_lambda_.10} parent=5 // pred_check
      _
    $region10: #{_lambda_.10} parent=5 // pred_check_branch
      %321 = sbr.rel (%p318) target = $region12
    $region11: #{_lambda_.10} parent=5 // pred_region
      %s322 = ssub.s32 %s20, 1
      // Predicated region
      $region13: #{_lambda_.10} parent=11 // pred_check
        %p323 = pneg %p93
      $region14: #{_lambda_.10} parent=11 // pred_check_branch
        %325 = sbr.rel (%p323) target = $region16
      $region15: #{_lambda_.10} parent=11 // pred_region
        _
      $region16: #{_lambda_.10} parent=11 // pred_fallthru
        _
      // Predicated region
      $region17: #{_lambda_.10} parent=11 // pred_check
        %p326 = pneg %p114
      $region18: #{_lambda_.10} parent=11 // pred_check_branch
        %328 = sbr.rel (%p326) target = $region20
      $region19: #{_lambda_.10} parent=11 // pred_region
        _
      $region20: #{_lambda_.10} parent=11 // pred_fallthru
        _
      // Predicated region
      $region21: #{_lambda_.10} parent=11 // pred_check
        %p329 = pneg %p135
      $region22: #{_lambda_.10} parent=11 // pred_check_branch
        %331 = sbr.rel (%p329) target = $region24
      $region23: #{_lambda_.10} parent=11 // pred_region
        _
      $region24: #{_lambda_.10} parent=11 // pred_fallthru
        _
      // Predicated region
      $region25: #{_lambda_.10} parent=11 // pred_check
        %p332 = pneg %p156
      $region26: #{_lambda_.10} parent=11 // pred_check_branch
        %334 = sbr.rel (%p332) target = $region28
      $region27: #{_lambda_.10} parent=11 // pred_region
        _
      $region28: #{_lambda_.10} parent=11 // pred_fallthru
        _
      // Predicated region
      $region29: #{_lambda_.10} parent=11 // pred_check
        %p335 = pneg %p177
      $region30: #{_lambda_.10} parent=11 // pred_check_branch
        %337 = sbr.rel (%p335) target = $region32
      $region31: #{_lambda_.10} parent=11 // pred_region
        _
      $region32: #{_lambda_.10} parent=11 // pred_fallthru
        _
      // Predicated region
      $region33: #{_lambda_.10} parent=11 // pred_check
        %p338 = pneg %p198
      $region34: #{_lambda_.10} parent=11 // pred_check_branch
        %340 = sbr.rel (%p338) target = $region36
      $region35: #{_lambda_.10} parent=11 // pred_region
        _
      $region36: #{_lambda_.10} parent=11 // pred_fallthru
        _
      // Predicated region
      $region37: #{_lambda_.10} parent=11 // pred_check
        %p341 = pneg %p219
      $region38: #{_lambda_.10} parent=11 // pred_check_branch
        %343 = sbr.rel (%p341) target = $region40
      $region39: #{_lambda_.10} parent=11 // pred_region
        _
      $region40: #{_lambda_.10} parent=11 // pred_fallthru
        _
      // Predicated region
      $region41: #{_lambda_.10} parent=11 // pred_check
        %p344 = pneg %p240
      $region42: #{_lambda_.10} parent=11 // pred_check_branch
        %346 = sbr.rel (%p344) target = $region44
      $region43: #{_lambda_.10} parent=11 // pred_region
        _
      $region44: #{_lambda_.10} parent=11 // pred_fallthru
        _
      // Predicated region
      $region45: #{_lambda_.10} parent=11 // pred_check
        %p347 = pneg %p261
      $region46: #{_lambda_.10} parent=11 // pred_check_branch
        %349 = sbr.rel (%p347) target = $region48
      $region47: #{_lambda_.10} parent=11 // pred_region
        _
      $region48: #{_lambda_.10} parent=11 // pred_fallthru
        _
      // Predicated region
      $region49: #{_lambda_.10} parent=11 // pred_check
        %p350 = pneg %p282
      $region50: #{_lambda_.10} parent=11 // pred_check_branch
        %352 = sbr.rel (%p350) target = $region52
      $region51: #{_lambda_.10} parent=11 // pred_region
        _
      $region52: #{_lambda_.10} parent=11 // pred_fallthru
        _
    $region12: #{_lambda_.10} parent=5 // pred_fallthru
      _
    %p353 = scmp.lt.s32.totalorder %s20, 2
    // Predicated region
    $region53: #{_lambda_.10} parent=5 // pred_check
      %p354 = pneg %p353
    $region54: #{_lambda_.10} parent=5 // pred_check_branch
      %356 = sbr.rel (%p354) target = $region56
    $region55: #{_lambda_.10} parent=5 // pred_region
      // Predicated region
      $region57: #{_lambda_.10} parent=55 // pred_check
        %p357 = pneg %p40
      $region58: #{_lambda_.10} parent=55 // pred_check_branch
        %359 = sbr.rel (%p357) target = $region60
      $region59: #{_lambda_.10} parent=55 // pred_region
        %p360 = scmp.lt.s32.totalorder %s20, 1
        %s361 = scalar_select %p360, %s20, 1
        %s362 = smul.addr %s361, 2
        %s363 = smul.addr %s362, 8
        %s364 = scalar_lea.vmem %s0, %s363
      $region60: #{_lambda_.10} parent=55 // pred_fallthru
        _
      // Predicated region
      $region61: #{_lambda_.10} parent=55 // pred_check
        %p365 = pneg %p66
      $region62: #{_lambda_.10} parent=55 // pred_check_branch
        %367 = sbr.rel (%p365) target = $region64
      $region63: #{_lambda_.10} parent=55 // pred_region
        %p368 = scmp.lt.s32.totalorder %s20, 1
        %s369 = scalar_select %p368, %s20, 1
        %s370 = smul.addr %s369, 2
        %s371 = smul.addr %s370, 8
        %s372 = scalar_lea.vmem %s1, %s371
      $region64: #{_lambda_.10} parent=55 // pred_fallthru
        _
    $region56: #{_lambda_.10} parent=5 // pred_fallthru
      _
    %p373 = scmp.le.s32.totalorder 1, %s20
    %p374 = scmp.lt.s32.totalorder %s20, 3
    %p375 = pnand %p373, %p374
    %p376 = pneg %p375
    // Predicated region
    $region65: #{_lambda_.10} parent=5 // pred_check
      _
    $region66: #{_lambda_.10} parent=5 // pred_check_branch
      %378 = sbr.rel (%p375) target = $region68
    $region67: #{_lambda_.10} parent=5 // pred_region
      %s379 = ssub.s32 %s20, 1
      %p380 = scmp.lt.s32.totalorder %s25, 1
      %s381 = scalar_select %p380, %s25, 1
      %s382 = smul.addr %s381, 2
      %s383 = smul.addr %s382, 8
      %s384 = scalar_lea.vmem %s0, %s383
      %p385 = pneg %p46
      %p386 = pneg %p43
      %p387 = scmp.lt.s32.totalorder %s25, 1
      %s388 = scalar_select %p387, %s25, 1
      %s389 = smul.addr %s388, 2
      %s390 = smul.addr %s389, 8
      %s391 = scalar_lea.vmem %s1, %s390
      %p392 = pneg %p72
      %p393 = pneg %p69
      %p394 = pneg %p93
      %p395 = pneg %p90
      %p396 = pneg %p114
      %p397 = pneg %p111
      %p398 = pneg %p135
      %p399 = pneg %p132
      %p400 = pneg %p156
      %p401 = pneg %p153
      %p402 = pneg %p177
      %p403 = pneg %p174
      %p404 = pneg %p198
      %p405 = pneg %p195
      %p406 = pneg %p219
      %p407 = pneg %p216
      %p408 = pneg %p240
      %p409 = pneg %p237
      %p410 = pneg %p261
      %p411 = pneg %p258
      %p412 = pneg %p282
      %p413 = pneg %p279
      %p414 = pneg %p308
      %p415 = pneg %p305
      %p416 = scmp.lt.s32.totalorder %s25, 1
      %s417 = scalar_select %p416, %s25, 1
      %s418 = smul.addr %s417, 2
      %s419 = smul.addr %s418, 8
      %s420 = scalar_lea.vmem %s12, %s419
      %p421 = scmp.lt.s32.totalorder %s25, 1
      %s422 = scalar_select %p421, %s25, 1
      %s423 = smul.addr %s422, 2
      %s424 = smul.addr %s423, 8
      %s425 = scalar_lea.vmem %s0, %s424
      %p426 = scmp.lt.s32.totalorder %s25, 1
      %s427 = scalar_select %p426, %s25, 1
      %s428 = smul.addr %s427, 2
      %s429 = smul.addr %s428, 8
      %s430 = scalar_lea.vmem %s1, %s429
      %p431 = scmp.lt.s32.totalorder %s25, 1
      %s432 = scalar_select %p431, %s25, 1
      %s433 = smul.addr %s432, 2
      %s434 = smul.addr %s433, 8
      %s435 = scalar_lea.vmem %s12, %s434
      %v437 = vld [vmem:[%s425] sm:$0xff]
      %v438 = vld [vmem:[%s425 + $0x8] sm:$0xff]
      %v439 = vld [vmem:[%s430] sm:$0xff]
      %v440 = vld [vmem:[%s430 + $0x8] sm:$0xff]
      %v441 = vld [vmem:[%s2] sm:$0xff]
      %v442 = vld [vmem:[%s2 + $0x8] sm:$0xff]
      %v443 = vld [vmem:[%s2 + $0x10] sm:$0xff]
      %v444 = vld [vmem:[%s2 + $0x18] sm:$0xff]
      %v445 = vld [vmem:[%s2 + $0x20] sm:$0xff]
      %v446 = vld [vmem:[%s2 + $0x28] sm:$0xff]
      %v447 = vld [vmem:[%s2 + $0x30] sm:$0xff]
      %v448 = vld [vmem:[%s2 + $0x38] sm:$0xff]
      %v449 = vld [vmem:[%s2 + $0x40] sm:$0xff]
      %v450 = vld [vmem:[%s2 + $0x48] sm:$0xff]
      %v451 = vld [vmem:[%s2 + $0x50] sm:$0xff]
      %v452 = vld [vmem:[%s2 + $0x58] sm:$0xff]
      %v453 = vld [vmem:[%s3] sm:$0x1]
      %vm456 = vcmask 1040384
      %v457 = vrot.slane %v437, 7
      %v458 = vrot.slane %v438, 7
      %v459 = vsel %vm456, %v457, %v458
      %v462 = vsel %vm456, 0.0, %v457
      %v463 = vpack.c.bf16 %v459, %v462
      %v464 = vpack.c.bf16 %v442, %v441
      %v465 = vpack.c.bf16 %v444, %v443
      %v466 = vpack.c.bf16 %v438, %v437
      %v467 = vpack.c.bf16 %v446, %v445
      %v468 = vpack.c.bf16 %v448, %v447
      %vm469 = vcmask 261120
      %v471 = vsel %vm469, %v466, 0
      %473 = vmatprep.subr.bf16.mxu0 0
      %474 = vmatpush1.bf16.msra.mxu0 0
      %475 = vmatprep.subr.bf16.mxu0 0
      %476 = vmatpush1.bf16.msra.mxu0 0
      %477 = vmatprep.subr.bf16.mxu0 0
      %478 = vmatpush1.bf16.msra.mxu0 0
      %479 = vmatprep.subr.bf16.mxu0 0
      %480 = vmatpush1.bf16.msra.mxu0 0
      %481 = vmatprep.subr.bf16.mxu0 0
      %482 = vmatpush1.bf16.msra.mxu0 0
      %483 = vmatprep.subr.bf16.mxu0 0
      %484 = vmatpush1.bf16.msra.mxu0 0
      %485 = vmatprep.subr.bf16.mxu0 0
      %486 = vmatpush1.bf16.msra.mxu0 %v468
      %487 = vmatprep.subr.bf16.mxu0 0
      %488 = vmatpush1.bf16.msra.mxu0 %v467
      %489 = vmatprep.subr.bf16.mxu0 0
      %490 = vmatpush2.bf16.msra.mxu0 0
      %491 = vmatprep.subr.bf16.mxu0 0
      %492 = vmatpush2.bf16.msra.mxu0 0
      %493 = vmatprep.subr.bf16.mxu0 0
      %494 = vmatpush2.bf16.msra.mxu0 0
      %495 = vmatprep.subr.bf16.mxu0 0
      %496 = vmatpush2.bf16.msra.mxu0 0
      %497 = vmatprep.subr.bf16.mxu0 0
      %498 = vmatpush2.bf16.msra.mxu0 0
      %499 = vmatprep.subr.bf16.mxu0 0
      %500 = vmatpush2.bf16.msra.mxu0 0
      %501 = vmatprep.subr.bf16.mxu0 0
      %502 = vmatpush2.bf16.msra.mxu0 0
      %503 = vmatprep.subr.bf16.mxu0 0
      %504 = vmatpush2.bf16.msra.mxu0 0
      %505 = vmatprep.mubr.bf16.mxu0 0
      %506 = vmatmul.mubr.bf16.gmra.mxu0 %v471
      %v507 = vpop.f32.mrf.mxu0
      %v508 = vadd.f32 0.0, %v507
      %v509 = vpop.f32.mrf.mxu0
      %v510 = vpop.f32.mrf.mxu0
      %v511 = vadd.f32 0.0, %v510
      %v512 = vpop.f32.mrf.mxu0
      %513 = vdwg.mxu0
      %v515 = vsel %vm469, %v463, 0
      %517 = vmatprep.subr.bf16.mxu0 0
      %518 = vmatpush1.bf16.msra.mxu0 0
      %519 = vmatprep.subr.bf16.mxu0 0
      %520 = vmatpush1.bf16.msra.mxu0 0
      %521 = vmatprep.subr.bf16.mxu0 0
      %522 = vmatpush1.bf16.msra.mxu0 0
      %523 = vmatprep.subr.bf16.mxu0 0
      %524 = vmatpush1.bf16.msra.mxu0 0
      %525 = vmatprep.subr.bf16.mxu0 0
      %526 = vmatpush1.bf16.msra.mxu0 0
      %527 = vmatprep.subr.bf16.mxu0 0
      %528 = vmatpush1.bf16.msra.mxu0 0
      %529 = vmatprep.subr.bf16.mxu0 0
      %530 = vmatpush1.bf16.msra.mxu0 %v465
      %531 = vmatprep.subr.bf16.mxu0 0
      %532 = vmatpush1.bf16.msra.mxu0 %v464
      %533 = vmatprep.subr.bf16.mxu0 0
      %534 = vmatpush2.bf16.msra.mxu0 0
      %535 = vmatprep.subr.bf16.mxu0 0
      %536 = vmatpush2.bf16.msra.mxu0 0
      %537 = vmatprep.subr.bf16.mxu0 0
      %538 = vmatpush2.bf16.msra.mxu0 0
      %539 = vmatprep.subr.bf16.mxu0 0
      %540 = vmatpush2.bf16.msra.mxu0 0
      %541 = vmatprep.subr.bf16.mxu0 0
      %542 = vmatpush2.bf16.msra.mxu0 0
      %543 = vmatprep.subr.bf16.mxu0 0
      %544 = vmatpush2.bf16.msra.mxu0 0
      %545 = vmatprep.subr.bf16.mxu0 0
      %546 = vmatpush2.bf16.msra.mxu0 0
      %547 = vmatprep.subr.bf16.mxu0 0
      %548 = vmatpush2.bf16.msra.mxu0 0
      %549 = vmatprep.mubr.bf16.mxu0 0
      %550 = vmatmul.mubr.bf16.gmra.mxu0 %v515
      %v551 = vpop.f32.mrf.mxu0
      %v552 = vadd.f32 %v508, %v551
      %v553 = vpop.f32.mrf.mxu0
      %v554 = vpop.f32.mrf.mxu0
      %v555 = vadd.f32 %v511, %v554
      %v556 = vpop.f32.mrf.mxu0
      %557 = vdwg.mxu0
      %vm558 = vcmask 1046528
      %v559 = vrot.slane %v437, 1
      %v560 = vrot.slane %v438, 1
      %v561 = vsel %vm558, %v559, %v560
      %v564 = vsel %vm558, %v560, 0.0
      %v565 = vpack.c.bf16 %v564, %v561
      %v566 = vpack.c.bf16 %v450, %v449
      %v567 = vpack.c.bf16 %v452, %v451
      %v569 = vsel %vm469, %v565, 0
      %571 = vmatprep.subr.bf16.mxu0 0
      %572 = vmatpush1.bf16.msra.mxu0 0
      %573 = vmatprep.subr.bf16.mxu0 0
      %574 = vmatpush1.bf16.msra.mxu0 0
      %575 = vmatprep.subr.bf16.mxu0 0
      %576 = vmatpush1.bf16.msra.mxu0 0
      %577 = vmatprep.subr.bf16.mxu0 0
      %578 = vmatpush1.bf16.msra.mxu0 0
      %579 = vmatprep.subr.bf16.mxu0 0
      %580 = vmatpush1.bf16.msra.mxu0 0
      %581 = vmatprep.subr.bf16.mxu0 0
      %582 = vmatpush1.bf16.msra.mxu0 0
      %583 = vmatprep.subr.bf16.mxu0 0
      %584 = vmatpush1.bf16.msra.mxu0 %v567
      %585 = vmatprep.subr.bf16.mxu0 0
      %586 = vmatpush1.bf16.msra.mxu0 %v566
      %587 = vmatprep.subr.bf16.mxu0 0
      %588 = vmatpush2.bf16.msra.mxu0 0
      %589 = vmatprep.subr.bf16.mxu0 0
      %590 = vmatpush2.bf16.msra.mxu0 0
      %591 = vmatprep.subr.bf16.mxu0 0
      %592 = vmatpush2.bf16.msra.mxu0 0
      %593 = vmatprep.subr.bf16.mxu0 0
      %594 = vmatpush2.bf16.msra.mxu0 0
      %595 = vmatprep.subr.bf16.mxu0 0
      %596 = vmatpush2.bf16.msra.mxu0 0
      %597 = vmatprep.subr.bf16.mxu0 0
      %598 = vmatpush2.bf16.msra.mxu0 0
      %599 = vmatprep.subr.bf16.mxu0 0
      %600 = vmatpush2.bf16.msra.mxu0 0
      %601 = vmatprep.subr.bf16.mxu0 0
      %602 = vmatpush2.bf16.msra.mxu0 0
      %603 = vmatprep.mubr.bf16.mxu0 0
      %604 = vmatmul.mubr.bf16.gmra.mxu0 %v569
      %v605 = vpop.f32.mrf.mxu0
      %v606 = vadd.f32 0.0, %v605
      %v607 = vpop.f32.mrf.mxu0
      %v608 = vpop.f32.mrf.mxu0
      %v609 = vadd.f32 0.0, %v608
      %v610 = vpop.f32.mrf.mxu0
      %611 = vdwg.mxu0
      %v612 = vadd.f32 %v552, %v606
      %v613 = vadd.f32 %v555, %v609
      %v615 = vlaneseq
      %v616 = vshrl.u32 %v615, 7
      %v617 = vsub.s32 0, %v616
      %v618 = vrot.slane %v453, %v617
      %v620 = vadd.f32 %v612, %v618
      %v621 = vadd.f32 %v613, %v618
      %v622 = vmax.f32 %v620, 0.0
      %v623 = vmax.f32 %v621, 0.0
      %v624 = vld [vmem:[%s4] sm:$0x1]
      %v625 = vld [vmem:[%s5] sm:$0x1]
      %v626 = vsel %vm469, %v622, 0.0
      %627 = vadd.xlane.f32.xlu0 %v626
      %v628 = vpop.xlane.xlu0 %627
      %v629 = vsel %vm469, %v623, 0.0
      %630 = vadd.xlane.f32.xlu0 %v629
      %v631 = vpop.xlane.xlu0 %630
      %v632 = vrcp.pop 32.0
      %v633 = vmul.f32 %v628, %v632
      %v634 = vmul.f32 %v631, %v632
      %v635 = vsub.f32 %v622, %v633
      %v636 = vsub.f32 %v623, %v634
      %v637 = vmul.f32 %v635, %v635
      %v638 = vmul.f32 %v636, %v636
      %v639 = vsel %vm469, %v637, 0.0
      %640 = vadd.xlane.f32.xlu0 %v639
      %v641 = vpop.xlane.xlu0 %640
      %v642 = vsel %vm469, %v638, 0.0
      %643 = vadd.xlane.f32.xlu0 %v642
      %v644 = vpop.xlane.xlu0 %643
      %v645 = vmul.f32 %v641, %v632
      %v646 = vmul.f32 %v644, %v632
      %v647 = vadd.f32 %v645, 1e-05
      %v648 = vadd.f32 %v646, 1e-05
      %v649 = vrsqrt.pop %v647
      %v650 = vrsqrt.pop %v648
      %v651 = vmul.f32 %v635, %v649
      %v652 = vmul.f32 %v636, %v650
      %v654 = vlaneseq
      %v655 = vshrl.u32 %v654, 7
      %v656 = vsub.s32 0, %v655
      %v657 = vrot.slane %v624, %v656
      %v659 = vmul.f32 %v651, %v657
      %v660 = vmul.f32 %v652, %v657
      %v662 = vlaneseq
      %v663 = vshrl.u32 %v662, 7
      %v664 = vsub.s32 0, %v663
      %v665 = vrot.slane %v625, %v664
      %v667 = vadd.f32 %v659, %v665
      %v668 = vadd.f32 %v660, %v665
      %v669 = vld [vmem:[%s6] sm:$0xff]
      %v670 = vld [vmem:[%s6 + $0x8] sm:$0xff]
      %v671 = vld [vmem:[%s6 + $0x10] sm:$0xff]
      %v672 = vld [vmem:[%s6 + $0x18] sm:$0xff]
      %v673 = vld [vmem:[%s6 + $0x20] sm:$0xff]
      %v674 = vld [vmem:[%s6 + $0x28] sm:$0xff]
      %v675 = vld [vmem:[%s6 + $0x30] sm:$0xff]
      %v676 = vld [vmem:[%s6 + $0x38] sm:$0xff]
      %v677 = vld [vmem:[%s6 + $0x40] sm:$0xff]
      %v678 = vld [vmem:[%s6 + $0x48] sm:$0xff]
      %v679 = vld [vmem:[%s6 + $0x50] sm:$0xff]
      %v680 = vld [vmem:[%s6 + $0x58] sm:$0xff]
      %v681 = vld [vmem:[%s7] sm:$0x1]
      %v684 = vrot.slane %v667, 7
      %v685 = vrot.slane %v668, 7
      %v686 = vsel %vm456, %v684, %v685
      %v689 = vsel %vm456, 0.0, %v684
      %v690 = vpack.c.bf16 %v686, %v689
      %v691 = vpack.c.bf16 %v670, %v669
      %v692 = vpack.c.bf16 %v672, %v671
      %v693 = vpack.c.bf16 %v668, %v667
      %v694 = vpack.c.bf16 %v674, %v673
      %v695 = vpack.c.bf16 %v676, %v675
      %v697 = vsel %vm469, %v693, 0
      %699 = vmatprep.subr.bf16.mxu0 0
      %700 = vmatpush1.bf16.msra.mxu0 0
      %701 = vmatprep.subr.bf16.mxu0 0
      %702 = vmatpush1.bf16.msra.mxu0 0
      %703 = vmatprep.subr.bf16.mxu0 0
      %704 = vmatpush1.bf16.msra.mxu0 0
      %705 = vmatprep.subr.bf16.mxu0 0
      %706 = vmatpush1.bf16.msra.mxu0 0
      %707 = vmatprep.subr.bf16.mxu0 0
      %708 = vmatpush1.bf16.msra.mxu0 0
      %709 = vmatprep.subr.bf16.mxu0 0
      %710 = vmatpush1.bf16.msra.mxu0 0
      %711 = vmatprep.subr.bf16.mxu0 0
      %712 = vmatpush1.bf16.msra.mxu0 %v695
      %713 = vmatprep.subr.bf16.mxu0 0
      %714 = vmatpush1.bf16.msra.mxu0 %v694
      %715 = vmatprep.subr.bf16.mxu0 0
      %716 = vmatpush2.bf16.msra.mxu0 0
      %717 = vmatprep.subr.bf16.mxu0 0
      %718 = vmatpush2.bf16.msra.mxu0 0
      %719 = vmatprep.subr.bf16.mxu0 0
      %720 = vmatpush2.bf16.msra.mxu0 0
      %721 = vmatprep.subr.bf16.mxu0 0
      %722 = vmatpush2.bf16.msra.mxu0 0
      %723 = vmatprep.subr.bf16.mxu0 0
      %724 = vmatpush2.bf16.msra.mxu0 0
      %725 = vmatprep.subr.bf16.mxu0 0
      %726 = vmatpush2.bf16.msra.mxu0 0
      %727 = vmatprep.subr.bf16.mxu0 0
      %728 = vmatpush2.bf16.msra.mxu0 0
      %729 = vmatprep.subr.bf16.mxu0 0
      %730 = vmatpush2.bf16.msra.mxu0 0
      %731 = vmatprep.mubr.bf16.mxu0 0
      %732 = vmatmul.mubr.bf16.gmra.mxu0 %v697
      %v733 = vpop.f32.mrf.mxu0
      %v734 = vadd.f32 0.0, %v733
      %v735 = vpop.f32.mrf.mxu0
      %v736 = vpop.f32.mrf.mxu0
      %v737 = vadd.f32 0.0, %v736
      %v738 = vpop.f32.mrf.mxu0
      %739 = vdwg.mxu0
      %v741 = vsel %vm469, %v690, 0
      %743 = vmatprep.subr.bf16.mxu0 0
      %744 = vmatpush1.bf16.msra.mxu0 0
      %745 = vmatprep.subr.bf16.mxu0 0
      %746 = vmatpush1.bf16.msra.mxu0 0
      %747 = vmatprep.subr.bf16.mxu0 0
      %748 = vmatpush1.bf16.msra.mxu0 0
      %749 = vmatprep.subr.bf16.mxu0 0
      %750 = vmatpush1.bf16.msra.mxu0 0
      %751 = vmatprep.subr.bf16.mxu0 0
      %752 = vmatpush1.bf16.msra.mxu0 0
      %753 = vmatprep.subr.bf16.mxu0 0
      %754 = vmatpush1.bf16.msra.mxu0 0
      %755 = vmatprep.subr.bf16.mxu0 0
      %756 = vmatpush1.bf16.msra.mxu0 %v692
      %757 = vmatprep.subr.bf16.mxu0 0
      %758 = vmatpush1.bf16.msra.mxu0 %v691
      %759 = vmatprep.subr.bf16.mxu0 0
      %760 = vmatpush2.bf16.msra.mxu0 0
      %761 = vmatprep.subr.bf16.mxu0 0
      %762 = vmatpush2.bf16.msra.mxu0 0
      %763 = vmatprep.subr.bf16.mxu0 0
      %764 = vmatpush2.bf16.msra.mxu0 0
      %765 = vmatprep.subr.bf16.mxu0 0
      %766 = vmatpush2.bf16.msra.mxu0 0
      %767 = vmatprep.subr.bf16.mxu0 0
      %768 = vmatpush2.bf16.msra.mxu0 0
      %769 = vmatprep.subr.bf16.mxu0 0
      %770 = vmatpush2.bf16.msra.mxu0 0
      %771 = vmatprep.subr.bf16.mxu0 0
      %772 = vmatpush2.bf16.msra.mxu0 0
      %773 = vmatprep.subr.bf16.mxu0 0
      %774 = vmatpush2.bf16.msra.mxu0 0
      %775 = vmatprep.mubr.bf16.mxu0 0
      %776 = vmatmul.mubr.bf16.gmra.mxu0 %v741
      %v777 = vpop.f32.mrf.mxu0
      %v778 = vadd.f32 %v734, %v777
      %v779 = vpop.f32.mrf.mxu0
      %v780 = vpop.f32.mrf.mxu0
      %v781 = vadd.f32 %v737, %v780
      %v782 = vpop.f32.mrf.mxu0
      %783 = vdwg.mxu0
      %v784 = vrot.slane %v667, 1
      %v785 = vrot.slane %v668, 1
      %v786 = vsel %vm558, %v784, %v785
      %v789 = vsel %vm558, %v785, 0.0
      %v790 = vpack.c.bf16 %v789, %v786
      %v791 = vpack.c.bf16 %v678, %v677
      %v792 = vpack.c.bf16 %v680, %v679
      %v794 = vsel %vm469, %v790, 0
      %796 = vmatprep.subr.bf16.mxu0 0
      %797 = vmatpush1.bf16.msra.mxu0 0
      %798 = vmatprep.subr.bf16.mxu0 0
      %799 = vmatpush1.bf16.msra.mxu0 0
      %800 = vmatprep.subr.bf16.mxu0 0
      %801 = vmatpush1.bf16.msra.mxu0 0
      %802 = vmatprep.subr.bf16.mxu0 0
      %803 = vmatpush1.bf16.msra.mxu0 0
      %804 = vmatprep.subr.bf16.mxu0 0
      %805 = vmatpush1.bf16.msra.mxu0 0
      %806 = vmatprep.subr.bf16.mxu0 0
      %807 = vmatpush1.bf16.msra.mxu0 0
      %808 = vmatprep.subr.bf16.mxu0 0
      %809 = vmatpush1.bf16.msra.mxu0 %v792
      %810 = vmatprep.subr.bf16.mxu0 0
      %811 = vmatpush1.bf16.msra.mxu0 %v791
      %812 = vmatprep.subr.bf16.mxu0 0
      %813 = vmatpush2.bf16.msra.mxu0 0
      %814 = vmatprep.subr.bf16.mxu0 0
      %815 = vmatpush2.bf16.msra.mxu0 0
      %816 = vmatprep.subr.bf16.mxu0 0
      %817 = vmatpush2.bf16.msra.mxu0 0
      %818 = vmatprep.subr.bf16.mxu0 0
      %819 = vmatpush2.bf16.msra.mxu0 0
      %820 = vmatprep.subr.bf16.mxu0 0
      %821 = vmatpush2.bf16.msra.mxu0 0
      %822 = vmatprep.subr.bf16.mxu0 0
      %823 = vmatpush2.bf16.msra.mxu0 0
      %824 = vmatprep.subr.bf16.mxu0 0
      %825 = vmatpush2.bf16.msra.mxu0 0
      %826 = vmatprep.subr.bf16.mxu0 0
      %827 = vmatpush2.bf16.msra.mxu0 0
      %828 = vmatprep.mubr.bf16.mxu0 0
      %829 = vmatmul.mubr.bf16.gmra.mxu0 %v794
      %v830 = vpop.f32.mrf.mxu0
      %v831 = vadd.f32 0.0, %v830
      %v832 = vpop.f32.mrf.mxu0
      %v833 = vpop.f32.mrf.mxu0
      %v834 = vadd.f32 0.0, %v833
      %v835 = vpop.f32.mrf.mxu0
      %836 = vdwg.mxu0
      %v837 = vadd.f32 %v778, %v831
      %v838 = vadd.f32 %v781, %v834
      %v840 = vlaneseq
      %v841 = vshrl.u32 %v840, 7
      %v842 = vsub.s32 0, %v841
      %v843 = vrot.slane %v681, %v842
      %v845 = vadd.f32 %v837, %v843
      %v846 = vadd.f32 %v838, %v843
      %v847 = vmax.f32 %v845, 0.0
      %v848 = vmax.f32 %v846, 0.0
      %v849 = vld [vmem:[%s8] sm:$0x1]
      %v850 = vld [vmem:[%s9] sm:$0x1]
      %v851 = vsel %vm469, %v847, 0.0
      %852 = vadd.xlane.f32.xlu0 %v851
      %v853 = vpop.xlane.xlu0 %852
      %v854 = vsel %vm469, %v848, 0.0
      %855 = vadd.xlane.f32.xlu0 %v854
      %v856 = vpop.xlane.xlu0 %855
      %v857 = vmul.f32 %v853, %v632
      %v858 = vmul.f32 %v856, %v632
      %v859 = vsub.f32 %v847, %v857
      %v860 = vsub.f32 %v848, %v858
      %v861 = vmul.f32 %v859, %v859
      %v862 = vmul.f32 %v860, %v860
      %v863 = vsel %vm469, %v861, 0.0
      %864 = vadd.xlane.f32.xlu0 %v863
      %v865 = vpop.xlane.xlu0 %864
      %v866 = vsel %vm469, %v862, 0.0
      %867 = vadd.xlane.f32.xlu0 %v866
      %v868 = vpop.xlane.xlu0 %867
      %v869 = vmul.f32 %v865, %v632
      %v870 = vmul.f32 %v868, %v632
      %v871 = vadd.f32 %v869, 1e-05
      %v872 = vadd.f32 %v870, 1e-05
      %v873 = vrsqrt.pop %v871
      %v874 = vrsqrt.pop %v872
      %v875 = vmul.f32 %v859, %v873
      %v876 = vmul.f32 %v860, %v874
      %v878 = vlaneseq
      %v879 = vshrl.u32 %v878, 7
      %v880 = vsub.s32 0, %v879
      %v881 = vrot.slane %v849, %v880
      %v883 = vmul.f32 %v875, %v881
      %v884 = vmul.f32 %v876, %v881
      %v886 = vlaneseq
      %v887 = vshrl.u32 %v886, 7
      %v888 = vsub.s32 0, %v887
      %v889 = vrot.slane %v850, %v888
      %v891 = vadd.f32 %v883, %v889
      %v892 = vadd.f32 %v884, %v889
      %v893 = vld [vmem:[%s10] sm:$0x1]
      %v895 = vlaneseq
      %v896 = vshrl.u32 %v895, 7
      %v897 = vsub.s32 0, %v896
      %v898 = vrot.slane %v893, %v897
      %v900 = vmul.f32 %v891, %v898
      %v901 = vmul.f32 %v892, %v898
      %v902 = vsel %vm469, %v900, 0.0
      %903 = vadd.xlane.f32.xlu0 %v902
      %v904 = vpop.xlane.xlu0 %903
      %v905 = vsel %vm469, %v901, 0.0
      %906 = vadd.xlane.f32.xlu0 %v905
      %v907 = vpop.xlane.xlu0 %906
      %v908 = vld [vmem:[#allocation2] sm:$0x1]
      %v910 = vlaneseq
      %v911 = vshrl.u32 %v910, 7
      %v912 = vsub.s32 0, %v911
      %v913 = vrot.slane %v908, %v912
      %v915 = vadd.f32 %v904, %v913
      %v916 = vadd.f32 %v907, %v913
      %v917 = vmul.f32 %v915, %v439
      %v918 = vmul.f32 %v916, %v440
      %vm919 = vcmask 7168
      %920 = vst.msk [vmem:[%s435] sm:$0xff] %vm919, %v917
      %921 = vst.msk [vmem:[%s435 + $0x8] sm:$0xff] %vm919, %v918
      %p922 = scmp.lt.s32.totalorder %s25, 1
      %s923 = scalar_select %p922, %s25, 1
      %s924 = smul.addr %s923, 2
      %s925 = smul.addr %s924, 8
      %s926 = scalar_lea.vmem %s12, %s925
      // Predicated region
      $region69: #{_lambda_.10} parent=67 // pred_check
        %p927 = pneg %p305
      $region70: #{_lambda_.10} parent=67 // pred_check_branch
        %929 = sbr.rel (%p927) target = $region72
      $region71: #{_lambda_.10} parent=67 // pred_region
        _
      $region72: #{_lambda_.10} parent=67 // pred_fallthru
        _
    $region68: #{_lambda_.10} parent=5 // pred_fallthru
      _
    %p930 = scmp.le.s32.totalorder 2, %s20
    // Predicated region
    $region73: #{_lambda_.10} parent=5 // pred_check
      %p931 = pneg %p930
    $region74: #{_lambda_.10} parent=5 // pred_check_branch
      %933 = sbr.rel (%p931) target = $region76
    $region75: #{_lambda_.10} parent=5 // pred_region
      %s934 = ssub.s32 %s20, 2
      // Predicated region
      $region77: #{_lambda_.10} parent=75 // pred_check
        %p935 = pneg %p311
      $region78: #{_lambda_.10} parent=75 // pred_check_branch
        %937 = sbr.rel (%p935) target = $region80
      $region79: #{_lambda_.10} parent=75 // pred_region
        %p938 = scmp.lt.s32.totalorder %s26, 1
        %s939 = scalar_select %p938, %s26, 1
        %s940 = smul.addr %s939, 2
        %s941 = smul.addr %s940, 8
        %s942 = scalar_lea.vmem %s12, %s941
      $region80: #{_lambda_.10} parent=75 // pred_fallthru
        _
    $region76: #{_lambda_.10} parent=5 // pred_fallthru
      _
  $region6: #{_lambda_.10} parent=0 // loop_footer
    %s24 = sadd.s32 1, %s20
  $region7: #{_lambda_.10} parent=0 // loop_footer_branch
    %19 = sbr.rel target = $region3
  $region8: #{_lambda_.10} parent=0 // loop_exit
    _

</llo_original>
